<compile_context>
chip_gen: v7x
topology: tpu7x:2x2x1
jax: 0.10.0
libtpu: 0.0.40
codegen_flags: <defaults>
</compile_context>

<pallas_src>
import jax
import jax.numpy as jnp
from jax.experimental import pallas as pl
from jax.experimental.pallas import tpu as pltpu

D = 8
W = 256
INPUT_CH = 3
INPUT_CH_VIEWS = 60
OUTPUT_CH = 4
OUT_PAD = 128            # lane-dense output width (multiple of 128, >= OUTPUT_CH)
PTS_PAD = 8              # pts packed to 8 f32 lanes -> 32 B aligned DMA rows
SKIP = 4                 # skips=[4] -> pts_linears[SKIP + 1] consumes cat([pts, h])
TILE_ALIGN = 256         # row-tile alignment
MAX_TILE = 4096          # cap so per-step working set stays well under v7x 64 MiB VMEM
VMEM_LIMIT_BYTES = 48 * 1024 * 1024


def cloudnerf_kernel(pts_ref, w0_ref, b0_ref, wh_ref, bh_ref, w5p_ref,
                     wout_ref, bout_ref, out_ref):
    # pts_ref:  (tn, 8)       f32  (cols 0..2 = xyz, rest zero padding)
    # w0_ref:   (3, W)        f32    b0_ref:   (1, W)      f32
    # wh_ref:   (D-1, W, W)   bf16   bh_ref:   (D-1, 1, W) f32
    # w5p_ref:  (3, W)        f32  (pts rows of the skip layer's weight)
    # wout_ref: (W, OUT_PAD)  bf16   bout_ref: (1, OUT_PAD) f32
    # out_ref:  (tn, OUT_PAD) f32
    pts = pts_ref[...]
    px = pts[:, 0:1]
    py = pts[:, 1:2]
    pz = pts[:, 2:3]

    # Layer i = 0 (K=3): VPU broadcast-MACs instead of a skinny MXU matmul.
    h = (px * w0_ref[0:1, :] + py * w0_ref[1:2, :] + pz * w0_ref[2:3, :]
         + b0_ref[...])
    h = jnp.maximum(h, 0.0)

    # Layers i = 1 .. D-1 (j = i - 1), static unroll: bf16 MXU, f32 acc/bias/ReLU.
    for j in range(D - 1):
        z = jnp.dot(h.astype(jnp.bfloat16), wh_ref[j],
                    preferred_element_type=jnp.float32) + bh_ref[j]
        if j == SKIP:
            # this layer consumes cat([input_pts, h], -1): add the pts part (VPU)
            z = z + (px * w5p_ref[0:1, :] + py * w5p_ref[1:2, :]
                     + pz * w5p_ref[2:3, :])
        h = jnp.maximum(z, 0.0)

    out = jnp.dot(h.astype(jnp.bfloat16), wout_ref[...],
                  preferred_element_type=jnp.float32) + bout_ref[...]
    out_ref[...] = out.astype(out_ref.dtype)


def _round_up(n, m):
    return ((n + m - 1) // m) * m


def _cdiv(a, b):
    return -(-a // b)


def _select_tile(n, tn_req):
    """Pick the row tile (multiple of TILE_ALIGN, <= MAX_TILE) and grid steps.

    Keeps an even number (>= 2) of grid steps whenever N is big enough to
    split so the two v7x TensorCores get balanced work under ("parallel",).
    """
    tn_req = min(max(TILE_ALIGN, _round_up(tn_req, TILE_ALIGN)), MAX_TILE)
    steps = _cdiv(n, tn_req)
    if n > TILE_ALIGN:
        if steps < 2:
            steps = 2
        elif steps % 2:
            steps += 1
    tn = _round_up(_cdiv(n, steps), TILE_ALIGN)
    return tn, steps


def init_params(key):
    """Deterministic PyTorch-Linear-style init (uniform +/- 1/sqrt(fan_in)).

    Returns (kernel_params, fp32_params). fp32_params holds the exact f32
    weights for the pure-JAX references; kernel_params holds the kernel layout
    (bf16 MXU weights, f32 VPU weights/biases, lane-dense padded output head).
    """
    def lin(k, fan_in, fan_out):
        kw, kb = jax.random.split(k)
        bound = 1.0 / jnp.sqrt(jnp.float32(fan_in))
        w = jax.random.uniform(kw, (fan_in, fan_out), jnp.float32, -bound, bound)
        b = jax.random.uniform(kb, (fan_out,), jnp.float32, -bound, bound)
        return w, b

    keys = jax.random.split(key, D + 1)
    w0, b0 = lin(keys[0], INPUT_CH, W)

    wh_list, bh_list = [], []
    w5p = None
    for j in range(D - 1):  # layer i = j + 1 of pts_linears
        fan_in = W + INPUT_CH if j == SKIP else W
        wfull, b = lin(keys[j + 1], fan_in, W)
        if j == SKIP:
            w5p = wfull[:INPUT_CH]          # rows multiplying pts (cat order [pts, h])
            wh_list.append(wfull[INPUT_CH:])
        else:
            wh_list.append(wfull)
        bh_list.append(b)

    wout, bout = lin(keys[D], W, OUTPUT_CH)

    fp32 = dict(w0=w0, b0=b0, wh=jnp.stack(wh_list), bh=jnp.stack(bh_list),
                w5p=w5p, wout=wout, bout=bout)

    wout_pad = jnp.zeros((W, OUT_PAD), jnp.float32).at[:, :OUTPUT_CH].set(wout)
    bout_pad = jnp.zeros((OUT_PAD,), jnp.float32).at[:OUTPUT_CH].set(bout)

    kparams = dict(
        w0=w0,                                     # f32 (3, W)     VPU
        b0=b0.reshape(1, W),                       # f32 (1, W)
        wh=fp32["wh"].astype(jnp.bfloat16),        # bf16 (D-1, W, W)
        bh=fp32["bh"].reshape(D - 1, 1, W),        # f32 (D-1, 1, W)
        w5p=w5p,                                   # f32 (3, W)     VPU
        wout=wout_pad.astype(jnp.bfloat16),        # bf16 (W, 128)
        bout=bout_pad.reshape(1, OUT_PAD),         # f32 (1, 128)
    )
    return kparams, fp32


def _make_in_specs(tn, weights_mode):
    """in_specs: the pts tile strides with the grid; all weights are constant."""
    def wspec(shape):
        idx_map = lambda i, _s=shape: (0,) * len(_s)
        if weights_mode is None:
            return pl.BlockSpec(shape, idx_map)
        return pl.BlockSpec(shape, idx_map, pipeline_mode=weights_mode)

    return [
        pl.BlockSpec((tn, PTS_PAD), lambda i: (i, 0)),   # pts tile (32 B rows)
        wspec((INPUT_CH, W)),                            # w0   (f32, VPU)
        wspec((1, W)),                                   # b0
        wspec((D - 1, W, W)),                            # wh   (bf16, MXU)
        wspec((D - 1, 1, W)),                            # bh
        wspec((INPUT_CH, W)),                            # w5p  (f32, VPU)
        wspec((W, OUT_PAD)),                             # wout (bf16, MXU)
        wspec((1, OUT_PAD)),                             # bout
    ]


def cloudnerf_forward(x, params, tn=2048):
    """x: (N, input_ch + input_ch_views); views are unused (use_viewdirs=False)."""
    N = x.shape[0]
    tn, steps = _select_tile(N, tn)
    n_pad = tn * steps

    # Pre-pack pts into a 32 B-aligned (n_pad, 8) f32 slab; padded rows/lanes = 0.
    pts = jnp.zeros((n_pad, PTS_PAD), jnp.float32)
    pts = pts.at[:N, :INPUT_CH].set(x[:, :INPUT_CH].astype(jnp.float32))

    flops = 2 * n_pad * ((D - 1) * W * W + 2 * INPUT_CH * W + W * OUT_PAD)
    bytes_accessed = (
        n_pad * PTS_PAD * 4 + n_pad * OUT_PAD * 4
        + params["wh"].size * 2 + params["wout"].size * 2
        + (params["w0"].size + params["b0"].size + params["bh"].size
           + params["w5p"].size + params["bout"].size) * 4)

    args = (pts, params["w0"], params["b0"], params["wh"], params["bh"],
            params["w5p"], params["wout"], params["bout"])

    # Constant-index weights only need a single VMEM buffer (pl.Buffered(1));
    # fall back to default double-buffering if this jax build rejects it.
    out = None
    last_err = None
    for weights_mode in (pl.Buffered(1), None):
        try:
            call = pl.pallas_call(
                cloudnerf_kernel,
                out_shape=jax.ShapeDtypeStruct((n_pad, OUT_PAD), jnp.float32),
                grid_spec=pltpu.PrefetchScalarGridSpec(
                    num_scalar_prefetch=0,
                    grid=(steps,),
                    in_specs=_make_in_specs(tn, weights_mode),
                    out_specs=pl.BlockSpec((tn, OUT_PAD), lambda i: (i, 0)),
                ),
                compiler_params=pltpu.CompilerParams(
                    dimension_semantics=("parallel",),
                    vmem_limit_bytes=VMEM_LIMIT_BYTES),
                cost_estimate=pl.CostEstimate(
                    flops=int(flops), transcendentals=0,
                    bytes_accessed=int(bytes_accessed)),
            )
            out = call(*args)
            break
        except Exception as e:  # only hit if Buffered(1) is unsupported
            last_err = e
    if out is None:
        raise last_err

    return out[:N, :OUTPUT_CH]   # f32, matching the f32 module parameters


def cloudnerf_ref_f32(x, fp):
    """Pure-JAX f32 reference mirroring the PyTorch forward exactly."""
    pts = x[:, :INPUT_CH]
    h = jax.nn.relu(pts @ fp["w0"] + fp["b0"])
    for j in range(D - 1):
        z = h @ fp["wh"][j] + fp["bh"][j]
        if j == SKIP:
            z = z + pts @ fp["w5p"]
        h = jax.nn.relu(z)
    return h @ fp["wout"] + fp["bout"]


def cloudnerf_ref_bf16(x, fp):
    """Reference mirroring the kernel's numerics (bf16 MXU operands, f32 acc)."""
    pts = x[:, :INPUT_CH]
    h = jax.nn.relu(pts @ fp["w0"] + fp["b0"])                      # f32 VPU path
    for j in range(D - 1):
        z = jnp.dot(h.astype(jnp.bfloat16), fp["wh"][j].astype(jnp.bfloat16),
                    preferred_element_type=jnp.float32) + fp["bh"][j]
        if j == SKIP:
            z = z + pts @ fp["w5p"]                                 # f32 VPU path
        h = jax.nn.relu(z)
    return jnp.dot(h.astype(jnp.bfloat16), fp["wout"].astype(jnp.bfloat16),
                   preferred_element_type=jnp.float32) + fp["bout"]


if __name__ == "__main__":
    key = jax.random.PRNGKey(0)
    k_params, k_x = jax.random.split(key)

    kparams, fp32 = init_params(k_params)

    # Small shapes: N=200 exercises the single-tile padded path, N=600 the
    # even 2-step grid path (both still tiny / fast).
    for case_idx, N in enumerate((200, 600)):
        x = jax.random.normal(jax.random.fold_in(k_x, case_idx),
                              (N, INPUT_CH + INPUT_CH_VIEWS), jnp.float32)
        out = jax.block_until_ready(cloudnerf_forward(x, kparams))
        assert out.shape == (N, OUTPUT_CH)

        ref_kernel_numerics = cloudnerf_ref_bf16(x, fp32)
        ref_module = cloudnerf_ref_f32(x, fp32)
        assert jnp.allclose(out, ref_kernel_numerics, atol=1e-2, rtol=1e-2), \
            f"N={N}: mismatch vs bf16-mimicking reference"
        assert jnp.allclose(out, ref_module, atol=5e-2, rtol=5e-2), \
            f"N={N}: mismatch vs f32 module reference"

    print("KERNEL_OK")
</pallas_src>

<mosaic_0001>
module attributes {stable_mosaic.version = 11 : i64} {
  func.func @cloudnerf_kernel(%arg0: i32, %arg1: memref<256x8xf32, #tpu.memory_space<vmem>>, %arg2: memref<3x256xf32, #tpu.memory_space<vmem>>, %arg3: memref<1x256xf32, #tpu.memory_space<vmem>>, %arg4: memref<7x256x256xbf16, #tpu.memory_space<vmem>>, %arg5: memref<7x1x256xf32, #tpu.memory_space<vmem>>, %arg6: memref<3x256xf32, #tpu.memory_space<vmem>>, %arg7: memref<256x128xbf16, #tpu.memory_space<vmem>>, %arg8: memref<1x128xf32, #tpu.memory_space<vmem>>, %arg9: memref<256x128xf32, #tpu.memory_space<vmem>>) attributes {dimension_semantics = [#tpu.dimension_semantics<parallel>], iteration_bounds = array<i64: 1>, scalar_prefetch = 0 : i64, scratch_operands = 0 : i64, tpu.core_type = #tpu.core_type<tc>, window_params = [{transform_indices = @transform_0, window_bounds = array<i64: 256, 8>}, {pipeline_mode = #tpu.pipeline_mode<synchronous>, transform_indices = @transform_1, window_bounds = array<i64: 3, 256>}, {pipeline_mode = #tpu.pipeline_mode<synchronous>, transform_indices = @transform_2, window_bounds = array<i64: 1, 256>}, {pipeline_mode = #tpu.pipeline_mode<synchronous>, transform_indices = @transform_3, window_bounds = array<i64: 7, 256, 256>}, {pipeline_mode = #tpu.pipeline_mode<synchronous>, transform_indices = @transform_4, window_bounds = array<i64: 7, 1, 256>}, {pipeline_mode = #tpu.pipeline_mode<synchronous>, transform_indices = @transform_5, window_bounds = array<i64: 3, 256>}, {pipeline_mode = #tpu.pipeline_mode<synchronous>, transform_indices = @transform_6, window_bounds = array<i64: 256, 128>}, {pipeline_mode = #tpu.pipeline_mode<synchronous>, transform_indices = @transform_7, window_bounds = array<i64: 1, 128>}, {transform_indices = @transform_8, window_bounds = array<i64: 256, 128>}]} {
    %c0 = arith.constant 0 : index
    %c0_0 = arith.constant 0 : index
    %0 = vector.load %arg1[%c0, %c0_0] : memref<256x8xf32, #tpu.memory_space<vmem>>, vector<256x8xf32>
    %1 = vector.extract_strided_slice %0 {offsets = [0, 0], sizes = [256, 1], strides = [1, 1]} : vector<256x8xf32> to vector<256x1xf32>
    %2 = vector.extract_strided_slice %0 {offsets = [0, 1], sizes = [256, 1], strides = [1, 1]} : vector<256x8xf32> to vector<256x1xf32>
    %3 = vector.extract_strided_slice %0 {offsets = [0, 2], sizes = [256, 1], strides = [1, 1]} : vector<256x8xf32> to vector<256x1xf32>
    %c0_1 = arith.constant 0 : index
    %c0_2 = arith.constant 0 : index
    %4 = vector.load %arg2[%c0_1, %c0_2] : memref<3x256xf32, #tpu.memory_space<vmem>>, vector<1x256xf32>
    %5 = vector.broadcast %1 : vector<256x1xf32> to vector<256x256xf32>
    %6 = vector.broadcast %4 : vector<1x256xf32> to vector<256x256xf32>
    %7 = arith.mulf %5, %6 : vector<256x256xf32>
    %c1 = arith.constant 1 : index
    %c0_3 = arith.constant 0 : index
    %8 = vector.load %arg2[%c1, %c0_3] : memref<3x256xf32, #tpu.memory_space<vmem>>, vector<1x256xf32>
    %9 = vector.broadcast %2 : vector<256x1xf32> to vector<256x256xf32>
    %10 = vector.broadcast %8 : vector<1x256xf32> to vector<256x256xf32>
    %11 = arith.mulf %9, %10 : vector<256x256xf32>
    %12 = arith.addf %7, %11 : vector<256x256xf32>
    %c2 = arith.constant 2 : index
    %c0_4 = arith.constant 0 : index
    %13 = vector.load %arg2[%c2, %c0_4] : memref<3x256xf32, #tpu.memory_space<vmem>>, vector<1x256xf32>
    %14 = vector.broadcast %3 : vector<256x1xf32> to vector<256x256xf32>
    %15 = vector.broadcast %13 : vector<1x256xf32> to vector<256x256xf32>
    %16 = arith.mulf %14, %15 : vector<256x256xf32>
    %17 = arith.addf %12, %16 : vector<256x256xf32>
    %c0_5 = arith.constant 0 : index
    %c0_6 = arith.constant 0 : index
    %18 = vector.load %arg3[%c0_5, %c0_6] : memref<1x256xf32, #tpu.memory_space<vmem>>, vector<1x256xf32>
    %19 = vector.broadcast %18 : vector<1x256xf32> to vector<256x256xf32>
    %20 = arith.addf %17, %19 : vector<256x256xf32>
    %cst = arith.constant 0.000000e+00 : f32
    %21 = vector.broadcast %cst : f32 to vector<256x256xf32>
    %22 = arith.maximumf %20, %21 : vector<256x256xf32>
    %23 = arith.truncf %22 : vector<256x256xf32> to vector<256x256xbf16>
    %c0_7 = arith.constant 0 : index
    %c0_8 = arith.constant 0 : index
    %c0_9 = arith.constant 0 : index
    %24 = vector.load %arg4[%c0_7, %c0_8, %c0_9] : memref<7x256x256xbf16, #tpu.memory_space<vmem>>, vector<1x256x256xbf16>
    %25 = vector.shape_cast %24 : vector<1x256x256xbf16> to vector<256x256xbf16>
    %cst_10 = arith.constant dense<0.000000e+00> : vector<256x256xf32>
    %26 = tpu.matmul %23, %25, %cst_10 {dimension_numbers = #tpu.dot_dimension_numbers<[1], [0], [0], [1], [0, 0, 1, 1], [], []>} : vector<256x256xbf16>, vector<256x256xbf16>, vector<256x256xf32> -> vector<256x256xf32>
    %c0_11 = arith.constant 0 : index
    %c0_12 = arith.constant 0 : index
    %c0_13 = arith.constant 0 : index
    %27 = vector.load %arg5[%c0_11, %c0_12, %c0_13] : memref<7x1x256xf32, #tpu.memory_space<vmem>>, vector<1x1x256xf32>
    %28 = vector.shape_cast %27 : vector<1x1x256xf32> to vector<1x256xf32>
    %29 = vector.broadcast %28 : vector<1x256xf32> to vector<256x256xf32>
    %30 = arith.addf %26, %29 : vector<256x256xf32>
    %cst_14 = arith.constant 0.000000e+00 : f32
    %31 = vector.broadcast %cst_14 : f32 to vector<256x256xf32>
    %32 = arith.maximumf %30, %31 : vector<256x256xf32>
    %33 = arith.truncf %32 : vector<256x256xf32> to vector<256x256xbf16>
    %c1_15 = arith.constant 1 : index
    %c0_16 = arith.constant 0 : index
    %c0_17 = arith.constant 0 : index
    %34 = vector.load %arg4[%c1_15, %c0_16, %c0_17] : memref<7x256x256xbf16, #tpu.memory_space<vmem>>, vector<1x256x256xbf16>
    %35 = vector.shape_cast %34 : vector<1x256x256xbf16> to vector<256x256xbf16>
    %cst_18 = arith.constant dense<0.000000e+00> : vector<256x256xf32>
    %36 = tpu.matmul %33, %35, %cst_18 {dimension_numbers = #tpu.dot_dimension_numbers<[1], [0], [0], [1], [0, 0, 1, 1], [], []>} : vector<256x256xbf16>, vector<256x256xbf16>, vector<256x256xf32> -> vector<256x256xf32>
    %c1_19 = arith.constant 1 : index
    %c0_20 = arith.constant 0 : index
    %c0_21 = arith.constant 0 : index
    %37 = vector.load %arg5[%c1_19, %c0_20, %c0_21] : memref<7x1x256xf32, #tpu.memory_space<vmem>>, vector<1x1x256xf32>
    %38 = vector.shape_cast %37 : vector<1x1x256xf32> to vector<1x256xf32>
    %39 = vector.broadcast %38 : vector<1x256xf32> to vector<256x256xf32>
    %40 = arith.addf %36, %39 : vector<256x256xf32>
    %cst_22 = arith.constant 0.000000e+00 : f32
    %41 = vector.broadcast %cst_22 : f32 to vector<256x256xf32>
    %42 = arith.maximumf %40, %41 : vector<256x256xf32>
    %43 = arith.truncf %42 : vector<256x256xf32> to vector<256x256xbf16>
    %c2_23 = arith.constant 2 : index
    %c0_24 = arith.constant 0 : index
    %c0_25 = arith.constant 0 : index
    %44 = vector.load %arg4[%c2_23, %c0_24, %c0_25] : memref<7x256x256xbf16, #tpu.memory_space<vmem>>, vector<1x256x256xbf16>
    %45 = vector.shape_cast %44 : vector<1x256x256xbf16> to vector<256x256xbf16>
    %cst_26 = arith.constant dense<0.000000e+00> : vector<256x256xf32>
    %46 = tpu.matmul %43, %45, %cst_26 {dimension_numbers = #tpu.dot_dimension_numbers<[1], [0], [0], [1], [0, 0, 1, 1], [], []>} : vector<256x256xbf16>, vector<256x256xbf16>, vector<256x256xf32> -> vector<256x256xf32>
    %c2_27 = arith.constant 2 : index
    %c0_28 = arith.constant 0 : index
    %c0_29 = arith.constant 0 : index
    %47 = vector.load %arg5[%c2_27, %c0_28, %c0_29] : memref<7x1x256xf32, #tpu.memory_space<vmem>>, vector<1x1x256xf32>
    %48 = vector.shape_cast %47 : vector<1x1x256xf32> to vector<1x256xf32>
    %49 = vector.broadcast %48 : vector<1x256xf32> to vector<256x256xf32>
    %50 = arith.addf %46, %49 : vector<256x256xf32>
    %cst_30 = arith.constant 0.000000e+00 : f32
    %51 = vector.broadcast %cst_30 : f32 to vector<256x256xf32>
    %52 = arith.maximumf %50, %51 : vector<256x256xf32>
    %53 = arith.truncf %52 : vector<256x256xf32> to vector<256x256xbf16>
    %c3 = arith.constant 3 : index
    %c0_31 = arith.constant 0 : index
    %c0_32 = arith.constant 0 : index
    %54 = vector.load %arg4[%c3, %c0_31, %c0_32] : memref<7x256x256xbf16, #tpu.memory_space<vmem>>, vector<1x256x256xbf16>
    %55 = vector.shape_cast %54 : vector<1x256x256xbf16> to vector<256x256xbf16>
    %cst_33 = arith.constant dense<0.000000e+00> : vector<256x256xf32>
    %56 = tpu.matmul %53, %55, %cst_33 {dimension_numbers = #tpu.dot_dimension_numbers<[1], [0], [0], [1], [0, 0, 1, 1], [], []>} : vector<256x256xbf16>, vector<256x256xbf16>, vector<256x256xf32> -> vector<256x256xf32>
    %c3_34 = arith.constant 3 : index
    %c0_35 = arith.constant 0 : index
    %c0_36 = arith.constant 0 : index
    %57 = vector.load %arg5[%c3_34, %c0_35, %c0_36] : memref<7x1x256xf32, #tpu.memory_space<vmem>>, vector<1x1x256xf32>
    %58 = vector.shape_cast %57 : vector<1x1x256xf32> to vector<1x256xf32>
    %59 = vector.broadcast %58 : vector<1x256xf32> to vector<256x256xf32>
    %60 = arith.addf %56, %59 : vector<256x256xf32>
    %cst_37 = arith.constant 0.000000e+00 : f32
    %61 = vector.broadcast %cst_37 : f32 to vector<256x256xf32>
    %62 = arith.maximumf %60, %61 : vector<256x256xf32>
    %63 = arith.truncf %62 : vector<256x256xf32> to vector<256x256xbf16>
    %c4 = arith.constant 4 : index
    %c0_38 = arith.constant 0 : index
    %c0_39 = arith.constant 0 : index
    %64 = vector.load %arg4[%c4, %c0_38, %c0_39] : memref<7x256x256xbf16, #tpu.memory_space<vmem>>, vector<1x256x256xbf16>
    %65 = vector.shape_cast %64 : vector<1x256x256xbf16> to vector<256x256xbf16>
    %cst_40 = arith.constant dense<0.000000e+00> : vector<256x256xf32>
    %66 = tpu.matmul %63, %65, %cst_40 {dimension_numbers = #tpu.dot_dimension_numbers<[1], [0], [0], [1], [0, 0, 1, 1], [], []>} : vector<256x256xbf16>, vector<256x256xbf16>, vector<256x256xf32> -> vector<256x256xf32>
    %c4_41 = arith.constant 4 : index
    %c0_42 = arith.constant 0 : index
    %c0_43 = arith.constant 0 : index
    %67 = vector.load %arg5[%c4_41, %c0_42, %c0_43] : memref<7x1x256xf32, #tpu.memory_space<vmem>>, vector<1x1x256xf32>
    %68 = vector.shape_cast %67 : vector<1x1x256xf32> to vector<1x256xf32>
    %69 = vector.broadcast %68 : vector<1x256xf32> to vector<256x256xf32>
    %70 = arith.addf %66, %69 : vector<256x256xf32>
    %c0_44 = arith.constant 0 : index
    %c0_45 = arith.constant 0 : index
    %71 = vector.load %arg6[%c0_44, %c0_45] : memref<3x256xf32, #tpu.memory_space<vmem>>, vector<1x256xf32>
    %72 = vector.broadcast %1 : vector<256x1xf32> to vector<256x256xf32>
    %73 = vector.broadcast %71 : vector<1x256xf32> to vector<256x256xf32>
    %74 = arith.mulf %72, %73 : vector<256x256xf32>
    %c1_46 = arith.constant 1 : index
    %c0_47 = arith.constant 0 : index
    %75 = vector.load %arg6[%c1_46, %c0_47] : memref<3x256xf32, #tpu.memory_space<vmem>>, vector<1x256xf32>
    %76 = vector.broadcast %2 : vector<256x1xf32> to vector<256x256xf32>
    %77 = vector.broadcast %75 : vector<1x256xf32> to vector<256x256xf32>
    %78 = arith.mulf %76, %77 : vector<256x256xf32>
    %79 = arith.addf %74, %78 : vector<256x256xf32>
    %c2_48 = arith.constant 2 : index
    %c0_49 = arith.constant 0 : index
    %80 = vector.load %arg6[%c2_48, %c0_49] : memref<3x256xf32, #tpu.memory_space<vmem>>, vector<1x256xf32>
    %81 = vector.broadcast %3 : vector<256x1xf32> to vector<256x256xf32>
    %82 = vector.broadcast %80 : vector<1x256xf32> to vector<256x256xf32>
    %83 = arith.mulf %81, %82 : vector<256x256xf32>
    %84 = arith.addf %79, %83 : vector<256x256xf32>
    %85 = arith.addf %70, %84 : vector<256x256xf32>
    %cst_50 = arith.constant 0.000000e+00 : f32
    %86 = vector.broadcast %cst_50 : f32 to vector<256x256xf32>
    %87 = arith.maximumf %85, %86 : vector<256x256xf32>
    %88 = arith.truncf %87 : vector<256x256xf32> to vector<256x256xbf16>
    %c5 = arith.constant 5 : index
    %c0_51 = arith.constant 0 : index
    %c0_52 = arith.constant 0 : index
    %89 = vector.load %arg4[%c5, %c0_51, %c0_52] : memref<7x256x256xbf16, #tpu.memory_space<vmem>>, vector<1x256x256xbf16>
    %90 = vector.shape_cast %89 : vector<1x256x256xbf16> to vector<256x256xbf16>
    %cst_53 = arith.constant dense<0.000000e+00> : vector<256x256xf32>
    %91 = tpu.matmul %88, %90, %cst_53 {dimension_numbers = #tpu.dot_dimension_numbers<[1], [0], [0], [1], [0, 0, 1, 1], [], []>} : vector<256x256xbf16>, vector<256x256xbf16>, vector<256x256xf32> -> vector<256x256xf32>
    %c5_54 = arith.constant 5 : index
    %c0_55 = arith.constant 0 : index
    %c0_56 = arith.constant 0 : index
    %92 = vector.load %arg5[%c5_54, %c0_55, %c0_56] : memref<7x1x256xf32, #tpu.memory_space<vmem>>, vector<1x1x256xf32>
    %93 = vector.shape_cast %92 : vector<1x1x256xf32> to vector<1x256xf32>
    %94 = vector.broadcast %93 : vector<1x256xf32> to vector<256x256xf32>
    %95 = arith.addf %91, %94 : vector<256x256xf32>
    %cst_57 = arith.constant 0.000000e+00 : f32
    %96 = vector.broadcast %cst_57 : f32 to vector<256x256xf32>
    %97 = arith.maximumf %95, %96 : vector<256x256xf32>
    %98 = arith.truncf %97 : vector<256x256xf32> to vector<256x256xbf16>
    %c6 = arith.constant 6 : index
    %c0_58 = arith.constant 0 : index
    %c0_59 = arith.constant 0 : index
    %99 = vector.load %arg4[%c6, %c0_58, %c0_59] : memref<7x256x256xbf16, #tpu.memory_space<vmem>>, vector<1x256x256xbf16>
    %100 = vector.shape_cast %99 : vector<1x256x256xbf16> to vector<256x256xbf16>
    %cst_60 = arith.constant dense<0.000000e+00> : vector<256x256xf32>
    %101 = tpu.matmul %98, %100, %cst_60 {dimension_numbers = #tpu.dot_dimension_numbers<[1], [0], [0], [1], [0, 0, 1, 1], [], []>} : vector<256x256xbf16>, vector<256x256xbf16>, vector<256x256xf32> -> vector<256x256xf32>
    %c6_61 = arith.constant 6 : index
    %c0_62 = arith.constant 0 : index
    %c0_63 = arith.constant 0 : index
    %102 = vector.load %arg5[%c6_61, %c0_62, %c0_63] : memref<7x1x256xf32, #tpu.memory_space<vmem>>, vector<1x1x256xf32>
    %103 = vector.shape_cast %102 : vector<1x1x256xf32> to vector<1x256xf32>
    %104 = vector.broadcast %103 : vector<1x256xf32> to vector<256x256xf32>
    %105 = arith.addf %101, %104 : vector<256x256xf32>
    %cst_64 = arith.constant 0.000000e+00 : f32
    %106 = vector.broadcast %cst_64 : f32 to vector<256x256xf32>
    %107 = arith.maximumf %105, %106 : vector<256x256xf32>
    %108 = arith.truncf %107 : vector<256x256xf32> to vector<256x256xbf16>
    %c0_65 = arith.constant 0 : index
    %c0_66 = arith.constant 0 : index
    %109 = vector.load %arg7[%c0_65, %c0_66] : memref<256x128xbf16, #tpu.memory_space<vmem>>, vector<256x128xbf16>
    %cst_67 = arith.constant dense<0.000000e+00> : vector<256x128xf32>
    %110 = tpu.matmul %108, %109, %cst_67 {dimension_numbers = #tpu.dot_dimension_numbers<[1], [0], [0], [1], [0, 0, 1, 1], [], []>} : vector<256x256xbf16>, vector<256x128xbf16>, vector<256x128xf32> -> vector<256x128xf32>
    %c0_68 = arith.constant 0 : index
    %c0_69 = arith.constant 0 : index
    %111 = vector.load %arg8[%c0_68, %c0_69] : memref<1x128xf32, #tpu.memory_space<vmem>>, vector<1x128xf32>
    %112 = vector.broadcast %111 : vector<1x128xf32> to vector<256x128xf32>
    %113 = arith.addf %110, %112 : vector<256x128xf32>
    %c0_70 = arith.constant 0 : index
    %c0_71 = arith.constant 0 : index
    %114 = vector.load %arg9[%c0_70, %c0_71] : memref<256x128xf32, #tpu.memory_space<vmem>>, vector<256x128xf32>
    tpu.vector_store %arg9[%c0_70, %c0_71], %113 {strides = array<i32>} : memref<256x128xf32, #tpu.memory_space<vmem>>, vector<256x128xf32>,
    return
  }
  func.func @transform_0(%arg0: i32) -> (i32, i32) {
    %c0_i32 = arith.constant 0 : i32
    %c0_i32_0 = arith.constant 0 : i32
    return %arg0, %c0_i32 : i32, i32
  }
  func.func @transform_1(%arg0: i32) -> (i32, i32) {
    %c0_i32 = arith.constant 0 : i32
    %c0_i32_0 = arith.constant 0 : i32
    %c0_i32_1 = arith.constant 0 : i32
    return %c0_i32, %c0_i32_0 : i32, i32
  }
  func.func @transform_2(%arg0: i32) -> (i32, i32) {
    %c0_i32 = arith.constant 0 : i32
    %c0_i32_0 = arith.constant 0 : i32
    %c0_i32_1 = arith.constant 0 : i32
    return %c0_i32, %c0_i32_0 : i32, i32
  }
  func.func @transform_3(%arg0: i32) -> (i32, i32, i32) {
    %c0_i32 = arith.constant 0 : i32
    %c0_i32_0 = arith.constant 0 : i32
    %c0_i32_1 = arith.constant 0 : i32
    %c0_i32_2 = arith.constant 0 : i32
    return %c0_i32, %c0_i32_0, %c0_i32_1 : i32, i32, i32
  }
  func.func @transform_4(%arg0: i32) -> (i32, i32, i32) {
    %c0_i32 = arith.constant 0 : i32
    %c0_i32_0 = arith.constant 0 : i32
    %c0_i32_1 = arith.constant 0 : i32
    %c0_i32_2 = arith.constant 0 : i32
    return %c0_i32, %c0_i32_0, %c0_i32_1 : i32, i32, i32
  }
  func.func @transform_5(%arg0: i32) -> (i32, i32) {
    %c0_i32 = arith.constant 0 : i32
    %c0_i32_0 = arith.constant 0 : i32
    %c0_i32_1 = arith.constant 0 : i32
    return %c0_i32, %c0_i32_0 : i32, i32
  }
  func.func @transform_6(%arg0: i32) -> (i32, i32) {
    %c0_i32 = arith.constant 0 : i32
    %c0_i32_0 = arith.constant 0 : i32
    %c0_i32_1 = arith.constant 0 : i32
    return %c0_i32, %c0_i32_0 : i32, i32
  }
  func.func @transform_7(%arg0: i32) -> (i32, i32) {
    %c0_i32 = arith.constant 0 : i32
    %c0_i32_0 = arith.constant 0 : i32
    %c0_i32_1 = arith.constant 0 : i32
    return %c0_i32, %c0_i32_0 : i32, i32
  }
  func.func @transform_8(%arg0: i32) -> (i32, i32) {
    %c0_i32 = arith.constant 0 : i32
    %c0_i32_0 = arith.constant 0 : i32
    return %arg0, %c0_i32 : i32, i32
  }
}

module attributes {stable_mosaic.version = 11 : i64} {
  func.func @cloudnerf_kernel(%arg0: i32, %arg1: memref<256x8xf32, #tpu.memory_space<vmem>>, %arg2: memref<3x256xf32, #tpu.memory_space<vmem>>, %arg3: memref<1x256xf32, #tpu.memory_space<vmem>>, %arg4: memref<7x256x256xbf16, #tpu.memory_space<vmem>>, %arg5: memref<7x1x256xf32, #tpu.memory_space<vmem>>, %arg6: memref<3x256xf32, #tpu.memory_space<vmem>>, %arg7: memref<256x128xbf16, #tpu.memory_space<vmem>>, %arg8: memref<1x128xf32, #tpu.memory_space<vmem>>, %arg9: memref<256x128xf32, #tpu.memory_space<vmem>>) attributes {dimension_semantics = [#tpu.dimension_semantics<parallel>], iteration_bounds = array<i64: 1>, scalar_prefetch = 0 : i64, scratch_operands = 0 : i64, tpu.core_type = #tpu.core_type<tc>, window_params = [{transform_indices = @transform_0, window_bounds = array<i64: 256, 8>}, {pipeline_mode = #tpu.pipeline_mode<synchronous>, transform_indices = @transform_1, window_bounds = array<i64: 3, 256>}, {pipeline_mode = #tpu.pipeline_mode<synchronous>, transform_indices = @transform_2, window_bounds = array<i64: 1, 256>}, {pipeline_mode = #tpu.pipeline_mode<synchronous>, transform_indices = @transform_3, window_bounds = array<i64: 7, 256, 256>}, {pipeline_mode = #tpu.pipeline_mode<synchronous>, transform_indices = @transform_4, window_bounds = array<i64: 7, 1, 256>}, {pipeline_mode = #tpu.pipeline_mode<synchronous>, transform_indices = @transform_5, window_bounds = array<i64: 3, 256>}, {pipeline_mode = #tpu.pipeline_mode<synchronous>, transform_indices = @transform_6, window_bounds = array<i64: 256, 128>}, {pipeline_mode = #tpu.pipeline_mode<synchronous>, transform_indices = @transform_7, window_bounds = array<i64: 1, 128>}, {transform_indices = @transform_8, window_bounds = array<i64: 256, 128>}]} {
    %c0 = arith.constant 0 : index
    %c0_0 = arith.constant 0 : index
    %0 = vector.load %arg1[%c0, %c0_0] : memref<256x8xf32, #tpu.memory_space<vmem>>, vector<256x8xf32>
    %1 = vector.extract_strided_slice %0 {offsets = [0, 0], sizes = [256, 1], strides = [1, 1]} : vector<256x8xf32> to vector<256x1xf32>
    %2 = vector.extract_strided_slice %0 {offsets = [0, 1], sizes = [256, 1], strides = [1, 1]} : vector<256x8xf32> to vector<256x1xf32>
    %3 = vector.extract_strided_slice %0 {offsets = [0, 2], sizes = [256, 1], strides = [1, 1]} : vector<256x8xf32> to vector<256x1xf32>
    %c0_1 = arith.constant 0 : index
    %c0_2 = arith.constant 0 : index
    %4 = vector.load %arg2[%c0_1, %c0_2] : memref<3x256xf32, #tpu.memory_space<vmem>>, vector<1x256xf32>
    %5 = vector.broadcast %1 : vector<256x1xf32> to vector<256x256xf32>
    %6 = vector.broadcast %4 : vector<1x256xf32> to vector<256x256xf32>
    %7 = arith.mulf %5, %6 : vector<256x256xf32>
    %c1 = arith.constant 1 : index
    %c0_3 = arith.constant 0 : index
    %8 = vector.load %arg2[%c1, %c0_3] : memref<3x256xf32, #tpu.memory_space<vmem>>, vector<1x256xf32>
    %9 = vector.broadcast %2 : vector<256x1xf32> to vector<256x256xf32>
    %10 = vector.broadcast %8 : vector<1x256xf32> to vector<256x256xf32>
    %11 = arith.mulf %9, %10 : vector<256x256xf32>
    %12 = arith.addf %7, %11 : vector<256x256xf32>
    %c2 = arith.constant 2 : index
    %c0_4 = arith.constant 0 : index
    %13 = vector.load %arg2[%c2, %c0_4] : memref<3x256xf32, #tpu.memory_space<vmem>>, vector<1x256xf32>
    %14 = vector.broadcast %3 : vector<256x1xf32> to vector<256x256xf32>
    %15 = vector.broadcast %13 : vector<1x256xf32> to vector<256x256xf32>
    %16 = arith.mulf %14, %15 : vector<256x256xf32>
    %17 = arith.addf %12, %16 : vector<256x256xf32>
    %c0_5 = arith.constant 0 : index
    %c0_6 = arith.constant 0 : index
    %18 = vector.load %arg3[%c0_5, %c0_6] : memref<1x256xf32, #tpu.memory_space<vmem>>, vector<1x256xf32>
    %19 = vector.broadcast %18 : vector<1x256xf32> to vector<256x256xf32>
    %20 = arith.addf %17, %19 : vector<256x256xf32>
    %cst = arith.constant 0.000000e+00 : f32
    %21 = vector.broadcast %cst : f32 to vector<256x256xf32>
    %22 = arith.maximumf %20, %21 : vector<256x256xf32>
    %23 = arith.truncf %22 : vector<256x256xf32> to vector<256x256xbf16>
    %c0_7 = arith.constant 0 : index
    %c0_8 = arith.constant 0 : index
    %c0_9 = arith.constant 0 : index
    %24 = vector.load %arg4[%c0_7, %c0_8, %c0_9] : memref<7x256x256xbf16, #tpu.memory_space<vmem>>, vector<1x256x256xbf16>
    %25 = vector.shape_cast %24 : vector<1x256x256xbf16> to vector<256x256xbf16>
    %cst_10 = arith.constant dense<0.000000e+00> : vector<256x256xf32>
    %26 = tpu.matmul %23, %25, %cst_10 {dimension_numbers = #tpu.dot_dimension_numbers<[1], [0], [0], [1], [0, 0, 1, 1], [], []>} : vector<256x256xbf16>, vector<256x256xbf16>, vector<256x256xf32> -> vector<256x256xf32>
    %c0_11 = arith.constant 0 : index
    %c0_12 = arith.constant 0 : index
    %c0_13 = arith.constant 0 : index
    %27 = vector.load %arg5[%c0_11, %c0_12, %c0_13] : memref<7x1x256xf32, #tpu.memory_space<vmem>>, vector<1x1x256xf32>
    %28 = vector.shape_cast %27 : vector<1x1x256xf32> to vector<1x256xf32>
    %29 = vector.broadcast %28 : vector<1x256xf32> to vector<256x256xf32>
    %30 = arith.addf %26, %29 : vector<256x256xf32>
    %cst_14 = arith.constant 0.000000e+00 : f32
    %31 = vector.broadcast %cst_14 : f32 to vector<256x256xf32>
    %32 = arith.maximumf %30, %31 : vector<256x256xf32>
    %33 = arith.truncf %32 : vector<256x256xf32> to vector<256x256xbf16>
    %c1_15 = arith.constant 1 : index
    %c0_16 = arith.constant 0 : index
    %c0_17 = arith.constant 0 : index
    %34 = vector.load %arg4[%c1_15, %c0_16, %c0_17] : memref<7x256x256xbf16, #tpu.memory_space<vmem>>, vector<1x256x256xbf16>
    %35 = vector.shape_cast %34 : vector<1x256x256xbf16> to vector<256x256xbf16>
    %cst_18 = arith.constant dense<0.000000e+00> : vector<256x256xf32>
    %36 = tpu.matmul %33, %35, %cst_18 {dimension_numbers = #tpu.dot_dimension_numbers<[1], [0], [0], [1], [0, 0, 1, 1], [], []>} : vector<256x256xbf16>, vector<256x256xbf16>, vector<256x256xf32> -> vector<256x256xf32>
    %c1_19 = arith.constant 1 : index
    %c0_20 = arith.constant 0 : index
    %c0_21 = arith.constant 0 : index
    %37 = vector.load %arg5[%c1_19, %c0_20, %c0_21] : memref<7x1x256xf32, #tpu.memory_space<vmem>>, vector<1x1x256xf32>
    %38 = vector.shape_cast %37 : vector<1x1x256xf32> to vector<1x256xf32>
    %39 = vector.broadcast %38 : vector<1x256xf32> to vector<256x256xf32>
    %40 = arith.addf %36, %39 : vector<256x256xf32>
    %cst_22 = arith.constant 0.000000e+00 : f32
    %41 = vector.broadcast %cst_22 : f32 to vector<256x256xf32>
    %42 = arith.maximumf %40, %41 : vector<256x256xf32>
    %43 = arith.truncf %42 : vector<256x256xf32> to vector<256x256xbf16>
    %c2_23 = arith.constant 2 : index
    %c0_24 = arith.constant 0 : index
    %c0_25 = arith.constant 0 : index
    %44 = vector.load %arg4[%c2_23, %c0_24, %c0_25] : memref<7x256x256xbf16, #tpu.memory_space<vmem>>, vector<1x256x256xbf16>
    %45 = vector.shape_cast %44 : vector<1x256x256xbf16> to vector<256x256xbf16>
    %cst_26 = arith.constant dense<0.000000e+00> : vector<256x256xf32>
    %46 = tpu.matmul %43, %45, %cst_26 {dimension_numbers = #tpu.dot_dimension_numbers<[1], [0], [0], [1], [0, 0, 1, 1], [], []>} : vector<256x256xbf16>, vector<256x256xbf16>, vector<256x256xf32> -> vector<256x256xf32>
    %c2_27 = arith.constant 2 : index
    %c0_28 = arith.constant 0 : index
    %c0_29 = arith.constant 0 : index
    %47 = vector.load %arg5[%c2_27, %c0_28, %c0_29] : memref<7x1x256xf32, #tpu.memory_space<vmem>>, vector<1x1x256xf32>
    %48 = vector.shape_cast %47 : vector<1x1x256xf32> to vector<1x256xf32>
    %49 = vector.broadcast %48 : vector<1x256xf32> to vector<256x256xf32>
    %50 = arith.addf %46, %49 : vector<256x256xf32>
    %cst_30 = arith.constant 0.000000e+00 : f32
    %51 = vector.broadcast %cst_30 : f32 to vector<256x256xf32>
    %52 = arith.maximumf %50, %51 : vector<256x256xf32>
    %53 = arith.truncf %52 : vector<256x256xf32> to vector<256x256xbf16>
    %c3 = arith.constant 3 : index
    %c0_31 = arith.constant 0 : index
    %c0_32 = arith.constant 0 : index
    %54 = vector.load %arg4[%c3, %c0_31, %c0_32] : memref<7x256x256xbf16, #tpu.memory_space<vmem>>, vector<1x256x256xbf16>
    %55 = vector.shape_cast %54 : vector<1x256x256xbf16> to vector<256x256xbf16>
    %cst_33 = arith.constant dense<0.000000e+00> : vector<256x256xf32>
    %56 = tpu.matmul %53, %55, %cst_33 {dimension_numbers = #tpu.dot_dimension_numbers<[1], [0], [0], [1], [0, 0, 1, 1], [], []>} : vector<256x256xbf16>, vector<256x256xbf16>, vector<256x256xf32> -> vector<256x256xf32>
    %c3_34 = arith.constant 3 : index
    %c0_35 = arith.constant 0 : index
    %c0_36 = arith.constant 0 : index
    %57 = vector.load %arg5[%c3_34, %c0_35, %c0_36] : memref<7x1x256xf32, #tpu.memory_space<vmem>>, vector<1x1x256xf32>
    %58 = vector.shape_cast %57 : vector<1x1x256xf32> to vector<1x256xf32>
    %59 = vector.broadcast %58 : vector<1x256xf32> to vector<256x256xf32>
    %60 = arith.addf %56, %59 : vector<256x256xf32>
    %cst_37 = arith.constant 0.000000e+00 : f32
    %61 = vector.broadcast %cst_37 : f32 to vector<256x256xf32>
    %62 = arith.maximumf %60, %61 : vector<256x256xf32>
    %63 = arith.truncf %62 : vector<256x256xf32> to vector<256x256xbf16>
    %c4 = arith.constant 4 : index
    %c0_38 = arith.constant 0 : index
    %c0_39 = arith.constant 0 : index
    %64 = vector.load %arg4[%c4, %c0_38, %c0_39] : memref<7x256x256xbf16, #tpu.memory_space<vmem>>, vector<1x256x256xbf16>
    %65 = vector.shape_cast %64 : vector<1x256x256xbf16> to vector<256x256xbf16>
    %cst_40 = arith.constant dense<0.000000e+00> : vector<256x256xf32>
    %66 = tpu.matmul %63, %65, %cst_40 {dimension_numbers = #tpu.dot_dimension_numbers<[1], [0], [0], [1], [0, 0, 1, 1], [], []>} : vector<256x256xbf16>, vector<256x256xbf16>, vector<256x256xf32> -> vector<256x256xf32>
    %c4_41 = arith.constant 4 : index
    %c0_42 = arith.constant 0 : index
    %c0_43 = arith.constant 0 : index
    %67 = vector.load %arg5[%c4_41, %c0_42, %c0_43] : memref<7x1x256xf32, #tpu.memory_space<vmem>>, vector<1x1x256xf32>
    %68 = vector.shape_cast %67 : vector<1x1x256xf32> to vector<1x256xf32>
    %69 = vector.broadcast %68 : vector<1x256xf32> to vector<256x256xf32>
    %70 = arith.addf %66, %69 : vector<256x256xf32>
    %c0_44 = arith.constant 0 : index
    %c0_45 = arith.constant 0 : index
    %71 = vector.load %arg6[%c0_44, %c0_45] : memref<3x256xf32, #tpu.memory_space<vmem>>, vector<1x256xf32>
    %72 = vector.broadcast %1 : vector<256x1xf32> to vector<256x256xf32>
    %73 = vector.broadcast %71 : vector<1x256xf32> to vector<256x256xf32>
    %74 = arith.mulf %72, %73 : vector<256x256xf32>
    %c1_46 = arith.constant 1 : index
    %c0_47 = arith.constant 0 : index
    %75 = vector.load %arg6[%c1_46, %c0_47] : memref<3x256xf32, #tpu.memory_space<vmem>>, vector<1x256xf32>
    %76 = vector.broadcast %2 : vector<256x1xf32> to vector<256x256xf32>
    %77 = vector.broadcast %75 : vector<1x256xf32> to vector<256x256xf32>
    %78 = arith.mulf %76, %77 : vector<256x256xf32>
    %79 = arith.addf %74, %78 : vector<256x256xf32>
    %c2_48 = arith.constant 2 : index
    %c0_49 = arith.constant 0 : index
    %80 = vector.load %arg6[%c2_48, %c0_49] : memref<3x256xf32, #tpu.memory_space<vmem>>, vector<1x256xf32>
    %81 = vector.broadcast %3 : vector<256x1xf32> to vector<256x256xf32>
    %82 = vector.broadcast %80 : vector<1x256xf32> to vector<256x256xf32>
    %83 = arith.mulf %81, %82 : vector<256x256xf32>
    %84 = arith.addf %79, %83 : vector<256x256xf32>
    %85 = arith.addf %70, %84 : vector<256x256xf32>
    %cst_50 = arith.constant 0.000000e+00 : f32
    %86 = vector.broadcast %cst_50 : f32 to vector<256x256xf32>
    %87 = arith.maximumf %85, %86 : vector<256x256xf32>
    %88 = arith.truncf %87 : vector<256x256xf32> to vector<256x256xbf16>
    %c5 = arith.constant 5 : index
    %c0_51 = arith.constant 0 : index
    %c0_52 = arith.constant 0 : index
    %89 = vector.load %arg4[%c5, %c0_51, %c0_52] : memref<7x256x256xbf16, #tpu.memory_space<vmem>>, vector<1x256x256xbf16>
    %90 = vector.shape_cast %89 : vector<1x256x256xbf16> to vector<256x256xbf16>
    %cst_53 = arith.constant dense<0.000000e+00> : vector<256x256xf32>
    %91 = tpu.matmul %88, %90, %cst_53 {dimension_numbers = #tpu.dot_dimension_numbers<[1], [0], [0], [1], [0, 0, 1, 1], [], []>} : vector<256x256xbf16>, vector<256x256xbf16>, vector<256x256xf32> -> vector<256x256xf32>
    %c5_54 = arith.constant 5 : index
    %c0_55 = arith.constant 0 : index
    %c0_56 = arith.constant 0 : index
    %92 = vector.load %arg5[%c5_54, %c0_55, %c0_56] : memref<7x1x256xf32, #tpu.memory_space<vmem>>, vector<1x1x256xf32>
    %93 = vector.shape_cast %92 : vector<1x1x256xf32> to vector<1x256xf32>
    %94 = vector.broadcast %93 : vector<1x256xf32> to vector<256x256xf32>
    %95 = arith.addf %91, %94 : vector<256x256xf32>
    %cst_57 = arith.constant 0.000000e+00 : f32
    %96 = vector.broadcast %cst_57 : f32 to vector<256x256xf32>
    %97 = arith.maximumf %95, %96 : vector<256x256xf32>
    %98 = arith.truncf %97 : vector<256x256xf32> to vector<256x256xbf16>
    %c6 = arith.constant 6 : index
    %c0_58 = arith.constant 0 : index
    %c0_59 = arith.constant 0 : index
    %99 = vector.load %arg4[%c6, %c0_58, %c0_59] : memref<7x256x256xbf16, #tpu.memory_space<vmem>>, vector<1x256x256xbf16>
    %100 = vector.shape_cast %99 : vector<1x256x256xbf16> to vector<256x256xbf16>
    %cst_60 = arith.constant dense<0.000000e+00> : vector<256x256xf32>
    %101 = tpu.matmul %98, %100, %cst_60 {dimension_numbers = #tpu.dot_dimension_numbers<[1], [0], [0], [1], [0, 0, 1, 1], [], []>} : vector<256x256xbf16>, vector<256x256xbf16>, vector<256x256xf32> -> vector<256x256xf32>
    %c6_61 = arith.constant 6 : index
    %c0_62 = arith.constant 0 : index
    %c0_63 = arith.constant 0 : index
    %102 = vector.load %arg5[%c6_61, %c0_62, %c0_63] : memref<7x1x256xf32, #tpu.memory_space<vmem>>, vector<1x1x256xf32>
    %103 = vector.shape_cast %102 : vector<1x1x256xf32> to vector<1x256xf32>
    %104 = vector.broadcast %103 : vector<1x256xf32> to vector<256x256xf32>
    %105 = arith.addf %101, %104 : vector<256x256xf32>
    %cst_64 = arith.constant 0.000000e+00 : f32
    %106 = vector.broadcast %cst_64 : f32 to vector<256x256xf32>
    %107 = arith.maximumf %105, %106 : vector<256x256xf32>
    %108 = arith.truncf %107 : vector<256x256xf32> to vector<256x256xbf16>
    %c0_65 = arith.constant 0 : index
    %c0_66 = arith.constant 0 : index
    %109 = vector.load %arg7[%c0_65, %c0_66] : memref<256x128xbf16, #tpu.memory_space<vmem>>, vector<256x128xbf16>
    %cst_67 = arith.constant dense<0.000000e+00> : vector<256x128xf32>
    %110 = tpu.matmul %108, %109, %cst_67 {dimension_numbers = #tpu.dot_dimension_numbers<[1], [0], [0], [1], [0, 0, 1, 1], [], []>} : vector<256x256xbf16>, vector<256x128xbf16>, vector<256x128xf32> -> vector<256x128xf32>
    %c0_68 = arith.constant 0 : index
    %c0_69 = arith.constant 0 : index
    %111 = vector.load %arg8[%c0_68, %c0_69] : memref<1x128xf32, #tpu.memory_space<vmem>>, vector<1x128xf32>
    %112 = vector.broadcast %111 : vector<1x128xf32> to vector<256x128xf32>
    %113 = arith.addf %110, %112 : vector<256x128xf32>
    %c0_70 = arith.constant 0 : index
    %c0_71 = arith.constant 0 : index
    %114 = vector.load %arg9[%c0_70, %c0_71] : memref<256x128xf32, #tpu.memory_space<vmem>>, vector<256x128xf32>
    tpu.vector_store %arg9[%c0_70, %c0_71], %113 {strides = array<i32>} : memref<256x128xf32, #tpu.memory_space<vmem>>, vector<256x128xf32>,
    return
  }
  func.func @transform_0(%arg0: i32) -> (i32, i32) {
    %c0_i32 = arith.constant 0 : i32
    %c0_i32_0 = arith.constant 0 : i32
    return %arg0, %c0_i32 : i32, i32
  }
  func.func @transform_1(%arg0: i32) -> (i32, i32) {
    %c0_i32 = arith.constant 0 : i32
    %c0_i32_0 = arith.constant 0 : i32
    %c0_i32_1 = arith.constant 0 : i32
    return %c0_i32, %c0_i32_0 : i32, i32
  }
  func.func @transform_2(%arg0: i32) -> (i32, i32) {
    %c0_i32 = arith.constant 0 : i32
    %c0_i32_0 = arith.constant 0 : i32
    %c0_i32_1 = arith.constant 0 : i32
    return %c0_i32, %c0_i32_0 : i32, i32
  }
  func.func @transform_3(%arg0: i32) -> (i32, i32, i32) {
    %c0_i32 = arith.constant 0 : i32
    %c0_i32_0 = arith.constant 0 : i32
    %c0_i32_1 = arith.constant 0 : i32
    %c0_i32_2 = arith.constant 0 : i32
    return %c0_i32, %c0_i32_0, %c0_i32_1 : i32, i32, i32
  }
  func.func @transform_4(%arg0: i32) -> (i32, i32, i32) {
    %c0_i32 = arith.constant 0 : i32
    %c0_i32_0 = arith.constant 0 : i32
    %c0_i32_1 = arith.constant 0 : i32
    %c0_i32_2 = arith.constant 0 : i32
    return %c0_i32, %c0_i32_0, %c0_i32_1 : i32, i32, i32
  }
  func.func @transform_5(%arg0: i32) -> (i32, i32) {
    %c0_i32 = arith.constant 0 : i32
    %c0_i32_0 = arith.constant 0 : i32
    %c0_i32_1 = arith.constant 0 : i32
    return %c0_i32, %c0_i32_0 : i32, i32
  }
  func.func @transform_6(%arg0: i32) -> (i32, i32) {
    %c0_i32 = arith.constant 0 : i32
    %c0_i32_0 = arith.constant 0 : i32
    %c0_i32_1 = arith.constant 0 : i32
    return %c0_i32, %c0_i32_0 : i32, i32
  }
  func.func @transform_7(%arg0: i32) -> (i32, i32) {
    %c0_i32 = arith.constant 0 : i32
    %c0_i32_0 = arith.constant 0 : i32
    %c0_i32_1 = arith.constant 0 : i32
    return %c0_i32, %c0_i32_0 : i32, i32
  }
  func.func @transform_8(%arg0: i32) -> (i32, i32) {
    %c0_i32 = arith.constant 0 : i32
    %c0_i32_0 = arith.constant 0 : i32
    return %arg0, %c0_i32 : i32, i32
  }
}

</mosaic_0001>

<llo_original>
// kernel: tpu_custom_call.1
$region0: #{tpu_custom_call.1}
  #allocation0 [shape = 'u32[]', space=smem, size = 0x4, offset = 0x4, fixed_abs, tag = 'smem constant byte address 0x4 - core index']
  #allocation1 [shape = 'u32[144,128]{1,0:T(1,128)}', space=vmem, size = 0x12000, scoped, tag = 'internal scratch']
  %s0 = inlined_call_operand.vmem [shape: f32[256,8], index: 0, kind: input, shape index: {}]
  %s1 = inlined_call_operand.vmem [shape: f32[3,256], index: 1, kind: input, shape index: {}]
  %s2 = inlined_call_operand.vmem [shape: f32[1,256], index: 2, kind: input, shape index: {}]
  %s3 = inlined_call_operand.hbm [shape: bf16[7,256,256], index: 3, kind: input, shape index: {}]
  %s4 = inlined_call_operand.vmem [shape: f32[7,1,256], index: 4, kind: input, shape index: {}]
  %s5 = inlined_call_operand.vmem [shape: f32[3,256], index: 5, kind: input, shape index: {}]
  %s6 = inlined_call_operand.vmem [shape: bf16[256,128], index: 6, kind: input, shape index: {}]
  %s7 = inlined_call_operand.vmem [shape: f32[1,128], index: 7, kind: input, shape index: {}]
  %s8 = inlined_call_operand.hbm [shape: f32[256,128], index: 8, kind: output, shape index: {}]
  %s9 = sld [smem:[#allocation0]]
  $region46: #{tpu_custom_call.1} parent=0
    _
  %s11 = ssub.s32 1, %s9
  %s12 = scalar_select 0, %s11, %s9
  $region1: #{tpu_custom_call.1} parent=0
    #allocation2 [shape = 'u8[917504]{0}', space=vmem, size = 0xe0000, scoped, tag = 'input window, operand 3, single buffered']
    #allocation3 [shape = 's32[1]{0}', space=sflag, size = 0x4, scoped, tag = 'scoped memory for tpu_custom_call.1']
    #allocation4 [shape = 's32[1]{0}', space=sflag, size = 0x4, scoped, tag = 'scoped memory for tpu_custom_call.1']
    #allocation5 [shape = 'u8[131072]{0}', space=vmem, size = 0x20000, scoped, tag = 'output window, operand 0, single buffered']
    %13 = vsyncpa [#allocation3], 0
    %14 = vsyncpa [#allocation4], 0
    // Predicated region
    $region2: #{tpu_custom_call.1} parent=1 // pred_check
      _
    $region3: #{tpu_custom_call.1} parent=1 // pred_check_branch
      %16 = sbr.rel (0) target = $region5
    $region4: #{tpu_custom_call.1} parent=1 // pred_region
      _
    $region5: #{tpu_custom_call.1} parent=1 // pred_fallthru
      _
    // Predicated region
    $region6: #{tpu_custom_call.1} parent=1 // pred_check
      _
    $region7: #{tpu_custom_call.1} parent=1 // pred_check_branch
      %18 = sbr.rel (0) target = $region9
    $region8: #{tpu_custom_call.1} parent=1 // pred_region
      _
    $region9: #{tpu_custom_call.1} parent=1 // pred_fallthru
      _
    // Predicated region
    $region10: #{tpu_custom_call.1} parent=1 // pred_check
      _
    $region11: #{tpu_custom_call.1} parent=1 // pred_check_branch
      %20 = sbr.rel (0) target = $region13
    $region12: #{tpu_custom_call.1} parent=1 // pred_region
      _
    $region13: #{tpu_custom_call.1} parent=1 // pred_fallthru
      _
    // Predicated region
    $region14: #{tpu_custom_call.1} parent=1 // pred_check
      _
    $region15: #{tpu_custom_call.1} parent=1 // pred_check_branch
      %22 = sbr.rel (0) target = $region17
    $region16: #{tpu_custom_call.1} parent=1 // pred_region
      %s24 = ssub.s32 28672, 28672
      %25 = vsyncadd [#allocation3], %s24
      %s26 = sshll.u32 [#allocation2], 4
      %s27 = int_to_ptr.vmem [resolvable:$true] %s26
      %32 = dma.hbm_to_vmem [thread:$0]  %s3, 28672, %s27, [#allocation3], 128, 128, 8
    $region17: #{tpu_custom_call.1} parent=1 // pred_fallthru
      _
    // Predicated region
    $region18: #{tpu_custom_call.1} parent=1 // pred_check
      _
    $region19: #{tpu_custom_call.1} parent=1 // pred_check_branch
      %34 = sbr.rel (0) target = $region21
    $region20: #{tpu_custom_call.1} parent=1 // pred_region
      _
    $region21: #{tpu_custom_call.1} parent=1 // pred_fallthru
      _
    // Predicated region
    $region22: #{tpu_custom_call.1} parent=1 // pred_check
      _
    $region23: #{tpu_custom_call.1} parent=1 // pred_check_branch
      %36 = sbr.rel (0) target = $region25
    $region24: #{tpu_custom_call.1} parent=1 // pred_region
      _
    $region25: #{tpu_custom_call.1} parent=1 // pred_fallthru
      _
    // Predicated region
    $region26: #{tpu_custom_call.1} parent=1 // pred_check
      _
    $region27: #{tpu_custom_call.1} parent=1 // pred_check_branch
      %38 = sbr.rel (0) target = $region29
    $region28: #{tpu_custom_call.1} parent=1 // pred_region
      _
    $region29: #{tpu_custom_call.1} parent=1 // pred_fallthru
      _
    // Predicated region
    $region30: #{tpu_custom_call.1} parent=1 // pred_check
      _
    $region31: #{tpu_custom_call.1} parent=1 // pred_check_branch
      %40 = sbr.rel (0) target = $region33
    $region32: #{tpu_custom_call.1} parent=1 // pred_region
      _
    $region33: #{tpu_custom_call.1} parent=1 // pred_fallthru
      _
    // Predicated region
    $region34: #{tpu_custom_call.1} parent=1 // pred_check
      _
    $region35: #{tpu_custom_call.1} parent=1 // pred_check_branch
      %42 = sbr.rel (0) target = $region37
    $region36: #{tpu_custom_call.1} parent=1 // pred_region
      %43 = dma.done [#allocation3], 28672
    $region37: #{tpu_custom_call.1} parent=1 // pred_fallthru
      _
    %v45 = vld [vmem:[%s0] sm:$0xff]
    %v46 = vld [vmem:[%s0 + $0x8] sm:$0xff]
    %v47 = vld [vmem:[%s0 + $0x10] sm:$0xff]
    %v48 = vld [vmem:[%s0 + $0x18] sm:$0xff]
    %v49 = vld [vmem:[%s0 + $0x20] sm:$0xff]
    %v50 = vld [vmem:[%s0 + $0x28] sm:$0xff]
    %v51 = vld [vmem:[%s0 + $0x30] sm:$0xff]
    %v52 = vld [vmem:[%s0 + $0x38] sm:$0xff]
    %v53 = vld [vmem:[%s0 + $0x40] sm:$0xff]
    %v54 = vld [vmem:[%s0 + $0x48] sm:$0xff]
    %v55 = vld [vmem:[%s0 + $0x50] sm:$0xff]
    %v56 = vld [vmem:[%s0 + $0x58] sm:$0xff]
    %v57 = vld [vmem:[%s0 + $0x60] sm:$0xff]
    %v58 = vld [vmem:[%s0 + $0x68] sm:$0xff]
    %v59 = vld [vmem:[%s0 + $0x70] sm:$0xff]
    %v60 = vld [vmem:[%s0 + $0x78] sm:$0xff]
    %v61 = vld [vmem:[%s0 + $0x80] sm:$0xff]
    %v62 = vld [vmem:[%s0 + $0x88] sm:$0xff]
    %v63 = vld [vmem:[%s0 + $0x90] sm:$0xff]
    %v64 = vld [vmem:[%s0 + $0x98] sm:$0xff]
    %v65 = vld [vmem:[%s0 + $0xa0] sm:$0xff]
    %v66 = vld [vmem:[%s0 + $0xa8] sm:$0xff]
    %v67 = vld [vmem:[%s0 + $0xb0] sm:$0xff]
    %v68 = vld [vmem:[%s0 + $0xb8] sm:$0xff]
    %v69 = vld [vmem:[%s0 + $0xc0] sm:$0xff]
    %v70 = vld [vmem:[%s0 + $0xc8] sm:$0xff]
    %v71 = vld [vmem:[%s0 + $0xd0] sm:$0xff]
    %v72 = vld [vmem:[%s0 + $0xd8] sm:$0xff]
    %v73 = vld [vmem:[%s0 + $0xe0] sm:$0xff]
    %v74 = vld [vmem:[%s0 + $0xe8] sm:$0xff]
    %v75 = vld [vmem:[%s0 + $0xf0] sm:$0xff]
    %v76 = vld [vmem:[%s0 + $0xf8] sm:$0xff]
    %v77 = vld [vmem:[%s1] ss:$4 sm:$0x3]
    %79 = vset.pattern.permute.xlu0 0
    %80 = vperm.xlu0 %79, %v45
    %v81 = vpop.permute.xlu0 %80
    %84 = vset.pattern.permute.xlu0 0
    %85 = vperm.xlu0 %84, %v46
    %v86 = vpop.permute.xlu0 %85
    %89 = vset.pattern.permute.xlu0 0
    %90 = vperm.xlu0 %89, %v47
    %v91 = vpop.permute.xlu0 %90
    %94 = vset.pattern.permute.xlu0 0
    %95 = vperm.xlu0 %94, %v48
    %v96 = vpop.permute.xlu0 %95
    %99 = vset.pattern.permute.xlu0 0
    %100 = vperm.xlu0 %99, %v49
    %v101 = vpop.permute.xlu0 %100
    %104 = vset.pattern.permute.xlu0 0
    %105 = vperm.xlu0 %104, %v50
    %v106 = vpop.permute.xlu0 %105
    %109 = vset.pattern.permute.xlu0 0
    %110 = vperm.xlu0 %109, %v51
    %v111 = vpop.permute.xlu0 %110
    %114 = vset.pattern.permute.xlu0 0
    %115 = vperm.xlu0 %114, %v52
    %v116 = vpop.permute.xlu0 %115
    %119 = vset.pattern.permute.xlu0 0
    %120 = vperm.xlu0 %119, %v53
    %v121 = vpop.permute.xlu0 %120
    %124 = vset.pattern.permute.xlu0 0
    %125 = vperm.xlu0 %124, %v54
    %v126 = vpop.permute.xlu0 %125
    %129 = vset.pattern.permute.xlu0 0
    %130 = vperm.xlu0 %129, %v55
    %v131 = vpop.permute.xlu0 %130
    %134 = vset.pattern.permute.xlu0 0
    %135 = vperm.xlu0 %134, %v56
    %v136 = vpop.permute.xlu0 %135
    %139 = vset.pattern.permute.xlu0 0
    %140 = vperm.xlu0 %139, %v57
    %v141 = vpop.permute.xlu0 %140
    %144 = vset.pattern.permute.xlu0 0
    %145 = vperm.xlu0 %144, %v58
    %v146 = vpop.permute.xlu0 %145
    %149 = vset.pattern.permute.xlu0 0
    %150 = vperm.xlu0 %149, %v59
    %v151 = vpop.permute.xlu0 %150
    %154 = vset.pattern.permute.xlu0 0
    %155 = vperm.xlu0 %154, %v60
    %v156 = vpop.permute.xlu0 %155
    %159 = vset.pattern.permute.xlu0 0
    %160 = vperm.xlu0 %159, %v61
    %v161 = vpop.permute.xlu0 %160
    %164 = vset.pattern.permute.xlu0 0
    %165 = vperm.xlu0 %164, %v62
    %v166 = vpop.permute.xlu0 %165
    %169 = vset.pattern.permute.xlu0 0
    %170 = vperm.xlu0 %169, %v63
    %v171 = vpop.permute.xlu0 %170
    %174 = vset.pattern.permute.xlu0 0
    %175 = vperm.xlu0 %174, %v64
    %v176 = vpop.permute.xlu0 %175
    %179 = vset.pattern.permute.xlu0 0
    %180 = vperm.xlu0 %179, %v65
    %v181 = vpop.permute.xlu0 %180
    %184 = vset.pattern.permute.xlu0 0
    %185 = vperm.xlu0 %184, %v66
    %v186 = vpop.permute.xlu0 %185
    %189 = vset.pattern.permute.xlu0 0
    %190 = vperm.xlu0 %189, %v67
    %v191 = vpop.permute.xlu0 %190
    %194 = vset.pattern.permute.xlu0 0
    %195 = vperm.xlu0 %194, %v68
    %v196 = vpop.permute.xlu0 %195
    %199 = vset.pattern.permute.xlu0 0
    %200 = vperm.xlu0 %199, %v69
    %v201 = vpop.permute.xlu0 %200
    %204 = vset.pattern.permute.xlu0 0
    %205 = vperm.xlu0 %204, %v70
    %v206 = vpop.permute.xlu0 %205
    %209 = vset.pattern.permute.xlu0 0
    %210 = vperm.xlu0 %209, %v71
    %v211 = vpop.permute.xlu0 %210
    %214 = vset.pattern.permute.xlu0 0
    %215 = vperm.xlu0 %214, %v72
    %v216 = vpop.permute.xlu0 %215
    %219 = vset.pattern.permute.xlu0 0
    %220 = vperm.xlu0 %219, %v73
    %v221 = vpop.permute.xlu0 %220
    %224 = vset.pattern.permute.xlu0 0
    %225 = vperm.xlu0 %224, %v74
    %v226 = vpop.permute.xlu0 %225
    %229 = vset.pattern.permute.xlu0 0
    %230 = vperm.xlu0 %229, %v75
    %v231 = vpop.permute.xlu0 %230
    %234 = vset.pattern.permute.xlu0 0
    %235 = vperm.xlu0 %234, %v76
    %v236 = vpop.permute.xlu0 %235
    %v239 = vlaneseq
    %v240 = vshrl.u32 %v239, 7
    %v241 = vsub.s32 0, %v240
    %v242 = vrot.slane %v77, %v241
    %v243 = vlaneseq
    %v244 = vshrl.u32 %v243, 7
    %v245 = vsub.s32 1, %v244
    %v246 = vrot.slane %v77, %v245
    %v249 = vmul.f32 %v81, %v242
    %v250 = vmul.f32 %v81, %v246
    %v251 = vmul.f32 %v86, %v242
    %v252 = vmul.f32 %v86, %v246
    %v253 = vmul.f32 %v91, %v242
    %v254 = vmul.f32 %v91, %v246
    %v255 = vmul.f32 %v96, %v242
    %v256 = vmul.f32 %v96, %v246
    %v257 = vmul.f32 %v101, %v242
    %v258 = vmul.f32 %v101, %v246
    %v259 = vmul.f32 %v106, %v242
    %v260 = vmul.f32 %v106, %v246
    %v261 = vmul.f32 %v111, %v242
    %v262 = vmul.f32 %v111, %v246
    %v263 = vmul.f32 %v116, %v242
    %v264 = vmul.f32 %v116, %v246
    %v265 = vmul.f32 %v121, %v242
    %v266 = vmul.f32 %v121, %v246
    %v267 = vmul.f32 %v126, %v242
    %v268 = vmul.f32 %v126, %v246
    %v269 = vmul.f32 %v131, %v242
    %v270 = vmul.f32 %v131, %v246
    %v271 = vmul.f32 %v136, %v242
    %v272 = vmul.f32 %v136, %v246
    %v273 = vmul.f32 %v141, %v242
    %v274 = vmul.f32 %v141, %v246
    %v275 = vmul.f32 %v146, %v242
    %v276 = vmul.f32 %v146, %v246
    %v277 = vmul.f32 %v151, %v242
    %v278 = vmul.f32 %v151, %v246
    %v279 = vmul.f32 %v156, %v242
    %v280 = vmul.f32 %v156, %v246
    %v281 = vmul.f32 %v161, %v242
    %v282 = vmul.f32 %v161, %v246
    %v283 = vmul.f32 %v166, %v242
    %v284 = vmul.f32 %v166, %v246
    %v285 = vmul.f32 %v171, %v242
    %v286 = vmul.f32 %v171, %v246
    %v287 = vmul.f32 %v176, %v242
    %v288 = vmul.f32 %v176, %v246
    %v289 = vmul.f32 %v181, %v242
    %v290 = vmul.f32 %v181, %v246
    %v291 = vmul.f32 %v186, %v242
    %v292 = vmul.f32 %v186, %v246
    %v293 = vmul.f32 %v191, %v242
    %v294 = vmul.f32 %v191, %v246
    %v295 = vmul.f32 %v196, %v242
    %v296 = vmul.f32 %v196, %v246
    %v297 = vmul.f32 %v201, %v242
    %v298 = vmul.f32 %v201, %v246
    %v299 = vmul.f32 %v206, %v242
    %v300 = vmul.f32 %v206, %v246
    %v301 = vmul.f32 %v211, %v242
    %v302 = vmul.f32 %v211, %v246
    %v303 = vmul.f32 %v216, %v242
    %v304 = vmul.f32 %v216, %v246
    %v305 = vmul.f32 %v221, %v242
    %v306 = vmul.f32 %v221, %v246
    %v307 = vmul.f32 %v226, %v242
    %v308 = vmul.f32 %v226, %v246
    %v309 = vmul.f32 %v231, %v242
    %v310 = vmul.f32 %v231, %v246
    %v311 = vmul.f32 %v236, %v242
    %v312 = vmul.f32 %v236, %v246
    %s313 = scalar_lea.vmem %s1, 1
    %v314 = vld [vmem:[%s313] ss:$4 sm:$0x3]
    %315 = vset.pattern.permute.xlu0 1
    %316 = vperm.xlu0 %315, %v45
    %v317 = vpop.permute.xlu0 %316
    %319 = vset.pattern.permute.xlu0 1
    %320 = vperm.xlu0 %319, %v46
    %v321 = vpop.permute.xlu0 %320
    %323 = vset.pattern.permute.xlu0 1
    %324 = vperm.xlu0 %323, %v47
    %v325 = vpop.permute.xlu0 %324
    %327 = vset.pattern.permute.xlu0 1
    %328 = vperm.xlu0 %327, %v48
    %v329 = vpop.permute.xlu0 %328
    %331 = vset.pattern.permute.xlu0 1
    %332 = vperm.xlu0 %331, %v49
    %v333 = vpop.permute.xlu0 %332
    %335 = vset.pattern.permute.xlu0 1
    %336 = vperm.xlu0 %335, %v50
    %v337 = vpop.permute.xlu0 %336
    %339 = vset.pattern.permute.xlu0 1
    %340 = vperm.xlu0 %339, %v51
    %v341 = vpop.permute.xlu0 %340
    %343 = vset.pattern.permute.xlu0 1
    %344 = vperm.xlu0 %343, %v52
    %v345 = vpop.permute.xlu0 %344
    %347 = vset.pattern.permute.xlu0 1
    %348 = vperm.xlu0 %347, %v53
    %v349 = vpop.permute.xlu0 %348
    %351 = vset.pattern.permute.xlu0 1
    %352 = vperm.xlu0 %351, %v54
    %v353 = vpop.permute.xlu0 %352
    %355 = vset.pattern.permute.xlu0 1
    %356 = vperm.xlu0 %355, %v55
    %v357 = vpop.permute.xlu0 %356
    %359 = vset.pattern.permute.xlu0 1
    %360 = vperm.xlu0 %359, %v56
    %v361 = vpop.permute.xlu0 %360
    %363 = vset.pattern.permute.xlu0 1
    %364 = vperm.xlu0 %363, %v57
    %v365 = vpop.permute.xlu0 %364
    %367 = vset.pattern.permute.xlu0 1
    %368 = vperm.xlu0 %367, %v58
    %v369 = vpop.permute.xlu0 %368
    %371 = vset.pattern.permute.xlu0 1
    %372 = vperm.xlu0 %371, %v59
    %v373 = vpop.permute.xlu0 %372
    %375 = vset.pattern.permute.xlu0 1
    %376 = vperm.xlu0 %375, %v60
    %v377 = vpop.permute.xlu0 %376
    %379 = vset.pattern.permute.xlu0 1
    %380 = vperm.xlu0 %379, %v61
    %v381 = vpop.permute.xlu0 %380
    %383 = vset.pattern.permute.xlu0 1
    %384 = vperm.xlu0 %383, %v62
    %v385 = vpop.permute.xlu0 %384
    %387 = vset.pattern.permute.xlu0 1
    %388 = vperm.xlu0 %387, %v63
    %v389 = vpop.permute.xlu0 %388
    %391 = vset.pattern.permute.xlu0 1
    %392 = vperm.xlu0 %391, %v64
    %v393 = vpop.permute.xlu0 %392
    %395 = vset.pattern.permute.xlu0 1
    %396 = vperm.xlu0 %395, %v65
    %v397 = vpop.permute.xlu0 %396
    %399 = vset.pattern.permute.xlu0 1
    %400 = vperm.xlu0 %399, %v66
    %v401 = vpop.permute.xlu0 %400
    %403 = vset.pattern.permute.xlu0 1
    %404 = vperm.xlu0 %403, %v67
    %v405 = vpop.permute.xlu0 %404
    %407 = vset.pattern.permute.xlu0 1
    %408 = vperm.xlu0 %407, %v68
    %v409 = vpop.permute.xlu0 %408
    %411 = vset.pattern.permute.xlu0 1
    %412 = vperm.xlu0 %411, %v69
    %v413 = vpop.permute.xlu0 %412
    %415 = vset.pattern.permute.xlu0 1
    %416 = vperm.xlu0 %415, %v70
    %v417 = vpop.permute.xlu0 %416
    %419 = vset.pattern.permute.xlu0 1
    %420 = vperm.xlu0 %419, %v71
    %v421 = vpop.permute.xlu0 %420
    %423 = vset.pattern.permute.xlu0 1
    %424 = vperm.xlu0 %423, %v72
    %v425 = vpop.permute.xlu0 %424
    %427 = vset.pattern.permute.xlu0 1
    %428 = vperm.xlu0 %427, %v73
    %v429 = vpop.permute.xlu0 %428
    %431 = vset.pattern.permute.xlu0 1
    %432 = vperm.xlu0 %431, %v74
    %v433 = vpop.permute.xlu0 %432
    %435 = vset.pattern.permute.xlu0 1
    %436 = vperm.xlu0 %435, %v75
    %v437 = vpop.permute.xlu0 %436
    %439 = vset.pattern.permute.xlu0 1
    %440 = vperm.xlu0 %439, %v76
    %v441 = vpop.permute.xlu0 %440
    %v444 = vlaneseq
    %v445 = vshrl.u32 %v444, 7
    %v446 = vsub.s32 0, %v445
    %v447 = vrot.slane %v314, %v446
    %v448 = vlaneseq
    %v449 = vshrl.u32 %v448, 7
    %v450 = vsub.s32 1, %v449
    %v451 = vrot.slane %v314, %v450
    %v454 = vmul.f32 %v317, %v447
    %v455 = vmul.f32 %v317, %v451
    %v456 = vmul.f32 %v321, %v447
    %v457 = vmul.f32 %v321, %v451
    %v458 = vmul.f32 %v325, %v447
    %v459 = vmul.f32 %v325, %v451
    %v460 = vmul.f32 %v329, %v447
    %v461 = vmul.f32 %v329, %v451
    %v462 = vmul.f32 %v333, %v447
    %v463 = vmul.f32 %v333, %v451
    %v464 = vmul.f32 %v337, %v447
    %v465 = vmul.f32 %v337, %v451
    %v466 = vmul.f32 %v341, %v447
    %v467 = vmul.f32 %v341, %v451
    %v468 = vmul.f32 %v345, %v447
    %v469 = vmul.f32 %v345, %v451
    %v470 = vmul.f32 %v349, %v447
    %v471 = vmul.f32 %v349, %v451
    %v472 = vmul.f32 %v353, %v447
    %v473 = vmul.f32 %v353, %v451
    %v474 = vmul.f32 %v357, %v447
    %v475 = vmul.f32 %v357, %v451
    %v476 = vmul.f32 %v361, %v447
    %v477 = vmul.f32 %v361, %v451
    %v478 = vmul.f32 %v365, %v447
    %v479 = vmul.f32 %v365, %v451
    %v480 = vmul.f32 %v369, %v447
    %v481 = vmul.f32 %v369, %v451
    %v482 = vmul.f32 %v373, %v447
    %v483 = vmul.f32 %v373, %v451
    %v484 = vmul.f32 %v377, %v447
    %v485 = vmul.f32 %v377, %v451
    %v486 = vmul.f32 %v381, %v447
    %v487 = vmul.f32 %v381, %v451
    %v488 = vmul.f32 %v385, %v447
    %v489 = vmul.f32 %v385, %v451
    %v490 = vmul.f32 %v389, %v447
    %v491 = vmul.f32 %v389, %v451
    %v492 = vmul.f32 %v393, %v447
    %v493 = vmul.f32 %v393, %v451
    %v494 = vmul.f32 %v397, %v447
    %v495 = vmul.f32 %v397, %v451
    %v496 = vmul.f32 %v401, %v447
    %v497 = vmul.f32 %v401, %v451
    %v498 = vmul.f32 %v405, %v447
    %v499 = vmul.f32 %v405, %v451
    %v500 = vmul.f32 %v409, %v447
    %v501 = vmul.f32 %v409, %v451
    %v502 = vmul.f32 %v413, %v447
    %v503 = vmul.f32 %v413, %v451
    %v504 = vmul.f32 %v417, %v447
    %v505 = vmul.f32 %v417, %v451
    %v506 = vmul.f32 %v421, %v447
    %v507 = vmul.f32 %v421, %v451
    %v508 = vmul.f32 %v425, %v447
    %v509 = vmul.f32 %v425, %v451
    %v510 = vmul.f32 %v429, %v447
    %v511 = vmul.f32 %v429, %v451
    %v512 = vmul.f32 %v433, %v447
    %v513 = vmul.f32 %v433, %v451
    %v514 = vmul.f32 %v437, %v447
    %v515 = vmul.f32 %v437, %v451
    %v516 = vmul.f32 %v441, %v447
    %v517 = vmul.f32 %v441, %v451
    %v518 = vadd.f32 %v249, %v454
    %v519 = vadd.f32 %v250, %v455
    %v520 = vadd.f32 %v251, %v456
    %v521 = vadd.f32 %v252, %v457
    %v522 = vadd.f32 %v253, %v458
    %v523 = vadd.f32 %v254, %v459
    %v524 = vadd.f32 %v255, %v460
    %v525 = vadd.f32 %v256, %v461
    %v526 = vadd.f32 %v257, %v462
    %v527 = vadd.f32 %v258, %v463
    %v528 = vadd.f32 %v259, %v464
    %v529 = vadd.f32 %v260, %v465
    %v530 = vadd.f32 %v261, %v466
    %v531 = vadd.f32 %v262, %v467
    %v532 = vadd.f32 %v263, %v468
    %v533 = vadd.f32 %v264, %v469
    %v534 = vadd.f32 %v265, %v470
    %v535 = vadd.f32 %v266, %v471
    %v536 = vadd.f32 %v267, %v472
    %v537 = vadd.f32 %v268, %v473
    %v538 = vadd.f32 %v269, %v474
    %v539 = vadd.f32 %v270, %v475
    %v540 = vadd.f32 %v271, %v476
    %v541 = vadd.f32 %v272, %v477
    %v542 = vadd.f32 %v273, %v478
    %v543 = vadd.f32 %v274, %v479
    %v544 = vadd.f32 %v275, %v480
    %v545 = vadd.f32 %v276, %v481
    %v546 = vadd.f32 %v277, %v482
    %v547 = vadd.f32 %v278, %v483
    %v548 = vadd.f32 %v279, %v484
    %v549 = vadd.f32 %v280, %v485
    %v550 = vadd.f32 %v281, %v486
    %v551 = vadd.f32 %v282, %v487
    %v552 = vadd.f32 %v283, %v488
    %v553 = vadd.f32 %v284, %v489
    %v554 = vadd.f32 %v285, %v490
    %v555 = vadd.f32 %v286, %v491
    %v556 = vadd.f32 %v287, %v492
    %v557 = vadd.f32 %v288, %v493
    %v558 = vadd.f32 %v289, %v494
    %v559 = vadd.f32 %v290, %v495
    %v560 = vadd.f32 %v291, %v496
    %v561 = vadd.f32 %v292, %v497
    %v562 = vadd.f32 %v293, %v498
    %v563 = vadd.f32 %v294, %v499
    %v564 = vadd.f32 %v295, %v500
    %v565 = vadd.f32 %v296, %v501
    %v566 = vadd.f32 %v297, %v502
    %v567 = vadd.f32 %v298, %v503
    %v568 = vadd.f32 %v299, %v504
    %v569 = vadd.f32 %v300, %v505
    %v570 = vadd.f32 %v301, %v506
    %v571 = vadd.f32 %v302, %v507
    %v572 = vadd.f32 %v303, %v508
    %v573 = vadd.f32 %v304, %v509
    %v574 = vadd.f32 %v305, %v510
    %v575 = vadd.f32 %v306, %v511
    %v576 = vadd.f32 %v307, %v512
    %v577 = vadd.f32 %v308, %v513
    %v578 = vadd.f32 %v309, %v514
    %v579 = vadd.f32 %v310, %v515
    %v580 = vadd.f32 %v311, %v516
    %v581 = vadd.f32 %v312, %v517
    %s582 = scalar_lea.vmem %s1, 2
    %v583 = vld [vmem:[%s582] ss:$4 sm:$0x3]
    %584 = vset.pattern.permute.xlu0 2
    %585 = vperm.xlu0 %584, %v45
    %v586 = vpop.permute.xlu0 %585
    %588 = vset.pattern.permute.xlu0 2
    %589 = vperm.xlu0 %588, %v46
    %v590 = vpop.permute.xlu0 %589
    %592 = vset.pattern.permute.xlu0 2
    %593 = vperm.xlu0 %592, %v47
    %v594 = vpop.permute.xlu0 %593
    %596 = vset.pattern.permute.xlu0 2
    %597 = vperm.xlu0 %596, %v48
    %v598 = vpop.permute.xlu0 %597
    %600 = vset.pattern.permute.xlu0 2
    %601 = vperm.xlu0 %600, %v49
    %v602 = vpop.permute.xlu0 %601
    %604 = vset.pattern.permute.xlu0 2
    %605 = vperm.xlu0 %604, %v50
    %v606 = vpop.permute.xlu0 %605
    %608 = vset.pattern.permute.xlu0 2
    %609 = vperm.xlu0 %608, %v51
    %v610 = vpop.permute.xlu0 %609
    %612 = vset.pattern.permute.xlu0 2
    %613 = vperm.xlu0 %612, %v52
    %v614 = vpop.permute.xlu0 %613
    %616 = vset.pattern.permute.xlu0 2
    %617 = vperm.xlu0 %616, %v53
    %v618 = vpop.permute.xlu0 %617
    %620 = vset.pattern.permute.xlu0 2
    %621 = vperm.xlu0 %620, %v54
    %v622 = vpop.permute.xlu0 %621
    %624 = vset.pattern.permute.xlu0 2
    %625 = vperm.xlu0 %624, %v55
    %v626 = vpop.permute.xlu0 %625
    %628 = vset.pattern.permute.xlu0 2
    %629 = vperm.xlu0 %628, %v56
    %v630 = vpop.permute.xlu0 %629
    %632 = vset.pattern.permute.xlu0 2
    %633 = vperm.xlu0 %632, %v57
    %v634 = vpop.permute.xlu0 %633
    %636 = vset.pattern.permute.xlu0 2
    %637 = vperm.xlu0 %636, %v58
    %v638 = vpop.permute.xlu0 %637
    %640 = vset.pattern.permute.xlu0 2
    %641 = vperm.xlu0 %640, %v59
    %v642 = vpop.permute.xlu0 %641
    %644 = vset.pattern.permute.xlu0 2
    %645 = vperm.xlu0 %644, %v60
    %v646 = vpop.permute.xlu0 %645
    %648 = vset.pattern.permute.xlu0 2
    %649 = vperm.xlu0 %648, %v61
    %v650 = vpop.permute.xlu0 %649
    %652 = vset.pattern.permute.xlu0 2
    %653 = vperm.xlu0 %652, %v62
    %v654 = vpop.permute.xlu0 %653
    %656 = vset.pattern.permute.xlu0 2
    %657 = vperm.xlu0 %656, %v63
    %v658 = vpop.permute.xlu0 %657
    %660 = vset.pattern.permute.xlu0 2
    %661 = vperm.xlu0 %660, %v64
    %v662 = vpop.permute.xlu0 %661
    %664 = vset.pattern.permute.xlu0 2
    %665 = vperm.xlu0 %664, %v65
    %v666 = vpop.permute.xlu0 %665
    %668 = vset.pattern.permute.xlu0 2
    %669 = vperm.xlu0 %668, %v66
    %v670 = vpop.permute.xlu0 %669
    %672 = vset.pattern.permute.xlu0 2
    %673 = vperm.xlu0 %672, %v67
    %v674 = vpop.permute.xlu0 %673
    %676 = vset.pattern.permute.xlu0 2
    %677 = vperm.xlu0 %676, %v68
    %v678 = vpop.permute.xlu0 %677
    %680 = vset.pattern.permute.xlu0 2
    %681 = vperm.xlu0 %680, %v69
    %v682 = vpop.permute.xlu0 %681
    %684 = vset.pattern.permute.xlu0 2
    %685 = vperm.xlu0 %684, %v70
    %v686 = vpop.permute.xlu0 %685
    %688 = vset.pattern.permute.xlu0 2
    %689 = vperm.xlu0 %688, %v71
    %v690 = vpop.permute.xlu0 %689
    %692 = vset.pattern.permute.xlu0 2
    %693 = vperm.xlu0 %692, %v72
    %v694 = vpop.permute.xlu0 %693
    %696 = vset.pattern.permute.xlu0 2
    %697 = vperm.xlu0 %696, %v73
    %v698 = vpop.permute.xlu0 %697
    %700 = vset.pattern.permute.xlu0 2
    %701 = vperm.xlu0 %700, %v74
    %v702 = vpop.permute.xlu0 %701
    %704 = vset.pattern.permute.xlu0 2
    %705 = vperm.xlu0 %704, %v75
    %v706 = vpop.permute.xlu0 %705
    %708 = vset.pattern.permute.xlu0 2
    %709 = vperm.xlu0 %708, %v76
    %v710 = vpop.permute.xlu0 %709
    %v713 = vlaneseq
    %v714 = vshrl.u32 %v713, 7
    %v715 = vsub.s32 0, %v714
    %v716 = vrot.slane %v583, %v715
    %v717 = vlaneseq
    %v718 = vshrl.u32 %v717, 7
    %v719 = vsub.s32 1, %v718
    %v720 = vrot.slane %v583, %v719
    %v723 = vmul.f32 %v586, %v716
    %v724 = vmul.f32 %v586, %v720
    %v725 = vmul.f32 %v590, %v716
    %v726 = vmul.f32 %v590, %v720
    %v727 = vmul.f32 %v594, %v716
    %v728 = vmul.f32 %v594, %v720
    %v729 = vmul.f32 %v598, %v716
    %v730 = vmul.f32 %v598, %v720
    %v731 = vmul.f32 %v602, %v716
    %v732 = vmul.f32 %v602, %v720
    %v733 = vmul.f32 %v606, %v716
    %v734 = vmul.f32 %v606, %v720
    %v735 = vmul.f32 %v610, %v716
    %v736 = vmul.f32 %v610, %v720
    %v737 = vmul.f32 %v614, %v716
    %v738 = vmul.f32 %v614, %v720
    %v739 = vmul.f32 %v618, %v716
    %v740 = vmul.f32 %v618, %v720
    %v741 = vmul.f32 %v622, %v716
    %v742 = vmul.f32 %v622, %v720
    %v743 = vmul.f32 %v626, %v716
    %v744 = vmul.f32 %v626, %v720
    %v745 = vmul.f32 %v630, %v716
    %v746 = vmul.f32 %v630, %v720
    %v747 = vmul.f32 %v634, %v716
    %v748 = vmul.f32 %v634, %v720
    %v749 = vmul.f32 %v638, %v716
    %v750 = vmul.f32 %v638, %v720
    %v751 = vmul.f32 %v642, %v716
    %v752 = vmul.f32 %v642, %v720
    %v753 = vmul.f32 %v646, %v716
    %v754 = vmul.f32 %v646, %v720
    %v755 = vmul.f32 %v650, %v716
    %v756 = vmul.f32 %v650, %v720
    %v757 = vmul.f32 %v654, %v716
    %v758 = vmul.f32 %v654, %v720
    %v759 = vmul.f32 %v658, %v716
    %v760 = vmul.f32 %v658, %v720
    %v761 = vmul.f32 %v662, %v716
    %v762 = vmul.f32 %v662, %v720
    %v763 = vmul.f32 %v666, %v716
    %v764 = vmul.f32 %v666, %v720
    %v765 = vmul.f32 %v670, %v716
    %v766 = vmul.f32 %v670, %v720
    %v767 = vmul.f32 %v674, %v716
    %v768 = vmul.f32 %v674, %v720
    %v769 = vmul.f32 %v678, %v716
    %v770 = vmul.f32 %v678, %v720
    %v771 = vmul.f32 %v682, %v716
    %v772 = vmul.f32 %v682, %v720
    %v773 = vmul.f32 %v686, %v716
    %v774 = vmul.f32 %v686, %v720
    %v775 = vmul.f32 %v690, %v716
    %v776 = vmul.f32 %v690, %v720
    %v777 = vmul.f32 %v694, %v716
    %v778 = vmul.f32 %v694, %v720
    %v779 = vmul.f32 %v698, %v716
    %v780 = vmul.f32 %v698, %v720
    %v781 = vmul.f32 %v702, %v716
    %v782 = vmul.f32 %v702, %v720
    %v783 = vmul.f32 %v706, %v716
    %v784 = vmul.f32 %v706, %v720
    %v785 = vmul.f32 %v710, %v716
    %v786 = vmul.f32 %v710, %v720
    %v787 = vadd.f32 %v518, %v723
    %v788 = vadd.f32 %v519, %v724
    %v789 = vadd.f32 %v520, %v725
    %v790 = vadd.f32 %v521, %v726
    %v791 = vadd.f32 %v522, %v727
    %v792 = vadd.f32 %v523, %v728
    %v793 = vadd.f32 %v524, %v729
    %v794 = vadd.f32 %v525, %v730
    %v795 = vadd.f32 %v526, %v731
    %v796 = vadd.f32 %v527, %v732
    %v797 = vadd.f32 %v528, %v733
    %v798 = vadd.f32 %v529, %v734
    %v799 = vadd.f32 %v530, %v735
    %v800 = vadd.f32 %v531, %v736
    %v801 = vadd.f32 %v532, %v737
    %v802 = vadd.f32 %v533, %v738
    %v803 = vadd.f32 %v534, %v739
    %v804 = vadd.f32 %v535, %v740
    %v805 = vadd.f32 %v536, %v741
    %v806 = vadd.f32 %v537, %v742
    %v807 = vadd.f32 %v538, %v743
    %v808 = vadd.f32 %v539, %v744
    %v809 = vadd.f32 %v540, %v745
    %v810 = vadd.f32 %v541, %v746
    %v811 = vadd.f32 %v542, %v747
    %v812 = vadd.f32 %v543, %v748
    %v813 = vadd.f32 %v544, %v749
    %v814 = vadd.f32 %v545, %v750
    %v815 = vadd.f32 %v546, %v751
    %v816 = vadd.f32 %v547, %v752
    %v817 = vadd.f32 %v548, %v753
    %v818 = vadd.f32 %v549, %v754
    %v819 = vadd.f32 %v550, %v755
    %v820 = vadd.f32 %v551, %v756
    %v821 = vadd.f32 %v552, %v757
    %v822 = vadd.f32 %v553, %v758
    %v823 = vadd.f32 %v554, %v759
    %v824 = vadd.f32 %v555, %v760
    %v825 = vadd.f32 %v556, %v761
    %v826 = vadd.f32 %v557, %v762
    %v827 = vadd.f32 %v558, %v763
    %v828 = vadd.f32 %v559, %v764
    %v829 = vadd.f32 %v560, %v765
    %v830 = vadd.f32 %v561, %v766
    %v831 = vadd.f32 %v562, %v767
    %v832 = vadd.f32 %v563, %v768
    %v833 = vadd.f32 %v564, %v769
    %v834 = vadd.f32 %v565, %v770
    %v835 = vadd.f32 %v566, %v771
    %v836 = vadd.f32 %v567, %v772
    %v837 = vadd.f32 %v568, %v773
    %v838 = vadd.f32 %v569, %v774
    %v839 = vadd.f32 %v570, %v775
    %v840 = vadd.f32 %v571, %v776
    %v841 = vadd.f32 %v572, %v777
    %v842 = vadd.f32 %v573, %v778
    %v843 = vadd.f32 %v574, %v779
    %v844 = vadd.f32 %v575, %v780
    %v845 = vadd.f32 %v576, %v781
    %v846 = vadd.f32 %v577, %v782
    %v847 = vadd.f32 %v578, %v783
    %v848 = vadd.f32 %v579, %v784
    %v849 = vadd.f32 %v580, %v785
    %v850 = vadd.f32 %v581, %v786
    %v851 = vld [vmem:[%s2] sm:$0x3]
    %v853 = vlaneseq
    %v854 = vshrl.u32 %v853, 7
    %v855 = vsub.s32 0, %v854
    %v856 = vrot.slane %v851, %v855
    %v857 = vlaneseq
    %v858 = vshrl.u32 %v857, 7
    %v859 = vsub.s32 1, %v858
    %v860 = vrot.slane %v851, %v859
    %v863 = vadd.f32 %v787, %v856
    %v864 = vadd.f32 %v788, %v860
    %v865 = vadd.f32 %v789, %v856
    %v866 = vadd.f32 %v790, %v860
    %v867 = vadd.f32 %v791, %v856
    %v868 = vadd.f32 %v792, %v860
    %v869 = vadd.f32 %v793, %v856
    %v870 = vadd.f32 %v794, %v860
    %v871 = vadd.f32 %v795, %v856
    %v872 = vadd.f32 %v796, %v860
    %v873 = vadd.f32 %v797, %v856
    %v874 = vadd.f32 %v798, %v860
    %v875 = vadd.f32 %v799, %v856
    %v876 = vadd.f32 %v800, %v860
    %v877 = vadd.f32 %v801, %v856
    %v878 = vadd.f32 %v802, %v860
    %v879 = vadd.f32 %v803, %v856
    %v880 = vadd.f32 %v804, %v860
    %v881 = vadd.f32 %v805, %v856
    %v882 = vadd.f32 %v806, %v860
    %v883 = vadd.f32 %v807, %v856
    %v884 = vadd.f32 %v808, %v860
    %v885 = vadd.f32 %v809, %v856
    %v886 = vadd.f32 %v810, %v860
    %v887 = vadd.f32 %v811, %v856
    %v888 = vadd.f32 %v812, %v860
    %v889 = vadd.f32 %v813, %v856
    %v890 = vadd.f32 %v814, %v860
    %v891 = vadd.f32 %v815, %v856
    %v892 = vadd.f32 %v816, %v860
    %v893 = vadd.f32 %v817, %v856
    %v894 = vadd.f32 %v818, %v860
    %v895 = vadd.f32 %v819, %v856
    %v896 = vadd.f32 %v820, %v860
    %v897 = vadd.f32 %v821, %v856
    %v898 = vadd.f32 %v822, %v860
    %v899 = vadd.f32 %v823, %v856
    %v900 = vadd.f32 %v824, %v860
    %v901 = vadd.f32 %v825, %v856
    %v902 = vadd.f32 %v826, %v860
    %v903 = vadd.f32 %v827, %v856
    %v904 = vadd.f32 %v828, %v860
    %v905 = vadd.f32 %v829, %v856
    %v906 = vadd.f32 %v830, %v860
    %v907 = vadd.f32 %v831, %v856
    %v908 = vadd.f32 %v832, %v860
    %v909 = vadd.f32 %v833, %v856
    %v910 = vadd.f32 %v834, %v860
    %v911 = vadd.f32 %v835, %v856
    %v912 = vadd.f32 %v836, %v860
    %v913 = vadd.f32 %v837, %v856
    %v914 = vadd.f32 %v838, %v860
    %v915 = vadd.f32 %v839, %v856
    %v916 = vadd.f32 %v840, %v860
    %v917 = vadd.f32 %v841, %v856
    %v918 = vadd.f32 %v842, %v860
    %v919 = vadd.f32 %v843, %v856
    %v920 = vadd.f32 %v844, %v860
    %v921 = vadd.f32 %v845, %v856
    %v922 = vadd.f32 %v846, %v860
    %v923 = vadd.f32 %v847, %v856
    %v924 = vadd.f32 %v848, %v860
    %v925 = vadd.f32 %v849, %v856
    %v926 = vadd.f32 %v850, %v860
    %v927 = vmax.f32 %v863, 0.0
    %v928 = vmax.f32 %v864, 0.0
    %v929 = vmax.f32 %v865, 0.0
    %v930 = vmax.f32 %v866, 0.0
    %v931 = vmax.f32 %v867, 0.0
    %v932 = vmax.f32 %v868, 0.0
    %v933 = vmax.f32 %v869, 0.0
    %v934 = vmax.f32 %v870, 0.0
    %v935 = vmax.f32 %v871, 0.0
    %v936 = vmax.f32 %v872, 0.0
    %v937 = vmax.f32 %v873, 0.0
    %v938 = vmax.f32 %v874, 0.0
    %v939 = vmax.f32 %v875, 0.0
    %v940 = vmax.f32 %v876, 0.0
    %v941 = vmax.f32 %v877, 0.0
    %v942 = vmax.f32 %v878, 0.0
    %v943 = vmax.f32 %v879, 0.0
    %v944 = vmax.f32 %v880, 0.0
    %v945 = vmax.f32 %v881, 0.0
    %v946 = vmax.f32 %v882, 0.0
    %v947 = vmax.f32 %v883, 0.0
    %v948 = vmax.f32 %v884, 0.0
    %v949 = vmax.f32 %v885, 0.0
    %v950 = vmax.f32 %v886, 0.0
    %v951 = vmax.f32 %v887, 0.0
    %v952 = vmax.f32 %v888, 0.0
    %v953 = vmax.f32 %v889, 0.0
    %v954 = vmax.f32 %v890, 0.0
    %v955 = vmax.f32 %v891, 0.0
    %v956 = vmax.f32 %v892, 0.0
    %v957 = vmax.f32 %v893, 0.0
    %v958 = vmax.f32 %v894, 0.0
    %v959 = vmax.f32 %v895, 0.0
    %v960 = vmax.f32 %v896, 0.0
    %v961 = vmax.f32 %v897, 0.0
    %v962 = vmax.f32 %v898, 0.0
    %v963 = vmax.f32 %v899, 0.0
    %v964 = vmax.f32 %v900, 0.0
    %v965 = vmax.f32 %v901, 0.0
    %v966 = vmax.f32 %v902, 0.0
    %v967 = vmax.f32 %v903, 0.0
    %v968 = vmax.f32 %v904, 0.0
    %v969 = vmax.f32 %v905, 0.0
    %v970 = vmax.f32 %v906, 0.0
    %v971 = vmax.f32 %v907, 0.0
    %v972 = vmax.f32 %v908, 0.0
    %v973 = vmax.f32 %v909, 0.0
    %v974 = vmax.f32 %v910, 0.0
    %v975 = vmax.f32 %v911, 0.0
    %v976 = vmax.f32 %v912, 0.0
    %v977 = vmax.f32 %v913, 0.0
    %v978 = vmax.f32 %v914, 0.0
    %v979 = vmax.f32 %v915, 0.0
    %v980 = vmax.f32 %v916, 0.0
    %v981 = vmax.f32 %v917, 0.0
    %v982 = vmax.f32 %v918, 0.0
    %v983 = vmax.f32 %v919, 0.0
    %v984 = vmax.f32 %v920, 0.0
    %v985 = vmax.f32 %v921, 0.0
    %v986 = vmax.f32 %v922, 0.0
    %v987 = vmax.f32 %v923, 0.0
    %v988 = vmax.f32 %v924, 0.0
    %v989 = vmax.f32 %v925, 0.0
    %v990 = vmax.f32 %v926, 0.0
    %v991 = vpack.c.bf16 %v929, %v927
    %v992 = vpack.c.bf16 %v930, %v928
    %v993 = vpack.c.bf16 %v933, %v931
    %v994 = vpack.c.bf16 %v934, %v932
    %v995 = vpack.c.bf16 %v937, %v935
    %v996 = vpack.c.bf16 %v938, %v936
    %v997 = vpack.c.bf16 %v941, %v939
    %v998 = vpack.c.bf16 %v942, %v940
    %v999 = vpack.c.bf16 %v945, %v943
    %v1000 = vpack.c.bf16 %v946, %v944
    %v1001 = vpack.c.bf16 %v949, %v947
    %v1002 = vpack.c.bf16 %v950, %v948
    %v1003 = vpack.c.bf16 %v953, %v951
    %v1004 = vpack.c.bf16 %v954, %v952
    %v1005 = vpack.c.bf16 %v957, %v955
    %v1006 = vpack.c.bf16 %v958, %v956
    %v1007 = vpack.c.bf16 %v961, %v959
    %v1008 = vpack.c.bf16 %v962, %v960
    %v1009 = vpack.c.bf16 %v965, %v963
    %v1010 = vpack.c.bf16 %v966, %v964
    %v1011 = vpack.c.bf16 %v969, %v967
    %v1012 = vpack.c.bf16 %v970, %v968
    %v1013 = vpack.c.bf16 %v973, %v971
    %v1014 = vpack.c.bf16 %v974, %v972
    %v1015 = vpack.c.bf16 %v977, %v975
    %v1016 = vpack.c.bf16 %v978, %v976
    %v1017 = vpack.c.bf16 %v981, %v979
    %v1018 = vpack.c.bf16 %v982, %v980
    %v1019 = vpack.c.bf16 %v985, %v983
    %v1020 = vpack.c.bf16 %v986, %v984
    %v1021 = vpack.c.bf16 %v989, %v987
    %v1022 = vpack.c.bf16 %v990, %v988
    %v1023 = vld [vmem:[#allocation2] sm:$0xff]
    %v1024 = vld [vmem:[#allocation2 + $0x8] sm:$0xff]
    %v1025 = vld [vmem:[#allocation2 + $0x10] sm:$0xff]
    %v1026 = vld [vmem:[#allocation2 + $0x18] sm:$0xff]
    %v1027 = vld [vmem:[#allocation2 + $0x20] sm:$0xff]
    %v1028 = vld [vmem:[#allocation2 + $0x28] sm:$0xff]
    %v1029 = vld [vmem:[#allocation2 + $0x30] sm:$0xff]
    %v1030 = vld [vmem:[#allocation2 + $0x38] sm:$0xff]
    %v1031 = vld [vmem:[#allocation2 + $0x40] sm:$0xff]
    %v1032 = vld [vmem:[#allocation2 + $0x48] sm:$0xff]
    %v1033 = vld [vmem:[#allocation2 + $0x50] sm:$0xff]
    %v1034 = vld [vmem:[#allocation2 + $0x58] sm:$0xff]
    %v1035 = vld [vmem:[#allocation2 + $0x60] sm:$0xff]
    %v1036 = vld [vmem:[#allocation2 + $0x68] sm:$0xff]
    %v1037 = vld [vmem:[#allocation2 + $0x70] sm:$0xff]
    %v1038 = vld [vmem:[#allocation2 + $0x78] sm:$0xff]
    %v1039 = vld [vmem:[#allocation2 + $0x80] sm:$0xff]
    %v1040 = vld [vmem:[#allocation2 + $0x88] sm:$0xff]
    %v1041 = vld [vmem:[#allocation2 + $0x90] sm:$0xff]
    %v1042 = vld [vmem:[#allocation2 + $0x98] sm:$0xff]
    %v1043 = vld [vmem:[#allocation2 + $0xa0] sm:$0xff]
    %v1044 = vld [vmem:[#allocation2 + $0xa8] sm:$0xff]
    %v1045 = vld [vmem:[#allocation2 + $0xb0] sm:$0xff]
    %v1046 = vld [vmem:[#allocation2 + $0xb8] sm:$0xff]
    %v1047 = vld [vmem:[#allocation2 + $0xc0] sm:$0xff]
    %v1048 = vld [vmem:[#allocation2 + $0xc8] sm:$0xff]
    %v1049 = vld [vmem:[#allocation2 + $0xd0] sm:$0xff]
    %v1050 = vld [vmem:[#allocation2 + $0xd8] sm:$0xff]
    %v1051 = vld [vmem:[#allocation2 + $0xe0] sm:$0xff]
    %v1052 = vld [vmem:[#allocation2 + $0xe8] sm:$0xff]
    %v1053 = vld [vmem:[#allocation2 + $0xf0] sm:$0xff]
    %v1054 = vld [vmem:[#allocation2 + $0xf8] sm:$0xff]
    %v1055 = vld [vmem:[%s4] sm:$0x3]
    %v1057 = vlaneseq
    %v1058 = vshrl.u32 %v1057, 7
    %v1059 = vsub.s32 0, %v1058
    %v1060 = vrot.slane %v1055, %v1059
    %v1061 = vlaneseq
    %v1062 = vshrl.u32 %v1061, 7
    %v1063 = vsub.s32 1, %v1062
    %v1064 = vrot.slane %v1055, %v1063
    %v1099 = vunpack.c.l.b16 %v1023
    %v1100 = vunpack.c.h.b16 %v1023
    %v1101 = vunpack.c.l.b16 %v1024
    %v1102 = vunpack.c.h.b16 %v1024
    %v1103 = vunpack.c.l.b16 %v1025
    %v1104 = vunpack.c.h.b16 %v1025
    %v1105 = vunpack.c.l.b16 %v1026
    %v1106 = vunpack.c.h.b16 %v1026
    %v1107 = vunpack.c.l.b16 %v1027
    %v1108 = vunpack.c.h.b16 %v1027
    %v1109 = vunpack.c.l.b16 %v1028
    %v1110 = vunpack.c.h.b16 %v1028
    %v1111 = vunpack.c.l.b16 %v1029
    %v1112 = vunpack.c.h.b16 %v1029
    %v1113 = vunpack.c.l.b16 %v1030
    %v1114 = vunpack.c.h.b16 %v1030
    %v1115 = vunpack.c.l.b16 %v1031
    %v1116 = vunpack.c.h.b16 %v1031
    %v1117 = vunpack.c.l.b16 %v1032
    %v1118 = vunpack.c.h.b16 %v1032
    %v1119 = vunpack.c.l.b16 %v1033
    %v1120 = vunpack.c.h.b16 %v1033
    %v1121 = vunpack.c.l.b16 %v1034
    %v1122 = vunpack.c.h.b16 %v1034
    %v1123 = vunpack.c.l.b16 %v1035
    %v1124 = vunpack.c.h.b16 %v1035
    %v1125 = vunpack.c.l.b16 %v1036
    %v1126 = vunpack.c.h.b16 %v1036
    %v1127 = vunpack.c.l.b16 %v1037
    %v1128 = vunpack.c.h.b16 %v1037
    %v1129 = vunpack.c.l.b16 %v1038
    %v1130 = vunpack.c.h.b16 %v1038
    %v1131 = vunpack.c.l.b16 %v1039
    %v1132 = vunpack.c.h.b16 %v1039
    %v1133 = vunpack.c.l.b16 %v1040
    %v1134 = vunpack.c.h.b16 %v1040
    %v1135 = vunpack.c.l.b16 %v1041
    %v1136 = vunpack.c.h.b16 %v1041
    %v1137 = vunpack.c.l.b16 %v1042
    %v1138 = vunpack.c.h.b16 %v1042
    %v1139 = vunpack.c.l.b16 %v1043
    %v1140 = vunpack.c.h.b16 %v1043
    %v1141 = vunpack.c.l.b16 %v1044
    %v1142 = vunpack.c.h.b16 %v1044
    %v1143 = vunpack.c.l.b16 %v1045
    %v1144 = vunpack.c.h.b16 %v1045
    %v1145 = vunpack.c.l.b16 %v1046
    %v1146 = vunpack.c.h.b16 %v1046
    %v1147 = vunpack.c.l.b16 %v1047
    %v1148 = vunpack.c.h.b16 %v1047
    %v1149 = vunpack.c.l.b16 %v1048
    %v1150 = vunpack.c.h.b16 %v1048
    %v1151 = vunpack.c.l.b16 %v1049
    %v1152 = vunpack.c.h.b16 %v1049
    %v1153 = vunpack.c.l.b16 %v1050
    %v1154 = vunpack.c.h.b16 %v1050
    %v1155 = vunpack.c.l.b16 %v1051
    %v1156 = vunpack.c.h.b16 %v1051
    %v1157 = vunpack.c.l.b16 %v1052
    %v1158 = vunpack.c.h.b16 %v1052
    %v1159 = vunpack.c.l.b16 %v1053
    %v1160 = vunpack.c.h.b16 %v1053
    %v1161 = vunpack.c.l.b16 %v1054
    %v1162 = vunpack.c.h.b16 %v1054
    %v1163 = vpack.c.b16 %v1101, %v1099
    %v1164 = vpack.c.b16 %v1102, %v1100
    %v1165 = vpack.c.b16 %v1105, %v1103
    %v1166 = vpack.c.b16 %v1106, %v1104
    %v1167 = vpack.c.b16 %v1109, %v1107
    %v1168 = vpack.c.b16 %v1110, %v1108
    %v1169 = vpack.c.b16 %v1113, %v1111
    %v1170 = vpack.c.b16 %v1114, %v1112
    %v1171 = vpack.c.b16 %v1117, %v1115
    %v1172 = vpack.c.b16 %v1118, %v1116
    %v1173 = vpack.c.b16 %v1121, %v1119
    %v1174 = vpack.c.b16 %v1122, %v1120
    %v1175 = vpack.c.b16 %v1125, %v1123
    %v1176 = vpack.c.b16 %v1126, %v1124
    %v1177 = vpack.c.b16 %v1129, %v1127
    %v1178 = vpack.c.b16 %v1130, %v1128
    %v1179 = vpack.c.b16 %v1133, %v1131
    %v1180 = vpack.c.b16 %v1134, %v1132
    %v1181 = vpack.c.b16 %v1137, %v1135
    %v1182 = vpack.c.b16 %v1138, %v1136
    %v1183 = vpack.c.b16 %v1141, %v1139
    %v1184 = vpack.c.b16 %v1142, %v1140
    %v1185 = vpack.c.b16 %v1145, %v1143
    %v1186 = vpack.c.b16 %v1146, %v1144
    %v1187 = vpack.c.b16 %v1149, %v1147
    %v1188 = vpack.c.b16 %v1150, %v1148
    %v1189 = vpack.c.b16 %v1153, %v1151
    %v1190 = vpack.c.b16 %v1154, %v1152
    %v1191 = vpack.c.b16 %v1157, %v1155
    %v1192 = vpack.c.b16 %v1158, %v1156
    %v1193 = vpack.c.b16 %v1161, %v1159
    %v1194 = vpack.c.b16 %v1162, %v1160
    %1227 = vmatprep.subr.bf16.mxu0 %v1164
    %1228 = vmatpush1.bf16.msra.mxu0 %v1163
    %1229 = vmatprep.subr.bf16.mxu0 %v1166
    %1230 = vmatpush1.bf16.msra.mxu0 %v1165
    %1231 = vmatprep.subr.bf16.mxu0 %v1168
    %1232 = vmatpush1.bf16.msra.mxu0 %v1167
    %1233 = vmatprep.subr.bf16.mxu0 %v1170
    %1234 = vmatpush1.bf16.msra.mxu0 %v1169
    %1235 = vmatprep.subr.bf16.mxu0 %v1172
    %1236 = vmatpush1.bf16.msra.mxu0 %v1171
    %1237 = vmatprep.subr.bf16.mxu0 %v1174
    %1238 = vmatpush1.bf16.msra.mxu0 %v1173
    %1239 = vmatprep.subr.bf16.mxu0 %v1176
    %1240 = vmatpush1.bf16.msra.mxu0 %v1175
    %1241 = vmatprep.subr.bf16.mxu0 %v1178
    %1242 = vmatpush1.bf16.msra.mxu0 %v1177
    %1243 = vmatprep.subr.bf16.mxu0 %v1180
    %1244 = vmatpush1.bf16.msra.mxu0 %v1179
    %1245 = vmatprep.subr.bf16.mxu0 %v1182
    %1246 = vmatpush1.bf16.msra.mxu0 %v1181
    %1247 = vmatprep.subr.bf16.mxu0 %v1184
    %1248 = vmatpush1.bf16.msra.mxu0 %v1183
    %1249 = vmatprep.subr.bf16.mxu0 %v1186
    %1250 = vmatpush1.bf16.msra.mxu0 %v1185
    %1251 = vmatprep.subr.bf16.mxu0 %v1188
    %1252 = vmatpush1.bf16.msra.mxu0 %v1187
    %1253 = vmatprep.subr.bf16.mxu0 %v1190
    %1254 = vmatpush1.bf16.msra.mxu0 %v1189
    %1255 = vmatprep.subr.bf16.mxu0 %v1192
    %1256 = vmatpush1.bf16.msra.mxu0 %v1191
    %1257 = vmatprep.subr.bf16.mxu0 %v1194
    %1258 = vmatpush1.bf16.msra.mxu0 %v1193
    %1259 = vmatprep.mubr.bf16.mxu0 %v992
    %1260 = vmatmul.mubr.bf16.gmra.mrb[0].mxu0 %v991
    %v1261 = vpop.f32.mrb[0].mxu0
    %v1262 = vadd.f32 %v1060, %v1261
    %v1263 = vpop.f32.mrb[0].mxu0
    %v1264 = vadd.f32 %v1064, %v1263
    %v1265 = vpop.f32.mrb[0].mxu0
    %v1266 = vadd.f32 %v1060, %v1265
    %v1267 = vpop.f32.mrb[0].mxu0
    %v1268 = vadd.f32 %v1064, %v1267
    %1269 = vmatprep.mubr.bf16.mxu0 %v994
    %1270 = vmatmul.mubr.bf16.gmra.mrb[0].mxu0 %v993
    %v1271 = vpop.f32.mrb[0].mxu0
    %v1272 = vadd.f32 %v1060, %v1271
    %v1273 = vpop.f32.mrb[0].mxu0
    %v1274 = vadd.f32 %v1064, %v1273
    %v1275 = vpop.f32.mrb[0].mxu0
    %v1276 = vadd.f32 %v1060, %v1275
    %v1277 = vpop.f32.mrb[0].mxu0
    %v1278 = vadd.f32 %v1064, %v1277
    %1279 = vmatprep.mubr.bf16.mxu0 %v996
    %1280 = vmatmul.mubr.bf16.gmra.mrb[0].mxu0 %v995
    %v1281 = vpop.f32.mrb[0].mxu0
    %v1282 = vadd.f32 %v1060, %v1281
    %v1283 = vpop.f32.mrb[0].mxu0
    %v1284 = vadd.f32 %v1064, %v1283
    %v1285 = vpop.f32.mrb[0].mxu0
    %v1286 = vadd.f32 %v1060, %v1285
    %v1287 = vpop.f32.mrb[0].mxu0
    %v1288 = vadd.f32 %v1064, %v1287
    %1289 = vmatprep.mubr.bf16.mxu0 %v998
    %1290 = vmatmul.mubr.bf16.gmra.mrb[0].mxu0 %v997
    %v1291 = vpop.f32.mrb[0].mxu0
    %v1292 = vadd.f32 %v1060, %v1291
    %v1293 = vpop.f32.mrb[0].mxu0
    %v1294 = vadd.f32 %v1064, %v1293
    %v1295 = vpop.f32.mrb[0].mxu0
    %v1296 = vadd.f32 %v1060, %v1295
    %v1297 = vpop.f32.mrb[0].mxu0
    %v1298 = vadd.f32 %v1064, %v1297
    %1299 = vmatprep.mubr.bf16.mxu0 %v1000
    %1300 = vmatmul.mubr.bf16.gmra.mrb[0].mxu0 %v999
    %v1301 = vpop.f32.mrb[0].mxu0
    %v1302 = vadd.f32 %v1060, %v1301
    %v1303 = vpop.f32.mrb[0].mxu0
    %v1304 = vadd.f32 %v1064, %v1303
    %v1305 = vpop.f32.mrb[0].mxu0
    %v1306 = vadd.f32 %v1060, %v1305
    %v1307 = vpop.f32.mrb[0].mxu0
    %v1308 = vadd.f32 %v1064, %v1307
    %1309 = vmatprep.mubr.bf16.mxu0 %v1002
    %1310 = vmatmul.mubr.bf16.gmra.mrb[0].mxu0 %v1001
    %v1311 = vpop.f32.mrb[0].mxu0
    %v1312 = vadd.f32 %v1060, %v1311
    %v1313 = vpop.f32.mrb[0].mxu0
    %v1314 = vadd.f32 %v1064, %v1313
    %v1315 = vpop.f32.mrb[0].mxu0
    %v1316 = vadd.f32 %v1060, %v1315
    %v1317 = vpop.f32.mrb[0].mxu0
    %v1318 = vadd.f32 %v1064, %v1317
    %1319 = vmatprep.mubr.bf16.mxu0 %v1004
    %1320 = vmatmul.mubr.bf16.gmra.mrb[0].mxu0 %v1003
    %v1321 = vpop.f32.mrb[0].mxu0
    %v1322 = vadd.f32 %v1060, %v1321
    %v1323 = vpop.f32.mrb[0].mxu0
    %v1324 = vadd.f32 %v1064, %v1323
    %v1325 = vpop.f32.mrb[0].mxu0
    %v1326 = vadd.f32 %v1060, %v1325
    %v1327 = vpop.f32.mrb[0].mxu0
    %v1328 = vadd.f32 %v1064, %v1327
    %1329 = vmatprep.mubr.bf16.mxu0 %v1006
    %1330 = vmatmul.mubr.bf16.gmra.mrb[0].mxu0 %v1005
    %v1331 = vpop.f32.mrb[0].mxu0
    %v1332 = vadd.f32 %v1060, %v1331
    %v1333 = vpop.f32.mrb[0].mxu0
    %v1334 = vadd.f32 %v1064, %v1333
    %v1335 = vpop.f32.mrb[0].mxu0
    %v1336 = vadd.f32 %v1060, %v1335
    %v1337 = vpop.f32.mrb[0].mxu0
    %v1338 = vadd.f32 %v1064, %v1337
    %1339 = vmatprep.mubr.bf16.mxu0 %v1008
    %1340 = vmatmul.mubr.bf16.gmra.mrb[0].mxu0 %v1007
    %v1341 = vpop.f32.mrb[0].mxu0
    %v1342 = vadd.f32 %v1060, %v1341
    %v1343 = vpop.f32.mrb[0].mxu0
    %v1344 = vadd.f32 %v1064, %v1343
    %v1345 = vpop.f32.mrb[0].mxu0
    %v1346 = vadd.f32 %v1060, %v1345
    %v1347 = vpop.f32.mrb[0].mxu0
    %v1348 = vadd.f32 %v1064, %v1347
    %1349 = vmatprep.mubr.bf16.mxu0 %v1010
    %1350 = vmatmul.mubr.bf16.gmra.mrb[0].mxu0 %v1009
    %v1351 = vpop.f32.mrb[0].mxu0
    %v1352 = vadd.f32 %v1060, %v1351
    %v1353 = vpop.f32.mrb[0].mxu0
    %v1354 = vadd.f32 %v1064, %v1353
    %v1355 = vpop.f32.mrb[0].mxu0
    %v1356 = vadd.f32 %v1060, %v1355
    %v1357 = vpop.f32.mrb[0].mxu0
    %v1358 = vadd.f32 %v1064, %v1357
    %1359 = vmatprep.mubr.bf16.mxu0 %v1012
    %1360 = vmatmul.mubr.bf16.gmra.mrb[0].mxu0 %v1011
    %v1361 = vpop.f32.mrb[0].mxu0
    %v1362 = vadd.f32 %v1060, %v1361
    %v1363 = vpop.f32.mrb[0].mxu0
    %v1364 = vadd.f32 %v1064, %v1363
    %v1365 = vpop.f32.mrb[0].mxu0
    %v1366 = vadd.f32 %v1060, %v1365
    %v1367 = vpop.f32.mrb[0].mxu0
    %v1368 = vadd.f32 %v1064, %v1367
    %1369 = vmatprep.mubr.bf16.mxu0 %v1014
    %1370 = vmatmul.mubr.bf16.gmra.mrb[0].mxu0 %v1013
    %v1371 = vpop.f32.mrb[0].mxu0
    %v1372 = vadd.f32 %v1060, %v1371
    %v1373 = vpop.f32.mrb[0].mxu0
    %v1374 = vadd.f32 %v1064, %v1373
    %v1375 = vpop.f32.mrb[0].mxu0
    %v1376 = vadd.f32 %v1060, %v1375
    %v1377 = vpop.f32.mrb[0].mxu0
    %v1378 = vadd.f32 %v1064, %v1377
    %1379 = vmatprep.mubr.bf16.mxu0 %v1016
    %1380 = vmatmul.mubr.bf16.gmra.mrb[0].mxu0 %v1015
    %v1381 = vpop.f32.mrb[0].mxu0
    %v1382 = vadd.f32 %v1060, %v1381
    %v1383 = vpop.f32.mrb[0].mxu0
    %v1384 = vadd.f32 %v1064, %v1383
    %v1385 = vpop.f32.mrb[0].mxu0
    %v1386 = vadd.f32 %v1060, %v1385
    %v1387 = vpop.f32.mrb[0].mxu0
    %v1388 = vadd.f32 %v1064, %v1387
    %1389 = vmatprep.mubr.bf16.mxu0 %v1018
    %1390 = vmatmul.mubr.bf16.gmra.mrb[0].mxu0 %v1017
    %v1391 = vpop.f32.mrb[0].mxu0
    %v1392 = vadd.f32 %v1060, %v1391
    %v1393 = vpop.f32.mrb[0].mxu0
    %v1394 = vadd.f32 %v1064, %v1393
    %v1395 = vpop.f32.mrb[0].mxu0
    %v1396 = vadd.f32 %v1060, %v1395
    %v1397 = vpop.f32.mrb[0].mxu0
    %v1398 = vadd.f32 %v1064, %v1397
    %1399 = vmatprep.mubr.bf16.mxu0 %v1020
    %1400 = vmatmul.mubr.bf16.gmra.mrb[0].mxu0 %v1019
    %v1401 = vpop.f32.mrb[0].mxu0
    %v1402 = vadd.f32 %v1060, %v1401
    %v1403 = vpop.f32.mrb[0].mxu0
    %v1404 = vadd.f32 %v1064, %v1403
    %v1405 = vpop.f32.mrb[0].mxu0
    %v1406 = vadd.f32 %v1060, %v1405
    %v1407 = vpop.f32.mrb[0].mxu0
    %v1408 = vadd.f32 %v1064, %v1407
    %1409 = vmatprep.mubr.bf16.mxu0 %v1022
    %1410 = vmatmul.mubr.bf16.gmra.mrb[0].mxu0 %v1021
    %v1411 = vpop.f32.mrb[0].mxu0
    %v1412 = vadd.f32 %v1060, %v1411
    %v1413 = vpop.f32.mrb[0].mxu0
    %v1414 = vadd.f32 %v1064, %v1413
    %v1415 = vpop.f32.mrb[0].mxu0
    %v1416 = vadd.f32 %v1060, %v1415
    %v1417 = vpop.f32.mrb[0].mxu0
    %v1418 = vadd.f32 %v1064, %v1417
    %1419 = vdwg.mxu0
    %v1420 = vmax.f32 %v1262, 0.0
    %v1421 = vmax.f32 %v1264, 0.0
    %v1422 = vmax.f32 %v1266, 0.0
    %v1423 = vmax.f32 %v1268, 0.0
    %v1424 = vmax.f32 %v1272, 0.0
    %v1425 = vmax.f32 %v1274, 0.0
    %v1426 = vmax.f32 %v1276, 0.0
    %v1427 = vmax.f32 %v1278, 0.0
    %v1428 = vmax.f32 %v1282, 0.0
    %v1429 = vmax.f32 %v1284, 0.0
    %v1430 = vmax.f32 %v1286, 0.0
    %v1431 = vmax.f32 %v1288, 0.0
    %v1432 = vmax.f32 %v1292, 0.0
    %v1433 = vmax.f32 %v1294, 0.0
    %v1434 = vmax.f32 %v1296, 0.0
    %v1435 = vmax.f32 %v1298, 0.0
    %v1436 = vmax.f32 %v1302, 0.0
    %v1437 = vmax.f32 %v1304, 0.0
    %v1438 = vmax.f32 %v1306, 0.0
    %v1439 = vmax.f32 %v1308, 0.0
    %v1440 = vmax.f32 %v1312, 0.0
    %v1441 = vmax.f32 %v1314, 0.0
    %v1442 = vmax.f32 %v1316, 0.0
    %v1443 = vmax.f32 %v1318, 0.0
    %v1444 = vmax.f32 %v1322, 0.0
    %v1445 = vmax.f32 %v1324, 0.0
    %v1446 = vmax.f32 %v1326, 0.0
    %v1447 = vmax.f32 %v1328, 0.0
    %v1448 = vmax.f32 %v1332, 0.0
    %v1449 = vmax.f32 %v1334, 0.0
    %v1450 = vmax.f32 %v1336, 0.0
    %v1451 = vmax.f32 %v1338, 0.0
    %v1452 = vmax.f32 %v1342, 0.0
    %v1453 = vmax.f32 %v1344, 0.0
    %v1454 = vmax.f32 %v1346, 0.0
    %v1455 = vmax.f32 %v1348, 0.0
    %v1456 = vmax.f32 %v1352, 0.0
    %v1457 = vmax.f32 %v1354, 0.0
    %v1458 = vmax.f32 %v1356, 0.0
    %v1459 = vmax.f32 %v1358, 0.0
    %v1460 = vmax.f32 %v1362, 0.0
    %v1461 = vmax.f32 %v1364, 0.0
    %v1462 = vmax.f32 %v1366, 0.0
    %v1463 = vmax.f32 %v1368, 0.0
    %v1464 = vmax.f32 %v1372, 0.0
    %v1465 = vmax.f32 %v1374, 0.0
    %v1466 = vmax.f32 %v1376, 0.0
    %v1467 = vmax.f32 %v1378, 0.0
    %v1468 = vmax.f32 %v1382, 0.0
    %v1469 = vmax.f32 %v1384, 0.0
    %v1470 = vmax.f32 %v1386, 0.0
    %v1471 = vmax.f32 %v1388, 0.0
    %v1472 = vmax.f32 %v1392, 0.0
    %v1473 = vmax.f32 %v1394, 0.0
    %v1474 = vmax.f32 %v1396, 0.0
    %v1475 = vmax.f32 %v1398, 0.0
    %v1476 = vmax.f32 %v1402, 0.0
    %v1477 = vmax.f32 %v1404, 0.0
    %v1478 = vmax.f32 %v1406, 0.0
    %v1479 = vmax.f32 %v1408, 0.0
    %v1480 = vmax.f32 %v1412, 0.0
    %v1481 = vmax.f32 %v1414, 0.0
    %v1482 = vmax.f32 %v1416, 0.0
    %v1483 = vmax.f32 %v1418, 0.0
    %v1484 = vpack.c.bf16 %v1422, %v1420
    %v1485 = vpack.c.bf16 %v1423, %v1421
    %v1486 = vpack.c.bf16 %v1426, %v1424
    %v1487 = vpack.c.bf16 %v1427, %v1425
    %v1488 = vpack.c.bf16 %v1430, %v1428
    %v1489 = vpack.c.bf16 %v1431, %v1429
    %v1490 = vpack.c.bf16 %v1434, %v1432
    %v1491 = vpack.c.bf16 %v1435, %v1433
    %v1492 = vpack.c.bf16 %v1438, %v1436
    %v1493 = vpack.c.bf16 %v1439, %v1437
    %v1494 = vpack.c.bf16 %v1442, %v1440
    %v1495 = vpack.c.bf16 %v1443, %v1441
    %v1496 = vpack.c.bf16 %v1446, %v1444
    %v1497 = vpack.c.bf16 %v1447, %v1445
    %v1498 = vpack.c.bf16 %v1450, %v1448
    %v1499 = vpack.c.bf16 %v1451, %v1449
    %v1500 = vpack.c.bf16 %v1454, %v1452
    %v1501 = vpack.c.bf16 %v1455, %v1453
    %v1502 = vpack.c.bf16 %v1458, %v1456
    %v1503 = vpack.c.bf16 %v1459, %v1457
    %v1504 = vpack.c.bf16 %v1462, %v1460
    %v1505 = vpack.c.bf16 %v1463, %v1461
    %v1506 = vpack.c.bf16 %v1466, %v1464
    %v1507 = vpack.c.bf16 %v1467, %v1465
    %v1508 = vpack.c.bf16 %v1470, %v1468
    %v1509 = vpack.c.bf16 %v1471, %v1469
    %v1510 = vpack.c.bf16 %v1474, %v1472
    %v1511 = vpack.c.bf16 %v1475, %v1473
    %v1512 = vpack.c.bf16 %v1478, %v1476
    %v1513 = vpack.c.bf16 %v1479, %v1477
    %v1514 = vpack.c.bf16 %v1482, %v1480
    %v1515 = vpack.c.bf16 %v1483, %v1481
    %s1516 = scalar_lea.vmem [#allocation2], 256
    %v1517 = vld [vmem:[%s1516] sm:$0xff]
    %v1518 = vld [vmem:[%s1516 + $0x8] sm:$0xff]
    %v1519 = vld [vmem:[%s1516 + $0x10] sm:$0xff]
    %v1520 = vld [vmem:[%s1516 + $0x18] sm:$0xff]
    %v1521 = vld [vmem:[%s1516 + $0x20] sm:$0xff]
    %v1522 = vld [vmem:[%s1516 + $0x28] sm:$0xff]
    %v1523 = vld [vmem:[%s1516 + $0x30] sm:$0xff]
    %v1524 = vld [vmem:[%s1516 + $0x38] sm:$0xff]
    %v1525 = vld [vmem:[%s1516 + $0x40] sm:$0xff]
    %v1526 = vld [vmem:[%s1516 + $0x48] sm:$0xff]
    %v1527 = vld [vmem:[%s1516 + $0x50] sm:$0xff]
    %v1528 = vld [vmem:[%s1516 + $0x58] sm:$0xff]
    %v1529 = vld [vmem:[%s1516 + $0x60] sm:$0xff]
    %v1530 = vld [vmem:[%s1516 + $0x68] sm:$0xff]
    %v1531 = vld [vmem:[%s1516 + $0x70] sm:$0xff]
    %v1532 = vld [vmem:[%s1516 + $0x78] sm:$0xff]
    %v1533 = vld [vmem:[%s1516 + $0x80] sm:$0xff]
    %v1534 = vld [vmem:[%s1516 + $0x88] sm:$0xff]
    %v1535 = vld [vmem:[%s1516 + $0x90] sm:$0xff]
    %v1536 = vld [vmem:[%s1516 + $0x98] sm:$0xff]
    %v1537 = vld [vmem:[%s1516 + $0xa0] sm:$0xff]
    %v1538 = vld [vmem:[%s1516 + $0xa8] sm:$0xff]
    %v1539 = vld [vmem:[%s1516 + $0xb0] sm:$0xff]
    %v1540 = vld [vmem:[%s1516 + $0xb8] sm:$0xff]
    %v1541 = vld [vmem:[%s1516 + $0xc0] sm:$0xff]
    %v1542 = vld [vmem:[%s1516 + $0xc8] sm:$0xff]
    %v1543 = vld [vmem:[%s1516 + $0xd0] sm:$0xff]
    %v1544 = vld [vmem:[%s1516 + $0xd8] sm:$0xff]
    %v1545 = vld [vmem:[%s1516 + $0xe0] sm:$0xff]
    %v1546 = vld [vmem:[%s1516 + $0xe8] sm:$0xff]
    %v1547 = vld [vmem:[%s1516 + $0xf0] sm:$0xff]
    %v1548 = vld [vmem:[%s1516 + $0xf8] sm:$0xff]
    %s1549 = scalar_lea.vmem %s4, 2
    %v1550 = vld [vmem:[%s1549] sm:$0x3]
    %v1552 = vlaneseq
    %v1553 = vshrl.u32 %v1552, 7
    %v1554 = vsub.s32 0, %v1553
    %v1555 = vrot.slane %v1550, %v1554
    %v1556 = vlaneseq
    %v1557 = vshrl.u32 %v1556, 7
    %v1558 = vsub.s32 1, %v1557
    %v1559 = vrot.slane %v1550, %v1558
    %v1594 = vunpack.c.l.b16 %v1517
    %v1595 = vunpack.c.h.b16 %v1517
    %v1596 = vunpack.c.l.b16 %v1518
    %v1597 = vunpack.c.h.b16 %v1518
    %v1598 = vunpack.c.l.b16 %v1519
    %v1599 = vunpack.c.h.b16 %v1519
    %v1600 = vunpack.c.l.b16 %v1520
    %v1601 = vunpack.c.h.b16 %v1520
    %v1602 = vunpack.c.l.b16 %v1521
    %v1603 = vunpack.c.h.b16 %v1521
    %v1604 = vunpack.c.l.b16 %v1522
    %v1605 = vunpack.c.h.b16 %v1522
    %v1606 = vunpack.c.l.b16 %v1523
    %v1607 = vunpack.c.h.b16 %v1523
    %v1608 = vunpack.c.l.b16 %v1524
    %v1609 = vunpack.c.h.b16 %v1524
    %v1610 = vunpack.c.l.b16 %v1525
    %v1611 = vunpack.c.h.b16 %v1525
    %v1612 = vunpack.c.l.b16 %v1526
    %v1613 = vunpack.c.h.b16 %v1526
    %v1614 = vunpack.c.l.b16 %v1527
    %v1615 = vunpack.c.h.b16 %v1527
    %v1616 = vunpack.c.l.b16 %v1528
    %v1617 = vunpack.c.h.b16 %v1528
    %v1618 = vunpack.c.l.b16 %v1529
    %v1619 = vunpack.c.h.b16 %v1529
    %v1620 = vunpack.c.l.b16 %v1530
    %v1621 = vunpack.c.h.b16 %v1530
    %v1622 = vunpack.c.l.b16 %v1531
    %v1623 = vunpack.c.h.b16 %v1531
    %v1624 = vunpack.c.l.b16 %v1532
    %v1625 = vunpack.c.h.b16 %v1532
    %v1626 = vunpack.c.l.b16 %v1533
    %v1627 = vunpack.c.h.b16 %v1533
    %v1628 = vunpack.c.l.b16 %v1534
    %v1629 = vunpack.c.h.b16 %v1534
    %v1630 = vunpack.c.l.b16 %v1535
    %v1631 = vunpack.c.h.b16 %v1535
    %v1632 = vunpack.c.l.b16 %v1536
    %v1633 = vunpack.c.h.b16 %v1536
    %v1634 = vunpack.c.l.b16 %v1537
    %v1635 = vunpack.c.h.b16 %v1537
    %v1636 = vunpack.c.l.b16 %v1538
    %v1637 = vunpack.c.h.b16 %v1538
    %v1638 = vunpack.c.l.b16 %v1539
    %v1639 = vunpack.c.h.b16 %v1539
    %v1640 = vunpack.c.l.b16 %v1540
    %v1641 = vunpack.c.h.b16 %v1540
    %v1642 = vunpack.c.l.b16 %v1541
    %v1643 = vunpack.c.h.b16 %v1541
    %v1644 = vunpack.c.l.b16 %v1542
    %v1645 = vunpack.c.h.b16 %v1542
    %v1646 = vunpack.c.l.b16 %v1543
    %v1647 = vunpack.c.h.b16 %v1543
    %v1648 = vunpack.c.l.b16 %v1544
    %v1649 = vunpack.c.h.b16 %v1544
    %v1650 = vunpack.c.l.b16 %v1545
    %v1651 = vunpack.c.h.b16 %v1545
    %v1652 = vunpack.c.l.b16 %v1546
    %v1653 = vunpack.c.h.b16 %v1546
    %v1654 = vunpack.c.l.b16 %v1547
    %v1655 = vunpack.c.h.b16 %v1547
    %v1656 = vunpack.c.l.b16 %v1548
    %v1657 = vunpack.c.h.b16 %v1548
    %v1658 = vpack.c.b16 %v1596, %v1594
    %v1659 = vpack.c.b16 %v1597, %v1595
    %v1660 = vpack.c.b16 %v1600, %v1598
    %v1661 = vpack.c.b16 %v1601, %v1599
    %v1662 = vpack.c.b16 %v1604, %v1602
    %v1663 = vpack.c.b16 %v1605, %v1603
    %v1664 = vpack.c.b16 %v1608, %v1606
    %v1665 = vpack.c.b16 %v1609, %v1607
    %v1666 = vpack.c.b16 %v1612, %v1610
    %v1667 = vpack.c.b16 %v1613, %v1611
    %v1668 = vpack.c.b16 %v1616, %v1614
    %v1669 = vpack.c.b16 %v1617, %v1615
    %v1670 = vpack.c.b16 %v1620, %v1618
    %v1671 = vpack.c.b16 %v1621, %v1619
    %v1672 = vpack.c.b16 %v1624, %v1622
    %v1673 = vpack.c.b16 %v1625, %v1623
    %v1674 = vpack.c.b16 %v1628, %v1626
    %v1675 = vpack.c.b16 %v1629, %v1627
    %v1676 = vpack.c.b16 %v1632, %v1630
    %v1677 = vpack.c.b16 %v1633, %v1631
    %v1678 = vpack.c.b16 %v1636, %v1634
    %v1679 = vpack.c.b16 %v1637, %v1635
    %v1680 = vpack.c.b16 %v1640, %v1638
    %v1681 = vpack.c.b16 %v1641, %v1639
    %v1682 = vpack.c.b16 %v1644, %v1642
    %v1683 = vpack.c.b16 %v1645, %v1643
    %v1684 = vpack.c.b16 %v1648, %v1646
    %v1685 = vpack.c.b16 %v1649, %v1647
    %v1686 = vpack.c.b16 %v1652, %v1650
    %v1687 = vpack.c.b16 %v1653, %v1651
    %v1688 = vpack.c.b16 %v1656, %v1654
    %v1689 = vpack.c.b16 %v1657, %v1655
    %1722 = vmatprep.subr.bf16.mxu0 %v1659
    %1723 = vmatpush1.bf16.msra.mxu0 %v1658
    %1724 = vmatprep.subr.bf16.mxu0 %v1661
    %1725 = vmatpush1.bf16.msra.mxu0 %v1660
    %1726 = vmatprep.subr.bf16.mxu0 %v1663
    %1727 = vmatpush1.bf16.msra.mxu0 %v1662
    %1728 = vmatprep.subr.bf16.mxu0 %v1665
    %1729 = vmatpush1.bf16.msra.mxu0 %v1664
    %1730 = vmatprep.subr.bf16.mxu0 %v1667
    %1731 = vmatpush1.bf16.msra.mxu0 %v1666
    %1732 = vmatprep.subr.bf16.mxu0 %v1669
    %1733 = vmatpush1.bf16.msra.mxu0 %v1668
    %1734 = vmatprep.subr.bf16.mxu0 %v1671
    %1735 = vmatpush1.bf16.msra.mxu0 %v1670
    %1736 = vmatprep.subr.bf16.mxu0 %v1673
    %1737 = vmatpush1.bf16.msra.mxu0 %v1672
    %1738 = vmatprep.subr.bf16.mxu0 %v1675
    %1739 = vmatpush1.bf16.msra.mxu0 %v1674
    %1740 = vmatprep.subr.bf16.mxu0 %v1677
    %1741 = vmatpush1.bf16.msra.mxu0 %v1676
    %1742 = vmatprep.subr.bf16.mxu0 %v1679
    %1743 = vmatpush1.bf16.msra.mxu0 %v1678
    %1744 = vmatprep.subr.bf16.mxu0 %v1681
    %1745 = vmatpush1.bf16.msra.mxu0 %v1680
    %1746 = vmatprep.subr.bf16.mxu0 %v1683
    %1747 = vmatpush1.bf16.msra.mxu0 %v1682
    %1748 = vmatprep.subr.bf16.mxu0 %v1685
    %1749 = vmatpush1.bf16.msra.mxu0 %v1684
    %1750 = vmatprep.subr.bf16.mxu0 %v1687
    %1751 = vmatpush1.bf16.msra.mxu0 %v1686
    %1752 = vmatprep.subr.bf16.mxu0 %v1689
    %1753 = vmatpush1.bf16.msra.mxu0 %v1688
    %1754 = vmatprep.mubr.bf16.mxu0 %v1485
    %1755 = vmatmul.mubr.bf16.gmra.mrb[0].mxu0 %v1484
    %v1756 = vpop.f32.mrb[0].mxu0
    %v1757 = vadd.f32 %v1555, %v1756
    %v1758 = vpop.f32.mrb[0].mxu0
    %v1759 = vadd.f32 %v1559, %v1758
    %v1760 = vpop.f32.mrb[0].mxu0
    %v1761 = vadd.f32 %v1555, %v1760
    %v1762 = vpop.f32.mrb[0].mxu0
    %v1763 = vadd.f32 %v1559, %v1762
    %1764 = vmatprep.mubr.bf16.mxu0 %v1487
    %1765 = vmatmul.mubr.bf16.gmra.mrb[0].mxu0 %v1486
    %v1766 = vpop.f32.mrb[0].mxu0
    %v1767 = vadd.f32 %v1555, %v1766
    %v1768 = vpop.f32.mrb[0].mxu0
    %v1769 = vadd.f32 %v1559, %v1768
    %v1770 = vpop.f32.mrb[0].mxu0
    %v1771 = vadd.f32 %v1555, %v1770
    %v1772 = vpop.f32.mrb[0].mxu0
    %v1773 = vadd.f32 %v1559, %v1772
    %1774 = vmatprep.mubr.bf16.mxu0 %v1489
    %1775 = vmatmul.mubr.bf16.gmra.mrb[0].mxu0 %v1488
    %v1776 = vpop.f32.mrb[0].mxu0
    %v1777 = vadd.f32 %v1555, %v1776
    %v1778 = vpop.f32.mrb[0].mxu0
    %v1779 = vadd.f32 %v1559, %v1778
    %v1780 = vpop.f32.mrb[0].mxu0
    %v1781 = vadd.f32 %v1555, %v1780
    %v1782 = vpop.f32.mrb[0].mxu0
    %v1783 = vadd.f32 %v1559, %v1782
    %1784 = vmatprep.mubr.bf16.mxu0 %v1491
    %1785 = vmatmul.mubr.bf16.gmra.mrb[0].mxu0 %v1490
    %v1786 = vpop.f32.mrb[0].mxu0
    %v1787 = vadd.f32 %v1555, %v1786
    %v1788 = vpop.f32.mrb[0].mxu0
    %v1789 = vadd.f32 %v1559, %v1788
    %v1790 = vpop.f32.mrb[0].mxu0
    %v1791 = vadd.f32 %v1555, %v1790
    %v1792 = vpop.f32.mrb[0].mxu0
    %v1793 = vadd.f32 %v1559, %v1792
    %1794 = vmatprep.mubr.bf16.mxu0 %v1493
    %1795 = vmatmul.mubr.bf16.gmra.mrb[0].mxu0 %v1492
    %v1796 = vpop.f32.mrb[0].mxu0
    %v1797 = vadd.f32 %v1555, %v1796
    %v1798 = vpop.f32.mrb[0].mxu0
    %v1799 = vadd.f32 %v1559, %v1798
    %v1800 = vpop.f32.mrb[0].mxu0
    %v1801 = vadd.f32 %v1555, %v1800
    %v1802 = vpop.f32.mrb[0].mxu0
    %v1803 = vadd.f32 %v1559, %v1802
    %1804 = vmatprep.mubr.bf16.mxu0 %v1495
    %1805 = vmatmul.mubr.bf16.gmra.mrb[0].mxu0 %v1494
    %v1806 = vpop.f32.mrb[0].mxu0
    %v1807 = vadd.f32 %v1555, %v1806
    %v1808 = vpop.f32.mrb[0].mxu0
    %v1809 = vadd.f32 %v1559, %v1808
    %v1810 = vpop.f32.mrb[0].mxu0
    %v1811 = vadd.f32 %v1555, %v1810
    %v1812 = vpop.f32.mrb[0].mxu0
    %v1813 = vadd.f32 %v1559, %v1812
    %1814 = vmatprep.mubr.bf16.mxu0 %v1497
    %1815 = vmatmul.mubr.bf16.gmra.mrb[0].mxu0 %v1496
    %v1816 = vpop.f32.mrb[0].mxu0
    %v1817 = vadd.f32 %v1555, %v1816
    %v1818 = vpop.f32.mrb[0].mxu0
    %v1819 = vadd.f32 %v1559, %v1818
    %v1820 = vpop.f32.mrb[0].mxu0
    %v1821 = vadd.f32 %v1555, %v1820
    %v1822 = vpop.f32.mrb[0].mxu0
    %v1823 = vadd.f32 %v1559, %v1822
    %1824 = vmatprep.mubr.bf16.mxu0 %v1499
    %1825 = vmatmul.mubr.bf16.gmra.mrb[0].mxu0 %v1498
    %v1826 = vpop.f32.mrb[0].mxu0
    %v1827 = vadd.f32 %v1555, %v1826
    %v1828 = vpop.f32.mrb[0].mxu0
    %v1829 = vadd.f32 %v1559, %v1828
    %v1830 = vpop.f32.mrb[0].mxu0
    %v1831 = vadd.f32 %v1555, %v1830
    %v1832 = vpop.f32.mrb[0].mxu0
    %v1833 = vadd.f32 %v1559, %v1832
    %1834 = vmatprep.mubr.bf16.mxu0 %v1501
    %1835 = vmatmul.mubr.bf16.gmra.mrb[0].mxu0 %v1500
    %v1836 = vpop.f32.mrb[0].mxu0
    %v1837 = vadd.f32 %v1555, %v1836
    %v1838 = vpop.f32.mrb[0].mxu0
    %v1839 = vadd.f32 %v1559, %v1838
    %v1840 = vpop.f32.mrb[0].mxu0
    %v1841 = vadd.f32 %v1555, %v1840
    %v1842 = vpop.f32.mrb[0].mxu0
    %v1843 = vadd.f32 %v1559, %v1842
    %1844 = vmatprep.mubr.bf16.mxu0 %v1503
    %1845 = vmatmul.mubr.bf16.gmra.mrb[0].mxu0 %v1502
    %v1846 = vpop.f32.mrb[0].mxu0
    %v1847 = vadd.f32 %v1555, %v1846
    %v1848 = vpop.f32.mrb[0].mxu0
    %v1849 = vadd.f32 %v1559, %v1848
    %v1850 = vpop.f32.mrb[0].mxu0
    %v1851 = vadd.f32 %v1555, %v1850
    %v1852 = vpop.f32.mrb[0].mxu0
    %v1853 = vadd.f32 %v1559, %v1852
    %1854 = vmatprep.mubr.bf16.mxu0 %v1505
    %1855 = vmatmul.mubr.bf16.gmra.mrb[0].mxu0 %v1504
    %v1856 = vpop.f32.mrb[0].mxu0
    %v1857 = vadd.f32 %v1555, %v1856
    %v1858 = vpop.f32.mrb[0].mxu0
    %v1859 = vadd.f32 %v1559, %v1858
    %v1860 = vpop.f32.mrb[0].mxu0
    %v1861 = vadd.f32 %v1555, %v1860
    %v1862 = vpop.f32.mrb[0].mxu0
    %v1863 = vadd.f32 %v1559, %v1862
    %1864 = vmatprep.mubr.bf16.mxu0 %v1507
    %1865 = vmatmul.mubr.bf16.gmra.mrb[0].mxu0 %v1506
    %v1866 = vpop.f32.mrb[0].mxu0
    %v1867 = vadd.f32 %v1555, %v1866
    %v1868 = vpop.f32.mrb[0].mxu0
    %v1869 = vadd.f32 %v1559, %v1868
    %v1870 = vpop.f32.mrb[0].mxu0
    %v1871 = vadd.f32 %v1555, %v1870
    %v1872 = vpop.f32.mrb[0].mxu0
    %v1873 = vadd.f32 %v1559, %v1872
    %1874 = vmatprep.mubr.bf16.mxu0 %v1509
    %1875 = vmatmul.mubr.bf16.gmra.mrb[0].mxu0 %v1508
    %v1876 = vpop.f32.mrb[0].mxu0
    %v1877 = vadd.f32 %v1555, %v1876
    %v1878 = vpop.f32.mrb[0].mxu0
    %v1879 = vadd.f32 %v1559, %v1878
    %v1880 = vpop.f32.mrb[0].mxu0
    %v1881 = vadd.f32 %v1555, %v1880
    %v1882 = vpop.f32.mrb[0].mxu0
    %v1883 = vadd.f32 %v1559, %v1882
    %1884 = vmatprep.mubr.bf16.mxu0 %v1511
    %1885 = vmatmul.mubr.bf16.gmra.mrb[0].mxu0 %v1510
    %v1886 = vpop.f32.mrb[0].mxu0
    %v1887 = vadd.f32 %v1555, %v1886
    %v1888 = vpop.f32.mrb[0].mxu0
    %v1889 = vadd.f32 %v1559, %v1888
    %v1890 = vpop.f32.mrb[0].mxu0
    %v1891 = vadd.f32 %v1555, %v1890
    %v1892 = vpop.f32.mrb[0].mxu0
    %v1893 = vadd.f32 %v1559, %v1892
    %1894 = vmatprep.mubr.bf16.mxu0 %v1513
    %1895 = vmatmul.mubr.bf16.gmra.mrb[0].mxu0 %v1512
    %v1896 = vpop.f32.mrb[0].mxu0
    %v1897 = vadd.f32 %v1555, %v1896
    %v1898 = vpop.f32.mrb[0].mxu0
    %v1899 = vadd.f32 %v1559, %v1898
    %v1900 = vpop.f32.mrb[0].mxu0
    %v1901 = vadd.f32 %v1555, %v1900
    %v1902 = vpop.f32.mrb[0].mxu0
    %v1903 = vadd.f32 %v1559, %v1902
    %1904 = vmatprep.mubr.bf16.mxu0 %v1515
    %1905 = vmatmul.mubr.bf16.gmra.mrb[0].mxu0 %v1514
    %v1906 = vpop.f32.mrb[0].mxu0
    %v1907 = vadd.f32 %v1555, %v1906
    %v1908 = vpop.f32.mrb[0].mxu0
    %v1909 = vadd.f32 %v1559, %v1908
    %v1910 = vpop.f32.mrb[0].mxu0
    %v1911 = vadd.f32 %v1555, %v1910
    %v1912 = vpop.f32.mrb[0].mxu0
    %v1913 = vadd.f32 %v1559, %v1912
    %1914 = vdwg.mxu0
    %v1915 = vmax.f32 %v1757, 0.0
    %v1916 = vmax.f32 %v1759, 0.0
    %v1917 = vmax.f32 %v1761, 0.0
    %v1918 = vmax.f32 %v1763, 0.0
    %v1919 = vmax.f32 %v1767, 0.0
    %v1920 = vmax.f32 %v1769, 0.0
    %v1921 = vmax.f32 %v1771, 0.0
    %v1922 = vmax.f32 %v1773, 0.0
    %v1923 = vmax.f32 %v1777, 0.0
    %v1924 = vmax.f32 %v1779, 0.0
    %v1925 = vmax.f32 %v1781, 0.0
    %v1926 = vmax.f32 %v1783, 0.0
    %v1927 = vmax.f32 %v1787, 0.0
    %v1928 = vmax.f32 %v1789, 0.0
    %v1929 = vmax.f32 %v1791, 0.0
    %v1930 = vmax.f32 %v1793, 0.0
    %v1931 = vmax.f32 %v1797, 0.0
    %v1932 = vmax.f32 %v1799, 0.0
    %v1933 = vmax.f32 %v1801, 0.0
    %v1934 = vmax.f32 %v1803, 0.0
    %v1935 = vmax.f32 %v1807, 0.0
    %v1936 = vmax.f32 %v1809, 0.0
    %v1937 = vmax.f32 %v1811, 0.0
    %v1938 = vmax.f32 %v1813, 0.0
    %v1939 = vmax.f32 %v1817, 0.0
    %v1940 = vmax.f32 %v1819, 0.0
    %v1941 = vmax.f32 %v1821, 0.0
    %v1942 = vmax.f32 %v1823, 0.0
    %v1943 = vmax.f32 %v1827, 0.0
    %v1944 = vmax.f32 %v1829, 0.0
    %v1945 = vmax.f32 %v1831, 0.0
    %v1946 = vmax.f32 %v1833, 0.0
    %v1947 = vmax.f32 %v1837, 0.0
    %v1948 = vmax.f32 %v1839, 0.0
    %v1949 = vmax.f32 %v1841, 0.0
    %v1950 = vmax.f32 %v1843, 0.0
    %v1951 = vmax.f32 %v1847, 0.0
    %v1952 = vmax.f32 %v1849, 0.0
    %v1953 = vmax.f32 %v1851, 0.0
    %v1954 = vmax.f32 %v1853, 0.0
    %v1955 = vmax.f32 %v1857, 0.0
    %v1956 = vmax.f32 %v1859, 0.0
    %v1957 = vmax.f32 %v1861, 0.0
    %v1958 = vmax.f32 %v1863, 0.0
    %v1959 = vmax.f32 %v1867, 0.0
    %v1960 = vmax.f32 %v1869, 0.0
    %v1961 = vmax.f32 %v1871, 0.0
    %v1962 = vmax.f32 %v1873, 0.0
    %v1963 = vmax.f32 %v1877, 0.0
    %v1964 = vmax.f32 %v1879, 0.0
    %v1965 = vmax.f32 %v1881, 0.0
    %v1966 = vmax.f32 %v1883, 0.0
    %v1967 = vmax.f32 %v1887, 0.0
    %v1968 = vmax.f32 %v1889, 0.0
    %v1969 = vmax.f32 %v1891, 0.0
    %v1970 = vmax.f32 %v1893, 0.0
    %v1971 = vmax.f32 %v1897, 0.0
    %v1972 = vmax.f32 %v1899, 0.0
    %v1973 = vmax.f32 %v1901, 0.0
    %v1974 = vmax.f32 %v1903, 0.0
    %v1975 = vmax.f32 %v1907, 0.0
    %v1976 = vmax.f32 %v1909, 0.0
    %v1977 = vmax.f32 %v1911, 0.0
    %v1978 = vmax.f32 %v1913, 0.0
    %v1979 = vpack.c.bf16 %v1917, %v1915
    %v1980 = vpack.c.bf16 %v1918, %v1916
    %v1981 = vpack.c.bf16 %v1921, %v1919
    %v1982 = vpack.c.bf16 %v1922, %v1920
    %v1983 = vpack.c.bf16 %v1925, %v1923
    %v1984 = vpack.c.bf16 %v1926, %v1924
    %v1985 = vpack.c.bf16 %v1929, %v1927
    %v1986 = vpack.c.bf16 %v1930, %v1928
    %v1987 = vpack.c.bf16 %v1933, %v1931
    %v1988 = vpack.c.bf16 %v1934, %v1932
    %v1989 = vpack.c.bf16 %v1937, %v1935
    %v1990 = vpack.c.bf16 %v1938, %v1936
    %v1991 = vpack.c.bf16 %v1941, %v1939
    %v1992 = vpack.c.bf16 %v1942, %v1940
    %v1993 = vpack.c.bf16 %v1945, %v1943
    %v1994 = vpack.c.bf16 %v1946, %v1944
    %v1995 = vpack.c.bf16 %v1949, %v1947
    %v1996 = vpack.c.bf16 %v1950, %v1948
    %v1997 = vpack.c.bf16 %v1953, %v1951
    %v1998 = vpack.c.bf16 %v1954, %v1952
    %v1999 = vpack.c.bf16 %v1957, %v1955
    %v2000 = vpack.c.bf16 %v1958, %v1956
    %v2001 = vpack.c.bf16 %v1961, %v1959
    %v2002 = vpack.c.bf16 %v1962, %v1960
    %v2003 = vpack.c.bf16 %v1965, %v1963
    %v2004 = vpack.c.bf16 %v1966, %v1964
    %v2005 = vpack.c.bf16 %v1969, %v1967
    %v2006 = vpack.c.bf16 %v1970, %v1968
    %v2007 = vpack.c.bf16 %v1973, %v1971
    %v2008 = vpack.c.bf16 %v1974, %v1972
    %v2009 = vpack.c.bf16 %v1977, %v1975
    %v2010 = vpack.c.bf16 %v1978, %v1976
    %s2011 = scalar_lea.vmem [#allocation2], 512
    %v2012 = vld [vmem:[%s2011] sm:$0xff]
    %v2013 = vld [vmem:[%s2011 + $0x8] sm:$0xff]
    %v2014 = vld [vmem:[%s2011 + $0x10] sm:$0xff]
    %v2015 = vld [vmem:[%s2011 + $0x18] sm:$0xff]
    %v2016 = vld [vmem:[%s2011 + $0x20] sm:$0xff]
    %v2017 = vld [vmem:[%s2011 + $0x28] sm:$0xff]
    %v2018 = vld [vmem:[%s2011 + $0x30] sm:$0xff]
    %v2019 = vld [vmem:[%s2011 + $0x38] sm:$0xff]
    %v2020 = vld [vmem:[%s2011 + $0x40] sm:$0xff]
    %v2021 = vld [vmem:[%s2011 + $0x48] sm:$0xff]
    %v2022 = vld [vmem:[%s2011 + $0x50] sm:$0xff]
    %v2023 = vld [vmem:[%s2011 + $0x58] sm:$0xff]
    %v2024 = vld [vmem:[%s2011 + $0x60] sm:$0xff]
    %v2025 = vld [vmem:[%s2011 + $0x68] sm:$0xff]
    %v2026 = vld [vmem:[%s2011 + $0x70] sm:$0xff]
    %v2027 = vld [vmem:[%s2011 + $0x78] sm:$0xff]
    %v2028 = vld [vmem:[%s2011 + $0x80] sm:$0xff]
    %v2029 = vld [vmem:[%s2011 + $0x88] sm:$0xff]
    %v2030 = vld [vmem:[%s2011 + $0x90] sm:$0xff]
    %v2031 = vld [vmem:[%s2011 + $0x98] sm:$0xff]
    %v2032 = vld [vmem:[%s2011 + $0xa0] sm:$0xff]
    %v2033 = vld [vmem:[%s2011 + $0xa8] sm:$0xff]
    %v2034 = vld [vmem:[%s2011 + $0xb0] sm:$0xff]
    %v2035 = vld [vmem:[%s2011 + $0xb8] sm:$0xff]
    %v2036 = vld [vmem:[%s2011 + $0xc0] sm:$0xff]
    %v2037 = vld [vmem:[%s2011 + $0xc8] sm:$0xff]
    %v2038 = vld [vmem:[%s2011 + $0xd0] sm:$0xff]
    %v2039 = vld [vmem:[%s2011 + $0xd8] sm:$0xff]
    %v2040 = vld [vmem:[%s2011 + $0xe0] sm:$0xff]
    %v2041 = vld [vmem:[%s2011 + $0xe8] sm:$0xff]
    %v2042 = vld [vmem:[%s2011 + $0xf0] sm:$0xff]
    %v2043 = vld [vmem:[%s2011 + $0xf8] sm:$0xff]
    %s2044 = scalar_lea.vmem %s4, 4
    %v2045 = vld [vmem:[%s2044] sm:$0x3]
    %v2047 = vlaneseq
    %v2048 = vshrl.u32 %v2047, 7
    %v2049 = vsub.s32 0, %v2048
    %v2050 = vrot.slane %v2045, %v2049
    %v2051 = vlaneseq
    %v2052 = vshrl.u32 %v2051, 7
    %v2053 = vsub.s32 1, %v2052
    %v2054 = vrot.slane %v2045, %v2053
    %v2089 = vunpack.c.l.b16 %v2012
    %v2090 = vunpack.c.h.b16 %v2012
    %v2091 = vunpack.c.l.b16 %v2013
    %v2092 = vunpack.c.h.b16 %v2013
    %v2093 = vunpack.c.l.b16 %v2014
    %v2094 = vunpack.c.h.b16 %v2014
    %v2095 = vunpack.c.l.b16 %v2015
    %v2096 = vunpack.c.h.b16 %v2015
    %v2097 = vunpack.c.l.b16 %v2016
    %v2098 = vunpack.c.h.b16 %v2016
    %v2099 = vunpack.c.l.b16 %v2017
    %v2100 = vunpack.c.h.b16 %v2017
    %v2101 = vunpack.c.l.b16 %v2018
    %v2102 = vunpack.c.h.b16 %v2018
    %v2103 = vunpack.c.l.b16 %v2019
    %v2104 = vunpack.c.h.b16 %v2019
    %v2105 = vunpack.c.l.b16 %v2020
    %v2106 = vunpack.c.h.b16 %v2020
    %v2107 = vunpack.c.l.b16 %v2021
    %v2108 = vunpack.c.h.b16 %v2021
    %v2109 = vunpack.c.l.b16 %v2022
    %v2110 = vunpack.c.h.b16 %v2022
    %v2111 = vunpack.c.l.b16 %v2023
    %v2112 = vunpack.c.h.b16 %v2023
    %v2113 = vunpack.c.l.b16 %v2024
    %v2114 = vunpack.c.h.b16 %v2024
    %v2115 = vunpack.c.l.b16 %v2025
    %v2116 = vunpack.c.h.b16 %v2025
    %v2117 = vunpack.c.l.b16 %v2026
    %v2118 = vunpack.c.h.b16 %v2026
    %v2119 = vunpack.c.l.b16 %v2027
    %v2120 = vunpack.c.h.b16 %v2027
    %v2121 = vunpack.c.l.b16 %v2028
    %v2122 = vunpack.c.h.b16 %v2028
    %v2123 = vunpack.c.l.b16 %v2029
    %v2124 = vunpack.c.h.b16 %v2029
    %v2125 = vunpack.c.l.b16 %v2030
    %v2126 = vunpack.c.h.b16 %v2030
    %v2127 = vunpack.c.l.b16 %v2031
    %v2128 = vunpack.c.h.b16 %v2031
    %v2129 = vunpack.c.l.b16 %v2032
    %v2130 = vunpack.c.h.b16 %v2032
    %v2131 = vunpack.c.l.b16 %v2033
    %v2132 = vunpack.c.h.b16 %v2033
    %v2133 = vunpack.c.l.b16 %v2034
    %v2134 = vunpack.c.h.b16 %v2034
    %v2135 = vunpack.c.l.b16 %v2035
    %v2136 = vunpack.c.h.b16 %v2035
    %v2137 = vunpack.c.l.b16 %v2036
    %v2138 = vunpack.c.h.b16 %v2036
    %v2139 = vunpack.c.l.b16 %v2037
    %v2140 = vunpack.c.h.b16 %v2037
    %v2141 = vunpack.c.l.b16 %v2038
    %v2142 = vunpack.c.h.b16 %v2038
    %v2143 = vunpack.c.l.b16 %v2039
    %v2144 = vunpack.c.h.b16 %v2039
    %v2145 = vunpack.c.l.b16 %v2040
    %v2146 = vunpack.c.h.b16 %v2040
    %v2147 = vunpack.c.l.b16 %v2041
    %v2148 = vunpack.c.h.b16 %v2041
    %v2149 = vunpack.c.l.b16 %v2042
    %v2150 = vunpack.c.h.b16 %v2042
    %v2151 = vunpack.c.l.b16 %v2043
    %v2152 = vunpack.c.h.b16 %v2043
    %v2153 = vpack.c.b16 %v2091, %v2089
    %v2154 = vpack.c.b16 %v2092, %v2090
    %v2155 = vpack.c.b16 %v2095, %v2093
    %v2156 = vpack.c.b16 %v2096, %v2094
    %v2157 = vpack.c.b16 %v2099, %v2097
    %v2158 = vpack.c.b16 %v2100, %v2098
    %v2159 = vpack.c.b16 %v2103, %v2101
    %v2160 = vpack.c.b16 %v2104, %v2102
    %v2161 = vpack.c.b16 %v2107, %v2105
    %v2162 = vpack.c.b16 %v2108, %v2106
    %v2163 = vpack.c.b16 %v2111, %v2109
    %v2164 = vpack.c.b16 %v2112, %v2110
    %v2165 = vpack.c.b16 %v2115, %v2113
    %v2166 = vpack.c.b16 %v2116, %v2114
    %v2167 = vpack.c.b16 %v2119, %v2117
    %v2168 = vpack.c.b16 %v2120, %v2118
    %v2169 = vpack.c.b16 %v2123, %v2121
    %v2170 = vpack.c.b16 %v2124, %v2122
    %v2171 = vpack.c.b16 %v2127, %v2125
    %v2172 = vpack.c.b16 %v2128, %v2126
    %v2173 = vpack.c.b16 %v2131, %v2129
    %v2174 = vpack.c.b16 %v2132, %v2130
    %v2175 = vpack.c.b16 %v2135, %v2133
    %v2176 = vpack.c.b16 %v2136, %v2134
    %v2177 = vpack.c.b16 %v2139, %v2137
    %v2178 = vpack.c.b16 %v2140, %v2138
    %v2179 = vpack.c.b16 %v2143, %v2141
    %v2180 = vpack.c.b16 %v2144, %v2142
    %v2181 = vpack.c.b16 %v2147, %v2145
    %v2182 = vpack.c.b16 %v2148, %v2146
    %v2183 = vpack.c.b16 %v2151, %v2149
    %v2184 = vpack.c.b16 %v2152, %v2150
    %2217 = vmatprep.subr.bf16.mxu0 %v2154
    %2218 = vmatpush1.bf16.msra.mxu0 %v2153
    %2219 = vmatprep.subr.bf16.mxu0 %v2156
    %2220 = vmatpush1.bf16.msra.mxu0 %v2155
    %2221 = vmatprep.subr.bf16.mxu0 %v2158
    %2222 = vmatpush1.bf16.msra.mxu0 %v2157
    %2223 = vmatprep.subr.bf16.mxu0 %v2160
    %2224 = vmatpush1.bf16.msra.mxu0 %v2159
    %2225 = vmatprep.subr.bf16.mxu0 %v2162
    %2226 = vmatpush1.bf16.msra.mxu0 %v2161
    %2227 = vmatprep.subr.bf16.mxu0 %v2164
    %2228 = vmatpush1.bf16.msra.mxu0 %v2163
    %2229 = vmatprep.subr.bf16.mxu0 %v2166
    %2230 = vmatpush1.bf16.msra.mxu0 %v2165
    %2231 = vmatprep.subr.bf16.mxu0 %v2168
    %2232 = vmatpush1.bf16.msra.mxu0 %v2167
    %2233 = vmatprep.subr.bf16.mxu0 %v2170
    %2234 = vmatpush1.bf16.msra.mxu0 %v2169
    %2235 = vmatprep.subr.bf16.mxu0 %v2172
    %2236 = vmatpush1.bf16.msra.mxu0 %v2171
    %2237 = vmatprep.subr.bf16.mxu0 %v2174
    %2238 = vmatpush1.bf16.msra.mxu0 %v2173
    %2239 = vmatprep.subr.bf16.mxu0 %v2176
    %2240 = vmatpush1.bf16.msra.mxu0 %v2175
    %2241 = vmatprep.subr.bf16.mxu0 %v2178
    %2242 = vmatpush1.bf16.msra.mxu0 %v2177
    %2243 = vmatprep.subr.bf16.mxu0 %v2180
    %2244 = vmatpush1.bf16.msra.mxu0 %v2179
    %2245 = vmatprep.subr.bf16.mxu0 %v2182
    %2246 = vmatpush1.bf16.msra.mxu0 %v2181
    %2247 = vmatprep.subr.bf16.mxu0 %v2184
    %2248 = vmatpush1.bf16.msra.mxu0 %v2183
    %2249 = vmatprep.mubr.bf16.mxu0 %v1980
    %2250 = vmatmul.mubr.bf16.gmra.mrb[0].mxu0 %v1979
    %v2251 = vpop.f32.mrb[0].mxu0
    %v2252 = vadd.f32 %v2050, %v2251
    %v2253 = vpop.f32.mrb[0].mxu0
    %v2254 = vadd.f32 %v2054, %v2253
    %v2255 = vpop.f32.mrb[0].mxu0
    %v2256 = vadd.f32 %v2050, %v2255
    %v2257 = vpop.f32.mrb[0].mxu0
    %v2258 = vadd.f32 %v2054, %v2257
    %2259 = vmatprep.mubr.bf16.mxu0 %v1982
    %2260 = vmatmul.mubr.bf16.gmra.mrb[0].mxu0 %v1981
    %v2261 = vpop.f32.mrb[0].mxu0
    %v2262 = vadd.f32 %v2050, %v2261
    %v2263 = vpop.f32.mrb[0].mxu0
    %v2264 = vadd.f32 %v2054, %v2263
    %v2265 = vpop.f32.mrb[0].mxu0
    %v2266 = vadd.f32 %v2050, %v2265
    %v2267 = vpop.f32.mrb[0].mxu0
    %v2268 = vadd.f32 %v2054, %v2267
    %2269 = vmatprep.mubr.bf16.mxu0 %v1984
    %2270 = vmatmul.mubr.bf16.gmra.mrb[0].mxu0 %v1983
    %v2271 = vpop.f32.mrb[0].mxu0
    %v2272 = vadd.f32 %v2050, %v2271
    %v2273 = vpop.f32.mrb[0].mxu0
    %v2274 = vadd.f32 %v2054, %v2273
    %v2275 = vpop.f32.mrb[0].mxu0
    %v2276 = vadd.f32 %v2050, %v2275
    %v2277 = vpop.f32.mrb[0].mxu0
    %v2278 = vadd.f32 %v2054, %v2277
    %2279 = vmatprep.mubr.bf16.mxu0 %v1986
    %2280 = vmatmul.mubr.bf16.gmra.mrb[0].mxu0 %v1985
    %v2281 = vpop.f32.mrb[0].mxu0
    %v2282 = vadd.f32 %v2050, %v2281
    %v2283 = vpop.f32.mrb[0].mxu0
    %v2284 = vadd.f32 %v2054, %v2283
    %v2285 = vpop.f32.mrb[0].mxu0
    %v2286 = vadd.f32 %v2050, %v2285
    %v2287 = vpop.f32.mrb[0].mxu0
    %v2288 = vadd.f32 %v2054, %v2287
    %2289 = vmatprep.mubr.bf16.mxu0 %v1988
    %2290 = vmatmul.mubr.bf16.gmra.mrb[0].mxu0 %v1987
    %v2291 = vpop.f32.mrb[0].mxu0
    %v2292 = vadd.f32 %v2050, %v2291
    %v2293 = vpop.f32.mrb[0].mxu0
    %v2294 = vadd.f32 %v2054, %v2293
    %v2295 = vpop.f32.mrb[0].mxu0
    %v2296 = vadd.f32 %v2050, %v2295
    %v2297 = vpop.f32.mrb[0].mxu0
    %v2298 = vadd.f32 %v2054, %v2297
    %2299 = vmatprep.mubr.bf16.mxu0 %v1990
    %2300 = vmatmul.mubr.bf16.gmra.mrb[0].mxu0 %v1989
    %v2301 = vpop.f32.mrb[0].mxu0
    %v2302 = vadd.f32 %v2050, %v2301
    %v2303 = vpop.f32.mrb[0].mxu0
    %v2304 = vadd.f32 %v2054, %v2303
    %v2305 = vpop.f32.mrb[0].mxu0
    %v2306 = vadd.f32 %v2050, %v2305
    %v2307 = vpop.f32.mrb[0].mxu0
    %v2308 = vadd.f32 %v2054, %v2307
    %2309 = vmatprep.mubr.bf16.mxu0 %v1992
    %2310 = vmatmul.mubr.bf16.gmra.mrb[0].mxu0 %v1991
    %v2311 = vpop.f32.mrb[0].mxu0
    %v2312 = vadd.f32 %v2050, %v2311
    %v2313 = vpop.f32.mrb[0].mxu0
    %v2314 = vadd.f32 %v2054, %v2313
    %v2315 = vpop.f32.mrb[0].mxu0
    %v2316 = vadd.f32 %v2050, %v2315
    %v2317 = vpop.f32.mrb[0].mxu0
    %v2318 = vadd.f32 %v2054, %v2317
    %2319 = vmatprep.mubr.bf16.mxu0 %v1994
    %2320 = vmatmul.mubr.bf16.gmra.mrb[0].mxu0 %v1993
    %v2321 = vpop.f32.mrb[0].mxu0
    %v2322 = vadd.f32 %v2050, %v2321
    %v2323 = vpop.f32.mrb[0].mxu0
    %v2324 = vadd.f32 %v2054, %v2323
    %v2325 = vpop.f32.mrb[0].mxu0
    %v2326 = vadd.f32 %v2050, %v2325
    %v2327 = vpop.f32.mrb[0].mxu0
    %v2328 = vadd.f32 %v2054, %v2327
    %2329 = vmatprep.mubr.bf16.mxu0 %v1996
    %2330 = vmatmul.mubr.bf16.gmra.mrb[0].mxu0 %v1995
    %v2331 = vpop.f32.mrb[0].mxu0
    %v2332 = vadd.f32 %v2050, %v2331
    %v2333 = vpop.f32.mrb[0].mxu0
    %v2334 = vadd.f32 %v2054, %v2333
    %v2335 = vpop.f32.mrb[0].mxu0
    %v2336 = vadd.f32 %v2050, %v2335
    %v2337 = vpop.f32.mrb[0].mxu0
    %v2338 = vadd.f32 %v2054, %v2337
    %2339 = vmatprep.mubr.bf16.mxu0 %v1998
    %2340 = vmatmul.mubr.bf16.gmra.mrb[0].mxu0 %v1997
    %v2341 = vpop.f32.mrb[0].mxu0
    %v2342 = vadd.f32 %v2050, %v2341
    %v2343 = vpop.f32.mrb[0].mxu0
    %v2344 = vadd.f32 %v2054, %v2343
    %v2345 = vpop.f32.mrb[0].mxu0
    %v2346 = vadd.f32 %v2050, %v2345
    %v2347 = vpop.f32.mrb[0].mxu0
    %v2348 = vadd.f32 %v2054, %v2347
    %2349 = vmatprep.mubr.bf16.mxu0 %v2000
    %2350 = vmatmul.mubr.bf16.gmra.mrb[0].mxu0 %v1999
    %v2351 = vpop.f32.mrb[0].mxu0
    %v2352 = vadd.f32 %v2050, %v2351
    %v2353 = vpop.f32.mrb[0].mxu0
    %v2354 = vadd.f32 %v2054, %v2353
    %v2355 = vpop.f32.mrb[0].mxu0
    %v2356 = vadd.f32 %v2050, %v2355
    %v2357 = vpop.f32.mrb[0].mxu0
    %v2358 = vadd.f32 %v2054, %v2357
    %2359 = vmatprep.mubr.bf16.mxu0 %v2002
    %2360 = vmatmul.mubr.bf16.gmra.mrb[0].mxu0 %v2001
    %v2361 = vpop.f32.mrb[0].mxu0
    %v2362 = vadd.f32 %v2050, %v2361
    %v2363 = vpop.f32.mrb[0].mxu0
    %v2364 = vadd.f32 %v2054, %v2363
    %v2365 = vpop.f32.mrb[0].mxu0
    %v2366 = vadd.f32 %v2050, %v2365
    %v2367 = vpop.f32.mrb[0].mxu0
    %v2368 = vadd.f32 %v2054, %v2367
    %2369 = vmatprep.mubr.bf16.mxu0 %v2004
    %2370 = vmatmul.mubr.bf16.gmra.mrb[0].mxu0 %v2003
    %v2371 = vpop.f32.mrb[0].mxu0
    %v2372 = vadd.f32 %v2050, %v2371
    %v2373 = vpop.f32.mrb[0].mxu0
    %v2374 = vadd.f32 %v2054, %v2373
    %v2375 = vpop.f32.mrb[0].mxu0
    %v2376 = vadd.f32 %v2050, %v2375
    %v2377 = vpop.f32.mrb[0].mxu0
    %v2378 = vadd.f32 %v2054, %v2377
    %2379 = vmatprep.mubr.bf16.mxu0 %v2006
    %2380 = vmatmul.mubr.bf16.gmra.mrb[0].mxu0 %v2005
    %v2381 = vpop.f32.mrb[0].mxu0
    %v2382 = vadd.f32 %v2050, %v2381
    %v2383 = vpop.f32.mrb[0].mxu0
    %v2384 = vadd.f32 %v2054, %v2383
    %v2385 = vpop.f32.mrb[0].mxu0
    %v2386 = vadd.f32 %v2050, %v2385
    %v2387 = vpop.f32.mrb[0].mxu0
    %v2388 = vadd.f32 %v2054, %v2387
    %2389 = vmatprep.mubr.bf16.mxu0 %v2008
    %2390 = vmatmul.mubr.bf16.gmra.mrb[0].mxu0 %v2007
    %v2391 = vpop.f32.mrb[0].mxu0
    %v2392 = vadd.f32 %v2050, %v2391
    %v2393 = vpop.f32.mrb[0].mxu0
    %v2394 = vadd.f32 %v2054, %v2393
    %v2395 = vpop.f32.mrb[0].mxu0
    %v2396 = vadd.f32 %v2050, %v2395
    %v2397 = vpop.f32.mrb[0].mxu0
    %v2398 = vadd.f32 %v2054, %v2397
    %2399 = vmatprep.mubr.bf16.mxu0 %v2010
    %2400 = vmatmul.mubr.bf16.gmra.mrb[0].mxu0 %v2009
    %v2401 = vpop.f32.mrb[0].mxu0
    %v2402 = vadd.f32 %v2050, %v2401
    %v2403 = vpop.f32.mrb[0].mxu0
    %v2404 = vadd.f32 %v2054, %v2403
    %v2405 = vpop.f32.mrb[0].mxu0
    %v2406 = vadd.f32 %v2050, %v2405
    %v2407 = vpop.f32.mrb[0].mxu0
    %v2408 = vadd.f32 %v2054, %v2407
    %2409 = vdwg.mxu0
    %v2410 = vmax.f32 %v2252, 0.0
    %v2411 = vmax.f32 %v2254, 0.0
    %v2412 = vmax.f32 %v2256, 0.0
    %v2413 = vmax.f32 %v2258, 0.0
    %v2414 = vmax.f32 %v2262, 0.0
    %v2415 = vmax.f32 %v2264, 0.0
    %v2416 = vmax.f32 %v2266, 0.0
    %v2417 = vmax.f32 %v2268, 0.0
    %v2418 = vmax.f32 %v2272, 0.0
    %v2419 = vmax.f32 %v2274, 0.0
    %v2420 = vmax.f32 %v2276, 0.0
    %v2421 = vmax.f32 %v2278, 0.0
    %v2422 = vmax.f32 %v2282, 0.0
    %v2423 = vmax.f32 %v2284, 0.0
    %v2424 = vmax.f32 %v2286, 0.0
    %v2425 = vmax.f32 %v2288, 0.0
    %v2426 = vmax.f32 %v2292, 0.0
    %v2427 = vmax.f32 %v2294, 0.0
    %v2428 = vmax.f32 %v2296, 0.0
    %v2429 = vmax.f32 %v2298, 0.0
    %v2430 = vmax.f32 %v2302, 0.0
    %v2431 = vmax.f32 %v2304, 0.0
    %v2432 = vmax.f32 %v2306, 0.0
    %v2433 = vmax.f32 %v2308, 0.0
    %v2434 = vmax.f32 %v2312, 0.0
    %v2435 = vmax.f32 %v2314, 0.0
    %v2436 = vmax.f32 %v2316, 0.0
    %v2437 = vmax.f32 %v2318, 0.0
    %v2438 = vmax.f32 %v2322, 0.0
    %v2439 = vmax.f32 %v2324, 0.0
    %v2440 = vmax.f32 %v2326, 0.0
    %v2441 = vmax.f32 %v2328, 0.0
    %v2442 = vmax.f32 %v2332, 0.0
    %v2443 = vmax.f32 %v2334, 0.0
    %v2444 = vmax.f32 %v2336, 0.0
    %v2445 = vmax.f32 %v2338, 0.0
    %v2446 = vmax.f32 %v2342, 0.0
    %v2447 = vmax.f32 %v2344, 0.0
    %v2448 = vmax.f32 %v2346, 0.0
    %v2449 = vmax.f32 %v2348, 0.0
    %v2450 = vmax.f32 %v2352, 0.0
    %v2451 = vmax.f32 %v2354, 0.0
    %v2452 = vmax.f32 %v2356, 0.0
    %v2453 = vmax.f32 %v2358, 0.0
    %v2454 = vmax.f32 %v2362, 0.0
    %v2455 = vmax.f32 %v2364, 0.0
    %v2456 = vmax.f32 %v2366, 0.0
    %v2457 = vmax.f32 %v2368, 0.0
    %v2458 = vmax.f32 %v2372, 0.0
    %v2459 = vmax.f32 %v2374, 0.0
    %v2460 = vmax.f32 %v2376, 0.0
    %v2461 = vmax.f32 %v2378, 0.0
    %v2462 = vmax.f32 %v2382, 0.0
    %v2463 = vmax.f32 %v2384, 0.0
    %v2464 = vmax.f32 %v2386, 0.0
    %v2465 = vmax.f32 %v2388, 0.0
    %v2466 = vmax.f32 %v2392, 0.0
    %v2467 = vmax.f32 %v2394, 0.0
    %v2468 = vmax.f32 %v2396, 0.0
    %v2469 = vmax.f32 %v2398, 0.0
    %v2470 = vmax.f32 %v2402, 0.0
    %v2471 = vmax.f32 %v2404, 0.0
    %v2472 = vmax.f32 %v2406, 0.0
    %v2473 = vmax.f32 %v2408, 0.0
    %v2474 = vpack.c.bf16 %v2412, %v2410
    %v2475 = vpack.c.bf16 %v2413, %v2411
    %v2476 = vpack.c.bf16 %v2416, %v2414
    %v2477 = vpack.c.bf16 %v2417, %v2415
    %v2478 = vpack.c.bf16 %v2420, %v2418
    %v2479 = vpack.c.bf16 %v2421, %v2419
    %v2480 = vpack.c.bf16 %v2424, %v2422
    %v2481 = vpack.c.bf16 %v2425, %v2423
    %v2482 = vpack.c.bf16 %v2428, %v2426
    %v2483 = vpack.c.bf16 %v2429, %v2427
    %v2484 = vpack.c.bf16 %v2432, %v2430
    %v2485 = vpack.c.bf16 %v2433, %v2431
    %v2486 = vpack.c.bf16 %v2436, %v2434
    %v2487 = vpack.c.bf16 %v2437, %v2435
    %v2488 = vpack.c.bf16 %v2440, %v2438
    %v2489 = vpack.c.bf16 %v2441, %v2439
    %v2490 = vpack.c.bf16 %v2444, %v2442
    %v2491 = vpack.c.bf16 %v2445, %v2443
    %v2492 = vpack.c.bf16 %v2448, %v2446
    %v2493 = vpack.c.bf16 %v2449, %v2447
    %v2494 = vpack.c.bf16 %v2452, %v2450
    %v2495 = vpack.c.bf16 %v2453, %v2451
    %v2496 = vpack.c.bf16 %v2456, %v2454
    %v2497 = vpack.c.bf16 %v2457, %v2455
    %v2498 = vpack.c.bf16 %v2460, %v2458
    %v2499 = vpack.c.bf16 %v2461, %v2459
    %v2500 = vpack.c.bf16 %v2464, %v2462
    %v2501 = vpack.c.bf16 %v2465, %v2463
    %v2502 = vpack.c.bf16 %v2468, %v2466
    %v2503 = vpack.c.bf16 %v2469, %v2467
    %v2504 = vpack.c.bf16 %v2472, %v2470
    %v2505 = vpack.c.bf16 %v2473, %v2471
    %s2506 = scalar_lea.vmem [#allocation2], 768
    %v2507 = vld [vmem:[%s2506] sm:$0xff]
    %v2508 = vld [vmem:[%s2506 + $0x8] sm:$0xff]
    %v2509 = vld [vmem:[%s2506 + $0x10] sm:$0xff]
    %v2510 = vld [vmem:[%s2506 + $0x18] sm:$0xff]
    %v2511 = vld [vmem:[%s2506 + $0x20] sm:$0xff]
    %v2512 = vld [vmem:[%s2506 + $0x28] sm:$0xff]
    %v2513 = vld [vmem:[%s2506 + $0x30] sm:$0xff]
    %v2514 = vld [vmem:[%s2506 + $0x38] sm:$0xff]
    %v2515 = vld [vmem:[%s2506 + $0x40] sm:$0xff]
    %v2516 = vld [vmem:[%s2506 + $0x48] sm:$0xff]
    %v2517 = vld [vmem:[%s2506 + $0x50] sm:$0xff]
    %v2518 = vld [vmem:[%s2506 + $0x58] sm:$0xff]
    %v2519 = vld [vmem:[%s2506 + $0x60] sm:$0xff]
    %v2520 = vld [vmem:[%s2506 + $0x68] sm:$0xff]
    %v2521 = vld [vmem:[%s2506 + $0x70] sm:$0xff]
    %v2522 = vld [vmem:[%s2506 + $0x78] sm:$0xff]
    %v2523 = vld [vmem:[%s2506 + $0x80] sm:$0xff]
    %v2524 = vld [vmem:[%s2506 + $0x88] sm:$0xff]
    %v2525 = vld [vmem:[%s2506 + $0x90] sm:$0xff]
    %v2526 = vld [vmem:[%s2506 + $0x98] sm:$0xff]
    %v2527 = vld [vmem:[%s2506 + $0xa0] sm:$0xff]
    %v2528 = vld [vmem:[%s2506 + $0xa8] sm:$0xff]
    %v2529 = vld [vmem:[%s2506 + $0xb0] sm:$0xff]
    %v2530 = vld [vmem:[%s2506 + $0xb8] sm:$0xff]
    %v2531 = vld [vmem:[%s2506 + $0xc0] sm:$0xff]
    %v2532 = vld [vmem:[%s2506 + $0xc8] sm:$0xff]
    %v2533 = vld [vmem:[%s2506 + $0xd0] sm:$0xff]
    %v2534 = vld [vmem:[%s2506 + $0xd8] sm:$0xff]
    %v2535 = vld [vmem:[%s2506 + $0xe0] sm:$0xff]
    %v2536 = vld [vmem:[%s2506 + $0xe8] sm:$0xff]
    %v2537 = vld [vmem:[%s2506 + $0xf0] sm:$0xff]
    %v2538 = vld [vmem:[%s2506 + $0xf8] sm:$0xff]
    %s2539 = scalar_lea.vmem %s4, 6
    %v2540 = vld [vmem:[%s2539] sm:$0x3]
    %v2542 = vlaneseq
    %v2543 = vshrl.u32 %v2542, 7
    %v2544 = vsub.s32 0, %v2543
    %v2545 = vrot.slane %v2540, %v2544
    %v2546 = vlaneseq
    %v2547 = vshrl.u32 %v2546, 7
    %v2548 = vsub.s32 1, %v2547
    %v2549 = vrot.slane %v2540, %v2548
    %v2584 = vunpack.c.l.b16 %v2507
    %v2585 = vunpack.c.h.b16 %v2507
    %v2586 = vunpack.c.l.b16 %v2508
    %v2587 = vunpack.c.h.b16 %v2508
    %v2588 = vunpack.c.l.b16 %v2509
    %v2589 = vunpack.c.h.b16 %v2509
    %v2590 = vunpack.c.l.b16 %v2510
    %v2591 = vunpack.c.h.b16 %v2510
    %v2592 = vunpack.c.l.b16 %v2511
    %v2593 = vunpack.c.h.b16 %v2511
    %v2594 = vunpack.c.l.b16 %v2512
    %v2595 = vunpack.c.h.b16 %v2512
    %v2596 = vunpack.c.l.b16 %v2513
    %v2597 = vunpack.c.h.b16 %v2513
    %v2598 = vunpack.c.l.b16 %v2514
    %v2599 = vunpack.c.h.b16 %v2514
    %v2600 = vunpack.c.l.b16 %v2515
    %v2601 = vunpack.c.h.b16 %v2515
    %v2602 = vunpack.c.l.b16 %v2516
    %v2603 = vunpack.c.h.b16 %v2516
    %v2604 = vunpack.c.l.b16 %v2517
    %v2605 = vunpack.c.h.b16 %v2517
    %v2606 = vunpack.c.l.b16 %v2518
    %v2607 = vunpack.c.h.b16 %v2518
    %v2608 = vunpack.c.l.b16 %v2519
    %v2609 = vunpack.c.h.b16 %v2519
    %v2610 = vunpack.c.l.b16 %v2520
    %v2611 = vunpack.c.h.b16 %v2520
    %v2612 = vunpack.c.l.b16 %v2521
    %v2613 = vunpack.c.h.b16 %v2521
    %v2614 = vunpack.c.l.b16 %v2522
    %v2615 = vunpack.c.h.b16 %v2522
    %v2616 = vunpack.c.l.b16 %v2523
    %v2617 = vunpack.c.h.b16 %v2523
    %v2618 = vunpack.c.l.b16 %v2524
    %v2619 = vunpack.c.h.b16 %v2524
    %v2620 = vunpack.c.l.b16 %v2525
    %v2621 = vunpack.c.h.b16 %v2525
    %v2622 = vunpack.c.l.b16 %v2526
    %v2623 = vunpack.c.h.b16 %v2526
    %v2624 = vunpack.c.l.b16 %v2527
    %v2625 = vunpack.c.h.b16 %v2527
    %v2626 = vunpack.c.l.b16 %v2528
    %v2627 = vunpack.c.h.b16 %v2528
    %v2628 = vunpack.c.l.b16 %v2529
    %v2629 = vunpack.c.h.b16 %v2529
    %v2630 = vunpack.c.l.b16 %v2530
    %v2631 = vunpack.c.h.b16 %v2530
    %v2632 = vunpack.c.l.b16 %v2531
    %v2633 = vunpack.c.h.b16 %v2531
    %v2634 = vunpack.c.l.b16 %v2532
    %v2635 = vunpack.c.h.b16 %v2532
    %v2636 = vunpack.c.l.b16 %v2533
    %v2637 = vunpack.c.h.b16 %v2533
    %v2638 = vunpack.c.l.b16 %v2534
    %v2639 = vunpack.c.h.b16 %v2534
    %v2640 = vunpack.c.l.b16 %v2535
    %v2641 = vunpack.c.h.b16 %v2535
    %v2642 = vunpack.c.l.b16 %v2536
    %v2643 = vunpack.c.h.b16 %v2536
    %v2644 = vunpack.c.l.b16 %v2537
    %v2645 = vunpack.c.h.b16 %v2537
    %v2646 = vunpack.c.l.b16 %v2538
    %v2647 = vunpack.c.h.b16 %v2538
    %v2648 = vpack.c.b16 %v2586, %v2584
    %v2649 = vpack.c.b16 %v2587, %v2585
    %v2650 = vpack.c.b16 %v2590, %v2588
    %v2651 = vpack.c.b16 %v2591, %v2589
    %v2652 = vpack.c.b16 %v2594, %v2592
    %v2653 = vpack.c.b16 %v2595, %v2593
    %v2654 = vpack.c.b16 %v2598, %v2596
    %v2655 = vpack.c.b16 %v2599, %v2597
    %v2656 = vpack.c.b16 %v2602, %v2600
    %v2657 = vpack.c.b16 %v2603, %v2601
    %v2658 = vpack.c.b16 %v2606, %v2604
    %v2659 = vpack.c.b16 %v2607, %v2605
    %v2660 = vpack.c.b16 %v2610, %v2608
    %v2661 = vpack.c.b16 %v2611, %v2609
    %v2662 = vpack.c.b16 %v2614, %v2612
    %v2663 = vpack.c.b16 %v2615, %v2613
    %v2664 = vpack.c.b16 %v2618, %v2616
    %v2665 = vpack.c.b16 %v2619, %v2617
    %v2666 = vpack.c.b16 %v2622, %v2620
    %v2667 = vpack.c.b16 %v2623, %v2621
    %v2668 = vpack.c.b16 %v2626, %v2624
    %v2669 = vpack.c.b16 %v2627, %v2625
    %v2670 = vpack.c.b16 %v2630, %v2628
    %v2671 = vpack.c.b16 %v2631, %v2629
    %v2672 = vpack.c.b16 %v2634, %v2632
    %v2673 = vpack.c.b16 %v2635, %v2633
    %v2674 = vpack.c.b16 %v2638, %v2636
    %v2675 = vpack.c.b16 %v2639, %v2637
    %v2676 = vpack.c.b16 %v2642, %v2640
    %v2677 = vpack.c.b16 %v2643, %v2641
    %v2678 = vpack.c.b16 %v2646, %v2644
    %v2679 = vpack.c.b16 %v2647, %v2645
    %2712 = vmatprep.subr.bf16.mxu0 %v2649
    %2713 = vmatpush1.bf16.msra.mxu0 %v2648
    %2714 = vmatprep.subr.bf16.mxu0 %v2651
    %2715 = vmatpush1.bf16.msra.mxu0 %v2650
    %2716 = vmatprep.subr.bf16.mxu0 %v2653
    %2717 = vmatpush1.bf16.msra.mxu0 %v2652
    %2718 = vmatprep.subr.bf16.mxu0 %v2655
    %2719 = vmatpush1.bf16.msra.mxu0 %v2654
    %2720 = vmatprep.subr.bf16.mxu0 %v2657
    %2721 = vmatpush1.bf16.msra.mxu0 %v2656
    %2722 = vmatprep.subr.bf16.mxu0 %v2659
    %2723 = vmatpush1.bf16.msra.mxu0 %v2658
    %2724 = vmatprep.subr.bf16.mxu0 %v2661
    %2725 = vmatpush1.bf16.msra.mxu0 %v2660
    %2726 = vmatprep.subr.bf16.mxu0 %v2663
    %2727 = vmatpush1.bf16.msra.mxu0 %v2662
    %2728 = vmatprep.subr.bf16.mxu0 %v2665
    %2729 = vmatpush1.bf16.msra.mxu0 %v2664
    %2730 = vmatprep.subr.bf16.mxu0 %v2667
    %2731 = vmatpush1.bf16.msra.mxu0 %v2666
    %2732 = vmatprep.subr.bf16.mxu0 %v2669
    %2733 = vmatpush1.bf16.msra.mxu0 %v2668
    %2734 = vmatprep.subr.bf16.mxu0 %v2671
    %2735 = vmatpush1.bf16.msra.mxu0 %v2670
    %2736 = vmatprep.subr.bf16.mxu0 %v2673
    %2737 = vmatpush1.bf16.msra.mxu0 %v2672
    %2738 = vmatprep.subr.bf16.mxu0 %v2675
    %2739 = vmatpush1.bf16.msra.mxu0 %v2674
    %2740 = vmatprep.subr.bf16.mxu0 %v2677
    %2741 = vmatpush1.bf16.msra.mxu0 %v2676
    %2742 = vmatprep.subr.bf16.mxu0 %v2679
    %2743 = vmatpush1.bf16.msra.mxu0 %v2678
    %2744 = vmatprep.mubr.bf16.mxu0 %v2475
    %2745 = vmatmul.mubr.bf16.gmra.mrb[0].mxu0 %v2474
    %v2746 = vpop.f32.mrb[0].mxu0
    %v2747 = vadd.f32 %v2545, %v2746
    %v2748 = vpop.f32.mrb[0].mxu0
    %v2749 = vadd.f32 %v2549, %v2748
    %v2750 = vpop.f32.mrb[0].mxu0
    %v2751 = vadd.f32 %v2545, %v2750
    %v2752 = vpop.f32.mrb[0].mxu0
    %v2753 = vadd.f32 %v2549, %v2752
    %2754 = vmatprep.mubr.bf16.mxu0 %v2477
    %2755 = vmatmul.mubr.bf16.gmra.mrb[0].mxu0 %v2476
    %v2756 = vpop.f32.mrb[0].mxu0
    %v2757 = vadd.f32 %v2545, %v2756
    %v2758 = vpop.f32.mrb[0].mxu0
    %v2759 = vadd.f32 %v2549, %v2758
    %v2760 = vpop.f32.mrb[0].mxu0
    %v2761 = vadd.f32 %v2545, %v2760
    %v2762 = vpop.f32.mrb[0].mxu0
    %v2763 = vadd.f32 %v2549, %v2762
    %2764 = vmatprep.mubr.bf16.mxu0 %v2479
    %2765 = vmatmul.mubr.bf16.gmra.mrb[0].mxu0 %v2478
    %v2766 = vpop.f32.mrb[0].mxu0
    %v2767 = vadd.f32 %v2545, %v2766
    %v2768 = vpop.f32.mrb[0].mxu0
    %v2769 = vadd.f32 %v2549, %v2768
    %v2770 = vpop.f32.mrb[0].mxu0
    %v2771 = vadd.f32 %v2545, %v2770
    %v2772 = vpop.f32.mrb[0].mxu0
    %v2773 = vadd.f32 %v2549, %v2772
    %2774 = vmatprep.mubr.bf16.mxu0 %v2481
    %2775 = vmatmul.mubr.bf16.gmra.mrb[0].mxu0 %v2480
    %v2776 = vpop.f32.mrb[0].mxu0
    %v2777 = vadd.f32 %v2545, %v2776
    %v2778 = vpop.f32.mrb[0].mxu0
    %v2779 = vadd.f32 %v2549, %v2778
    %v2780 = vpop.f32.mrb[0].mxu0
    %v2781 = vadd.f32 %v2545, %v2780
    %v2782 = vpop.f32.mrb[0].mxu0
    %v2783 = vadd.f32 %v2549, %v2782
    %2784 = vmatprep.mubr.bf16.mxu0 %v2483
    %2785 = vmatmul.mubr.bf16.gmra.mrb[0].mxu0 %v2482
    %v2786 = vpop.f32.mrb[0].mxu0
    %v2787 = vadd.f32 %v2545, %v2786
    %v2788 = vpop.f32.mrb[0].mxu0
    %v2789 = vadd.f32 %v2549, %v2788
    %v2790 = vpop.f32.mrb[0].mxu0
    %v2791 = vadd.f32 %v2545, %v2790
    %v2792 = vpop.f32.mrb[0].mxu0
    %v2793 = vadd.f32 %v2549, %v2792
    %2794 = vmatprep.mubr.bf16.mxu0 %v2485
    %2795 = vmatmul.mubr.bf16.gmra.mrb[0].mxu0 %v2484
    %v2796 = vpop.f32.mrb[0].mxu0
    %v2797 = vadd.f32 %v2545, %v2796
    %v2798 = vpop.f32.mrb[0].mxu0
    %v2799 = vadd.f32 %v2549, %v2798
    %v2800 = vpop.f32.mrb[0].mxu0
    %v2801 = vadd.f32 %v2545, %v2800
    %v2802 = vpop.f32.mrb[0].mxu0
    %v2803 = vadd.f32 %v2549, %v2802
    %2804 = vmatprep.mubr.bf16.mxu0 %v2487
    %2805 = vmatmul.mubr.bf16.gmra.mrb[0].mxu0 %v2486
    %v2806 = vpop.f32.mrb[0].mxu0
    %v2807 = vadd.f32 %v2545, %v2806
    %v2808 = vpop.f32.mrb[0].mxu0
    %v2809 = vadd.f32 %v2549, %v2808
    %v2810 = vpop.f32.mrb[0].mxu0
    %v2811 = vadd.f32 %v2545, %v2810
    %v2812 = vpop.f32.mrb[0].mxu0
    %v2813 = vadd.f32 %v2549, %v2812
    %2814 = vmatprep.mubr.bf16.mxu0 %v2489
    %2815 = vmatmul.mubr.bf16.gmra.mrb[0].mxu0 %v2488
    %v2816 = vpop.f32.mrb[0].mxu0
    %v2817 = vadd.f32 %v2545, %v2816
    %v2818 = vpop.f32.mrb[0].mxu0
    %v2819 = vadd.f32 %v2549, %v2818
    %v2820 = vpop.f32.mrb[0].mxu0
    %v2821 = vadd.f32 %v2545, %v2820
    %v2822 = vpop.f32.mrb[0].mxu0
    %v2823 = vadd.f32 %v2549, %v2822
    %2824 = vmatprep.mubr.bf16.mxu0 %v2491
    %2825 = vmatmul.mubr.bf16.gmra.mrb[0].mxu0 %v2490
    %v2826 = vpop.f32.mrb[0].mxu0
    %v2827 = vadd.f32 %v2545, %v2826
    %v2828 = vpop.f32.mrb[0].mxu0
    %v2829 = vadd.f32 %v2549, %v2828
    %v2830 = vpop.f32.mrb[0].mxu0
    %v2831 = vadd.f32 %v2545, %v2830
    %v2832 = vpop.f32.mrb[0].mxu0
    %v2833 = vadd.f32 %v2549, %v2832
    %2834 = vmatprep.mubr.bf16.mxu0 %v2493
    %2835 = vmatmul.mubr.bf16.gmra.mrb[0].mxu0 %v2492
    %v2836 = vpop.f32.mrb[0].mxu0
    %v2837 = vadd.f32 %v2545, %v2836
    %v2838 = vpop.f32.mrb[0].mxu0
    %v2839 = vadd.f32 %v2549, %v2838
    %v2840 = vpop.f32.mrb[0].mxu0
    %v2841 = vadd.f32 %v2545, %v2840
    %v2842 = vpop.f32.mrb[0].mxu0
    %v2843 = vadd.f32 %v2549, %v2842
    %2844 = vmatprep.mubr.bf16.mxu0 %v2495
    %2845 = vmatmul.mubr.bf16.gmra.mrb[0].mxu0 %v2494
    %v2846 = vpop.f32.mrb[0].mxu0
    %v2847 = vadd.f32 %v2545, %v2846
    %v2848 = vpop.f32.mrb[0].mxu0
    %v2849 = vadd.f32 %v2549, %v2848
    %v2850 = vpop.f32.mrb[0].mxu0
    %v2851 = vadd.f32 %v2545, %v2850
    %v2852 = vpop.f32.mrb[0].mxu0
    %v2853 = vadd.f32 %v2549, %v2852
    %2854 = vmatprep.mubr.bf16.mxu0 %v2497
    %2855 = vmatmul.mubr.bf16.gmra.mrb[0].mxu0 %v2496
    %v2856 = vpop.f32.mrb[0].mxu0
    %v2857 = vadd.f32 %v2545, %v2856
    %v2858 = vpop.f32.mrb[0].mxu0
    %v2859 = vadd.f32 %v2549, %v2858
    %v2860 = vpop.f32.mrb[0].mxu0
    %v2861 = vadd.f32 %v2545, %v2860
    %v2862 = vpop.f32.mrb[0].mxu0
    %v2863 = vadd.f32 %v2549, %v2862
    %2864 = vmatprep.mubr.bf16.mxu0 %v2499
    %2865 = vmatmul.mubr.bf16.gmra.mrb[0].mxu0 %v2498
    %v2866 = vpop.f32.mrb[0].mxu0
    %v2867 = vadd.f32 %v2545, %v2866
    %v2868 = vpop.f32.mrb[0].mxu0
    %v2869 = vadd.f32 %v2549, %v2868
    %v2870 = vpop.f32.mrb[0].mxu0
    %v2871 = vadd.f32 %v2545, %v2870
    %v2872 = vpop.f32.mrb[0].mxu0
    %v2873 = vadd.f32 %v2549, %v2872
    %2874 = vmatprep.mubr.bf16.mxu0 %v2501
    %2875 = vmatmul.mubr.bf16.gmra.mrb[0].mxu0 %v2500
    %v2876 = vpop.f32.mrb[0].mxu0
    %v2877 = vadd.f32 %v2545, %v2876
    %v2878 = vpop.f32.mrb[0].mxu0
    %v2879 = vadd.f32 %v2549, %v2878
    %v2880 = vpop.f32.mrb[0].mxu0
    %v2881 = vadd.f32 %v2545, %v2880
    %v2882 = vpop.f32.mrb[0].mxu0
    %v2883 = vadd.f32 %v2549, %v2882
    %2884 = vmatprep.mubr.bf16.mxu0 %v2503
    %2885 = vmatmul.mubr.bf16.gmra.mrb[0].mxu0 %v2502
    %v2886 = vpop.f32.mrb[0].mxu0
    %v2887 = vadd.f32 %v2545, %v2886
    %v2888 = vpop.f32.mrb[0].mxu0
    %v2889 = vadd.f32 %v2549, %v2888
    %v2890 = vpop.f32.mrb[0].mxu0
    %v2891 = vadd.f32 %v2545, %v2890
    %v2892 = vpop.f32.mrb[0].mxu0
    %v2893 = vadd.f32 %v2549, %v2892
    %2894 = vmatprep.mubr.bf16.mxu0 %v2505
    %2895 = vmatmul.mubr.bf16.gmra.mrb[0].mxu0 %v2504
    %v2896 = vpop.f32.mrb[0].mxu0
    %v2897 = vadd.f32 %v2545, %v2896
    %v2898 = vpop.f32.mrb[0].mxu0
    %v2899 = vadd.f32 %v2549, %v2898
    %v2900 = vpop.f32.mrb[0].mxu0
    %v2901 = vadd.f32 %v2545, %v2900
    %v2902 = vpop.f32.mrb[0].mxu0
    %v2903 = vadd.f32 %v2549, %v2902
    %2904 = vdwg.mxu0
    %v2905 = vmax.f32 %v2747, 0.0
    %v2906 = vmax.f32 %v2749, 0.0
    %v2907 = vmax.f32 %v2751, 0.0
    %v2908 = vmax.f32 %v2753, 0.0
    %v2909 = vmax.f32 %v2757, 0.0
    %v2910 = vmax.f32 %v2759, 0.0
    %v2911 = vmax.f32 %v2761, 0.0
    %v2912 = vmax.f32 %v2763, 0.0
    %v2913 = vmax.f32 %v2767, 0.0
    %v2914 = vmax.f32 %v2769, 0.0
    %v2915 = vmax.f32 %v2771, 0.0
    %v2916 = vmax.f32 %v2773, 0.0
    %v2917 = vmax.f32 %v2777, 0.0
    %v2918 = vmax.f32 %v2779, 0.0
    %v2919 = vmax.f32 %v2781, 0.0
    %v2920 = vmax.f32 %v2783, 0.0
    %v2921 = vmax.f32 %v2787, 0.0
    %v2922 = vmax.f32 %v2789, 0.0
    %v2923 = vmax.f32 %v2791, 0.0
    %v2924 = vmax.f32 %v2793, 0.0
    %v2925 = vmax.f32 %v2797, 0.0
    %v2926 = vmax.f32 %v2799, 0.0
    %v2927 = vmax.f32 %v2801, 0.0
    %v2928 = vmax.f32 %v2803, 0.0
    %v2929 = vmax.f32 %v2807, 0.0
    %v2930 = vmax.f32 %v2809, 0.0
    %v2931 = vmax.f32 %v2811, 0.0
    %v2932 = vmax.f32 %v2813, 0.0
    %v2933 = vmax.f32 %v2817, 0.0
    %v2934 = vmax.f32 %v2819, 0.0
    %v2935 = vmax.f32 %v2821, 0.0
    %v2936 = vmax.f32 %v2823, 0.0
    %v2937 = vmax.f32 %v2827, 0.0
    %v2938 = vmax.f32 %v2829, 0.0
    %v2939 = vmax.f32 %v2831, 0.0
    %v2940 = vmax.f32 %v2833, 0.0
    %v2941 = vmax.f32 %v2837, 0.0
    %v2942 = vmax.f32 %v2839, 0.0
    %v2943 = vmax.f32 %v2841, 0.0
    %v2944 = vmax.f32 %v2843, 0.0
    %v2945 = vmax.f32 %v2847, 0.0
    %v2946 = vmax.f32 %v2849, 0.0
    %v2947 = vmax.f32 %v2851, 0.0
    %v2948 = vmax.f32 %v2853, 0.0
    %v2949 = vmax.f32 %v2857, 0.0
    %v2950 = vmax.f32 %v2859, 0.0
    %v2951 = vmax.f32 %v2861, 0.0
    %v2952 = vmax.f32 %v2863, 0.0
    %v2953 = vmax.f32 %v2867, 0.0
    %v2954 = vmax.f32 %v2869, 0.0
    %v2955 = vmax.f32 %v2871, 0.0
    %v2956 = vmax.f32 %v2873, 0.0
    %v2957 = vmax.f32 %v2877, 0.0
    %v2958 = vmax.f32 %v2879, 0.0
    %v2959 = vmax.f32 %v2881, 0.0
    %v2960 = vmax.f32 %v2883, 0.0
    %v2961 = vmax.f32 %v2887, 0.0
    %v2962 = vmax.f32 %v2889, 0.0
    %v2963 = vmax.f32 %v2891, 0.0
    %v2964 = vmax.f32 %v2893, 0.0
    %v2965 = vmax.f32 %v2897, 0.0
    %v2966 = vmax.f32 %v2899, 0.0
    %v2967 = vmax.f32 %v2901, 0.0
    %v2968 = vmax.f32 %v2903, 0.0
    %v2969 = vpack.c.bf16 %v2907, %v2905
    %v2970 = vpack.c.bf16 %v2908, %v2906
    %v2971 = vpack.c.bf16 %v2911, %v2909
    %v2972 = vpack.c.bf16 %v2912, %v2910
    %v2973 = vpack.c.bf16 %v2915, %v2913
    %v2974 = vpack.c.bf16 %v2916, %v2914
    %v2975 = vpack.c.bf16 %v2919, %v2917
    %v2976 = vpack.c.bf16 %v2920, %v2918
    %v2977 = vpack.c.bf16 %v2923, %v2921
    %v2978 = vpack.c.bf16 %v2924, %v2922
    %v2979 = vpack.c.bf16 %v2927, %v2925
    %v2980 = vpack.c.bf16 %v2928, %v2926
    %v2981 = vpack.c.bf16 %v2931, %v2929
    %v2982 = vpack.c.bf16 %v2932, %v2930
    %v2983 = vpack.c.bf16 %v2935, %v2933
    %v2984 = vpack.c.bf16 %v2936, %v2934
    %v2985 = vpack.c.bf16 %v2939, %v2937
    %v2986 = vpack.c.bf16 %v2940, %v2938
    %v2987 = vpack.c.bf16 %v2943, %v2941
    %v2988 = vpack.c.bf16 %v2944, %v2942
    %v2989 = vpack.c.bf16 %v2947, %v2945
    %v2990 = vpack.c.bf16 %v2948, %v2946
    %v2991 = vpack.c.bf16 %v2951, %v2949
    %v2992 = vpack.c.bf16 %v2952, %v2950
    %v2993 = vpack.c.bf16 %v2955, %v2953
    %v2994 = vpack.c.bf16 %v2956, %v2954
    %v2995 = vpack.c.bf16 %v2959, %v2957
    %v2996 = vpack.c.bf16 %v2960, %v2958
    %v2997 = vpack.c.bf16 %v2963, %v2961
    %v2998 = vpack.c.bf16 %v2964, %v2962
    %v2999 = vpack.c.bf16 %v2967, %v2965
    %v3000 = vpack.c.bf16 %v2968, %v2966
    %s3001 = scalar_lea.vmem [#allocation2], 1024
    %v3002 = vld [vmem:[%s3001] sm:$0xff]
    %v3003 = vld [vmem:[%s3001 + $0x8] sm:$0xff]
    %v3004 = vld [vmem:[%s3001 + $0x10] sm:$0xff]
    %v3005 = vld [vmem:[%s3001 + $0x18] sm:$0xff]
    %v3006 = vld [vmem:[%s3001 + $0x20] sm:$0xff]
    %v3007 = vld [vmem:[%s3001 + $0x28] sm:$0xff]
    %v3008 = vld [vmem:[%s3001 + $0x30] sm:$0xff]
    %v3009 = vld [vmem:[%s3001 + $0x38] sm:$0xff]
    %v3010 = vld [vmem:[%s3001 + $0x40] sm:$0xff]
    %v3011 = vld [vmem:[%s3001 + $0x48] sm:$0xff]
    %v3012 = vld [vmem:[%s3001 + $0x50] sm:$0xff]
    %v3013 = vld [vmem:[%s3001 + $0x58] sm:$0xff]
    %v3014 = vld [vmem:[%s3001 + $0x60] sm:$0xff]
    %v3015 = vld [vmem:[%s3001 + $0x68] sm:$0xff]
    %v3016 = vld [vmem:[%s3001 + $0x70] sm:$0xff]
    %v3017 = vld [vmem:[%s3001 + $0x78] sm:$0xff]
    %v3018 = vld [vmem:[%s3001 + $0x80] sm:$0xff]
    %v3019 = vld [vmem:[%s3001 + $0x88] sm:$0xff]
    %v3020 = vld [vmem:[%s3001 + $0x90] sm:$0xff]
    %v3021 = vld [vmem:[%s3001 + $0x98] sm:$0xff]
    %v3022 = vld [vmem:[%s3001 + $0xa0] sm:$0xff]
    %v3023 = vld [vmem:[%s3001 + $0xa8] sm:$0xff]
    %v3024 = vld [vmem:[%s3001 + $0xb0] sm:$0xff]
    %v3025 = vld [vmem:[%s3001 + $0xb8] sm:$0xff]
    %v3026 = vld [vmem:[%s3001 + $0xc0] sm:$0xff]
    %v3027 = vld [vmem:[%s3001 + $0xc8] sm:$0xff]
    %v3028 = vld [vmem:[%s3001 + $0xd0] sm:$0xff]
    %v3029 = vld [vmem:[%s3001 + $0xd8] sm:$0xff]
    %v3030 = vld [vmem:[%s3001 + $0xe0] sm:$0xff]
    %v3031 = vld [vmem:[%s3001 + $0xe8] sm:$0xff]
    %v3032 = vld [vmem:[%s3001 + $0xf0] sm:$0xff]
    %v3033 = vld [vmem:[%s3001 + $0xf8] sm:$0xff]
    %s3034 = scalar_lea.vmem %s4, 8
    %v3035 = vld [vmem:[%s3034] sm:$0x3]
    %v3037 = vlaneseq
    %v3038 = vshrl.u32 %v3037, 7
    %v3039 = vsub.s32 0, %v3038
    %v3040 = vrot.slane %v3035, %v3039
    %v3041 = vlaneseq
    %v3042 = vshrl.u32 %v3041, 7
    %v3043 = vsub.s32 1, %v3042
    %v3044 = vrot.slane %v3035, %v3043
    %v3079 = vunpack.c.l.b16 %v3002
    %v3080 = vunpack.c.h.b16 %v3002
    %v3081 = vunpack.c.l.b16 %v3003
    %v3082 = vunpack.c.h.b16 %v3003
    %v3083 = vunpack.c.l.b16 %v3004
    %v3084 = vunpack.c.h.b16 %v3004
    %v3085 = vunpack.c.l.b16 %v3005
    %v3086 = vunpack.c.h.b16 %v3005
    %v3087 = vunpack.c.l.b16 %v3006
    %v3088 = vunpack.c.h.b16 %v3006
    %v3089 = vunpack.c.l.b16 %v3007
    %v3090 = vunpack.c.h.b16 %v3007
    %v3091 = vunpack.c.l.b16 %v3008
    %v3092 = vunpack.c.h.b16 %v3008
    %v3093 = vunpack.c.l.b16 %v3009
    %v3094 = vunpack.c.h.b16 %v3009
    %v3095 = vunpack.c.l.b16 %v3010
    %v3096 = vunpack.c.h.b16 %v3010
    %v3097 = vunpack.c.l.b16 %v3011
    %v3098 = vunpack.c.h.b16 %v3011
    %v3099 = vunpack.c.l.b16 %v3012
    %v3100 = vunpack.c.h.b16 %v3012
    %v3101 = vunpack.c.l.b16 %v3013
    %v3102 = vunpack.c.h.b16 %v3013
    %v3103 = vunpack.c.l.b16 %v3014
    %v3104 = vunpack.c.h.b16 %v3014
    %v3105 = vunpack.c.l.b16 %v3015
    %v3106 = vunpack.c.h.b16 %v3015
    %v3107 = vunpack.c.l.b16 %v3016
    %v3108 = vunpack.c.h.b16 %v3016
    %v3109 = vunpack.c.l.b16 %v3017
    %v3110 = vunpack.c.h.b16 %v3017
    %v3111 = vunpack.c.l.b16 %v3018
    %v3112 = vunpack.c.h.b16 %v3018
    %v3113 = vunpack.c.l.b16 %v3019
    %v3114 = vunpack.c.h.b16 %v3019
    %v3115 = vunpack.c.l.b16 %v3020
    %v3116 = vunpack.c.h.b16 %v3020
    %v3117 = vunpack.c.l.b16 %v3021
    %v3118 = vunpack.c.h.b16 %v3021
    %v3119 = vunpack.c.l.b16 %v3022
    %v3120 = vunpack.c.h.b16 %v3022
    %v3121 = vunpack.c.l.b16 %v3023
    %v3122 = vunpack.c.h.b16 %v3023
    %v3123 = vunpack.c.l.b16 %v3024
    %v3124 = vunpack.c.h.b16 %v3024
    %v3125 = vunpack.c.l.b16 %v3025
    %v3126 = vunpack.c.h.b16 %v3025
    %v3127 = vunpack.c.l.b16 %v3026
    %v3128 = vunpack.c.h.b16 %v3026
    %v3129 = vunpack.c.l.b16 %v3027
    %v3130 = vunpack.c.h.b16 %v3027
    %v3131 = vunpack.c.l.b16 %v3028
    %v3132 = vunpack.c.h.b16 %v3028
    %v3133 = vunpack.c.l.b16 %v3029
    %v3134 = vunpack.c.h.b16 %v3029
    %v3135 = vunpack.c.l.b16 %v3030
    %v3136 = vunpack.c.h.b16 %v3030
    %v3137 = vunpack.c.l.b16 %v3031
    %v3138 = vunpack.c.h.b16 %v3031
    %v3139 = vunpack.c.l.b16 %v3032
    %v3140 = vunpack.c.h.b16 %v3032
    %v3141 = vunpack.c.l.b16 %v3033
    %v3142 = vunpack.c.h.b16 %v3033
    %v3143 = vpack.c.b16 %v3081, %v3079
    %v3144 = vpack.c.b16 %v3082, %v3080
    %v3145 = vpack.c.b16 %v3085, %v3083
    %v3146 = vpack.c.b16 %v3086, %v3084
    %v3147 = vpack.c.b16 %v3089, %v3087
    %v3148 = vpack.c.b16 %v3090, %v3088
    %v3149 = vpack.c.b16 %v3093, %v3091
    %v3150 = vpack.c.b16 %v3094, %v3092
    %v3151 = vpack.c.b16 %v3097, %v3095
    %v3152 = vpack.c.b16 %v3098, %v3096
    %v3153 = vpack.c.b16 %v3101, %v3099
    %v3154 = vpack.c.b16 %v3102, %v3100
    %v3155 = vpack.c.b16 %v3105, %v3103
    %v3156 = vpack.c.b16 %v3106, %v3104
    %v3157 = vpack.c.b16 %v3109, %v3107
    %v3158 = vpack.c.b16 %v3110, %v3108
    %v3159 = vpack.c.b16 %v3113, %v3111
    %v3160 = vpack.c.b16 %v3114, %v3112
    %v3161 = vpack.c.b16 %v3117, %v3115
    %v3162 = vpack.c.b16 %v3118, %v3116
    %v3163 = vpack.c.b16 %v3121, %v3119
    %v3164 = vpack.c.b16 %v3122, %v3120
    %v3165 = vpack.c.b16 %v3125, %v3123
    %v3166 = vpack.c.b16 %v3126, %v3124
    %v3167 = vpack.c.b16 %v3129, %v3127
    %v3168 = vpack.c.b16 %v3130, %v3128
    %v3169 = vpack.c.b16 %v3133, %v3131
    %v3170 = vpack.c.b16 %v3134, %v3132
    %v3171 = vpack.c.b16 %v3137, %v3135
    %v3172 = vpack.c.b16 %v3138, %v3136
    %v3173 = vpack.c.b16 %v3141, %v3139
    %v3174 = vpack.c.b16 %v3142, %v3140
    %3207 = vmatprep.subr.bf16.mxu0 %v3144
    %3208 = vmatpush1.bf16.msra.mxu0 %v3143
    %3209 = vmatprep.subr.bf16.mxu0 %v3146
    %3210 = vmatpush1.bf16.msra.mxu0 %v3145
    %3211 = vmatprep.subr.bf16.mxu0 %v3148
    %3212 = vmatpush1.bf16.msra.mxu0 %v3147
    %3213 = vmatprep.subr.bf16.mxu0 %v3150
    %3214 = vmatpush1.bf16.msra.mxu0 %v3149
    %3215 = vmatprep.subr.bf16.mxu0 %v3152
    %3216 = vmatpush1.bf16.msra.mxu0 %v3151
    %3217 = vmatprep.subr.bf16.mxu0 %v3154
    %3218 = vmatpush1.bf16.msra.mxu0 %v3153
    %3219 = vmatprep.subr.bf16.mxu0 %v3156
    %3220 = vmatpush1.bf16.msra.mxu0 %v3155
    %3221 = vmatprep.subr.bf16.mxu0 %v3158
    %3222 = vmatpush1.bf16.msra.mxu0 %v3157
    %3223 = vmatprep.subr.bf16.mxu0 %v3160
    %3224 = vmatpush1.bf16.msra.mxu0 %v3159
    %3225 = vmatprep.subr.bf16.mxu0 %v3162
    %3226 = vmatpush1.bf16.msra.mxu0 %v3161
    %3227 = vmatprep.subr.bf16.mxu0 %v3164
    %3228 = vmatpush1.bf16.msra.mxu0 %v3163
    %3229 = vmatprep.subr.bf16.mxu0 %v3166
    %3230 = vmatpush1.bf16.msra.mxu0 %v3165
    %3231 = vmatprep.subr.bf16.mxu0 %v3168
    %3232 = vmatpush1.bf16.msra.mxu0 %v3167
    %3233 = vmatprep.subr.bf16.mxu0 %v3170
    %3234 = vmatpush1.bf16.msra.mxu0 %v3169
    %3235 = vmatprep.subr.bf16.mxu0 %v3172
    %3236 = vmatpush1.bf16.msra.mxu0 %v3171
    %3237 = vmatprep.subr.bf16.mxu0 %v3174
    %3238 = vmatpush1.bf16.msra.mxu0 %v3173
    %3239 = vmatprep.mubr.bf16.mxu0 %v2970
    %3240 = vmatmul.mubr.bf16.gmra.mrb[0].mxu0 %v2969
    %v3241 = vpop.f32.mrb[0].mxu0
    %v3242 = vadd.f32 %v3040, %v3241
    %v3243 = vpop.f32.mrb[0].mxu0
    %v3244 = vadd.f32 %v3044, %v3243
    %v3245 = vpop.f32.mrb[0].mxu0
    %v3246 = vadd.f32 %v3040, %v3245
    %v3247 = vpop.f32.mrb[0].mxu0
    %v3248 = vadd.f32 %v3044, %v3247
    %3249 = vmatprep.mubr.bf16.mxu0 %v2972
    %3250 = vmatmul.mubr.bf16.gmra.mrb[0].mxu0 %v2971
    %v3251 = vpop.f32.mrb[0].mxu0
    %v3252 = vadd.f32 %v3040, %v3251
    %v3253 = vpop.f32.mrb[0].mxu0
    %v3254 = vadd.f32 %v3044, %v3253
    %v3255 = vpop.f32.mrb[0].mxu0
    %v3256 = vadd.f32 %v3040, %v3255
    %v3257 = vpop.f32.mrb[0].mxu0
    %v3258 = vadd.f32 %v3044, %v3257
    %3259 = vmatprep.mubr.bf16.mxu0 %v2974
    %3260 = vmatmul.mubr.bf16.gmra.mrb[0].mxu0 %v2973
    %v3261 = vpop.f32.mrb[0].mxu0
    %v3262 = vadd.f32 %v3040, %v3261
    %v3263 = vpop.f32.mrb[0].mxu0
    %v3264 = vadd.f32 %v3044, %v3263
    %v3265 = vpop.f32.mrb[0].mxu0
    %v3266 = vadd.f32 %v3040, %v3265
    %v3267 = vpop.f32.mrb[0].mxu0
    %v3268 = vadd.f32 %v3044, %v3267
    %3269 = vmatprep.mubr.bf16.mxu0 %v2976
    %3270 = vmatmul.mubr.bf16.gmra.mrb[0].mxu0 %v2975
    %v3271 = vpop.f32.mrb[0].mxu0
    %v3272 = vadd.f32 %v3040, %v3271
    %v3273 = vpop.f32.mrb[0].mxu0
    %v3274 = vadd.f32 %v3044, %v3273
    %v3275 = vpop.f32.mrb[0].mxu0
    %v3276 = vadd.f32 %v3040, %v3275
    %v3277 = vpop.f32.mrb[0].mxu0
    %v3278 = vadd.f32 %v3044, %v3277
    %3279 = vmatprep.mubr.bf16.mxu0 %v2978
    %3280 = vmatmul.mubr.bf16.gmra.mrb[0].mxu0 %v2977
    %v3281 = vpop.f32.mrb[0].mxu0
    %v3282 = vadd.f32 %v3040, %v3281
    %v3283 = vpop.f32.mrb[0].mxu0
    %v3284 = vadd.f32 %v3044, %v3283
    %v3285 = vpop.f32.mrb[0].mxu0
    %v3286 = vadd.f32 %v3040, %v3285
    %v3287 = vpop.f32.mrb[0].mxu0
    %v3288 = vadd.f32 %v3044, %v3287
    %3289 = vmatprep.mubr.bf16.mxu0 %v2980
    %3290 = vmatmul.mubr.bf16.gmra.mrb[0].mxu0 %v2979
    %v3291 = vpop.f32.mrb[0].mxu0
    %v3292 = vadd.f32 %v3040, %v3291
    %v3293 = vpop.f32.mrb[0].mxu0
    %v3294 = vadd.f32 %v3044, %v3293
    %v3295 = vpop.f32.mrb[0].mxu0
    %v3296 = vadd.f32 %v3040, %v3295
    %v3297 = vpop.f32.mrb[0].mxu0
    %v3298 = vadd.f32 %v3044, %v3297
    %3299 = vmatprep.mubr.bf16.mxu0 %v2982
    %3300 = vmatmul.mubr.bf16.gmra.mrb[0].mxu0 %v2981
    %v3301 = vpop.f32.mrb[0].mxu0
    %v3302 = vadd.f32 %v3040, %v3301
    %v3303 = vpop.f32.mrb[0].mxu0
    %v3304 = vadd.f32 %v3044, %v3303
    %v3305 = vpop.f32.mrb[0].mxu0
    %v3306 = vadd.f32 %v3040, %v3305
    %v3307 = vpop.f32.mrb[0].mxu0
    %v3308 = vadd.f32 %v3044, %v3307
    %3309 = vmatprep.mubr.bf16.mxu0 %v2984
    %3310 = vmatmul.mubr.bf16.gmra.mrb[0].mxu0 %v2983
    %v3311 = vpop.f32.mrb[0].mxu0
    %v3312 = vadd.f32 %v3040, %v3311
    %v3313 = vpop.f32.mrb[0].mxu0
    %v3314 = vadd.f32 %v3044, %v3313
    %v3315 = vpop.f32.mrb[0].mxu0
    %v3316 = vadd.f32 %v3040, %v3315
    %v3317 = vpop.f32.mrb[0].mxu0
    %v3318 = vadd.f32 %v3044, %v3317
    %3319 = vmatprep.mubr.bf16.mxu0 %v2986
    %3320 = vmatmul.mubr.bf16.gmra.mrb[0].mxu0 %v2985
    %v3321 = vpop.f32.mrb[0].mxu0
    %v3322 = vadd.f32 %v3040, %v3321
    %v3323 = vpop.f32.mrb[0].mxu0
    %v3324 = vadd.f32 %v3044, %v3323
    %v3325 = vpop.f32.mrb[0].mxu0
    %v3326 = vadd.f32 %v3040, %v3325
    %v3327 = vpop.f32.mrb[0].mxu0
    %v3328 = vadd.f32 %v3044, %v3327
    %3329 = vmatprep.mubr.bf16.mxu0 %v2988
    %3330 = vmatmul.mubr.bf16.gmra.mrb[0].mxu0 %v2987
    %v3331 = vpop.f32.mrb[0].mxu0
    %v3332 = vadd.f32 %v3040, %v3331
    %v3333 = vpop.f32.mrb[0].mxu0
    %v3334 = vadd.f32 %v3044, %v3333
    %v3335 = vpop.f32.mrb[0].mxu0
    %v3336 = vadd.f32 %v3040, %v3335
    %v3337 = vpop.f32.mrb[0].mxu0
    %v3338 = vadd.f32 %v3044, %v3337
    %3339 = vmatprep.mubr.bf16.mxu0 %v2990
    %3340 = vmatmul.mubr.bf16.gmra.mrb[0].mxu0 %v2989
    %v3341 = vpop.f32.mrb[0].mxu0
    %v3342 = vadd.f32 %v3040, %v3341
    %v3343 = vpop.f32.mrb[0].mxu0
    %v3344 = vadd.f32 %v3044, %v3343
    %v3345 = vpop.f32.mrb[0].mxu0
    %v3346 = vadd.f32 %v3040, %v3345
    %v3347 = vpop.f32.mrb[0].mxu0
    %v3348 = vadd.f32 %v3044, %v3347
    %3349 = vmatprep.mubr.bf16.mxu0 %v2992
    %3350 = vmatmul.mubr.bf16.gmra.mrb[0].mxu0 %v2991
    %v3351 = vpop.f32.mrb[0].mxu0
    %v3352 = vadd.f32 %v3040, %v3351
    %v3353 = vpop.f32.mrb[0].mxu0
    %v3354 = vadd.f32 %v3044, %v3353
    %v3355 = vpop.f32.mrb[0].mxu0
    %v3356 = vadd.f32 %v3040, %v3355
    %v3357 = vpop.f32.mrb[0].mxu0
    %v3358 = vadd.f32 %v3044, %v3357
    %3359 = vmatprep.mubr.bf16.mxu0 %v2994
    %3360 = vmatmul.mubr.bf16.gmra.mrb[0].mxu0 %v2993
    %v3361 = vpop.f32.mrb[0].mxu0
    %v3362 = vadd.f32 %v3040, %v3361
    %v3363 = vpop.f32.mrb[0].mxu0
    %v3364 = vadd.f32 %v3044, %v3363
    %v3365 = vpop.f32.mrb[0].mxu0
    %v3366 = vadd.f32 %v3040, %v3365
    %v3367 = vpop.f32.mrb[0].mxu0
    %v3368 = vadd.f32 %v3044, %v3367
    %3369 = vmatprep.mubr.bf16.mxu0 %v2996
    %3370 = vmatmul.mubr.bf16.gmra.mrb[0].mxu0 %v2995
    %v3371 = vpop.f32.mrb[0].mxu0
    %v3372 = vadd.f32 %v3040, %v3371
    %v3373 = vpop.f32.mrb[0].mxu0
    %v3374 = vadd.f32 %v3044, %v3373
    %v3375 = vpop.f32.mrb[0].mxu0
    %v3376 = vadd.f32 %v3040, %v3375
    %v3377 = vpop.f32.mrb[0].mxu0
    %v3378 = vadd.f32 %v3044, %v3377
    %3379 = vmatprep.mubr.bf16.mxu0 %v2998
    %3380 = vmatmul.mubr.bf16.gmra.mrb[0].mxu0 %v2997
    %v3381 = vpop.f32.mrb[0].mxu0
    %v3382 = vadd.f32 %v3040, %v3381
    %v3383 = vpop.f32.mrb[0].mxu0
    %v3384 = vadd.f32 %v3044, %v3383
    %v3385 = vpop.f32.mrb[0].mxu0
    %v3386 = vadd.f32 %v3040, %v3385
    %v3387 = vpop.f32.mrb[0].mxu0
    %v3388 = vadd.f32 %v3044, %v3387
    %3389 = vmatprep.mubr.bf16.mxu0 %v3000
    %3390 = vmatmul.mubr.bf16.gmra.mrb[0].mxu0 %v2999
    %v3391 = vpop.f32.mrb[0].mxu0
    %v3392 = vadd.f32 %v3040, %v3391
    %v3393 = vpop.f32.mrb[0].mxu0
    %v3394 = vadd.f32 %v3044, %v3393
    %v3395 = vpop.f32.mrb[0].mxu0
    %v3396 = vadd.f32 %v3040, %v3395
    %v3397 = vpop.f32.mrb[0].mxu0
    %v3398 = vadd.f32 %v3044, %v3397
    %3399 = vdwg.mxu0
    %v3400 = vld [vmem:[%s5] ss:$4 sm:$0x3]
    %v3402 = vlaneseq
    %v3403 = vshrl.u32 %v3402, 7
    %v3404 = vsub.s32 0, %v3403
    %v3405 = vrot.slane %v3400, %v3404
    %v3406 = vlaneseq
    %v3407 = vshrl.u32 %v3406, 7
    %v3408 = vsub.s32 1, %v3407
    %v3409 = vrot.slane %v3400, %v3408
    %v3412 = vmul.f32 %v81, %v3405
    %v3413 = vmul.f32 %v81, %v3409
    %v3414 = vmul.f32 %v86, %v3405
    %v3415 = vmul.f32 %v86, %v3409
    %v3416 = vmul.f32 %v91, %v3405
    %v3417 = vmul.f32 %v91, %v3409
    %v3418 = vmul.f32 %v96, %v3405
    %v3419 = vmul.f32 %v96, %v3409
    %v3420 = vmul.f32 %v101, %v3405
    %v3421 = vmul.f32 %v101, %v3409
    %v3422 = vmul.f32 %v106, %v3405
    %v3423 = vmul.f32 %v106, %v3409
    %v3424 = vmul.f32 %v111, %v3405
    %v3425 = vmul.f32 %v111, %v3409
    %v3426 = vmul.f32 %v116, %v3405
    %v3427 = vmul.f32 %v116, %v3409
    %v3428 = vmul.f32 %v121, %v3405
    %v3429 = vmul.f32 %v121, %v3409
    %v3430 = vmul.f32 %v126, %v3405
    %v3431 = vmul.f32 %v126, %v3409
    %v3432 = vmul.f32 %v131, %v3405
    %v3433 = vmul.f32 %v131, %v3409
    %v3434 = vmul.f32 %v136, %v3405
    %v3435 = vmul.f32 %v136, %v3409
    %v3436 = vmul.f32 %v141, %v3405
    %v3437 = vmul.f32 %v141, %v3409
    %v3438 = vmul.f32 %v146, %v3405
    %v3439 = vmul.f32 %v146, %v3409
    %v3440 = vmul.f32 %v151, %v3405
    %v3441 = vmul.f32 %v151, %v3409
    %v3442 = vmul.f32 %v156, %v3405
    %v3443 = vmul.f32 %v156, %v3409
    %v3444 = vmul.f32 %v161, %v3405
    %v3445 = vmul.f32 %v161, %v3409
    %v3446 = vmul.f32 %v166, %v3405
    %v3447 = vmul.f32 %v166, %v3409
    %v3448 = vmul.f32 %v171, %v3405
    %v3449 = vmul.f32 %v171, %v3409
    %v3450 = vmul.f32 %v176, %v3405
    %v3451 = vmul.f32 %v176, %v3409
    %v3452 = vmul.f32 %v181, %v3405
    %v3453 = vmul.f32 %v181, %v3409
    %v3454 = vmul.f32 %v186, %v3405
    %v3455 = vmul.f32 %v186, %v3409
    %v3456 = vmul.f32 %v191, %v3405
    %v3457 = vmul.f32 %v191, %v3409
    %v3458 = vmul.f32 %v196, %v3405
    %v3459 = vmul.f32 %v196, %v3409
    %v3460 = vmul.f32 %v201, %v3405
    %v3461 = vmul.f32 %v201, %v3409
    %v3462 = vmul.f32 %v206, %v3405
    %v3463 = vmul.f32 %v206, %v3409
    %v3464 = vmul.f32 %v211, %v3405
    %v3465 = vmul.f32 %v211, %v3409
    %v3466 = vmul.f32 %v216, %v3405
    %v3467 = vmul.f32 %v216, %v3409
    %v3468 = vmul.f32 %v221, %v3405
    %v3469 = vmul.f32 %v221, %v3409
    %v3470 = vmul.f32 %v226, %v3405
    %v3471 = vmul.f32 %v226, %v3409
    %v3472 = vmul.f32 %v231, %v3405
    %v3473 = vmul.f32 %v231, %v3409
    %v3474 = vmul.f32 %v236, %v3405
    %v3475 = vmul.f32 %v236, %v3409
    %s3476 = scalar_lea.vmem %s5, 1
    %v3477 = vld [vmem:[%s3476] ss:$4 sm:$0x3]
    %v3479 = vlaneseq
    %v3480 = vshrl.u32 %v3479, 7
    %v3481 = vsub.s32 0, %v3480
    %v3482 = vrot.slane %v3477, %v3481
    %v3483 = vlaneseq
    %v3484 = vshrl.u32 %v3483, 7
    %v3485 = vsub.s32 1, %v3484
    %v3486 = vrot.slane %v3477, %v3485
    %v3489 = vmul.f32 %v317, %v3482
    %v3490 = vmul.f32 %v317, %v3486
    %v3491 = vmul.f32 %v321, %v3482
    %v3492 = vmul.f32 %v321, %v3486
    %v3493 = vmul.f32 %v325, %v3482
    %v3494 = vmul.f32 %v325, %v3486
    %v3495 = vmul.f32 %v329, %v3482
    %v3496 = vmul.f32 %v329, %v3486
    %v3497 = vmul.f32 %v333, %v3482
    %v3498 = vmul.f32 %v333, %v3486
    %v3499 = vmul.f32 %v337, %v3482
    %v3500 = vmul.f32 %v337, %v3486
    %v3501 = vmul.f32 %v341, %v3482
    %v3502 = vmul.f32 %v341, %v3486
    %v3503 = vmul.f32 %v345, %v3482
    %v3504 = vmul.f32 %v345, %v3486
    %v3505 = vmul.f32 %v349, %v3482
    %v3506 = vmul.f32 %v349, %v3486
    %v3507 = vmul.f32 %v353, %v3482
    %v3508 = vmul.f32 %v353, %v3486
    %v3509 = vmul.f32 %v357, %v3482
    %v3510 = vmul.f32 %v357, %v3486
    %v3511 = vmul.f32 %v361, %v3482
    %v3512 = vmul.f32 %v361, %v3486
    %v3513 = vmul.f32 %v365, %v3482
    %v3514 = vmul.f32 %v365, %v3486
    %v3515 = vmul.f32 %v369, %v3482
    %v3516 = vmul.f32 %v369, %v3486
    %v3517 = vmul.f32 %v373, %v3482
    %v3518 = vmul.f32 %v373, %v3486
    %v3519 = vmul.f32 %v377, %v3482
    %v3520 = vmul.f32 %v377, %v3486
    %v3521 = vmul.f32 %v381, %v3482
    %v3522 = vmul.f32 %v381, %v3486
    %v3523 = vmul.f32 %v385, %v3482
    %v3524 = vmul.f32 %v385, %v3486
    %v3525 = vmul.f32 %v389, %v3482
    %v3526 = vmul.f32 %v389, %v3486
    %v3527 = vmul.f32 %v393, %v3482
    %v3528 = vmul.f32 %v393, %v3486
    %v3529 = vmul.f32 %v397, %v3482
    %v3530 = vmul.f32 %v397, %v3486
    %v3531 = vmul.f32 %v401, %v3482
    %v3532 = vmul.f32 %v401, %v3486
    %v3533 = vmul.f32 %v405, %v3482
    %v3534 = vmul.f32 %v405, %v3486
    %v3535 = vmul.f32 %v409, %v3482
    %v3536 = vmul.f32 %v409, %v3486
    %v3537 = vmul.f32 %v413, %v3482
    %v3538 = vmul.f32 %v413, %v3486
    %v3539 = vmul.f32 %v417, %v3482
    %v3540 = vmul.f32 %v417, %v3486
    %v3541 = vmul.f32 %v421, %v3482
    %v3542 = vmul.f32 %v421, %v3486
    %v3543 = vmul.f32 %v425, %v3482
    %v3544 = vmul.f32 %v425, %v3486
    %v3545 = vmul.f32 %v429, %v3482
    %v3546 = vmul.f32 %v429, %v3486
    %v3547 = vmul.f32 %v433, %v3482
    %v3548 = vmul.f32 %v433, %v3486
    %v3549 = vmul.f32 %v437, %v3482
    %v3550 = vmul.f32 %v437, %v3486
    %v3551 = vmul.f32 %v441, %v3482
    %v3552 = vmul.f32 %v441, %v3486
    %v3553 = vadd.f32 %v3412, %v3489
    %v3554 = vadd.f32 %v3413, %v3490
    %v3555 = vadd.f32 %v3414, %v3491
    %v3556 = vadd.f32 %v3415, %v3492
    %v3557 = vadd.f32 %v3416, %v3493
    %v3558 = vadd.f32 %v3417, %v3494
    %v3559 = vadd.f32 %v3418, %v3495
    %v3560 = vadd.f32 %v3419, %v3496
    %v3561 = vadd.f32 %v3420, %v3497
    %v3562 = vadd.f32 %v3421, %v3498
    %v3563 = vadd.f32 %v3422, %v3499
    %v3564 = vadd.f32 %v3423, %v3500
    %v3565 = vadd.f32 %v3424, %v3501
    %v3566 = vadd.f32 %v3425, %v3502
    %v3567 = vadd.f32 %v3426, %v3503
    %v3568 = vadd.f32 %v3427, %v3504
    %v3569 = vadd.f32 %v3428, %v3505
    %v3570 = vadd.f32 %v3429, %v3506
    %v3571 = vadd.f32 %v3430, %v3507
    %v3572 = vadd.f32 %v3431, %v3508
    %v3573 = vadd.f32 %v3432, %v3509
    %v3574 = vadd.f32 %v3433, %v3510
    %v3575 = vadd.f32 %v3434, %v3511
    %v3576 = vadd.f32 %v3435, %v3512
    %v3577 = vadd.f32 %v3436, %v3513
    %v3578 = vadd.f32 %v3437, %v3514
    %v3579 = vadd.f32 %v3438, %v3515
    %v3580 = vadd.f32 %v3439, %v3516
    %v3581 = vadd.f32 %v3440, %v3517
    %v3582 = vadd.f32 %v3441, %v3518
    %v3583 = vadd.f32 %v3442, %v3519
    %v3584 = vadd.f32 %v3443, %v3520
    %v3585 = vadd.f32 %v3444, %v3521
    %v3586 = vadd.f32 %v3445, %v3522
    %v3587 = vadd.f32 %v3446, %v3523
    %v3588 = vadd.f32 %v3447, %v3524
    %v3589 = vadd.f32 %v3448, %v3525
    %v3590 = vadd.f32 %v3449, %v3526
    %v3591 = vadd.f32 %v3450, %v3527
    %v3592 = vadd.f32 %v3451, %v3528
    %v3593 = vadd.f32 %v3452, %v3529
    %v3594 = vadd.f32 %v3453, %v3530
    %v3595 = vadd.f32 %v3454, %v3531
    %v3596 = vadd.f32 %v3455, %v3532
    %v3597 = vadd.f32 %v3456, %v3533
    %v3598 = vadd.f32 %v3457, %v3534
    %v3599 = vadd.f32 %v3458, %v3535
    %v3600 = vadd.f32 %v3459, %v3536
    %v3601 = vadd.f32 %v3460, %v3537
    %v3602 = vadd.f32 %v3461, %v3538
    %v3603 = vadd.f32 %v3462, %v3539
    %v3604 = vadd.f32 %v3463, %v3540
    %v3605 = vadd.f32 %v3464, %v3541
    %v3606 = vadd.f32 %v3465, %v3542
    %v3607 = vadd.f32 %v3466, %v3543
    %v3608 = vadd.f32 %v3467, %v3544
    %v3609 = vadd.f32 %v3468, %v3545
    %v3610 = vadd.f32 %v3469, %v3546
    %v3611 = vadd.f32 %v3470, %v3547
    %v3612 = vadd.f32 %v3471, %v3548
    %v3613 = vadd.f32 %v3472, %v3549
    %v3614 = vadd.f32 %v3473, %v3550
    %v3615 = vadd.f32 %v3474, %v3551
    %v3616 = vadd.f32 %v3475, %v3552
    %s3617 = scalar_lea.vmem %s5, 2
    %v3618 = vld [vmem:[%s3617] ss:$4 sm:$0x3]
    %v3620 = vlaneseq
    %v3621 = vshrl.u32 %v3620, 7
    %v3622 = vsub.s32 0, %v3621
    %v3623 = vrot.slane %v3618, %v3622
    %v3624 = vlaneseq
    %v3625 = vshrl.u32 %v3624, 7
    %v3626 = vsub.s32 1, %v3625
    %v3627 = vrot.slane %v3618, %v3626
    %v3630 = vmul.f32 %v586, %v3623
    %v3631 = vmul.f32 %v586, %v3627
    %v3632 = vmul.f32 %v590, %v3623
    %v3633 = vmul.f32 %v590, %v3627
    %v3634 = vmul.f32 %v594, %v3623
    %v3635 = vmul.f32 %v594, %v3627
    %v3636 = vmul.f32 %v598, %v3623
    %v3637 = vmul.f32 %v598, %v3627
    %v3638 = vmul.f32 %v602, %v3623
    %v3639 = vmul.f32 %v602, %v3627
    %v3640 = vmul.f32 %v606, %v3623
    %v3641 = vmul.f32 %v606, %v3627
    %v3642 = vmul.f32 %v610, %v3623
    %v3643 = vmul.f32 %v610, %v3627
    %v3644 = vmul.f32 %v614, %v3623
    %v3645 = vmul.f32 %v614, %v3627
    %v3646 = vmul.f32 %v618, %v3623
    %v3647 = vmul.f32 %v618, %v3627
    %v3648 = vmul.f32 %v622, %v3623
    %v3649 = vmul.f32 %v622, %v3627
    %v3650 = vmul.f32 %v626, %v3623
    %v3651 = vmul.f32 %v626, %v3627
    %v3652 = vmul.f32 %v630, %v3623
    %v3653 = vmul.f32 %v630, %v3627
    %v3654 = vmul.f32 %v634, %v3623
    %v3655 = vmul.f32 %v634, %v3627
    %v3656 = vmul.f32 %v638, %v3623
    %v3657 = vmul.f32 %v638, %v3627
    %v3658 = vmul.f32 %v642, %v3623
    %v3659 = vmul.f32 %v642, %v3627
    %v3660 = vmul.f32 %v646, %v3623
    %v3661 = vmul.f32 %v646, %v3627
    %v3662 = vmul.f32 %v650, %v3623
    %v3663 = vmul.f32 %v650, %v3627
    %v3664 = vmul.f32 %v654, %v3623
    %v3665 = vmul.f32 %v654, %v3627
    %v3666 = vmul.f32 %v658, %v3623
    %v3667 = vmul.f32 %v658, %v3627
    %v3668 = vmul.f32 %v662, %v3623
    %v3669 = vmul.f32 %v662, %v3627
    %v3670 = vmul.f32 %v666, %v3623
    %v3671 = vmul.f32 %v666, %v3627
    %v3672 = vmul.f32 %v670, %v3623
    %v3673 = vmul.f32 %v670, %v3627
    %v3674 = vmul.f32 %v674, %v3623
    %v3675 = vmul.f32 %v674, %v3627
    %v3676 = vmul.f32 %v678, %v3623
    %v3677 = vmul.f32 %v678, %v3627
    %v3678 = vmul.f32 %v682, %v3623
    %v3679 = vmul.f32 %v682, %v3627
    %v3680 = vmul.f32 %v686, %v3623
    %v3681 = vmul.f32 %v686, %v3627
    %v3682 = vmul.f32 %v690, %v3623
    %v3683 = vmul.f32 %v690, %v3627
    %v3684 = vmul.f32 %v694, %v3623
    %v3685 = vmul.f32 %v694, %v3627
    %v3686 = vmul.f32 %v698, %v3623
    %v3687 = vmul.f32 %v698, %v3627
    %v3688 = vmul.f32 %v702, %v3623
    %v3689 = vmul.f32 %v702, %v3627
    %v3690 = vmul.f32 %v706, %v3623
    %v3691 = vmul.f32 %v706, %v3627
    %v3692 = vmul.f32 %v710, %v3623
    %v3693 = vmul.f32 %v710, %v3627
    %v3694 = vadd.f32 %v3553, %v3630
    %v3695 = vadd.f32 %v3554, %v3631
    %v3696 = vadd.f32 %v3555, %v3632
    %v3697 = vadd.f32 %v3556, %v3633
    %v3698 = vadd.f32 %v3557, %v3634
    %v3699 = vadd.f32 %v3558, %v3635
    %v3700 = vadd.f32 %v3559, %v3636
    %v3701 = vadd.f32 %v3560, %v3637
    %v3702 = vadd.f32 %v3561, %v3638
    %v3703 = vadd.f32 %v3562, %v3639
    %v3704 = vadd.f32 %v3563, %v3640
    %v3705 = vadd.f32 %v3564, %v3641
    %v3706 = vadd.f32 %v3565, %v3642
    %v3707 = vadd.f32 %v3566, %v3643
    %v3708 = vadd.f32 %v3567, %v3644
    %v3709 = vadd.f32 %v3568, %v3645
    %v3710 = vadd.f32 %v3569, %v3646
    %v3711 = vadd.f32 %v3570, %v3647
    %v3712 = vadd.f32 %v3571, %v3648
    %v3713 = vadd.f32 %v3572, %v3649
    %v3714 = vadd.f32 %v3573, %v3650
    %v3715 = vadd.f32 %v3574, %v3651
    %v3716 = vadd.f32 %v3575, %v3652
    %v3717 = vadd.f32 %v3576, %v3653
    %v3718 = vadd.f32 %v3577, %v3654
    %v3719 = vadd.f32 %v3578, %v3655
    %v3720 = vadd.f32 %v3579, %v3656
    %v3721 = vadd.f32 %v3580, %v3657
    %v3722 = vadd.f32 %v3581, %v3658
    %v3723 = vadd.f32 %v3582, %v3659
    %v3724 = vadd.f32 %v3583, %v3660
    %v3725 = vadd.f32 %v3584, %v3661
    %v3726 = vadd.f32 %v3585, %v3662
    %v3727 = vadd.f32 %v3586, %v3663
    %v3728 = vadd.f32 %v3587, %v3664
    %v3729 = vadd.f32 %v3588, %v3665
    %v3730 = vadd.f32 %v3589, %v3666
    %v3731 = vadd.f32 %v3590, %v3667
    %v3732 = vadd.f32 %v3591, %v3668
    %v3733 = vadd.f32 %v3592, %v3669
    %v3734 = vadd.f32 %v3593, %v3670
    %v3735 = vadd.f32 %v3594, %v3671
    %v3736 = vadd.f32 %v3595, %v3672
    %v3737 = vadd.f32 %v3596, %v3673
    %v3738 = vadd.f32 %v3597, %v3674
    %v3739 = vadd.f32 %v3598, %v3675
    %v3740 = vadd.f32 %v3599, %v3676
    %v3741 = vadd.f32 %v3600, %v3677
    %v3742 = vadd.f32 %v3601, %v3678
    %v3743 = vadd.f32 %v3602, %v3679
    %v3744 = vadd.f32 %v3603, %v3680
    %v3745 = vadd.f32 %v3604, %v3681
    %v3746 = vadd.f32 %v3605, %v3682
    %v3747 = vadd.f32 %v3606, %v3683
    %v3748 = vadd.f32 %v3607, %v3684
    %v3749 = vadd.f32 %v3608, %v3685
    %v3750 = vadd.f32 %v3609, %v3686
    %v3751 = vadd.f32 %v3610, %v3687
    %v3752 = vadd.f32 %v3611, %v3688
    %v3753 = vadd.f32 %v3612, %v3689
    %v3754 = vadd.f32 %v3613, %v3690
    %v3755 = vadd.f32 %v3614, %v3691
    %v3756 = vadd.f32 %v3615, %v3692
    %v3757 = vadd.f32 %v3616, %v3693
    %v3758 = vadd.f32 %v3242, %v3694
    %v3759 = vadd.f32 %v3244, %v3695
    %v3760 = vadd.f32 %v3246, %v3696
    %v3761 = vadd.f32 %v3248, %v3697
    %v3762 = vadd.f32 %v3252, %v3698
    %v3763 = vadd.f32 %v3254, %v3699
    %v3764 = vadd.f32 %v3256, %v3700
    %v3765 = vadd.f32 %v3258, %v3701
    %v3766 = vadd.f32 %v3262, %v3702
    %v3767 = vadd.f32 %v3264, %v3703
    %v3768 = vadd.f32 %v3266, %v3704
    %v3769 = vadd.f32 %v3268, %v3705
    %v3770 = vadd.f32 %v3272, %v3706
    %v3771 = vadd.f32 %v3274, %v3707
    %v3772 = vadd.f32 %v3276, %v3708
    %v3773 = vadd.f32 %v3278, %v3709
    %v3774 = vadd.f32 %v3282, %v3710
    %v3775 = vadd.f32 %v3284, %v3711
    %v3776 = vadd.f32 %v3286, %v3712
    %v3777 = vadd.f32 %v3288, %v3713
    %v3778 = vadd.f32 %v3292, %v3714
    %v3779 = vadd.f32 %v3294, %v3715
    %v3780 = vadd.f32 %v3296, %v3716
    %v3781 = vadd.f32 %v3298, %v3717
    %v3782 = vadd.f32 %v3302, %v3718
    %v3783 = vadd.f32 %v3304, %v3719
    %v3784 = vadd.f32 %v3306, %v3720
    %v3785 = vadd.f32 %v3308, %v3721
    %v3786 = vadd.f32 %v3312, %v3722
    %v3787 = vadd.f32 %v3314, %v3723
    %v3788 = vadd.f32 %v3316, %v3724
    %v3789 = vadd.f32 %v3318, %v3725
    %v3790 = vadd.f32 %v3322, %v3726
    %v3791 = vadd.f32 %v3324, %v3727
    %v3792 = vadd.f32 %v3326, %v3728
    %v3793 = vadd.f32 %v3328, %v3729
    %v3794 = vadd.f32 %v3332, %v3730
    %v3795 = vadd.f32 %v3334, %v3731
    %v3796 = vadd.f32 %v3336, %v3732
    %v3797 = vadd.f32 %v3338, %v3733
    %v3798 = vadd.f32 %v3342, %v3734
    %v3799 = vadd.f32 %v3344, %v3735
    %v3800 = vadd.f32 %v3346, %v3736
    %v3801 = vadd.f32 %v3348, %v3737
    %v3802 = vadd.f32 %v3352, %v3738
    %v3803 = vadd.f32 %v3354, %v3739
    %v3804 = vadd.f32 %v3356, %v3740
    %v3805 = vadd.f32 %v3358, %v3741
    %v3806 = vadd.f32 %v3362, %v3742
    %v3807 = vadd.f32 %v3364, %v3743
    %v3808 = vadd.f32 %v3366, %v3744
    %v3809 = vadd.f32 %v3368, %v3745
    %v3810 = vadd.f32 %v3372, %v3746
    %v3811 = vadd.f32 %v3374, %v3747
    %v3812 = vadd.f32 %v3376, %v3748
    %v3813 = vadd.f32 %v3378, %v3749
    %v3814 = vadd.f32 %v3382, %v3750
    %v3815 = vadd.f32 %v3384, %v3751
    %v3816 = vadd.f32 %v3386, %v3752
    %v3817 = vadd.f32 %v3388, %v3753
    %v3818 = vadd.f32 %v3392, %v3754
    %v3819 = vadd.f32 %v3394, %v3755
    %v3820 = vadd.f32 %v3396, %v3756
    %v3821 = vadd.f32 %v3398, %v3757
    %v3822 = vmax.f32 %v3758, 0.0
    %v3823 = vmax.f32 %v3759, 0.0
    %v3824 = vmax.f32 %v3760, 0.0
    %v3825 = vmax.f32 %v3761, 0.0
    %v3826 = vmax.f32 %v3762, 0.0
    %v3827 = vmax.f32 %v3763, 0.0
    %v3828 = vmax.f32 %v3764, 0.0
    %v3829 = vmax.f32 %v3765, 0.0
    %v3830 = vmax.f32 %v3766, 0.0
    %v3831 = vmax.f32 %v3767, 0.0
    %v3832 = vmax.f32 %v3768, 0.0
    %v3833 = vmax.f32 %v3769, 0.0
    %v3834 = vmax.f32 %v3770, 0.0
    %v3835 = vmax.f32 %v3771, 0.0
    %v3836 = vmax.f32 %v3772, 0.0
    %v3837 = vmax.f32 %v3773, 0.0
    %v3838 = vmax.f32 %v3774, 0.0
    %v3839 = vmax.f32 %v3775, 0.0
    %v3840 = vmax.f32 %v3776, 0.0
    %v3841 = vmax.f32 %v3777, 0.0
    %v3842 = vmax.f32 %v3778, 0.0
    %v3843 = vmax.f32 %v3779, 0.0
    %v3844 = vmax.f32 %v3780, 0.0
    %v3845 = vmax.f32 %v3781, 0.0
    %v3846 = vmax.f32 %v3782, 0.0
    %v3847 = vmax.f32 %v3783, 0.0
    %v3848 = vmax.f32 %v3784, 0.0
    %v3849 = vmax.f32 %v3785, 0.0
    %v3850 = vmax.f32 %v3786, 0.0
    %v3851 = vmax.f32 %v3787, 0.0
    %v3852 = vmax.f32 %v3788, 0.0
    %v3853 = vmax.f32 %v3789, 0.0
    %v3854 = vmax.f32 %v3790, 0.0
    %v3855 = vmax.f32 %v3791, 0.0
    %v3856 = vmax.f32 %v3792, 0.0
    %v3857 = vmax.f32 %v3793, 0.0
    %v3858 = vmax.f32 %v3794, 0.0
    %v3859 = vmax.f32 %v3795, 0.0
    %v3860 = vmax.f32 %v3796, 0.0
    %v3861 = vmax.f32 %v3797, 0.0
    %v3862 = vmax.f32 %v3798, 0.0
    %v3863 = vmax.f32 %v3799, 0.0
    %v3864 = vmax.f32 %v3800, 0.0
    %v3865 = vmax.f32 %v3801, 0.0
    %v3866 = vmax.f32 %v3802, 0.0
    %v3867 = vmax.f32 %v3803, 0.0
    %v3868 = vmax.f32 %v3804, 0.0
    %v3869 = vmax.f32 %v3805, 0.0
    %v3870 = vmax.f32 %v3806, 0.0
    %v3871 = vmax.f32 %v3807, 0.0
    %v3872 = vmax.f32 %v3808, 0.0
    %v3873 = vmax.f32 %v3809, 0.0
    %v3874 = vmax.f32 %v3810, 0.0
    %v3875 = vmax.f32 %v3811, 0.0
    %v3876 = vmax.f32 %v3812, 0.0
    %v3877 = vmax.f32 %v3813, 0.0
    %v3878 = vmax.f32 %v3814, 0.0
    %v3879 = vmax.f32 %v3815, 0.0
    %v3880 = vmax.f32 %v3816, 0.0
    %v3881 = vmax.f32 %v3817, 0.0
    %v3882 = vmax.f32 %v3818, 0.0
    %v3883 = vmax.f32 %v3819, 0.0
    %v3884 = vmax.f32 %v3820, 0.0
    %v3885 = vmax.f32 %v3821, 0.0
    %v3886 = vpack.c.bf16 %v3824, %v3822
    %v3887 = vpack.c.bf16 %v3825, %v3823
    %v3888 = vpack.c.bf16 %v3828, %v3826
    %v3889 = vpack.c.bf16 %v3829, %v3827
    %v3890 = vpack.c.bf16 %v3832, %v3830
    %v3891 = vpack.c.bf16 %v3833, %v3831
    %v3892 = vpack.c.bf16 %v3836, %v3834
    %v3893 = vpack.c.bf16 %v3837, %v3835
    %v3894 = vpack.c.bf16 %v3840, %v3838
    %v3895 = vpack.c.bf16 %v3841, %v3839
    %v3896 = vpack.c.bf16 %v3844, %v3842
    %v3897 = vpack.c.bf16 %v3845, %v3843
    %v3898 = vpack.c.bf16 %v3848, %v3846
    %v3899 = vpack.c.bf16 %v3849, %v3847
    %v3900 = vpack.c.bf16 %v3852, %v3850
    %v3901 = vpack.c.bf16 %v3853, %v3851
    %v3902 = vpack.c.bf16 %v3856, %v3854
    %v3903 = vpack.c.bf16 %v3857, %v3855
    %v3904 = vpack.c.bf16 %v3860, %v3858
    %v3905 = vpack.c.bf16 %v3861, %v3859
    %v3906 = vpack.c.bf16 %v3864, %v3862
    %v3907 = vpack.c.bf16 %v3865, %v3863
    %v3908 = vpack.c.bf16 %v3868, %v3866
    %v3909 = vpack.c.bf16 %v3869, %v3867
    %v3910 = vpack.c.bf16 %v3872, %v3870
    %v3911 = vpack.c.bf16 %v3873, %v3871
    %v3912 = vpack.c.bf16 %v3876, %v3874
    %v3913 = vpack.c.bf16 %v3877, %v3875
    %v3914 = vpack.c.bf16 %v3880, %v3878
    %v3915 = vpack.c.bf16 %v3881, %v3879
    %v3916 = vpack.c.bf16 %v3884, %v3882
    %v3917 = vpack.c.bf16 %v3885, %v3883
    %s3918 = scalar_lea.vmem [#allocation2], 1280
    %v3919 = vld [vmem:[%s3918] sm:$0xff]
    %v3920 = vld [vmem:[%s3918 + $0x8] sm:$0xff]
    %v3921 = vld [vmem:[%s3918 + $0x10] sm:$0xff]
    %v3922 = vld [vmem:[%s3918 + $0x18] sm:$0xff]
    %v3923 = vld [vmem:[%s3918 + $0x20] sm:$0xff]
    %v3924 = vld [vmem:[%s3918 + $0x28] sm:$0xff]
    %v3925 = vld [vmem:[%s3918 + $0x30] sm:$0xff]
    %v3926 = vld [vmem:[%s3918 + $0x38] sm:$0xff]
    %v3927 = vld [vmem:[%s3918 + $0x40] sm:$0xff]
    %v3928 = vld [vmem:[%s3918 + $0x48] sm:$0xff]
    %v3929 = vld [vmem:[%s3918 + $0x50] sm:$0xff]
    %v3930 = vld [vmem:[%s3918 + $0x58] sm:$0xff]
    %v3931 = vld [vmem:[%s3918 + $0x60] sm:$0xff]
    %v3932 = vld [vmem:[%s3918 + $0x68] sm:$0xff]
    %v3933 = vld [vmem:[%s3918 + $0x70] sm:$0xff]
    %v3934 = vld [vmem:[%s3918 + $0x78] sm:$0xff]
    %v3935 = vld [vmem:[%s3918 + $0x80] sm:$0xff]
    %v3936 = vld [vmem:[%s3918 + $0x88] sm:$0xff]
    %v3937 = vld [vmem:[%s3918 + $0x90] sm:$0xff]
    %v3938 = vld [vmem:[%s3918 + $0x98] sm:$0xff]
    %v3939 = vld [vmem:[%s3918 + $0xa0] sm:$0xff]
    %v3940 = vld [vmem:[%s3918 + $0xa8] sm:$0xff]
    %v3941 = vld [vmem:[%s3918 + $0xb0] sm:$0xff]
    %v3942 = vld [vmem:[%s3918 + $0xb8] sm:$0xff]
    %v3943 = vld [vmem:[%s3918 + $0xc0] sm:$0xff]
    %v3944 = vld [vmem:[%s3918 + $0xc8] sm:$0xff]
    %v3945 = vld [vmem:[%s3918 + $0xd0] sm:$0xff]
    %v3946 = vld [vmem:[%s3918 + $0xd8] sm:$0xff]
    %v3947 = vld [vmem:[%s3918 + $0xe0] sm:$0xff]
    %v3948 = vld [vmem:[%s3918 + $0xe8] sm:$0xff]
    %v3949 = vld [vmem:[%s3918 + $0xf0] sm:$0xff]
    %v3950 = vld [vmem:[%s3918 + $0xf8] sm:$0xff]
    %s3951 = scalar_lea.vmem %s4, 10
    %v3952 = vld [vmem:[%s3951] sm:$0x3]
    %v3954 = vlaneseq
    %v3955 = vshrl.u32 %v3954, 7
    %v3956 = vsub.s32 0, %v3955
    %v3957 = vrot.slane %v3952, %v3956
    %v3958 = vlaneseq
    %v3959 = vshrl.u32 %v3958, 7
    %v3960 = vsub.s32 1, %v3959
    %v3961 = vrot.slane %v3952, %v3960
    %v3996 = vunpack.c.l.b16 %v3919
    %v3997 = vunpack.c.h.b16 %v3919
    %v3998 = vunpack.c.l.b16 %v3920
    %v3999 = vunpack.c.h.b16 %v3920
    %v4000 = vunpack.c.l.b16 %v3921
    %v4001 = vunpack.c.h.b16 %v3921
    %v4002 = vunpack.c.l.b16 %v3922
    %v4003 = vunpack.c.h.b16 %v3922
    %v4004 = vunpack.c.l.b16 %v3923
    %v4005 = vunpack.c.h.b16 %v3923
    %v4006 = vunpack.c.l.b16 %v3924
    %v4007 = vunpack.c.h.b16 %v3924
    %v4008 = vunpack.c.l.b16 %v3925
    %v4009 = vunpack.c.h.b16 %v3925
    %v4010 = vunpack.c.l.b16 %v3926
    %v4011 = vunpack.c.h.b16 %v3926
    %v4012 = vunpack.c.l.b16 %v3927
    %v4013 = vunpack.c.h.b16 %v3927
    %v4014 = vunpack.c.l.b16 %v3928
    %v4015 = vunpack.c.h.b16 %v3928
    %v4016 = vunpack.c.l.b16 %v3929
    %v4017 = vunpack.c.h.b16 %v3929
    %v4018 = vunpack.c.l.b16 %v3930
    %v4019 = vunpack.c.h.b16 %v3930
    %v4020 = vunpack.c.l.b16 %v3931
    %v4021 = vunpack.c.h.b16 %v3931
    %v4022 = vunpack.c.l.b16 %v3932
    %v4023 = vunpack.c.h.b16 %v3932
    %v4024 = vunpack.c.l.b16 %v3933
    %v4025 = vunpack.c.h.b16 %v3933
    %v4026 = vunpack.c.l.b16 %v3934
    %v4027 = vunpack.c.h.b16 %v3934
    %v4028 = vunpack.c.l.b16 %v3935
    %v4029 = vunpack.c.h.b16 %v3935
    %v4030 = vunpack.c.l.b16 %v3936
    %v4031 = vunpack.c.h.b16 %v3936
    %v4032 = vunpack.c.l.b16 %v3937
    %v4033 = vunpack.c.h.b16 %v3937
    %v4034 = vunpack.c.l.b16 %v3938
    %v4035 = vunpack.c.h.b16 %v3938
    %v4036 = vunpack.c.l.b16 %v3939
    %v4037 = vunpack.c.h.b16 %v3939
    %v4038 = vunpack.c.l.b16 %v3940
    %v4039 = vunpack.c.h.b16 %v3940
    %v4040 = vunpack.c.l.b16 %v3941
    %v4041 = vunpack.c.h.b16 %v3941
    %v4042 = vunpack.c.l.b16 %v3942
    %v4043 = vunpack.c.h.b16 %v3942
    %v4044 = vunpack.c.l.b16 %v3943
    %v4045 = vunpack.c.h.b16 %v3943
    %v4046 = vunpack.c.l.b16 %v3944
    %v4047 = vunpack.c.h.b16 %v3944
    %v4048 = vunpack.c.l.b16 %v3945
    %v4049 = vunpack.c.h.b16 %v3945
    %v4050 = vunpack.c.l.b16 %v3946
    %v4051 = vunpack.c.h.b16 %v3946
    %v4052 = vunpack.c.l.b16 %v3947
    %v4053 = vunpack.c.h.b16 %v3947
    %v4054 = vunpack.c.l.b16 %v3948
    %v4055 = vunpack.c.h.b16 %v3948
    %v4056 = vunpack.c.l.b16 %v3949
    %v4057 = vunpack.c.h.b16 %v3949
    %v4058 = vunpack.c.l.b16 %v3950
    %v4059 = vunpack.c.h.b16 %v3950
    %v4060 = vpack.c.b16 %v3998, %v3996
    %v4061 = vpack.c.b16 %v3999, %v3997
    %v4062 = vpack.c.b16 %v4002, %v4000
    %v4063 = vpack.c.b16 %v4003, %v4001
    %v4064 = vpack.c.b16 %v4006, %v4004
    %v4065 = vpack.c.b16 %v4007, %v4005
    %v4066 = vpack.c.b16 %v4010, %v4008
    %v4067 = vpack.c.b16 %v4011, %v4009
    %v4068 = vpack.c.b16 %v4014, %v4012
    %v4069 = vpack.c.b16 %v4015, %v4013
    %v4070 = vpack.c.b16 %v4018, %v4016
    %v4071 = vpack.c.b16 %v4019, %v4017
    %v4072 = vpack.c.b16 %v4022, %v4020
    %v4073 = vpack.c.b16 %v4023, %v4021
    %v4074 = vpack.c.b16 %v4026, %v4024
    %v4075 = vpack.c.b16 %v4027, %v4025
    %v4076 = vpack.c.b16 %v4030, %v4028
    %v4077 = vpack.c.b16 %v4031, %v4029
    %v4078 = vpack.c.b16 %v4034, %v4032
    %v4079 = vpack.c.b16 %v4035, %v4033
    %v4080 = vpack.c.b16 %v4038, %v4036
    %v4081 = vpack.c.b16 %v4039, %v4037
    %v4082 = vpack.c.b16 %v4042, %v4040
    %v4083 = vpack.c.b16 %v4043, %v4041
    %v4084 = vpack.c.b16 %v4046, %v4044
    %v4085 = vpack.c.b16 %v4047, %v4045
    %v4086 = vpack.c.b16 %v4050, %v4048
    %v4087 = vpack.c.b16 %v4051, %v4049
    %v4088 = vpack.c.b16 %v4054, %v4052
    %v4089 = vpack.c.b16 %v4055, %v4053
    %v4090 = vpack.c.b16 %v4058, %v4056
    %v4091 = vpack.c.b16 %v4059, %v4057
    %4124 = vmatprep.subr.bf16.mxu0 %v4061
    %4125 = vmatpush1.bf16.msra.mxu0 %v4060
    %4126 = vmatprep.subr.bf16.mxu0 %v4063
    %4127 = vmatpush1.bf16.msra.mxu0 %v4062
    %4128 = vmatprep.subr.bf16.mxu0 %v4065
    %4129 = vmatpush1.bf16.msra.mxu0 %v4064
    %4130 = vmatprep.subr.bf16.mxu0 %v4067
    %4131 = vmatpush1.bf16.msra.mxu0 %v4066
    %4132 = vmatprep.subr.bf16.mxu0 %v4069
    %4133 = vmatpush1.bf16.msra.mxu0 %v4068
    %4134 = vmatprep.subr.bf16.mxu0 %v4071
    %4135 = vmatpush1.bf16.msra.mxu0 %v4070
    %4136 = vmatprep.subr.bf16.mxu0 %v4073
    %4137 = vmatpush1.bf16.msra.mxu0 %v4072
    %4138 = vmatprep.subr.bf16.mxu0 %v4075
    %4139 = vmatpush1.bf16.msra.mxu0 %v4074
    %4140 = vmatprep.subr.bf16.mxu0 %v4077
    %4141 = vmatpush1.bf16.msra.mxu0 %v4076
    %4142 = vmatprep.subr.bf16.mxu0 %v4079
    %4143 = vmatpush1.bf16.msra.mxu0 %v4078
    %4144 = vmatprep.subr.bf16.mxu0 %v4081
    %4145 = vmatpush1.bf16.msra.mxu0 %v4080
    %4146 = vmatprep.subr.bf16.mxu0 %v4083
    %4147 = vmatpush1.bf16.msra.mxu0 %v4082
    %4148 = vmatprep.subr.bf16.mxu0 %v4085
    %4149 = vmatpush1.bf16.msra.mxu0 %v4084
    %4150 = vmatprep.subr.bf16.mxu0 %v4087
    %4151 = vmatpush1.bf16.msra.mxu0 %v4086
    %4152 = vmatprep.subr.bf16.mxu0 %v4089
    %4153 = vmatpush1.bf16.msra.mxu0 %v4088
    %4154 = vmatprep.subr.bf16.mxu0 %v4091
    %4155 = vmatpush1.bf16.msra.mxu0 %v4090
    %4156 = vmatprep.mubr.bf16.mxu0 %v3887
    %4157 = vmatmul.mubr.bf16.gmra.mrb[0].mxu0 %v3886
    %v4158 = vpop.f32.mrb[0].mxu0
    %v4159 = vadd.f32 %v3957, %v4158
    %v4160 = vpop.f32.mrb[0].mxu0
    %v4161 = vadd.f32 %v3961, %v4160
    %v4162 = vpop.f32.mrb[0].mxu0
    %v4163 = vadd.f32 %v3957, %v4162
    %v4164 = vpop.f32.mrb[0].mxu0
    %v4165 = vadd.f32 %v3961, %v4164
    %4166 = vmatprep.mubr.bf16.mxu0 %v3889
    %4167 = vmatmul.mubr.bf16.gmra.mrb[0].mxu0 %v3888
    %v4168 = vpop.f32.mrb[0].mxu0
    %v4169 = vadd.f32 %v3957, %v4168
    %v4170 = vpop.f32.mrb[0].mxu0
    %v4171 = vadd.f32 %v3961, %v4170
    %v4172 = vpop.f32.mrb[0].mxu0
    %v4173 = vadd.f32 %v3957, %v4172
    %v4174 = vpop.f32.mrb[0].mxu0
    %v4175 = vadd.f32 %v3961, %v4174
    %4176 = vmatprep.mubr.bf16.mxu0 %v3891
    %4177 = vmatmul.mubr.bf16.gmra.mrb[0].mxu0 %v3890
    %v4178 = vpop.f32.mrb[0].mxu0
    %v4179 = vadd.f32 %v3957, %v4178
    %v4180 = vpop.f32.mrb[0].mxu0
    %v4181 = vadd.f32 %v3961, %v4180
    %v4182 = vpop.f32.mrb[0].mxu0
    %v4183 = vadd.f32 %v3957, %v4182
    %v4184 = vpop.f32.mrb[0].mxu0
    %v4185 = vadd.f32 %v3961, %v4184
    %4186 = vmatprep.mubr.bf16.mxu0 %v3893
    %4187 = vmatmul.mubr.bf16.gmra.mrb[0].mxu0 %v3892
    %v4188 = vpop.f32.mrb[0].mxu0
    %v4189 = vadd.f32 %v3957, %v4188
    %v4190 = vpop.f32.mrb[0].mxu0
    %v4191 = vadd.f32 %v3961, %v4190
    %v4192 = vpop.f32.mrb[0].mxu0
    %v4193 = vadd.f32 %v3957, %v4192
    %v4194 = vpop.f32.mrb[0].mxu0
    %v4195 = vadd.f32 %v3961, %v4194
    %4196 = vmatprep.mubr.bf16.mxu0 %v3895
    %4197 = vmatmul.mubr.bf16.gmra.mrb[0].mxu0 %v3894
    %v4198 = vpop.f32.mrb[0].mxu0
    %v4199 = vadd.f32 %v3957, %v4198
    %v4200 = vpop.f32.mrb[0].mxu0
    %v4201 = vadd.f32 %v3961, %v4200
    %v4202 = vpop.f32.mrb[0].mxu0
    %v4203 = vadd.f32 %v3957, %v4202
    %v4204 = vpop.f32.mrb[0].mxu0
    %v4205 = vadd.f32 %v3961, %v4204
    %4206 = vmatprep.mubr.bf16.mxu0 %v3897
    %4207 = vmatmul.mubr.bf16.gmra.mrb[0].mxu0 %v3896
    %v4208 = vpop.f32.mrb[0].mxu0
    %v4209 = vadd.f32 %v3957, %v4208
    %v4210 = vpop.f32.mrb[0].mxu0
    %v4211 = vadd.f32 %v3961, %v4210
    %v4212 = vpop.f32.mrb[0].mxu0
    %v4213 = vadd.f32 %v3957, %v4212
    %v4214 = vpop.f32.mrb[0].mxu0
    %v4215 = vadd.f32 %v3961, %v4214
    %4216 = vmatprep.mubr.bf16.mxu0 %v3899
    %4217 = vmatmul.mubr.bf16.gmra.mrb[0].mxu0 %v3898
    %v4218 = vpop.f32.mrb[0].mxu0
    %v4219 = vadd.f32 %v3957, %v4218
    %v4220 = vpop.f32.mrb[0].mxu0
    %v4221 = vadd.f32 %v3961, %v4220
    %v4222 = vpop.f32.mrb[0].mxu0
    %v4223 = vadd.f32 %v3957, %v4222
    %v4224 = vpop.f32.mrb[0].mxu0
    %v4225 = vadd.f32 %v3961, %v4224
    %4226 = vmatprep.mubr.bf16.mxu0 %v3901
    %4227 = vmatmul.mubr.bf16.gmra.mrb[0].mxu0 %v3900
    %v4228 = vpop.f32.mrb[0].mxu0
    %v4229 = vadd.f32 %v3957, %v4228
    %v4230 = vpop.f32.mrb[0].mxu0
    %v4231 = vadd.f32 %v3961, %v4230
    %v4232 = vpop.f32.mrb[0].mxu0
    %v4233 = vadd.f32 %v3957, %v4232
    %v4234 = vpop.f32.mrb[0].mxu0
    %v4235 = vadd.f32 %v3961, %v4234
    %4236 = vmatprep.mubr.bf16.mxu0 %v3903
    %4237 = vmatmul.mubr.bf16.gmra.mrb[0].mxu0 %v3902
    %v4238 = vpop.f32.mrb[0].mxu0
    %v4239 = vadd.f32 %v3957, %v4238
    %v4240 = vpop.f32.mrb[0].mxu0
    %v4241 = vadd.f32 %v3961, %v4240
    %v4242 = vpop.f32.mrb[0].mxu0
    %v4243 = vadd.f32 %v3957, %v4242
    %v4244 = vpop.f32.mrb[0].mxu0
    %v4245 = vadd.f32 %v3961, %v4244
    %4246 = vmatprep.mubr.bf16.mxu0 %v3905
    %4247 = vmatmul.mubr.bf16.gmra.mrb[0].mxu0 %v3904
    %v4248 = vpop.f32.mrb[0].mxu0
    %v4249 = vadd.f32 %v3957, %v4248
    %v4250 = vpop.f32.mrb[0].mxu0
    %v4251 = vadd.f32 %v3961, %v4250
    %v4252 = vpop.f32.mrb[0].mxu0
    %v4253 = vadd.f32 %v3957, %v4252
    %v4254 = vpop.f32.mrb[0].mxu0
    %v4255 = vadd.f32 %v3961, %v4254
    %4256 = vmatprep.mubr.bf16.mxu0 %v3907
    %4257 = vmatmul.mubr.bf16.gmra.mrb[0].mxu0 %v3906
    %v4258 = vpop.f32.mrb[0].mxu0
    %v4259 = vadd.f32 %v3957, %v4258
    %v4260 = vpop.f32.mrb[0].mxu0
    %v4261 = vadd.f32 %v3961, %v4260
    %v4262 = vpop.f32.mrb[0].mxu0
    %v4263 = vadd.f32 %v3957, %v4262
    %v4264 = vpop.f32.mrb[0].mxu0
    %v4265 = vadd.f32 %v3961, %v4264
    %4266 = vmatprep.mubr.bf16.mxu0 %v3909
    %4267 = vmatmul.mubr.bf16.gmra.mrb[0].mxu0 %v3908
    %v4268 = vpop.f32.mrb[0].mxu0
    %v4269 = vadd.f32 %v3957, %v4268
    %v4270 = vpop.f32.mrb[0].mxu0
    %v4271 = vadd.f32 %v3961, %v4270
    %v4272 = vpop.f32.mrb[0].mxu0
    %v4273 = vadd.f32 %v3957, %v4272
    %v4274 = vpop.f32.mrb[0].mxu0
    %v4275 = vadd.f32 %v3961, %v4274
    %4276 = vmatprep.mubr.bf16.mxu0 %v3911
    %4277 = vmatmul.mubr.bf16.gmra.mrb[0].mxu0 %v3910
    %v4278 = vpop.f32.mrb[0].mxu0
    %v4279 = vadd.f32 %v3957, %v4278
    %v4280 = vpop.f32.mrb[0].mxu0
    %v4281 = vadd.f32 %v3961, %v4280
    %v4282 = vpop.f32.mrb[0].mxu0
    %v4283 = vadd.f32 %v3957, %v4282
    %v4284 = vpop.f32.mrb[0].mxu0
    %v4285 = vadd.f32 %v3961, %v4284
    %4286 = vmatprep.mubr.bf16.mxu0 %v3913
    %4287 = vmatmul.mubr.bf16.gmra.mrb[0].mxu0 %v3912
    %v4288 = vpop.f32.mrb[0].mxu0
    %v4289 = vadd.f32 %v3957, %v4288
    %v4290 = vpop.f32.mrb[0].mxu0
    %v4291 = vadd.f32 %v3961, %v4290
    %v4292 = vpop.f32.mrb[0].mxu0
    %v4293 = vadd.f32 %v3957, %v4292
    %v4294 = vpop.f32.mrb[0].mxu0
    %v4295 = vadd.f32 %v3961, %v4294
    %4296 = vmatprep.mubr.bf16.mxu0 %v3915
    %4297 = vmatmul.mubr.bf16.gmra.mrb[0].mxu0 %v3914
    %v4298 = vpop.f32.mrb[0].mxu0
    %v4299 = vadd.f32 %v3957, %v4298
    %v4300 = vpop.f32.mrb[0].mxu0
    %v4301 = vadd.f32 %v3961, %v4300
    %v4302 = vpop.f32.mrb[0].mxu0
    %v4303 = vadd.f32 %v3957, %v4302
    %v4304 = vpop.f32.mrb[0].mxu0
    %v4305 = vadd.f32 %v3961, %v4304
    %4306 = vmatprep.mubr.bf16.mxu0 %v3917
    %4307 = vmatmul.mubr.bf16.gmra.mrb[0].mxu0 %v3916
    %v4308 = vpop.f32.mrb[0].mxu0
    %v4309 = vadd.f32 %v3957, %v4308
    %v4310 = vpop.f32.mrb[0].mxu0
    %v4311 = vadd.f32 %v3961, %v4310
    %v4312 = vpop.f32.mrb[0].mxu0
    %v4313 = vadd.f32 %v3957, %v4312
    %v4314 = vpop.f32.mrb[0].mxu0
    %v4315 = vadd.f32 %v3961, %v4314
    %4316 = vdwg.mxu0
    %v4317 = vmax.f32 %v4159, 0.0
    %v4318 = vmax.f32 %v4161, 0.0
    %v4319 = vmax.f32 %v4163, 0.0
    %v4320 = vmax.f32 %v4165, 0.0
    %v4321 = vmax.f32 %v4169, 0.0
    %v4322 = vmax.f32 %v4171, 0.0
    %v4323 = vmax.f32 %v4173, 0.0
    %v4324 = vmax.f32 %v4175, 0.0
    %v4325 = vmax.f32 %v4179, 0.0
    %v4326 = vmax.f32 %v4181, 0.0
    %v4327 = vmax.f32 %v4183, 0.0
    %v4328 = vmax.f32 %v4185, 0.0
    %v4329 = vmax.f32 %v4189, 0.0
    %v4330 = vmax.f32 %v4191, 0.0
    %v4331 = vmax.f32 %v4193, 0.0
    %v4332 = vmax.f32 %v4195, 0.0
    %v4333 = vmax.f32 %v4199, 0.0
    %v4334 = vmax.f32 %v4201, 0.0
    %v4335 = vmax.f32 %v4203, 0.0
    %v4336 = vmax.f32 %v4205, 0.0
    %v4337 = vmax.f32 %v4209, 0.0
    %v4338 = vmax.f32 %v4211, 0.0
    %v4339 = vmax.f32 %v4213, 0.0
    %v4340 = vmax.f32 %v4215, 0.0
    %v4341 = vmax.f32 %v4219, 0.0
    %v4342 = vmax.f32 %v4221, 0.0
    %v4343 = vmax.f32 %v4223, 0.0
    %v4344 = vmax.f32 %v4225, 0.0
    %v4345 = vmax.f32 %v4229, 0.0
    %v4346 = vmax.f32 %v4231, 0.0
    %v4347 = vmax.f32 %v4233, 0.0
    %v4348 = vmax.f32 %v4235, 0.0
    %v4349 = vmax.f32 %v4239, 0.0
    %v4350 = vmax.f32 %v4241, 0.0
    %v4351 = vmax.f32 %v4243, 0.0
    %v4352 = vmax.f32 %v4245, 0.0
    %v4353 = vmax.f32 %v4249, 0.0
    %v4354 = vmax.f32 %v4251, 0.0
    %v4355 = vmax.f32 %v4253, 0.0
    %v4356 = vmax.f32 %v4255, 0.0
    %v4357 = vmax.f32 %v4259, 0.0
    %v4358 = vmax.f32 %v4261, 0.0
    %v4359 = vmax.f32 %v4263, 0.0
    %v4360 = vmax.f32 %v4265, 0.0
    %v4361 = vmax.f32 %v4269, 0.0
    %v4362 = vmax.f32 %v4271, 0.0
    %v4363 = vmax.f32 %v4273, 0.0
    %v4364 = vmax.f32 %v4275, 0.0
    %v4365 = vmax.f32 %v4279, 0.0
    %v4366 = vmax.f32 %v4281, 0.0
    %v4367 = vmax.f32 %v4283, 0.0
    %v4368 = vmax.f32 %v4285, 0.0
    %v4369 = vmax.f32 %v4289, 0.0
    %v4370 = vmax.f32 %v4291, 0.0
    %v4371 = vmax.f32 %v4293, 0.0
    %v4372 = vmax.f32 %v4295, 0.0
    %v4373 = vmax.f32 %v4299, 0.0
    %v4374 = vmax.f32 %v4301, 0.0
    %v4375 = vmax.f32 %v4303, 0.0
    %v4376 = vmax.f32 %v4305, 0.0
    %v4377 = vmax.f32 %v4309, 0.0
    %v4378 = vmax.f32 %v4311, 0.0
    %v4379 = vmax.f32 %v4313, 0.0
    %v4380 = vmax.f32 %v4315, 0.0
    %v4381 = vpack.c.bf16 %v4319, %v4317
    %v4382 = vpack.c.bf16 %v4320, %v4318
    %v4383 = vpack.c.bf16 %v4323, %v4321
    %v4384 = vpack.c.bf16 %v4324, %v4322
    %v4385 = vpack.c.bf16 %v4327, %v4325
    %v4386 = vpack.c.bf16 %v4328, %v4326
    %v4387 = vpack.c.bf16 %v4331, %v4329
    %v4388 = vpack.c.bf16 %v4332, %v4330
    %v4389 = vpack.c.bf16 %v4335, %v4333
    %v4390 = vpack.c.bf16 %v4336, %v4334
    %v4391 = vpack.c.bf16 %v4339, %v4337
    %v4392 = vpack.c.bf16 %v4340, %v4338
    %v4393 = vpack.c.bf16 %v4343, %v4341
    %v4394 = vpack.c.bf16 %v4344, %v4342
    %v4395 = vpack.c.bf16 %v4347, %v4345
    %v4396 = vpack.c.bf16 %v4348, %v4346
    %v4397 = vpack.c.bf16 %v4351, %v4349
    %v4398 = vpack.c.bf16 %v4352, %v4350
    %v4399 = vpack.c.bf16 %v4355, %v4353
    %v4400 = vpack.c.bf16 %v4356, %v4354
    %v4401 = vpack.c.bf16 %v4359, %v4357
    %v4402 = vpack.c.bf16 %v4360, %v4358
    %v4403 = vpack.c.bf16 %v4363, %v4361
    %v4404 = vpack.c.bf16 %v4364, %v4362
    %v4405 = vpack.c.bf16 %v4367, %v4365
    %v4406 = vpack.c.bf16 %v4368, %v4366
    %v4407 = vpack.c.bf16 %v4371, %v4369
    %v4408 = vpack.c.bf16 %v4372, %v4370
    %v4409 = vpack.c.bf16 %v4375, %v4373
    %v4410 = vpack.c.bf16 %v4376, %v4374
    %v4411 = vpack.c.bf16 %v4379, %v4377
    %v4412 = vpack.c.bf16 %v4380, %v4378
    %s4413 = scalar_lea.vmem [#allocation2], 1536
    %v4414 = vld [vmem:[%s4413] sm:$0xff]
    %v4415 = vld [vmem:[%s4413 + $0x8] sm:$0xff]
    %v4416 = vld [vmem:[%s4413 + $0x10] sm:$0xff]
    %v4417 = vld [vmem:[%s4413 + $0x18] sm:$0xff]
    %v4418 = vld [vmem:[%s4413 + $0x20] sm:$0xff]
    %v4419 = vld [vmem:[%s4413 + $0x28] sm:$0xff]
    %v4420 = vld [vmem:[%s4413 + $0x30] sm:$0xff]
    %v4421 = vld [vmem:[%s4413 + $0x38] sm:$0xff]
    %v4422 = vld [vmem:[%s4413 + $0x40] sm:$0xff]
    %v4423 = vld [vmem:[%s4413 + $0x48] sm:$0xff]
    %v4424 = vld [vmem:[%s4413 + $0x50] sm:$0xff]
    %v4425 = vld [vmem:[%s4413 + $0x58] sm:$0xff]
    %v4426 = vld [vmem:[%s4413 + $0x60] sm:$0xff]
    %v4427 = vld [vmem:[%s4413 + $0x68] sm:$0xff]
    %v4428 = vld [vmem:[%s4413 + $0x70] sm:$0xff]
    %v4429 = vld [vmem:[%s4413 + $0x78] sm:$0xff]
    %v4430 = vld [vmem:[%s4413 + $0x80] sm:$0xff]
    %v4431 = vld [vmem:[%s4413 + $0x88] sm:$0xff]
    %v4432 = vld [vmem:[%s4413 + $0x90] sm:$0xff]
    %v4433 = vld [vmem:[%s4413 + $0x98] sm:$0xff]
    %v4434 = vld [vmem:[%s4413 + $0xa0] sm:$0xff]
    %v4435 = vld [vmem:[%s4413 + $0xa8] sm:$0xff]
    %v4436 = vld [vmem:[%s4413 + $0xb0] sm:$0xff]
    %v4437 = vld [vmem:[%s4413 + $0xb8] sm:$0xff]
    %v4438 = vld [vmem:[%s4413 + $0xc0] sm:$0xff]
    %v4439 = vld [vmem:[%s4413 + $0xc8] sm:$0xff]
    %v4440 = vld [vmem:[%s4413 + $0xd0] sm:$0xff]
    %v4441 = vld [vmem:[%s4413 + $0xd8] sm:$0xff]
    %v4442 = vld [vmem:[%s4413 + $0xe0] sm:$0xff]
    %v4443 = vld [vmem:[%s4413 + $0xe8] sm:$0xff]
    %v4444 = vld [vmem:[%s4413 + $0xf0] sm:$0xff]
    %v4445 = vld [vmem:[%s4413 + $0xf8] sm:$0xff]
    %s4446 = scalar_lea.vmem %s4, 12
    %v4447 = vld [vmem:[%s4446] sm:$0x3]
    %v4449 = vlaneseq
    %v4450 = vshrl.u32 %v4449, 7
    %v4451 = vsub.s32 0, %v4450
    %v4452 = vrot.slane %v4447, %v4451
    %v4453 = vlaneseq
    %v4454 = vshrl.u32 %v4453, 7
    %v4455 = vsub.s32 1, %v4454
    %v4456 = vrot.slane %v4447, %v4455
    %v4491 = vunpack.c.l.b16 %v4414
    %v4492 = vunpack.c.h.b16 %v4414
    %v4493 = vunpack.c.l.b16 %v4415
    %v4494 = vunpack.c.h.b16 %v4415
    %v4495 = vunpack.c.l.b16 %v4416
    %v4496 = vunpack.c.h.b16 %v4416
    %v4497 = vunpack.c.l.b16 %v4417
    %v4498 = vunpack.c.h.b16 %v4417
    %v4499 = vunpack.c.l.b16 %v4418
    %v4500 = vunpack.c.h.b16 %v4418
    %v4501 = vunpack.c.l.b16 %v4419
    %v4502 = vunpack.c.h.b16 %v4419
    %v4503 = vunpack.c.l.b16 %v4420
    %v4504 = vunpack.c.h.b16 %v4420
    %v4505 = vunpack.c.l.b16 %v4421
    %v4506 = vunpack.c.h.b16 %v4421
    %v4507 = vunpack.c.l.b16 %v4422
    %v4508 = vunpack.c.h.b16 %v4422
    %v4509 = vunpack.c.l.b16 %v4423
    %v4510 = vunpack.c.h.b16 %v4423
    %v4511 = vunpack.c.l.b16 %v4424
    %v4512 = vunpack.c.h.b16 %v4424
    %v4513 = vunpack.c.l.b16 %v4425
    %v4514 = vunpack.c.h.b16 %v4425
    %v4515 = vunpack.c.l.b16 %v4426
    %v4516 = vunpack.c.h.b16 %v4426
    %v4517 = vunpack.c.l.b16 %v4427
    %v4518 = vunpack.c.h.b16 %v4427
    %v4519 = vunpack.c.l.b16 %v4428
    %v4520 = vunpack.c.h.b16 %v4428
    %v4521 = vunpack.c.l.b16 %v4429
    %v4522 = vunpack.c.h.b16 %v4429
    %v4523 = vunpack.c.l.b16 %v4430
    %v4524 = vunpack.c.h.b16 %v4430
    %v4525 = vunpack.c.l.b16 %v4431
    %v4526 = vunpack.c.h.b16 %v4431
    %v4527 = vunpack.c.l.b16 %v4432
    %v4528 = vunpack.c.h.b16 %v4432
    %v4529 = vunpack.c.l.b16 %v4433
    %v4530 = vunpack.c.h.b16 %v4433
    %v4531 = vunpack.c.l.b16 %v4434
    %v4532 = vunpack.c.h.b16 %v4434
    %v4533 = vunpack.c.l.b16 %v4435
    %v4534 = vunpack.c.h.b16 %v4435
    %v4535 = vunpack.c.l.b16 %v4436
    %v4536 = vunpack.c.h.b16 %v4436
    %v4537 = vunpack.c.l.b16 %v4437
    %v4538 = vunpack.c.h.b16 %v4437
    %v4539 = vunpack.c.l.b16 %v4438
    %v4540 = vunpack.c.h.b16 %v4438
    %v4541 = vunpack.c.l.b16 %v4439
    %v4542 = vunpack.c.h.b16 %v4439
    %v4543 = vunpack.c.l.b16 %v4440
    %v4544 = vunpack.c.h.b16 %v4440
    %v4545 = vunpack.c.l.b16 %v4441
    %v4546 = vunpack.c.h.b16 %v4441
    %v4547 = vunpack.c.l.b16 %v4442
    %v4548 = vunpack.c.h.b16 %v4442
    %v4549 = vunpack.c.l.b16 %v4443
    %v4550 = vunpack.c.h.b16 %v4443
    %v4551 = vunpack.c.l.b16 %v4444
    %v4552 = vunpack.c.h.b16 %v4444
    %v4553 = vunpack.c.l.b16 %v4445
    %v4554 = vunpack.c.h.b16 %v4445
    %v4555 = vpack.c.b16 %v4493, %v4491
    %v4556 = vpack.c.b16 %v4494, %v4492
    %v4557 = vpack.c.b16 %v4497, %v4495
    %v4558 = vpack.c.b16 %v4498, %v4496
    %v4559 = vpack.c.b16 %v4501, %v4499
    %v4560 = vpack.c.b16 %v4502, %v4500
    %v4561 = vpack.c.b16 %v4505, %v4503
    %v4562 = vpack.c.b16 %v4506, %v4504
    %v4563 = vpack.c.b16 %v4509, %v4507
    %v4564 = vpack.c.b16 %v4510, %v4508
    %v4565 = vpack.c.b16 %v4513, %v4511
    %v4566 = vpack.c.b16 %v4514, %v4512
    %v4567 = vpack.c.b16 %v4517, %v4515
    %v4568 = vpack.c.b16 %v4518, %v4516
    %v4569 = vpack.c.b16 %v4521, %v4519
    %v4570 = vpack.c.b16 %v4522, %v4520
    %v4571 = vpack.c.b16 %v4525, %v4523
    %v4572 = vpack.c.b16 %v4526, %v4524
    %v4573 = vpack.c.b16 %v4529, %v4527
    %v4574 = vpack.c.b16 %v4530, %v4528
    %v4575 = vpack.c.b16 %v4533, %v4531
    %v4576 = vpack.c.b16 %v4534, %v4532
    %v4577 = vpack.c.b16 %v4537, %v4535
    %v4578 = vpack.c.b16 %v4538, %v4536
    %v4579 = vpack.c.b16 %v4541, %v4539
    %v4580 = vpack.c.b16 %v4542, %v4540
    %v4581 = vpack.c.b16 %v4545, %v4543
    %v4582 = vpack.c.b16 %v4546, %v4544
    %v4583 = vpack.c.b16 %v4549, %v4547
    %v4584 = vpack.c.b16 %v4550, %v4548
    %v4585 = vpack.c.b16 %v4553, %v4551
    %v4586 = vpack.c.b16 %v4554, %v4552
    %4619 = vmatprep.subr.bf16.mxu0 %v4556
    %4620 = vmatpush1.bf16.msra.mxu0 %v4555
    %4621 = vmatprep.subr.bf16.mxu0 %v4558
    %4622 = vmatpush1.bf16.msra.mxu0 %v4557
    %4623 = vmatprep.subr.bf16.mxu0 %v4560
    %4624 = vmatpush1.bf16.msra.mxu0 %v4559
    %4625 = vmatprep.subr.bf16.mxu0 %v4562
    %4626 = vmatpush1.bf16.msra.mxu0 %v4561
    %4627 = vmatprep.subr.bf16.mxu0 %v4564
    %4628 = vmatpush1.bf16.msra.mxu0 %v4563
    %4629 = vmatprep.subr.bf16.mxu0 %v4566
    %4630 = vmatpush1.bf16.msra.mxu0 %v4565
    %4631 = vmatprep.subr.bf16.mxu0 %v4568
    %4632 = vmatpush1.bf16.msra.mxu0 %v4567
    %4633 = vmatprep.subr.bf16.mxu0 %v4570
    %4634 = vmatpush1.bf16.msra.mxu0 %v4569
    %4635 = vmatprep.subr.bf16.mxu0 %v4572
    %4636 = vmatpush1.bf16.msra.mxu0 %v4571
    %4637 = vmatprep.subr.bf16.mxu0 %v4574
    %4638 = vmatpush1.bf16.msra.mxu0 %v4573
    %4639 = vmatprep.subr.bf16.mxu0 %v4576
    %4640 = vmatpush1.bf16.msra.mxu0 %v4575
    %4641 = vmatprep.subr.bf16.mxu0 %v4578
    %4642 = vmatpush1.bf16.msra.mxu0 %v4577
    %4643 = vmatprep.subr.bf16.mxu0 %v4580
    %4644 = vmatpush1.bf16.msra.mxu0 %v4579
    %4645 = vmatprep.subr.bf16.mxu0 %v4582
    %4646 = vmatpush1.bf16.msra.mxu0 %v4581
    %4647 = vmatprep.subr.bf16.mxu0 %v4584
    %4648 = vmatpush1.bf16.msra.mxu0 %v4583
    %4649 = vmatprep.subr.bf16.mxu0 %v4586
    %4650 = vmatpush1.bf16.msra.mxu0 %v4585
    %4651 = vmatprep.mubr.bf16.mxu0 %v4382
    %4652 = vmatmul.mubr.bf16.gmra.mrb[0].mxu0 %v4381
    %v4653 = vpop.f32.mrb[0].mxu0
    %v4654 = vadd.f32 %v4452, %v4653
    %v4655 = vpop.f32.mrb[0].mxu0
    %v4656 = vadd.f32 %v4456, %v4655
    %v4657 = vpop.f32.mrb[0].mxu0
    %v4658 = vadd.f32 %v4452, %v4657
    %v4659 = vpop.f32.mrb[0].mxu0
    %v4660 = vadd.f32 %v4456, %v4659
    %4661 = vmatprep.mubr.bf16.mxu0 %v4384
    %4662 = vmatmul.mubr.bf16.gmra.mrb[0].mxu0 %v4383
    %v4663 = vpop.f32.mrb[0].mxu0
    %v4664 = vadd.f32 %v4452, %v4663
    %v4665 = vpop.f32.mrb[0].mxu0
    %v4666 = vadd.f32 %v4456, %v4665
    %v4667 = vpop.f32.mrb[0].mxu0
    %v4668 = vadd.f32 %v4452, %v4667
    %v4669 = vpop.f32.mrb[0].mxu0
    %v4670 = vadd.f32 %v4456, %v4669
    %4671 = vmatprep.mubr.bf16.mxu0 %v4386
    %4672 = vmatmul.mubr.bf16.gmra.mrb[0].mxu0 %v4385
    %v4673 = vpop.f32.mrb[0].mxu0
    %v4674 = vadd.f32 %v4452, %v4673
    %v4675 = vpop.f32.mrb[0].mxu0
    %v4676 = vadd.f32 %v4456, %v4675
    %v4677 = vpop.f32.mrb[0].mxu0
    %v4678 = vadd.f32 %v4452, %v4677
    %v4679 = vpop.f32.mrb[0].mxu0
    %v4680 = vadd.f32 %v4456, %v4679
    %4681 = vmatprep.mubr.bf16.mxu0 %v4388
    %4682 = vmatmul.mubr.bf16.gmra.mrb[0].mxu0 %v4387
    %v4683 = vpop.f32.mrb[0].mxu0
    %v4684 = vadd.f32 %v4452, %v4683
    %v4685 = vpop.f32.mrb[0].mxu0
    %v4686 = vadd.f32 %v4456, %v4685
    %v4687 = vpop.f32.mrb[0].mxu0
    %v4688 = vadd.f32 %v4452, %v4687
    %v4689 = vpop.f32.mrb[0].mxu0
    %v4690 = vadd.f32 %v4456, %v4689
    %4691 = vmatprep.mubr.bf16.mxu0 %v4390
    %4692 = vmatmul.mubr.bf16.gmra.mrb[0].mxu0 %v4389
    %v4693 = vpop.f32.mrb[0].mxu0
    %v4694 = vadd.f32 %v4452, %v4693
    %v4695 = vpop.f32.mrb[0].mxu0
    %v4696 = vadd.f32 %v4456, %v4695
    %v4697 = vpop.f32.mrb[0].mxu0
    %v4698 = vadd.f32 %v4452, %v4697
    %v4699 = vpop.f32.mrb[0].mxu0
    %v4700 = vadd.f32 %v4456, %v4699
    %4701 = vmatprep.mubr.bf16.mxu0 %v4392
    %4702 = vmatmul.mubr.bf16.gmra.mrb[0].mxu0 %v4391
    %v4703 = vpop.f32.mrb[0].mxu0
    %v4704 = vadd.f32 %v4452, %v4703
    %v4705 = vpop.f32.mrb[0].mxu0
    %v4706 = vadd.f32 %v4456, %v4705
    %v4707 = vpop.f32.mrb[0].mxu0
    %v4708 = vadd.f32 %v4452, %v4707
    %v4709 = vpop.f32.mrb[0].mxu0
    %v4710 = vadd.f32 %v4456, %v4709
    %4711 = vmatprep.mubr.bf16.mxu0 %v4394
    %4712 = vmatmul.mubr.bf16.gmra.mrb[0].mxu0 %v4393
    %v4713 = vpop.f32.mrb[0].mxu0
    %v4714 = vadd.f32 %v4452, %v4713
    %v4715 = vpop.f32.mrb[0].mxu0
    %v4716 = vadd.f32 %v4456, %v4715
    %v4717 = vpop.f32.mrb[0].mxu0
    %v4718 = vadd.f32 %v4452, %v4717
    %v4719 = vpop.f32.mrb[0].mxu0
    %v4720 = vadd.f32 %v4456, %v4719
    %4721 = vmatprep.mubr.bf16.mxu0 %v4396
    %4722 = vmatmul.mubr.bf16.gmra.mrb[0].mxu0 %v4395
    %v4723 = vpop.f32.mrb[0].mxu0
    %v4724 = vadd.f32 %v4452, %v4723
    %v4725 = vpop.f32.mrb[0].mxu0
    %v4726 = vadd.f32 %v4456, %v4725
    %v4727 = vpop.f32.mrb[0].mxu0
    %v4728 = vadd.f32 %v4452, %v4727
    %v4729 = vpop.f32.mrb[0].mxu0
    %v4730 = vadd.f32 %v4456, %v4729
    %4731 = vmatprep.mubr.bf16.mxu0 %v4398
    %4732 = vmatmul.mubr.bf16.gmra.mrb[0].mxu0 %v4397
    %v4733 = vpop.f32.mrb[0].mxu0
    %v4734 = vadd.f32 %v4452, %v4733
    %v4735 = vpop.f32.mrb[0].mxu0
    %v4736 = vadd.f32 %v4456, %v4735
    %v4737 = vpop.f32.mrb[0].mxu0
    %v4738 = vadd.f32 %v4452, %v4737
    %v4739 = vpop.f32.mrb[0].mxu0
    %v4740 = vadd.f32 %v4456, %v4739
    %4741 = vmatprep.mubr.bf16.mxu0 %v4400
    %4742 = vmatmul.mubr.bf16.gmra.mrb[0].mxu0 %v4399
    %v4743 = vpop.f32.mrb[0].mxu0
    %v4744 = vadd.f32 %v4452, %v4743
    %v4745 = vpop.f32.mrb[0].mxu0
    %v4746 = vadd.f32 %v4456, %v4745
    %v4747 = vpop.f32.mrb[0].mxu0
    %v4748 = vadd.f32 %v4452, %v4747
    %v4749 = vpop.f32.mrb[0].mxu0
    %v4750 = vadd.f32 %v4456, %v4749
    %4751 = vmatprep.mubr.bf16.mxu0 %v4402
    %4752 = vmatmul.mubr.bf16.gmra.mrb[0].mxu0 %v4401
    %v4753 = vpop.f32.mrb[0].mxu0
    %v4754 = vadd.f32 %v4452, %v4753
    %v4755 = vpop.f32.mrb[0].mxu0
    %v4756 = vadd.f32 %v4456, %v4755
    %v4757 = vpop.f32.mrb[0].mxu0
    %v4758 = vadd.f32 %v4452, %v4757
    %v4759 = vpop.f32.mrb[0].mxu0
    %v4760 = vadd.f32 %v4456, %v4759
    %4761 = vmatprep.mubr.bf16.mxu0 %v4404
    %4762 = vmatmul.mubr.bf16.gmra.mrb[0].mxu0 %v4403
    %v4763 = vpop.f32.mrb[0].mxu0
    %v4764 = vadd.f32 %v4452, %v4763
    %v4765 = vpop.f32.mrb[0].mxu0
    %v4766 = vadd.f32 %v4456, %v4765
    %v4767 = vpop.f32.mrb[0].mxu0
    %v4768 = vadd.f32 %v4452, %v4767
    %v4769 = vpop.f32.mrb[0].mxu0
    %v4770 = vadd.f32 %v4456, %v4769
    %4771 = vmatprep.mubr.bf16.mxu0 %v4406
    %4772 = vmatmul.mubr.bf16.gmra.mrb[0].mxu0 %v4405
    %v4773 = vpop.f32.mrb[0].mxu0
    %v4774 = vadd.f32 %v4452, %v4773
    %v4775 = vpop.f32.mrb[0].mxu0
    %v4776 = vadd.f32 %v4456, %v4775
    %v4777 = vpop.f32.mrb[0].mxu0
    %v4778 = vadd.f32 %v4452, %v4777
    %v4779 = vpop.f32.mrb[0].mxu0
    %v4780 = vadd.f32 %v4456, %v4779
    %4781 = vmatprep.mubr.bf16.mxu0 %v4408
    %4782 = vmatmul.mubr.bf16.gmra.mrb[0].mxu0 %v4407
    %v4783 = vpop.f32.mrb[0].mxu0
    %v4784 = vadd.f32 %v4452, %v4783
    %v4785 = vpop.f32.mrb[0].mxu0
    %v4786 = vadd.f32 %v4456, %v4785
    %v4787 = vpop.f32.mrb[0].mxu0
    %v4788 = vadd.f32 %v4452, %v4787
    %v4789 = vpop.f32.mrb[0].mxu0
    %v4790 = vadd.f32 %v4456, %v4789
    %4791 = vmatprep.mubr.bf16.mxu0 %v4410
    %4792 = vmatmul.mubr.bf16.gmra.mrb[0].mxu0 %v4409
    %v4793 = vpop.f32.mrb[0].mxu0
    %v4794 = vadd.f32 %v4452, %v4793
    %v4795 = vpop.f32.mrb[0].mxu0
    %v4796 = vadd.f32 %v4456, %v4795
    %v4797 = vpop.f32.mrb[0].mxu0
    %v4798 = vadd.f32 %v4452, %v4797
    %v4799 = vpop.f32.mrb[0].mxu0
    %v4800 = vadd.f32 %v4456, %v4799
    %4801 = vmatprep.mubr.bf16.mxu0 %v4412
    %4802 = vmatmul.mubr.bf16.gmra.mrb[0].mxu0 %v4411
    %v4803 = vpop.f32.mrb[0].mxu0
    %v4804 = vadd.f32 %v4452, %v4803
    %v4805 = vpop.f32.mrb[0].mxu0
    %v4806 = vadd.f32 %v4456, %v4805
    %v4807 = vpop.f32.mrb[0].mxu0
    %v4808 = vadd.f32 %v4452, %v4807
    %v4809 = vpop.f32.mrb[0].mxu0
    %v4810 = vadd.f32 %v4456, %v4809
    %4811 = vdwg.mxu0
    %v4812 = vmax.f32 %v4654, 0.0
    %v4813 = vmax.f32 %v4656, 0.0
    %v4814 = vmax.f32 %v4658, 0.0
    %v4815 = vmax.f32 %v4660, 0.0
    %v4816 = vmax.f32 %v4664, 0.0
    %v4817 = vmax.f32 %v4666, 0.0
    %v4818 = vmax.f32 %v4668, 0.0
    %v4819 = vmax.f32 %v4670, 0.0
    %v4820 = vmax.f32 %v4674, 0.0
    %v4821 = vmax.f32 %v4676, 0.0
    %v4822 = vmax.f32 %v4678, 0.0
    %v4823 = vmax.f32 %v4680, 0.0
    %v4824 = vmax.f32 %v4684, 0.0
    %v4825 = vmax.f32 %v4686, 0.0
    %v4826 = vmax.f32 %v4688, 0.0
    %v4827 = vmax.f32 %v4690, 0.0
    %v4828 = vmax.f32 %v4694, 0.0
    %v4829 = vmax.f32 %v4696, 0.0
    %v4830 = vmax.f32 %v4698, 0.0
    %v4831 = vmax.f32 %v4700, 0.0
    %v4832 = vmax.f32 %v4704, 0.0
    %v4833 = vmax.f32 %v4706, 0.0
    %v4834 = vmax.f32 %v4708, 0.0
    %v4835 = vmax.f32 %v4710, 0.0
    %v4836 = vmax.f32 %v4714, 0.0
    %v4837 = vmax.f32 %v4716, 0.0
    %v4838 = vmax.f32 %v4718, 0.0
    %v4839 = vmax.f32 %v4720, 0.0
    %v4840 = vmax.f32 %v4724, 0.0
    %v4841 = vmax.f32 %v4726, 0.0
    %v4842 = vmax.f32 %v4728, 0.0
    %v4843 = vmax.f32 %v4730, 0.0
    %v4844 = vmax.f32 %v4734, 0.0
    %v4845 = vmax.f32 %v4736, 0.0
    %v4846 = vmax.f32 %v4738, 0.0
    %v4847 = vmax.f32 %v4740, 0.0
    %v4848 = vmax.f32 %v4744, 0.0
    %v4849 = vmax.f32 %v4746, 0.0
    %v4850 = vmax.f32 %v4748, 0.0
    %v4851 = vmax.f32 %v4750, 0.0
    %v4852 = vmax.f32 %v4754, 0.0
    %v4853 = vmax.f32 %v4756, 0.0
    %v4854 = vmax.f32 %v4758, 0.0
    %v4855 = vmax.f32 %v4760, 0.0
    %v4856 = vmax.f32 %v4764, 0.0
    %v4857 = vmax.f32 %v4766, 0.0
    %v4858 = vmax.f32 %v4768, 0.0
    %v4859 = vmax.f32 %v4770, 0.0
    %v4860 = vmax.f32 %v4774, 0.0
    %v4861 = vmax.f32 %v4776, 0.0
    %v4862 = vmax.f32 %v4778, 0.0
    %v4863 = vmax.f32 %v4780, 0.0
    %v4864 = vmax.f32 %v4784, 0.0
    %v4865 = vmax.f32 %v4786, 0.0
    %v4866 = vmax.f32 %v4788, 0.0
    %v4867 = vmax.f32 %v4790, 0.0
    %v4868 = vmax.f32 %v4794, 0.0
    %v4869 = vmax.f32 %v4796, 0.0
    %v4870 = vmax.f32 %v4798, 0.0
    %v4871 = vmax.f32 %v4800, 0.0
    %v4872 = vmax.f32 %v4804, 0.0
    %v4873 = vmax.f32 %v4806, 0.0
    %v4874 = vmax.f32 %v4808, 0.0
    %v4875 = vmax.f32 %v4810, 0.0
    %v4876 = vpack.c.bf16 %v4814, %v4812
    %v4877 = vpack.c.bf16 %v4815, %v4813
    %v4878 = vpack.c.bf16 %v4818, %v4816
    %v4879 = vpack.c.bf16 %v4819, %v4817
    %v4880 = vpack.c.bf16 %v4822, %v4820
    %v4881 = vpack.c.bf16 %v4823, %v4821
    %v4882 = vpack.c.bf16 %v4826, %v4824
    %v4883 = vpack.c.bf16 %v4827, %v4825
    %v4884 = vpack.c.bf16 %v4830, %v4828
    %v4885 = vpack.c.bf16 %v4831, %v4829
    %v4886 = vpack.c.bf16 %v4834, %v4832
    %v4887 = vpack.c.bf16 %v4835, %v4833
    %v4888 = vpack.c.bf16 %v4838, %v4836
    %v4889 = vpack.c.bf16 %v4839, %v4837
    %v4890 = vpack.c.bf16 %v4842, %v4840
    %v4891 = vpack.c.bf16 %v4843, %v4841
    %v4892 = vpack.c.bf16 %v4846, %v4844
    %v4893 = vpack.c.bf16 %v4847, %v4845
    %v4894 = vpack.c.bf16 %v4850, %v4848
    %v4895 = vpack.c.bf16 %v4851, %v4849
    %v4896 = vpack.c.bf16 %v4854, %v4852
    %v4897 = vpack.c.bf16 %v4855, %v4853
    %v4898 = vpack.c.bf16 %v4858, %v4856
    %v4899 = vpack.c.bf16 %v4859, %v4857
    %v4900 = vpack.c.bf16 %v4862, %v4860
    %v4901 = vpack.c.bf16 %v4863, %v4861
    %v4902 = vpack.c.bf16 %v4866, %v4864
    %v4903 = vpack.c.bf16 %v4867, %v4865
    %v4904 = vpack.c.bf16 %v4870, %v4868
    %v4905 = vpack.c.bf16 %v4871, %v4869
    %v4906 = vpack.c.bf16 %v4874, %v4872
    %v4907 = vpack.c.bf16 %v4875, %v4873
    %v4908 = vld [vmem:[%s6] sm:$0xf]
    %v4909 = vld [vmem:[%s6 + $0x4] sm:$0xf]
    %v4910 = vld [vmem:[%s6 + $0x8] sm:$0xf]
    %v4911 = vld [vmem:[%s6 + $0xc] sm:$0xf]
    %v4912 = vld [vmem:[%s6 + $0x10] sm:$0xf]
    %v4913 = vld [vmem:[%s6 + $0x14] sm:$0xf]
    %v4914 = vld [vmem:[%s6 + $0x18] sm:$0xf]
    %v4915 = vld [vmem:[%s6 + $0x1c] sm:$0xf]
    %v4916 = vld [vmem:[%s6 + $0x20] sm:$0xf]
    %v4917 = vld [vmem:[%s6 + $0x24] sm:$0xf]
    %v4918 = vld [vmem:[%s6 + $0x28] sm:$0xf]
    %v4919 = vld [vmem:[%s6 + $0x2c] sm:$0xf]
    %v4920 = vld [vmem:[%s6 + $0x30] sm:$0xf]
    %v4921 = vld [vmem:[%s6 + $0x34] sm:$0xf]
    %v4922 = vld [vmem:[%s6 + $0x38] sm:$0xf]
    %v4923 = vld [vmem:[%s6 + $0x3c] sm:$0xf]
    %v4924 = vld [vmem:[%s6 + $0x40] sm:$0xf]
    %v4925 = vld [vmem:[%s6 + $0x44] sm:$0xf]
    %v4926 = vld [vmem:[%s6 + $0x48] sm:$0xf]
    %v4927 = vld [vmem:[%s6 + $0x4c] sm:$0xf]
    %v4928 = vld [vmem:[%s6 + $0x50] sm:$0xf]
    %v4929 = vld [vmem:[%s6 + $0x54] sm:$0xf]
    %v4930 = vld [vmem:[%s6 + $0x58] sm:$0xf]
    %v4931 = vld [vmem:[%s6 + $0x5c] sm:$0xf]
    %v4932 = vld [vmem:[%s6 + $0x60] sm:$0xf]
    %v4933 = vld [vmem:[%s6 + $0x64] sm:$0xf]
    %v4934 = vld [vmem:[%s6 + $0x68] sm:$0xf]
    %v4935 = vld [vmem:[%s6 + $0x6c] sm:$0xf]
    %v4936 = vld [vmem:[%s6 + $0x70] sm:$0xf]
    %v4937 = vld [vmem:[%s6 + $0x74] sm:$0xf]
    %v4938 = vld [vmem:[%s6 + $0x78] sm:$0xf]
    %v4939 = vld [vmem:[%s6 + $0x7c] sm:$0xf]
    %v4940 = vld [vmem:[%s7] sm:$0x1]
    %v4942 = vlaneseq
    %v4943 = vshrl.u32 %v4942, 7
    %v4944 = vsub.s32 0, %v4943
    %v4945 = vrot.slane %v4940, %v4944
    %v4979 = vunpack.c.l.b16 %v4908
    %v4980 = vunpack.c.l.b16 %v4909
    %v4981 = vunpack.c.l.b16 %v4910
    %v4982 = vunpack.c.l.b16 %v4911
    %v4983 = vunpack.c.l.b16 %v4912
    %v4984 = vunpack.c.l.b16 %v4913
    %v4985 = vunpack.c.l.b16 %v4914
    %v4986 = vunpack.c.l.b16 %v4915
    %v4987 = vunpack.c.l.b16 %v4916
    %v4988 = vunpack.c.l.b16 %v4917
    %v4989 = vunpack.c.l.b16 %v4918
    %v4990 = vunpack.c.l.b16 %v4919
    %v4991 = vunpack.c.l.b16 %v4920
    %v4992 = vunpack.c.l.b16 %v4921
    %v4993 = vunpack.c.l.b16 %v4922
    %v4994 = vunpack.c.l.b16 %v4923
    %v4995 = vunpack.c.l.b16 %v4924
    %v4996 = vunpack.c.l.b16 %v4925
    %v4997 = vunpack.c.l.b16 %v4926
    %v4998 = vunpack.c.l.b16 %v4927
    %v4999 = vunpack.c.l.b16 %v4928
    %v5000 = vunpack.c.l.b16 %v4929
    %v5001 = vunpack.c.l.b16 %v4930
    %v5002 = vunpack.c.l.b16 %v4931
    %v5003 = vunpack.c.l.b16 %v4932
    %v5004 = vunpack.c.l.b16 %v4933
    %v5005 = vunpack.c.l.b16 %v4934
    %v5006 = vunpack.c.l.b16 %v4935
    %v5007 = vunpack.c.l.b16 %v4936
    %v5008 = vunpack.c.l.b16 %v4937
    %v5009 = vunpack.c.l.b16 %v4938
    %v5010 = vunpack.c.l.b16 %v4939
    %v5011 = vpack.c.b16 %v4980, %v4979
    %v5012 = vpack.c.b16 %v4982, %v4981
    %v5013 = vpack.c.b16 %v4984, %v4983
    %v5014 = vpack.c.b16 %v4986, %v4985
    %v5015 = vpack.c.b16 %v4988, %v4987
    %v5016 = vpack.c.b16 %v4990, %v4989
    %v5017 = vpack.c.b16 %v4992, %v4991
    %v5018 = vpack.c.b16 %v4994, %v4993
    %v5019 = vpack.c.b16 %v4996, %v4995
    %v5020 = vpack.c.b16 %v4998, %v4997
    %v5021 = vpack.c.b16 %v5000, %v4999
    %v5022 = vpack.c.b16 %v5002, %v5001
    %v5023 = vpack.c.b16 %v5004, %v5003
    %v5024 = vpack.c.b16 %v5006, %v5005
    %v5025 = vpack.c.b16 %v5008, %v5007
    %v5026 = vpack.c.b16 %v5010, %v5009
    %5043 = vmatprep.subr.bf16.mxu0 0
    %5044 = vmatpush1.bf16.msra.mxu0 %v5011
    %5045 = vmatprep.subr.bf16.mxu0 0
    %5046 = vmatpush1.bf16.msra.mxu0 %v5012
    %5047 = vmatprep.subr.bf16.mxu0 0
    %5048 = vmatpush1.bf16.msra.mxu0 %v5013
    %5049 = vmatprep.subr.bf16.mxu0 0
    %5050 = vmatpush1.bf16.msra.mxu0 %v5014
    %5051 = vmatprep.subr.bf16.mxu0 0
    %5052 = vmatpush1.bf16.msra.mxu0 %v5015
    %5053 = vmatprep.subr.bf16.mxu0 0
    %5054 = vmatpush1.bf16.msra.mxu0 %v5016
    %5055 = vmatprep.subr.bf16.mxu0 0
    %5056 = vmatpush1.bf16.msra.mxu0 %v5017
    %5057 = vmatprep.subr.bf16.mxu0 0
    %5058 = vmatpush1.bf16.msra.mxu0 %v5018
    %5059 = vmatprep.subr.bf16.mxu0 0
    %5060 = vmatpush1.bf16.msra.mxu0 %v5019
    %5061 = vmatprep.subr.bf16.mxu0 0
    %5062 = vmatpush1.bf16.msra.mxu0 %v5020
    %5063 = vmatprep.subr.bf16.mxu0 0
    %5064 = vmatpush1.bf16.msra.mxu0 %v5021
    %5065 = vmatprep.subr.bf16.mxu0 0
    %5066 = vmatpush1.bf16.msra.mxu0 %v5022
    %5067 = vmatprep.subr.bf16.mxu0 0
    %5068 = vmatpush1.bf16.msra.mxu0 %v5023
    %5069 = vmatprep.subr.bf16.mxu0 0
    %5070 = vmatpush1.bf16.msra.mxu0 %v5024
    %5071 = vmatprep.subr.bf16.mxu0 0
    %5072 = vmatpush1.bf16.msra.mxu0 %v5025
    %5073 = vmatprep.subr.bf16.mxu0 0
    %5074 = vmatpush1.bf16.msra.mxu0 %v5026
    %5075 = vmatprep.mubr.bf16.mxu0 %v4877
    %5076 = vmatmul.mubr.bf16.gmra.mrb[0].mxu0 %v4876
    %v5077 = vpop.f32.mrb[0].mxu0
    %v5078 = vadd.f32 %v4945, %v5077
    %v5079 = vpop.f32.mrb[0].mxu0
    %v5080 = vpop.f32.mrb[0].mxu0
    %v5081 = vadd.f32 %v4945, %v5080
    %v5082 = vpop.f32.mrb[0].mxu0
    %5083 = vmatprep.mubr.bf16.mxu0 %v4879
    %5084 = vmatmul.mubr.bf16.gmra.mrb[0].mxu0 %v4878
    %v5085 = vpop.f32.mrb[0].mxu0
    %v5086 = vadd.f32 %v4945, %v5085
    %v5087 = vpop.f32.mrb[0].mxu0
    %v5088 = vpop.f32.mrb[0].mxu0
    %v5089 = vadd.f32 %v4945, %v5088
    %v5090 = vpop.f32.mrb[0].mxu0
    %5091 = vmatprep.mubr.bf16.mxu0 %v4881
    %5092 = vmatmul.mubr.bf16.gmra.mrb[0].mxu0 %v4880
    %v5093 = vpop.f32.mrb[0].mxu0
    %v5094 = vadd.f32 %v4945, %v5093
    %v5095 = vpop.f32.mrb[0].mxu0
    %v5096 = vpop.f32.mrb[0].mxu0
    %v5097 = vadd.f32 %v4945, %v5096
    %v5098 = vpop.f32.mrb[0].mxu0
    %5099 = vmatprep.mubr.bf16.mxu0 %v4883
    %5100 = vmatmul.mubr.bf16.gmra.mrb[0].mxu0 %v4882
    %v5101 = vpop.f32.mrb[0].mxu0
    %v5102 = vadd.f32 %v4945, %v5101
    %v5103 = vpop.f32.mrb[0].mxu0
    %v5104 = vpop.f32.mrb[0].mxu0
    %v5105 = vadd.f32 %v4945, %v5104
    %v5106 = vpop.f32.mrb[0].mxu0
    %5107 = vmatprep.mubr.bf16.mxu0 %v4885
    %5108 = vmatmul.mubr.bf16.gmra.mrb[0].mxu0 %v4884
    %v5109 = vpop.f32.mrb[0].mxu0
    %v5110 = vadd.f32 %v4945, %v5109
    %v5111 = vpop.f32.mrb[0].mxu0
    %v5112 = vpop.f32.mrb[0].mxu0
    %v5113 = vadd.f32 %v4945, %v5112
    %v5114 = vpop.f32.mrb[0].mxu0
    %5115 = vmatprep.mubr.bf16.mxu0 %v4887
    %5116 = vmatmul.mubr.bf16.gmra.mrb[0].mxu0 %v4886
    %v5117 = vpop.f32.mrb[0].mxu0
    %v5118 = vadd.f32 %v4945, %v5117
    %v5119 = vpop.f32.mrb[0].mxu0
    %v5120 = vpop.f32.mrb[0].mxu0
    %v5121 = vadd.f32 %v4945, %v5120
    %v5122 = vpop.f32.mrb[0].mxu0
    %5123 = vmatprep.mubr.bf16.mxu0 %v4889
    %5124 = vmatmul.mubr.bf16.gmra.mrb[0].mxu0 %v4888
    %v5125 = vpop.f32.mrb[0].mxu0
    %v5126 = vadd.f32 %v4945, %v5125
    %v5127 = vpop.f32.mrb[0].mxu0
    %v5128 = vpop.f32.mrb[0].mxu0
    %v5129 = vadd.f32 %v4945, %v5128
    %v5130 = vpop.f32.mrb[0].mxu0
    %5131 = vmatprep.mubr.bf16.mxu0 %v4891
    %5132 = vmatmul.mubr.bf16.gmra.mrb[0].mxu0 %v4890
    %v5133 = vpop.f32.mrb[0].mxu0
    %v5134 = vadd.f32 %v4945, %v5133
    %v5135 = vpop.f32.mrb[0].mxu0
    %v5136 = vpop.f32.mrb[0].mxu0
    %v5137 = vadd.f32 %v4945, %v5136
    %v5138 = vpop.f32.mrb[0].mxu0
    %5139 = vmatprep.mubr.bf16.mxu0 %v4893
    %5140 = vmatmul.mubr.bf16.gmra.mrb[0].mxu0 %v4892
    %v5141 = vpop.f32.mrb[0].mxu0
    %v5142 = vadd.f32 %v4945, %v5141
    %v5143 = vpop.f32.mrb[0].mxu0
    %v5144 = vpop.f32.mrb[0].mxu0
    %v5145 = vadd.f32 %v4945, %v5144
    %v5146 = vpop.f32.mrb[0].mxu0
    %5147 = vmatprep.mubr.bf16.mxu0 %v4895
    %5148 = vmatmul.mubr.bf16.gmra.mrb[0].mxu0 %v4894
    %v5149 = vpop.f32.mrb[0].mxu0
    %v5150 = vadd.f32 %v4945, %v5149
    %v5151 = vpop.f32.mrb[0].mxu0
    %v5152 = vpop.f32.mrb[0].mxu0
    %v5153 = vadd.f32 %v4945, %v5152
    %v5154 = vpop.f32.mrb[0].mxu0
    %5155 = vmatprep.mubr.bf16.mxu0 %v4897
    %5156 = vmatmul.mubr.bf16.gmra.mrb[0].mxu0 %v4896
    %v5157 = vpop.f32.mrb[0].mxu0
    %v5158 = vadd.f32 %v4945, %v5157
    %v5159 = vpop.f32.mrb[0].mxu0
    %v5160 = vpop.f32.mrb[0].mxu0
    %v5161 = vadd.f32 %v4945, %v5160
    %v5162 = vpop.f32.mrb[0].mxu0
    %5163 = vmatprep.mubr.bf16.mxu0 %v4899
    %5164 = vmatmul.mubr.bf16.gmra.mrb[0].mxu0 %v4898
    %v5165 = vpop.f32.mrb[0].mxu0
    %v5166 = vadd.f32 %v4945, %v5165
    %v5167 = vpop.f32.mrb[0].mxu0
    %v5168 = vpop.f32.mrb[0].mxu0
    %v5169 = vadd.f32 %v4945, %v5168
    %v5170 = vpop.f32.mrb[0].mxu0
    %5171 = vmatprep.mubr.bf16.mxu0 %v4901
    %5172 = vmatmul.mubr.bf16.gmra.mrb[0].mxu0 %v4900
    %v5173 = vpop.f32.mrb[0].mxu0
    %v5174 = vadd.f32 %v4945, %v5173
    %v5175 = vpop.f32.mrb[0].mxu0
    %v5176 = vpop.f32.mrb[0].mxu0
    %v5177 = vadd.f32 %v4945, %v5176
    %v5178 = vpop.f32.mrb[0].mxu0
    %5179 = vmatprep.mubr.bf16.mxu0 %v4903
    %5180 = vmatmul.mubr.bf16.gmra.mrb[0].mxu0 %v4902
    %v5181 = vpop.f32.mrb[0].mxu0
    %v5182 = vadd.f32 %v4945, %v5181
    %v5183 = vpop.f32.mrb[0].mxu0
    %v5184 = vpop.f32.mrb[0].mxu0
    %v5185 = vadd.f32 %v4945, %v5184
    %v5186 = vpop.f32.mrb[0].mxu0
    %5187 = vmatprep.mubr.bf16.mxu0 %v4905
    %5188 = vmatmul.mubr.bf16.gmra.mrb[0].mxu0 %v4904
    %v5189 = vpop.f32.mrb[0].mxu0
    %v5190 = vadd.f32 %v4945, %v5189
    %v5191 = vpop.f32.mrb[0].mxu0
    %v5192 = vpop.f32.mrb[0].mxu0
    %v5193 = vadd.f32 %v4945, %v5192
    %v5194 = vpop.f32.mrb[0].mxu0
    %5195 = vmatprep.mubr.bf16.mxu0 %v4907
    %5196 = vmatmul.mubr.bf16.gmra.mrb[0].mxu0 %v4906
    %v5197 = vpop.f32.mrb[0].mxu0
    %v5198 = vadd.f32 %v4945, %v5197
    %v5199 = vpop.f32.mrb[0].mxu0
    %v5200 = vpop.f32.mrb[0].mxu0
    %v5201 = vadd.f32 %v4945, %v5200
    %v5202 = vpop.f32.mrb[0].mxu0
    %5203 = vdwg.mxu0
    %5204 = vst [vmem:[#allocation5] sm:$0xff] %v5078
    %5205 = vst [vmem:[#allocation5 + $0x8] sm:$0xff] %v5081
    %5206 = vst [vmem:[#allocation5 + $0x10] sm:$0xff] %v5086
    %5207 = vst [vmem:[#allocation5 + $0x18] sm:$0xff] %v5089
    %5208 = vst [vmem:[#allocation5 + $0x20] sm:$0xff] %v5094
    %5209 = vst [vmem:[#allocation5 + $0x28] sm:$0xff] %v5097
    %5210 = vst [vmem:[#allocation5 + $0x30] sm:$0xff] %v5102
    %5211 = vst [vmem:[#allocation5 + $0x38] sm:$0xff] %v5105
    %5212 = vst [vmem:[#allocation5 + $0x40] sm:$0xff] %v5110
    %5213 = vst [vmem:[#allocation5 + $0x48] sm:$0xff] %v5113
    %5214 = vst [vmem:[#allocation5 + $0x50] sm:$0xff] %v5118
    %5215 = vst [vmem:[#allocation5 + $0x58] sm:$0xff] %v5121
    %5216 = vst [vmem:[#allocation5 + $0x60] sm:$0xff] %v5126
    %5217 = vst [vmem:[#allocation5 + $0x68] sm:$0xff] %v5129
    %5218 = vst [vmem:[#allocation5 + $0x70] sm:$0xff] %v5134
    %5219 = vst [vmem:[#allocation5 + $0x78] sm:$0xff] %v5137
    %5220 = vst [vmem:[#allocation5 + $0x80] sm:$0xff] %v5142
    %5221 = vst [vmem:[#allocation5 + $0x88] sm:$0xff] %v5145
    %5222 = vst [vmem:[#allocation5 + $0x90] sm:$0xff] %v5150
    %5223 = vst [vmem:[#allocation5 + $0x98] sm:$0xff] %v5153
    %5224 = vst [vmem:[#allocation5 + $0xa0] sm:$0xff] %v5158
    %5225 = vst [vmem:[#allocation5 + $0xa8] sm:$0xff] %v5161
    %5226 = vst [vmem:[#allocation5 + $0xb0] sm:$0xff] %v5166
    %5227 = vst [vmem:[#allocation5 + $0xb8] sm:$0xff] %v5169
    %5228 = vst [vmem:[#allocation5 + $0xc0] sm:$0xff] %v5174
    %5229 = vst [vmem:[#allocation5 + $0xc8] sm:$0xff] %v5177
    %5230 = vst [vmem:[#allocation5 + $0xd0] sm:$0xff] %v5182
    %5231 = vst [vmem:[#allocation5 + $0xd8] sm:$0xff] %v5185
    %5232 = vst [vmem:[#allocation5 + $0xe0] sm:$0xff] %v5190
    %5233 = vst [vmem:[#allocation5 + $0xe8] sm:$0xff] %v5193
    %5234 = vst [vmem:[#allocation5 + $0xf0] sm:$0xff] %v5198
    %5235 = vst [vmem:[#allocation5 + $0xf8] sm:$0xff] %v5201
    // Predicated region
    $region38: #{tpu_custom_call.1} parent=1 // pred_check
      _
    $region39: #{tpu_custom_call.1} parent=1 // pred_check_branch
      %5237 = sbr.rel (0) target = $region41
    $region40: #{tpu_custom_call.1} parent=1 // pred_region
      %s5239 = ssub.s32 4096, 4096
      %5240 = vsyncadd [#allocation4], %s5239
      %s5241 = sshll.u32 [#allocation5], 4
      %s5242 = int_to_ptr.vmem [resolvable:$true] %s5241
      %5247 = dma.vmem_to_hbm [thread:$0]  %s5242, 4096, %s8, [#allocation4], 128, 128, 8
    $region41: #{tpu_custom_call.1} parent=1 // pred_fallthru
      _
    // Predicated region
    $region42: #{tpu_custom_call.1} parent=1 // pred_check
      _
    $region43: #{tpu_custom_call.1} parent=1 // pred_check_branch
      %5249 = sbr.rel (0) target = $region45
    $region44: #{tpu_custom_call.1} parent=1 // pred_region
      %5250 = dma.done [#allocation4], 4096
    $region45: #{tpu_custom_call.1} parent=1 // pred_fallthru
      _
    %5251 = vsyncpa [#allocation3], 1
    %5252 = vsyncpa [#allocation4], 1

// kernel: tpu_custom_call.1
$region0: #{tpu_custom_call.1}
  #allocation0 [shape = 'u32[]', space=smem, size = 0x4, offset = 0x4, fixed_abs, tag = 'smem constant byte address 0x4 - core index']
  #allocation1 [shape = 'u32[144,128]{1,0:T(1,128)}', space=vmem, size = 0x12000, scoped, tag = 'internal scratch']
  %s0 = inlined_call_operand.vmem [shape: f32[256,8], index: 0, kind: input, shape index: {}]
  %s1 = inlined_call_operand.vmem [shape: f32[3,256], index: 1, kind: input, shape index: {}]
  %s2 = inlined_call_operand.vmem [shape: f32[1,256], index: 2, kind: input, shape index: {}]
  %s3 = inlined_call_operand.hbm [shape: bf16[7,256,256], index: 3, kind: input, shape index: {}]
  %s4 = inlined_call_operand.vmem [shape: f32[7,1,256], index: 4, kind: input, shape index: {}]
  %s5 = inlined_call_operand.vmem [shape: f32[3,256], index: 5, kind: input, shape index: {}]
  %s6 = inlined_call_operand.vmem [shape: bf16[256,128], index: 6, kind: input, shape index: {}]
  %s7 = inlined_call_operand.vmem [shape: f32[1,128], index: 7, kind: input, shape index: {}]
  %s8 = inlined_call_operand.hbm [shape: f32[256,128], index: 8, kind: output, shape index: {}]
  %s9 = sld [smem:[#allocation0]]
  $region46: #{tpu_custom_call.1} parent=0
    _
  %s11 = ssub.s32 1, %s9
  %s12 = scalar_select 0, %s11, %s9
  $region1: #{tpu_custom_call.1} parent=0
    #allocation2 [shape = 'u8[917504]{0}', space=vmem, size = 0xe0000, scoped, tag = 'input window, operand 3, single buffered']
    #allocation3 [shape = 's32[1]{0}', space=sflag, size = 0x4, scoped, tag = 'scoped memory for tpu_custom_call.1']
    #allocation4 [shape = 's32[1]{0}', space=sflag, size = 0x4, scoped, tag = 'scoped memory for tpu_custom_call.1']
    #allocation5 [shape = 'u8[131072]{0}', space=vmem, size = 0x20000, scoped, tag = 'output window, operand 0, single buffered']
    %13 = vsyncpa [#allocation3], 0
    %14 = vsyncpa [#allocation4], 0
    // Predicated region
    $region2: #{tpu_custom_call.1} parent=1 // pred_check
      _
    $region3: #{tpu_custom_call.1} parent=1 // pred_check_branch
      %16 = sbr.rel (0) target = $region5
    $region4: #{tpu_custom_call.1} parent=1 // pred_region
      _
    $region5: #{tpu_custom_call.1} parent=1 // pred_fallthru
      _
    // Predicated region
    $region6: #{tpu_custom_call.1} parent=1 // pred_check
      _
    $region7: #{tpu_custom_call.1} parent=1 // pred_check_branch
      %18 = sbr.rel (0) target = $region9
    $region8: #{tpu_custom_call.1} parent=1 // pred_region
      _
    $region9: #{tpu_custom_call.1} parent=1 // pred_fallthru
      _
    // Predicated region
    $region10: #{tpu_custom_call.1} parent=1 // pred_check
      _
    $region11: #{tpu_custom_call.1} parent=1 // pred_check_branch
      %20 = sbr.rel (0) target = $region13
    $region12: #{tpu_custom_call.1} parent=1 // pred_region
      _
    $region13: #{tpu_custom_call.1} parent=1 // pred_fallthru
      _
    // Predicated region
    $region14: #{tpu_custom_call.1} parent=1 // pred_check
      _
    $region15: #{tpu_custom_call.1} parent=1 // pred_check_branch
      %22 = sbr.rel (0) target = $region17
    $region16: #{tpu_custom_call.1} parent=1 // pred_region
      %s24 = ssub.s32 28672, 28672
      %25 = vsyncadd [#allocation3], %s24
      %s26 = sshll.u32 [#allocation2], 4
      %s27 = int_to_ptr.vmem [resolvable:$true] %s26
      %32 = dma.hbm_to_vmem [thread:$0]  %s3, 28672, %s27, [#allocation3], 128, 128, 8
    $region17: #{tpu_custom_call.1} parent=1 // pred_fallthru
      _
    // Predicated region
    $region18: #{tpu_custom_call.1} parent=1 // pred_check
      _
    $region19: #{tpu_custom_call.1} parent=1 // pred_check_branch
      %34 = sbr.rel (0) target = $region21
    $region20: #{tpu_custom_call.1} parent=1 // pred_region
      _
    $region21: #{tpu_custom_call.1} parent=1 // pred_fallthru
      _
    // Predicated region
    $region22: #{tpu_custom_call.1} parent=1 // pred_check
      _
    $region23: #{tpu_custom_call.1} parent=1 // pred_check_branch
      %36 = sbr.rel (0) target = $region25
    $region24: #{tpu_custom_call.1} parent=1 // pred_region
      _
    $region25: #{tpu_custom_call.1} parent=1 // pred_fallthru
      _
    // Predicated region
    $region26: #{tpu_custom_call.1} parent=1 // pred_check
      _
    $region27: #{tpu_custom_call.1} parent=1 // pred_check_branch
      %38 = sbr.rel (0) target = $region29
    $region28: #{tpu_custom_call.1} parent=1 // pred_region
      _
    $region29: #{tpu_custom_call.1} parent=1 // pred_fallthru
      _
    // Predicated region
    $region30: #{tpu_custom_call.1} parent=1 // pred_check
      _
    $region31: #{tpu_custom_call.1} parent=1 // pred_check_branch
      %40 = sbr.rel (0) target = $region33
    $region32: #{tpu_custom_call.1} parent=1 // pred_region
      _
    $region33: #{tpu_custom_call.1} parent=1 // pred_fallthru
      _
    // Predicated region
    $region34: #{tpu_custom_call.1} parent=1 // pred_check
      _
    $region35: #{tpu_custom_call.1} parent=1 // pred_check_branch
      %42 = sbr.rel (0) target = $region37
    $region36: #{tpu_custom_call.1} parent=1 // pred_region
      %43 = dma.done [#allocation3], 28672
    $region37: #{tpu_custom_call.1} parent=1 // pred_fallthru
      _
    %v45 = vld [vmem:[%s0] sm:$0xff]
    %v46 = vld [vmem:[%s0 + $0x8] sm:$0xff]
    %v47 = vld [vmem:[%s0 + $0x10] sm:$0xff]
    %v48 = vld [vmem:[%s0 + $0x18] sm:$0xff]
    %v49 = vld [vmem:[%s0 + $0x20] sm:$0xff]
    %v50 = vld [vmem:[%s0 + $0x28] sm:$0xff]
    %v51 = vld [vmem:[%s0 + $0x30] sm:$0xff]
    %v52 = vld [vmem:[%s0 + $0x38] sm:$0xff]
    %v53 = vld [vmem:[%s0 + $0x40] sm:$0xff]
    %v54 = vld [vmem:[%s0 + $0x48] sm:$0xff]
    %v55 = vld [vmem:[%s0 + $0x50] sm:$0xff]
    %v56 = vld [vmem:[%s0 + $0x58] sm:$0xff]
    %v57 = vld [vmem:[%s0 + $0x60] sm:$0xff]
    %v58 = vld [vmem:[%s0 + $0x68] sm:$0xff]
    %v59 = vld [vmem:[%s0 + $0x70] sm:$0xff]
    %v60 = vld [vmem:[%s0 + $0x78] sm:$0xff]
    %v61 = vld [vmem:[%s0 + $0x80] sm:$0xff]
    %v62 = vld [vmem:[%s0 + $0x88] sm:$0xff]
    %v63 = vld [vmem:[%s0 + $0x90] sm:$0xff]
    %v64 = vld [vmem:[%s0 + $0x98] sm:$0xff]
    %v65 = vld [vmem:[%s0 + $0xa0] sm:$0xff]
    %v66 = vld [vmem:[%s0 + $0xa8] sm:$0xff]
    %v67 = vld [vmem:[%s0 + $0xb0] sm:$0xff]
    %v68 = vld [vmem:[%s0 + $0xb8] sm:$0xff]
    %v69 = vld [vmem:[%s0 + $0xc0] sm:$0xff]
    %v70 = vld [vmem:[%s0 + $0xc8] sm:$0xff]
    %v71 = vld [vmem:[%s0 + $0xd0] sm:$0xff]
    %v72 = vld [vmem:[%s0 + $0xd8] sm:$0xff]
    %v73 = vld [vmem:[%s0 + $0xe0] sm:$0xff]
    %v74 = vld [vmem:[%s0 + $0xe8] sm:$0xff]
    %v75 = vld [vmem:[%s0 + $0xf0] sm:$0xff]
    %v76 = vld [vmem:[%s0 + $0xf8] sm:$0xff]
    %v77 = vld [vmem:[%s1] ss:$4 sm:$0x3]
    %79 = vset.pattern.permute.xlu0 0
    %80 = vperm.xlu0 %79, %v45
    %v81 = vpop.permute.xlu0 %80
    %84 = vset.pattern.permute.xlu0 0
    %85 = vperm.xlu0 %84, %v46
    %v86 = vpop.permute.xlu0 %85
    %89 = vset.pattern.permute.xlu0 0
    %90 = vperm.xlu0 %89, %v47
    %v91 = vpop.permute.xlu0 %90
    %94 = vset.pattern.permute.xlu0 0
    %95 = vperm.xlu0 %94, %v48
    %v96 = vpop.permute.xlu0 %95
    %99 = vset.pattern.permute.xlu0 0
    %100 = vperm.xlu0 %99, %v49
    %v101 = vpop.permute.xlu0 %100
    %104 = vset.pattern.permute.xlu0 0
    %105 = vperm.xlu0 %104, %v50
    %v106 = vpop.permute.xlu0 %105
    %109 = vset.pattern.permute.xlu0 0
    %110 = vperm.xlu0 %109, %v51
    %v111 = vpop.permute.xlu0 %110
    %114 = vset.pattern.permute.xlu0 0
    %115 = vperm.xlu0 %114, %v52
    %v116 = vpop.permute.xlu0 %115
    %119 = vset.pattern.permute.xlu0 0
    %120 = vperm.xlu0 %119, %v53
    %v121 = vpop.permute.xlu0 %120
    %124 = vset.pattern.permute.xlu0 0
    %125 = vperm.xlu0 %124, %v54
    %v126 = vpop.permute.xlu0 %125
    %129 = vset.pattern.permute.xlu0 0
    %130 = vperm.xlu0 %129, %v55
    %v131 = vpop.permute.xlu0 %130
    %134 = vset.pattern.permute.xlu0 0
    %135 = vperm.xlu0 %134, %v56
    %v136 = vpop.permute.xlu0 %135
    %139 = vset.pattern.permute.xlu0 0
    %140 = vperm.xlu0 %139, %v57
    %v141 = vpop.permute.xlu0 %140
    %144 = vset.pattern.permute.xlu0 0
    %145 = vperm.xlu0 %144, %v58
    %v146 = vpop.permute.xlu0 %145
    %149 = vset.pattern.permute.xlu0 0
    %150 = vperm.xlu0 %149, %v59
    %v151 = vpop.permute.xlu0 %150
    %154 = vset.pattern.permute.xlu0 0
    %155 = vperm.xlu0 %154, %v60
    %v156 = vpop.permute.xlu0 %155
    %159 = vset.pattern.permute.xlu0 0
    %160 = vperm.xlu0 %159, %v61
    %v161 = vpop.permute.xlu0 %160
    %164 = vset.pattern.permute.xlu0 0
    %165 = vperm.xlu0 %164, %v62
    %v166 = vpop.permute.xlu0 %165
    %169 = vset.pattern.permute.xlu0 0
    %170 = vperm.xlu0 %169, %v63
    %v171 = vpop.permute.xlu0 %170
    %174 = vset.pattern.permute.xlu0 0
    %175 = vperm.xlu0 %174, %v64
    %v176 = vpop.permute.xlu0 %175
    %179 = vset.pattern.permute.xlu0 0
    %180 = vperm.xlu0 %179, %v65
    %v181 = vpop.permute.xlu0 %180
    %184 = vset.pattern.permute.xlu0 0
    %185 = vperm.xlu0 %184, %v66
    %v186 = vpop.permute.xlu0 %185
    %189 = vset.pattern.permute.xlu0 0
    %190 = vperm.xlu0 %189, %v67
    %v191 = vpop.permute.xlu0 %190
    %194 = vset.pattern.permute.xlu0 0
    %195 = vperm.xlu0 %194, %v68
    %v196 = vpop.permute.xlu0 %195
    %199 = vset.pattern.permute.xlu0 0
    %200 = vperm.xlu0 %199, %v69
    %v201 = vpop.permute.xlu0 %200
    %204 = vset.pattern.permute.xlu0 0
    %205 = vperm.xlu0 %204, %v70
    %v206 = vpop.permute.xlu0 %205
    %209 = vset.pattern.permute.xlu0 0
    %210 = vperm.xlu0 %209, %v71
    %v211 = vpop.permute.xlu0 %210
    %214 = vset.pattern.permute.xlu0 0
    %215 = vperm.xlu0 %214, %v72
    %v216 = vpop.permute.xlu0 %215
    %219 = vset.pattern.permute.xlu0 0
    %220 = vperm.xlu0 %219, %v73
    %v221 = vpop.permute.xlu0 %220
    %224 = vset.pattern.permute.xlu0 0
    %225 = vperm.xlu0 %224, %v74
    %v226 = vpop.permute.xlu0 %225
    %229 = vset.pattern.permute.xlu0 0
    %230 = vperm.xlu0 %229, %v75
    %v231 = vpop.permute.xlu0 %230
    %234 = vset.pattern.permute.xlu0 0
    %235 = vperm.xlu0 %234, %v76
    %v236 = vpop.permute.xlu0 %235
    %v239 = vlaneseq
    %v240 = vshrl.u32 %v239, 7
    %v241 = vsub.s32 0, %v240
    %v242 = vrot.slane %v77, %v241
    %v243 = vlaneseq
    %v244 = vshrl.u32 %v243, 7
    %v245 = vsub.s32 1, %v244
    %v246 = vrot.slane %v77, %v245
    %v249 = vmul.f32 %v81, %v242
    %v250 = vmul.f32 %v81, %v246
    %v251 = vmul.f32 %v86, %v242
    %v252 = vmul.f32 %v86, %v246
    %v253 = vmul.f32 %v91, %v242
    %v254 = vmul.f32 %v91, %v246
    %v255 = vmul.f32 %v96, %v242
    %v256 = vmul.f32 %v96, %v246
    %v257 = vmul.f32 %v101, %v242
    %v258 = vmul.f32 %v101, %v246
    %v259 = vmul.f32 %v106, %v242
    %v260 = vmul.f32 %v106, %v246
    %v261 = vmul.f32 %v111, %v242
    %v262 = vmul.f32 %v111, %v246
    %v263 = vmul.f32 %v116, %v242
    %v264 = vmul.f32 %v116, %v246
    %v265 = vmul.f32 %v121, %v242
    %v266 = vmul.f32 %v121, %v246
    %v267 = vmul.f32 %v126, %v242
    %v268 = vmul.f32 %v126, %v246
    %v269 = vmul.f32 %v131, %v242
    %v270 = vmul.f32 %v131, %v246
    %v271 = vmul.f32 %v136, %v242
    %v272 = vmul.f32 %v136, %v246
    %v273 = vmul.f32 %v141, %v242
    %v274 = vmul.f32 %v141, %v246
    %v275 = vmul.f32 %v146, %v242
    %v276 = vmul.f32 %v146, %v246
    %v277 = vmul.f32 %v151, %v242
    %v278 = vmul.f32 %v151, %v246
    %v279 = vmul.f32 %v156, %v242
    %v280 = vmul.f32 %v156, %v246
    %v281 = vmul.f32 %v161, %v242
    %v282 = vmul.f32 %v161, %v246
    %v283 = vmul.f32 %v166, %v242
    %v284 = vmul.f32 %v166, %v246
    %v285 = vmul.f32 %v171, %v242
    %v286 = vmul.f32 %v171, %v246
    %v287 = vmul.f32 %v176, %v242
    %v288 = vmul.f32 %v176, %v246
    %v289 = vmul.f32 %v181, %v242
    %v290 = vmul.f32 %v181, %v246
    %v291 = vmul.f32 %v186, %v242
    %v292 = vmul.f32 %v186, %v246
    %v293 = vmul.f32 %v191, %v242
    %v294 = vmul.f32 %v191, %v246
    %v295 = vmul.f32 %v196, %v242
    %v296 = vmul.f32 %v196, %v246
    %v297 = vmul.f32 %v201, %v242
    %v298 = vmul.f32 %v201, %v246
    %v299 = vmul.f32 %v206, %v242
    %v300 = vmul.f32 %v206, %v246
    %v301 = vmul.f32 %v211, %v242
    %v302 = vmul.f32 %v211, %v246
    %v303 = vmul.f32 %v216, %v242
    %v304 = vmul.f32 %v216, %v246
    %v305 = vmul.f32 %v221, %v242
    %v306 = vmul.f32 %v221, %v246
    %v307 = vmul.f32 %v226, %v242
    %v308 = vmul.f32 %v226, %v246
    %v309 = vmul.f32 %v231, %v242
    %v310 = vmul.f32 %v231, %v246
    %v311 = vmul.f32 %v236, %v242
    %v312 = vmul.f32 %v236, %v246
    %s313 = scalar_lea.vmem %s1, 1
    %v314 = vld [vmem:[%s313] ss:$4 sm:$0x3]
    %315 = vset.pattern.permute.xlu0 1
    %316 = vperm.xlu0 %315, %v45
    %v317 = vpop.permute.xlu0 %316
    %319 = vset.pattern.permute.xlu0 1
    %320 = vperm.xlu0 %319, %v46
    %v321 = vpop.permute.xlu0 %320
    %323 = vset.pattern.permute.xlu0 1
    %324 = vperm.xlu0 %323, %v47
    %v325 = vpop.permute.xlu0 %324
    %327 = vset.pattern.permute.xlu0 1
    %328 = vperm.xlu0 %327, %v48
    %v329 = vpop.permute.xlu0 %328
    %331 = vset.pattern.permute.xlu0 1
    %332 = vperm.xlu0 %331, %v49
    %v333 = vpop.permute.xlu0 %332
    %335 = vset.pattern.permute.xlu0 1
    %336 = vperm.xlu0 %335, %v50
    %v337 = vpop.permute.xlu0 %336
    %339 = vset.pattern.permute.xlu0 1
    %340 = vperm.xlu0 %339, %v51
    %v341 = vpop.permute.xlu0 %340
    %343 = vset.pattern.permute.xlu0 1
    %344 = vperm.xlu0 %343, %v52
    %v345 = vpop.permute.xlu0 %344
    %347 = vset.pattern.permute.xlu0 1
    %348 = vperm.xlu0 %347, %v53
    %v349 = vpop.permute.xlu0 %348
    %351 = vset.pattern.permute.xlu0 1
    %352 = vperm.xlu0 %351, %v54
    %v353 = vpop.permute.xlu0 %352
    %355 = vset.pattern.permute.xlu0 1
    %356 = vperm.xlu0 %355, %v55
    %v357 = vpop.permute.xlu0 %356
    %359 = vset.pattern.permute.xlu0 1
    %360 = vperm.xlu0 %359, %v56
    %v361 = vpop.permute.xlu0 %360
    %363 = vset.pattern.permute.xlu0 1
    %364 = vperm.xlu0 %363, %v57
    %v365 = vpop.permute.xlu0 %364
    %367 = vset.pattern.permute.xlu0 1
    %368 = vperm.xlu0 %367, %v58
    %v369 = vpop.permute.xlu0 %368
    %371 = vset.pattern.permute.xlu0 1
    %372 = vperm.xlu0 %371, %v59
    %v373 = vpop.permute.xlu0 %372
    %375 = vset.pattern.permute.xlu0 1
    %376 = vperm.xlu0 %375, %v60
    %v377 = vpop.permute.xlu0 %376
    %379 = vset.pattern.permute.xlu0 1
    %380 = vperm.xlu0 %379, %v61
    %v381 = vpop.permute.xlu0 %380
    %383 = vset.pattern.permute.xlu0 1
    %384 = vperm.xlu0 %383, %v62
    %v385 = vpop.permute.xlu0 %384
    %387 = vset.pattern.permute.xlu0 1
    %388 = vperm.xlu0 %387, %v63
    %v389 = vpop.permute.xlu0 %388
    %391 = vset.pattern.permute.xlu0 1
    %392 = vperm.xlu0 %391, %v64
    %v393 = vpop.permute.xlu0 %392
    %395 = vset.pattern.permute.xlu0 1
    %396 = vperm.xlu0 %395, %v65
    %v397 = vpop.permute.xlu0 %396
    %399 = vset.pattern.permute.xlu0 1
    %400 = vperm.xlu0 %399, %v66
    %v401 = vpop.permute.xlu0 %400
    %403 = vset.pattern.permute.xlu0 1
    %404 = vperm.xlu0 %403, %v67
    %v405 = vpop.permute.xlu0 %404
    %407 = vset.pattern.permute.xlu0 1
    %408 = vperm.xlu0 %407, %v68
    %v409 = vpop.permute.xlu0 %408
    %411 = vset.pattern.permute.xlu0 1
    %412 = vperm.xlu0 %411, %v69
    %v413 = vpop.permute.xlu0 %412
    %415 = vset.pattern.permute.xlu0 1
    %416 = vperm.xlu0 %415, %v70
    %v417 = vpop.permute.xlu0 %416
    %419 = vset.pattern.permute.xlu0 1
    %420 = vperm.xlu0 %419, %v71
    %v421 = vpop.permute.xlu0 %420
    %423 = vset.pattern.permute.xlu0 1
    %424 = vperm.xlu0 %423, %v72
    %v425 = vpop.permute.xlu0 %424
    %427 = vset.pattern.permute.xlu0 1
    %428 = vperm.xlu0 %427, %v73
    %v429 = vpop.permute.xlu0 %428
    %431 = vset.pattern.permute.xlu0 1
    %432 = vperm.xlu0 %431, %v74
    %v433 = vpop.permute.xlu0 %432
    %435 = vset.pattern.permute.xlu0 1
    %436 = vperm.xlu0 %435, %v75
    %v437 = vpop.permute.xlu0 %436
    %439 = vset.pattern.permute.xlu0 1
    %440 = vperm.xlu0 %439, %v76
    %v441 = vpop.permute.xlu0 %440
    %v444 = vlaneseq
    %v445 = vshrl.u32 %v444, 7
    %v446 = vsub.s32 0, %v445
    %v447 = vrot.slane %v314, %v446
    %v448 = vlaneseq
    %v449 = vshrl.u32 %v448, 7
    %v450 = vsub.s32 1, %v449
    %v451 = vrot.slane %v314, %v450
    %v454 = vmul.f32 %v317, %v447
    %v455 = vmul.f32 %v317, %v451
    %v456 = vmul.f32 %v321, %v447
    %v457 = vmul.f32 %v321, %v451
    %v458 = vmul.f32 %v325, %v447
    %v459 = vmul.f32 %v325, %v451
    %v460 = vmul.f32 %v329, %v447
    %v461 = vmul.f32 %v329, %v451
    %v462 = vmul.f32 %v333, %v447
    %v463 = vmul.f32 %v333, %v451
    %v464 = vmul.f32 %v337, %v447
    %v465 = vmul.f32 %v337, %v451
    %v466 = vmul.f32 %v341, %v447
    %v467 = vmul.f32 %v341, %v451
    %v468 = vmul.f32 %v345, %v447
    %v469 = vmul.f32 %v345, %v451
    %v470 = vmul.f32 %v349, %v447
    %v471 = vmul.f32 %v349, %v451
    %v472 = vmul.f32 %v353, %v447
    %v473 = vmul.f32 %v353, %v451
    %v474 = vmul.f32 %v357, %v447
    %v475 = vmul.f32 %v357, %v451
    %v476 = vmul.f32 %v361, %v447
    %v477 = vmul.f32 %v361, %v451
    %v478 = vmul.f32 %v365, %v447
    %v479 = vmul.f32 %v365, %v451
    %v480 = vmul.f32 %v369, %v447
    %v481 = vmul.f32 %v369, %v451
    %v482 = vmul.f32 %v373, %v447
    %v483 = vmul.f32 %v373, %v451
    %v484 = vmul.f32 %v377, %v447
    %v485 = vmul.f32 %v377, %v451
    %v486 = vmul.f32 %v381, %v447
    %v487 = vmul.f32 %v381, %v451
    %v488 = vmul.f32 %v385, %v447
    %v489 = vmul.f32 %v385, %v451
    %v490 = vmul.f32 %v389, %v447
    %v491 = vmul.f32 %v389, %v451
    %v492 = vmul.f32 %v393, %v447
    %v493 = vmul.f32 %v393, %v451
    %v494 = vmul.f32 %v397, %v447
    %v495 = vmul.f32 %v397, %v451
    %v496 = vmul.f32 %v401, %v447
    %v497 = vmul.f32 %v401, %v451
    %v498 = vmul.f32 %v405, %v447
    %v499 = vmul.f32 %v405, %v451
    %v500 = vmul.f32 %v409, %v447
    %v501 = vmul.f32 %v409, %v451
    %v502 = vmul.f32 %v413, %v447
    %v503 = vmul.f32 %v413, %v451
    %v504 = vmul.f32 %v417, %v447
    %v505 = vmul.f32 %v417, %v451
    %v506 = vmul.f32 %v421, %v447
    %v507 = vmul.f32 %v421, %v451
    %v508 = vmul.f32 %v425, %v447
    %v509 = vmul.f32 %v425, %v451
    %v510 = vmul.f32 %v429, %v447
    %v511 = vmul.f32 %v429, %v451
    %v512 = vmul.f32 %v433, %v447
    %v513 = vmul.f32 %v433, %v451
    %v514 = vmul.f32 %v437, %v447
    %v515 = vmul.f32 %v437, %v451
    %v516 = vmul.f32 %v441, %v447
    %v517 = vmul.f32 %v441, %v451
    %v518 = vadd.f32 %v249, %v454
    %v519 = vadd.f32 %v250, %v455
    %v520 = vadd.f32 %v251, %v456
    %v521 = vadd.f32 %v252, %v457
    %v522 = vadd.f32 %v253, %v458
    %v523 = vadd.f32 %v254, %v459
    %v524 = vadd.f32 %v255, %v460
    %v525 = vadd.f32 %v256, %v461
    %v526 = vadd.f32 %v257, %v462
    %v527 = vadd.f32 %v258, %v463
    %v528 = vadd.f32 %v259, %v464
    %v529 = vadd.f32 %v260, %v465
    %v530 = vadd.f32 %v261, %v466
    %v531 = vadd.f32 %v262, %v467
    %v532 = vadd.f32 %v263, %v468
    %v533 = vadd.f32 %v264, %v469
    %v534 = vadd.f32 %v265, %v470
    %v535 = vadd.f32 %v266, %v471
    %v536 = vadd.f32 %v267, %v472
    %v537 = vadd.f32 %v268, %v473
    %v538 = vadd.f32 %v269, %v474
    %v539 = vadd.f32 %v270, %v475
    %v540 = vadd.f32 %v271, %v476
    %v541 = vadd.f32 %v272, %v477
    %v542 = vadd.f32 %v273, %v478
    %v543 = vadd.f32 %v274, %v479
    %v544 = vadd.f32 %v275, %v480
    %v545 = vadd.f32 %v276, %v481
    %v546 = vadd.f32 %v277, %v482
    %v547 = vadd.f32 %v278, %v483
    %v548 = vadd.f32 %v279, %v484
    %v549 = vadd.f32 %v280, %v485
    %v550 = vadd.f32 %v281, %v486
    %v551 = vadd.f32 %v282, %v487
    %v552 = vadd.f32 %v283, %v488
    %v553 = vadd.f32 %v284, %v489
    %v554 = vadd.f32 %v285, %v490
    %v555 = vadd.f32 %v286, %v491
    %v556 = vadd.f32 %v287, %v492
    %v557 = vadd.f32 %v288, %v493
    %v558 = vadd.f32 %v289, %v494
    %v559 = vadd.f32 %v290, %v495
    %v560 = vadd.f32 %v291, %v496
    %v561 = vadd.f32 %v292, %v497
    %v562 = vadd.f32 %v293, %v498
    %v563 = vadd.f32 %v294, %v499
    %v564 = vadd.f32 %v295, %v500
    %v565 = vadd.f32 %v296, %v501
    %v566 = vadd.f32 %v297, %v502
    %v567 = vadd.f32 %v298, %v503
    %v568 = vadd.f32 %v299, %v504
    %v569 = vadd.f32 %v300, %v505
    %v570 = vadd.f32 %v301, %v506
    %v571 = vadd.f32 %v302, %v507
    %v572 = vadd.f32 %v303, %v508
    %v573 = vadd.f32 %v304, %v509
    %v574 = vadd.f32 %v305, %v510
    %v575 = vadd.f32 %v306, %v511
    %v576 = vadd.f32 %v307, %v512
    %v577 = vadd.f32 %v308, %v513
    %v578 = vadd.f32 %v309, %v514
    %v579 = vadd.f32 %v310, %v515
    %v580 = vadd.f32 %v311, %v516
    %v581 = vadd.f32 %v312, %v517
    %s582 = scalar_lea.vmem %s1, 2
    %v583 = vld [vmem:[%s582] ss:$4 sm:$0x3]
    %584 = vset.pattern.permute.xlu0 2
    %585 = vperm.xlu0 %584, %v45
    %v586 = vpop.permute.xlu0 %585
    %588 = vset.pattern.permute.xlu0 2
    %589 = vperm.xlu0 %588, %v46
    %v590 = vpop.permute.xlu0 %589
    %592 = vset.pattern.permute.xlu0 2
    %593 = vperm.xlu0 %592, %v47
    %v594 = vpop.permute.xlu0 %593
    %596 = vset.pattern.permute.xlu0 2
    %597 = vperm.xlu0 %596, %v48
    %v598 = vpop.permute.xlu0 %597
    %600 = vset.pattern.permute.xlu0 2
    %601 = vperm.xlu0 %600, %v49
    %v602 = vpop.permute.xlu0 %601
    %604 = vset.pattern.permute.xlu0 2
    %605 = vperm.xlu0 %604, %v50
    %v606 = vpop.permute.xlu0 %605
    %608 = vset.pattern.permute.xlu0 2
    %609 = vperm.xlu0 %608, %v51
    %v610 = vpop.permute.xlu0 %609
    %612 = vset.pattern.permute.xlu0 2
    %613 = vperm.xlu0 %612, %v52
    %v614 = vpop.permute.xlu0 %613
    %616 = vset.pattern.permute.xlu0 2
    %617 = vperm.xlu0 %616, %v53
    %v618 = vpop.permute.xlu0 %617
    %620 = vset.pattern.permute.xlu0 2
    %621 = vperm.xlu0 %620, %v54
    %v622 = vpop.permute.xlu0 %621
    %624 = vset.pattern.permute.xlu0 2
    %625 = vperm.xlu0 %624, %v55
    %v626 = vpop.permute.xlu0 %625
    %628 = vset.pattern.permute.xlu0 2
    %629 = vperm.xlu0 %628, %v56
    %v630 = vpop.permute.xlu0 %629
    %632 = vset.pattern.permute.xlu0 2
    %633 = vperm.xlu0 %632, %v57
    %v634 = vpop.permute.xlu0 %633
    %636 = vset.pattern.permute.xlu0 2
    %637 = vperm.xlu0 %636, %v58
    %v638 = vpop.permute.xlu0 %637
    %640 = vset.pattern.permute.xlu0 2
    %641 = vperm.xlu0 %640, %v59
    %v642 = vpop.permute.xlu0 %641
    %644 = vset.pattern.permute.xlu0 2
    %645 = vperm.xlu0 %644, %v60
    %v646 = vpop.permute.xlu0 %645
    %648 = vset.pattern.permute.xlu0 2
    %649 = vperm.xlu0 %648, %v61
    %v650 = vpop.permute.xlu0 %649
    %652 = vset.pattern.permute.xlu0 2
    %653 = vperm.xlu0 %652, %v62
    %v654 = vpop.permute.xlu0 %653
    %656 = vset.pattern.permute.xlu0 2
    %657 = vperm.xlu0 %656, %v63
    %v658 = vpop.permute.xlu0 %657
    %660 = vset.pattern.permute.xlu0 2
    %661 = vperm.xlu0 %660, %v64
    %v662 = vpop.permute.xlu0 %661
    %664 = vset.pattern.permute.xlu0 2
    %665 = vperm.xlu0 %664, %v65
    %v666 = vpop.permute.xlu0 %665
    %668 = vset.pattern.permute.xlu0 2
    %669 = vperm.xlu0 %668, %v66
    %v670 = vpop.permute.xlu0 %669
    %672 = vset.pattern.permute.xlu0 2
    %673 = vperm.xlu0 %672, %v67
    %v674 = vpop.permute.xlu0 %673
    %676 = vset.pattern.permute.xlu0 2
    %677 = vperm.xlu0 %676, %v68
    %v678 = vpop.permute.xlu0 %677
    %680 = vset.pattern.permute.xlu0 2
    %681 = vperm.xlu0 %680, %v69
    %v682 = vpop.permute.xlu0 %681
    %684 = vset.pattern.permute.xlu0 2
    %685 = vperm.xlu0 %684, %v70
    %v686 = vpop.permute.xlu0 %685
    %688 = vset.pattern.permute.xlu0 2
    %689 = vperm.xlu0 %688, %v71
    %v690 = vpop.permute.xlu0 %689
    %692 = vset.pattern.permute.xlu0 2
    %693 = vperm.xlu0 %692, %v72
    %v694 = vpop.permute.xlu0 %693
    %696 = vset.pattern.permute.xlu0 2
    %697 = vperm.xlu0 %696, %v73
    %v698 = vpop.permute.xlu0 %697
    %700 = vset.pattern.permute.xlu0 2
    %701 = vperm.xlu0 %700, %v74
    %v702 = vpop.permute.xlu0 %701
    %704 = vset.pattern.permute.xlu0 2
    %705 = vperm.xlu0 %704, %v75
    %v706 = vpop.permute.xlu0 %705
    %708 = vset.pattern.permute.xlu0 2
    %709 = vperm.xlu0 %708, %v76
    %v710 = vpop.permute.xlu0 %709
    %v713 = vlaneseq
    %v714 = vshrl.u32 %v713, 7
    %v715 = vsub.s32 0, %v714
    %v716 = vrot.slane %v583, %v715
    %v717 = vlaneseq
    %v718 = vshrl.u32 %v717, 7
    %v719 = vsub.s32 1, %v718
    %v720 = vrot.slane %v583, %v719
    %v723 = vmul.f32 %v586, %v716
    %v724 = vmul.f32 %v586, %v720
    %v725 = vmul.f32 %v590, %v716
    %v726 = vmul.f32 %v590, %v720
    %v727 = vmul.f32 %v594, %v716
    %v728 = vmul.f32 %v594, %v720
    %v729 = vmul.f32 %v598, %v716
    %v730 = vmul.f32 %v598, %v720
    %v731 = vmul.f32 %v602, %v716
    %v732 = vmul.f32 %v602, %v720
    %v733 = vmul.f32 %v606, %v716
    %v734 = vmul.f32 %v606, %v720
    %v735 = vmul.f32 %v610, %v716
    %v736 = vmul.f32 %v610, %v720
    %v737 = vmul.f32 %v614, %v716
    %v738 = vmul.f32 %v614, %v720
    %v739 = vmul.f32 %v618, %v716
    %v740 = vmul.f32 %v618, %v720
    %v741 = vmul.f32 %v622, %v716
    %v742 = vmul.f32 %v622, %v720
    %v743 = vmul.f32 %v626, %v716
    %v744 = vmul.f32 %v626, %v720
    %v745 = vmul.f32 %v630, %v716
    %v746 = vmul.f32 %v630, %v720
    %v747 = vmul.f32 %v634, %v716
    %v748 = vmul.f32 %v634, %v720
    %v749 = vmul.f32 %v638, %v716
    %v750 = vmul.f32 %v638, %v720
    %v751 = vmul.f32 %v642, %v716
    %v752 = vmul.f32 %v642, %v720
    %v753 = vmul.f32 %v646, %v716
    %v754 = vmul.f32 %v646, %v720
    %v755 = vmul.f32 %v650, %v716
    %v756 = vmul.f32 %v650, %v720
    %v757 = vmul.f32 %v654, %v716
    %v758 = vmul.f32 %v654, %v720
    %v759 = vmul.f32 %v658, %v716
    %v760 = vmul.f32 %v658, %v720
    %v761 = vmul.f32 %v662, %v716
    %v762 = vmul.f32 %v662, %v720
    %v763 = vmul.f32 %v666, %v716
    %v764 = vmul.f32 %v666, %v720
    %v765 = vmul.f32 %v670, %v716
    %v766 = vmul.f32 %v670, %v720
    %v767 = vmul.f32 %v674, %v716
    %v768 = vmul.f32 %v674, %v720
    %v769 = vmul.f32 %v678, %v716
    %v770 = vmul.f32 %v678, %v720
    %v771 = vmul.f32 %v682, %v716
    %v772 = vmul.f32 %v682, %v720
    %v773 = vmul.f32 %v686, %v716
    %v774 = vmul.f32 %v686, %v720
    %v775 = vmul.f32 %v690, %v716
    %v776 = vmul.f32 %v690, %v720
    %v777 = vmul.f32 %v694, %v716
    %v778 = vmul.f32 %v694, %v720
    %v779 = vmul.f32 %v698, %v716
    %v780 = vmul.f32 %v698, %v720
    %v781 = vmul.f32 %v702, %v716
    %v782 = vmul.f32 %v702, %v720
    %v783 = vmul.f32 %v706, %v716
    %v784 = vmul.f32 %v706, %v720
    %v785 = vmul.f32 %v710, %v716
    %v786 = vmul.f32 %v710, %v720
    %v787 = vadd.f32 %v518, %v723
    %v788 = vadd.f32 %v519, %v724
    %v789 = vadd.f32 %v520, %v725
    %v790 = vadd.f32 %v521, %v726
    %v791 = vadd.f32 %v522, %v727
    %v792 = vadd.f32 %v523, %v728
    %v793 = vadd.f32 %v524, %v729
    %v794 = vadd.f32 %v525, %v730
    %v795 = vadd.f32 %v526, %v731
    %v796 = vadd.f32 %v527, %v732
    %v797 = vadd.f32 %v528, %v733
    %v798 = vadd.f32 %v529, %v734
    %v799 = vadd.f32 %v530, %v735
    %v800 = vadd.f32 %v531, %v736
    %v801 = vadd.f32 %v532, %v737
    %v802 = vadd.f32 %v533, %v738
    %v803 = vadd.f32 %v534, %v739
    %v804 = vadd.f32 %v535, %v740
    %v805 = vadd.f32 %v536, %v741
    %v806 = vadd.f32 %v537, %v742
    %v807 = vadd.f32 %v538, %v743
    %v808 = vadd.f32 %v539, %v744
    %v809 = vadd.f32 %v540, %v745
    %v810 = vadd.f32 %v541, %v746
    %v811 = vadd.f32 %v542, %v747
    %v812 = vadd.f32 %v543, %v748
    %v813 = vadd.f32 %v544, %v749
    %v814 = vadd.f32 %v545, %v750
    %v815 = vadd.f32 %v546, %v751
    %v816 = vadd.f32 %v547, %v752
    %v817 = vadd.f32 %v548, %v753
    %v818 = vadd.f32 %v549, %v754
    %v819 = vadd.f32 %v550, %v755
    %v820 = vadd.f32 %v551, %v756
    %v821 = vadd.f32 %v552, %v757
    %v822 = vadd.f32 %v553, %v758
    %v823 = vadd.f32 %v554, %v759
    %v824 = vadd.f32 %v555, %v760
    %v825 = vadd.f32 %v556, %v761
    %v826 = vadd.f32 %v557, %v762
    %v827 = vadd.f32 %v558, %v763
    %v828 = vadd.f32 %v559, %v764
    %v829 = vadd.f32 %v560, %v765
    %v830 = vadd.f32 %v561, %v766
    %v831 = vadd.f32 %v562, %v767
    %v832 = vadd.f32 %v563, %v768
    %v833 = vadd.f32 %v564, %v769
    %v834 = vadd.f32 %v565, %v770
    %v835 = vadd.f32 %v566, %v771
    %v836 = vadd.f32 %v567, %v772
    %v837 = vadd.f32 %v568, %v773
    %v838 = vadd.f32 %v569, %v774
    %v839 = vadd.f32 %v570, %v775
    %v840 = vadd.f32 %v571, %v776
    %v841 = vadd.f32 %v572, %v777
    %v842 = vadd.f32 %v573, %v778
    %v843 = vadd.f32 %v574, %v779
    %v844 = vadd.f32 %v575, %v780
    %v845 = vadd.f32 %v576, %v781
    %v846 = vadd.f32 %v577, %v782
    %v847 = vadd.f32 %v578, %v783
    %v848 = vadd.f32 %v579, %v784
    %v849 = vadd.f32 %v580, %v785
    %v850 = vadd.f32 %v581, %v786
    %v851 = vld [vmem:[%s2] sm:$0x3]
    %v853 = vlaneseq
    %v854 = vshrl.u32 %v853, 7
    %v855 = vsub.s32 0, %v854
    %v856 = vrot.slane %v851, %v855
    %v857 = vlaneseq
    %v858 = vshrl.u32 %v857, 7
    %v859 = vsub.s32 1, %v858
    %v860 = vrot.slane %v851, %v859
    %v863 = vadd.f32 %v787, %v856
    %v864 = vadd.f32 %v788, %v860
    %v865 = vadd.f32 %v789, %v856
    %v866 = vadd.f32 %v790, %v860
    %v867 = vadd.f32 %v791, %v856
    %v868 = vadd.f32 %v792, %v860
    %v869 = vadd.f32 %v793, %v856
    %v870 = vadd.f32 %v794, %v860
    %v871 = vadd.f32 %v795, %v856
    %v872 = vadd.f32 %v796, %v860
    %v873 = vadd.f32 %v797, %v856
    %v874 = vadd.f32 %v798, %v860
    %v875 = vadd.f32 %v799, %v856
    %v876 = vadd.f32 %v800, %v860
    %v877 = vadd.f32 %v801, %v856
    %v878 = vadd.f32 %v802, %v860
    %v879 = vadd.f32 %v803, %v856
    %v880 = vadd.f32 %v804, %v860
    %v881 = vadd.f32 %v805, %v856
    %v882 = vadd.f32 %v806, %v860
    %v883 = vadd.f32 %v807, %v856
    %v884 = vadd.f32 %v808, %v860
    %v885 = vadd.f32 %v809, %v856
    %v886 = vadd.f32 %v810, %v860
    %v887 = vadd.f32 %v811, %v856
    %v888 = vadd.f32 %v812, %v860
    %v889 = vadd.f32 %v813, %v856
    %v890 = vadd.f32 %v814, %v860
    %v891 = vadd.f32 %v815, %v856
    %v892 = vadd.f32 %v816, %v860
    %v893 = vadd.f32 %v817, %v856
    %v894 = vadd.f32 %v818, %v860
    %v895 = vadd.f32 %v819, %v856
    %v896 = vadd.f32 %v820, %v860
    %v897 = vadd.f32 %v821, %v856
    %v898 = vadd.f32 %v822, %v860
    %v899 = vadd.f32 %v823, %v856
    %v900 = vadd.f32 %v824, %v860
    %v901 = vadd.f32 %v825, %v856
    %v902 = vadd.f32 %v826, %v860
    %v903 = vadd.f32 %v827, %v856
    %v904 = vadd.f32 %v828, %v860
    %v905 = vadd.f32 %v829, %v856
    %v906 = vadd.f32 %v830, %v860
    %v907 = vadd.f32 %v831, %v856
    %v908 = vadd.f32 %v832, %v860
    %v909 = vadd.f32 %v833, %v856
    %v910 = vadd.f32 %v834, %v860
    %v911 = vadd.f32 %v835, %v856
    %v912 = vadd.f32 %v836, %v860
    %v913 = vadd.f32 %v837, %v856
    %v914 = vadd.f32 %v838, %v860
    %v915 = vadd.f32 %v839, %v856
    %v916 = vadd.f32 %v840, %v860
    %v917 = vadd.f32 %v841, %v856
    %v918 = vadd.f32 %v842, %v860
    %v919 = vadd.f32 %v843, %v856
    %v920 = vadd.f32 %v844, %v860
    %v921 = vadd.f32 %v845, %v856
    %v922 = vadd.f32 %v846, %v860
    %v923 = vadd.f32 %v847, %v856
    %v924 = vadd.f32 %v848, %v860
    %v925 = vadd.f32 %v849, %v856
    %v926 = vadd.f32 %v850, %v860
    %v927 = vmax.f32 %v863, 0.0
    %v928 = vmax.f32 %v864, 0.0
    %v929 = vmax.f32 %v865, 0.0
    %v930 = vmax.f32 %v866, 0.0
    %v931 = vmax.f32 %v867, 0.0
    %v932 = vmax.f32 %v868, 0.0
    %v933 = vmax.f32 %v869, 0.0
    %v934 = vmax.f32 %v870, 0.0
    %v935 = vmax.f32 %v871, 0.0
    %v936 = vmax.f32 %v872, 0.0
    %v937 = vmax.f32 %v873, 0.0
    %v938 = vmax.f32 %v874, 0.0
    %v939 = vmax.f32 %v875, 0.0
    %v940 = vmax.f32 %v876, 0.0
    %v941 = vmax.f32 %v877, 0.0
    %v942 = vmax.f32 %v878, 0.0
    %v943 = vmax.f32 %v879, 0.0
    %v944 = vmax.f32 %v880, 0.0
    %v945 = vmax.f32 %v881, 0.0
    %v946 = vmax.f32 %v882, 0.0
    %v947 = vmax.f32 %v883, 0.0
    %v948 = vmax.f32 %v884, 0.0
    %v949 = vmax.f32 %v885, 0.0
    %v950 = vmax.f32 %v886, 0.0
    %v951 = vmax.f32 %v887, 0.0
    %v952 = vmax.f32 %v888, 0.0
    %v953 = vmax.f32 %v889, 0.0
    %v954 = vmax.f32 %v890, 0.0
    %v955 = vmax.f32 %v891, 0.0
    %v956 = vmax.f32 %v892, 0.0
    %v957 = vmax.f32 %v893, 0.0
    %v958 = vmax.f32 %v894, 0.0
    %v959 = vmax.f32 %v895, 0.0
    %v960 = vmax.f32 %v896, 0.0
    %v961 = vmax.f32 %v897, 0.0
    %v962 = vmax.f32 %v898, 0.0
    %v963 = vmax.f32 %v899, 0.0
    %v964 = vmax.f32 %v900, 0.0
    %v965 = vmax.f32 %v901, 0.0
    %v966 = vmax.f32 %v902, 0.0
    %v967 = vmax.f32 %v903, 0.0
    %v968 = vmax.f32 %v904, 0.0
    %v969 = vmax.f32 %v905, 0.0
    %v970 = vmax.f32 %v906, 0.0
    %v971 = vmax.f32 %v907, 0.0
    %v972 = vmax.f32 %v908, 0.0
    %v973 = vmax.f32 %v909, 0.0
    %v974 = vmax.f32 %v910, 0.0
    %v975 = vmax.f32 %v911, 0.0
    %v976 = vmax.f32 %v912, 0.0
    %v977 = vmax.f32 %v913, 0.0
    %v978 = vmax.f32 %v914, 0.0
    %v979 = vmax.f32 %v915, 0.0
    %v980 = vmax.f32 %v916, 0.0
    %v981 = vmax.f32 %v917, 0.0
    %v982 = vmax.f32 %v918, 0.0
    %v983 = vmax.f32 %v919, 0.0
    %v984 = vmax.f32 %v920, 0.0
    %v985 = vmax.f32 %v921, 0.0
    %v986 = vmax.f32 %v922, 0.0
    %v987 = vmax.f32 %v923, 0.0
    %v988 = vmax.f32 %v924, 0.0
    %v989 = vmax.f32 %v925, 0.0
    %v990 = vmax.f32 %v926, 0.0
    %v991 = vpack.c.bf16 %v929, %v927
    %v992 = vpack.c.bf16 %v930, %v928
    %v993 = vpack.c.bf16 %v933, %v931
    %v994 = vpack.c.bf16 %v934, %v932
    %v995 = vpack.c.bf16 %v937, %v935
    %v996 = vpack.c.bf16 %v938, %v936
    %v997 = vpack.c.bf16 %v941, %v939
    %v998 = vpack.c.bf16 %v942, %v940
    %v999 = vpack.c.bf16 %v945, %v943
    %v1000 = vpack.c.bf16 %v946, %v944
    %v1001 = vpack.c.bf16 %v949, %v947
    %v1002 = vpack.c.bf16 %v950, %v948
    %v1003 = vpack.c.bf16 %v953, %v951
    %v1004 = vpack.c.bf16 %v954, %v952
    %v1005 = vpack.c.bf16 %v957, %v955
    %v1006 = vpack.c.bf16 %v958, %v956
    %v1007 = vpack.c.bf16 %v961, %v959
    %v1008 = vpack.c.bf16 %v962, %v960
    %v1009 = vpack.c.bf16 %v965, %v963
    %v1010 = vpack.c.bf16 %v966, %v964
    %v1011 = vpack.c.bf16 %v969, %v967
    %v1012 = vpack.c.bf16 %v970, %v968
    %v1013 = vpack.c.bf16 %v973, %v971
    %v1014 = vpack.c.bf16 %v974, %v972
    %v1015 = vpack.c.bf16 %v977, %v975
    %v1016 = vpack.c.bf16 %v978, %v976
    %v1017 = vpack.c.bf16 %v981, %v979
    %v1018 = vpack.c.bf16 %v982, %v980
    %v1019 = vpack.c.bf16 %v985, %v983
    %v1020 = vpack.c.bf16 %v986, %v984
    %v1021 = vpack.c.bf16 %v989, %v987
    %v1022 = vpack.c.bf16 %v990, %v988
    %v1023 = vld [vmem:[#allocation2] sm:$0xff]
    %v1024 = vld [vmem:[#allocation2 + $0x8] sm:$0xff]
    %v1025 = vld [vmem:[#allocation2 + $0x10] sm:$0xff]
    %v1026 = vld [vmem:[#allocation2 + $0x18] sm:$0xff]
    %v1027 = vld [vmem:[#allocation2 + $0x20] sm:$0xff]
    %v1028 = vld [vmem:[#allocation2 + $0x28] sm:$0xff]
    %v1029 = vld [vmem:[#allocation2 + $0x30] sm:$0xff]
    %v1030 = vld [vmem:[#allocation2 + $0x38] sm:$0xff]
    %v1031 = vld [vmem:[#allocation2 + $0x40] sm:$0xff]
    %v1032 = vld [vmem:[#allocation2 + $0x48] sm:$0xff]
    %v1033 = vld [vmem:[#allocation2 + $0x50] sm:$0xff]
    %v1034 = vld [vmem:[#allocation2 + $0x58] sm:$0xff]
    %v1035 = vld [vmem:[#allocation2 + $0x60] sm:$0xff]
    %v1036 = vld [vmem:[#allocation2 + $0x68] sm:$0xff]
    %v1037 = vld [vmem:[#allocation2 + $0x70] sm:$0xff]
    %v1038 = vld [vmem:[#allocation2 + $0x78] sm:$0xff]
    %v1039 = vld [vmem:[#allocation2 + $0x80] sm:$0xff]
    %v1040 = vld [vmem:[#allocation2 + $0x88] sm:$0xff]
    %v1041 = vld [vmem:[#allocation2 + $0x90] sm:$0xff]
    %v1042 = vld [vmem:[#allocation2 + $0x98] sm:$0xff]
    %v1043 = vld [vmem:[#allocation2 + $0xa0] sm:$0xff]
    %v1044 = vld [vmem:[#allocation2 + $0xa8] sm:$0xff]
    %v1045 = vld [vmem:[#allocation2 + $0xb0] sm:$0xff]
    %v1046 = vld [vmem:[#allocation2 + $0xb8] sm:$0xff]
    %v1047 = vld [vmem:[#allocation2 + $0xc0] sm:$0xff]
    %v1048 = vld [vmem:[#allocation2 + $0xc8] sm:$0xff]
    %v1049 = vld [vmem:[#allocation2 + $0xd0] sm:$0xff]
    %v1050 = vld [vmem:[#allocation2 + $0xd8] sm:$0xff]
    %v1051 = vld [vmem:[#allocation2 + $0xe0] sm:$0xff]
    %v1052 = vld [vmem:[#allocation2 + $0xe8] sm:$0xff]
    %v1053 = vld [vmem:[#allocation2 + $0xf0] sm:$0xff]
    %v1054 = vld [vmem:[#allocation2 + $0xf8] sm:$0xff]
    %v1055 = vld [vmem:[%s4] sm:$0x3]
    %v1057 = vlaneseq
    %v1058 = vshrl.u32 %v1057, 7
    %v1059 = vsub.s32 0, %v1058
    %v1060 = vrot.slane %v1055, %v1059
    %v1061 = vlaneseq
    %v1062 = vshrl.u32 %v1061, 7
    %v1063 = vsub.s32 1, %v1062
    %v1064 = vrot.slane %v1055, %v1063
    %v1099 = vunpack.c.l.b16 %v1023
    %v1100 = vunpack.c.h.b16 %v1023
    %v1101 = vunpack.c.l.b16 %v1024
    %v1102 = vunpack.c.h.b16 %v1024
    %v1103 = vunpack.c.l.b16 %v1025
    %v1104 = vunpack.c.h.b16 %v1025
    %v1105 = vunpack.c.l.b16 %v1026
    %v1106 = vunpack.c.h.b16 %v1026
    %v1107 = vunpack.c.l.b16 %v1027
    %v1108 = vunpack.c.h.b16 %v1027
    %v1109 = vunpack.c.l.b16 %v1028
    %v1110 = vunpack.c.h.b16 %v1028
    %v1111 = vunpack.c.l.b16 %v1029
    %v1112 = vunpack.c.h.b16 %v1029
    %v1113 = vunpack.c.l.b16 %v1030
    %v1114 = vunpack.c.h.b16 %v1030
    %v1115 = vunpack.c.l.b16 %v1031
    %v1116 = vunpack.c.h.b16 %v1031
    %v1117 = vunpack.c.l.b16 %v1032
    %v1118 = vunpack.c.h.b16 %v1032
    %v1119 = vunpack.c.l.b16 %v1033
    %v1120 = vunpack.c.h.b16 %v1033
    %v1121 = vunpack.c.l.b16 %v1034
    %v1122 = vunpack.c.h.b16 %v1034
    %v1123 = vunpack.c.l.b16 %v1035
    %v1124 = vunpack.c.h.b16 %v1035
    %v1125 = vunpack.c.l.b16 %v1036
    %v1126 = vunpack.c.h.b16 %v1036
    %v1127 = vunpack.c.l.b16 %v1037
    %v1128 = vunpack.c.h.b16 %v1037
    %v1129 = vunpack.c.l.b16 %v1038
    %v1130 = vunpack.c.h.b16 %v1038
    %v1131 = vunpack.c.l.b16 %v1039
    %v1132 = vunpack.c.h.b16 %v1039
    %v1133 = vunpack.c.l.b16 %v1040
    %v1134 = vunpack.c.h.b16 %v1040
    %v1135 = vunpack.c.l.b16 %v1041
    %v1136 = vunpack.c.h.b16 %v1041
    %v1137 = vunpack.c.l.b16 %v1042
    %v1138 = vunpack.c.h.b16 %v1042
    %v1139 = vunpack.c.l.b16 %v1043
    %v1140 = vunpack.c.h.b16 %v1043
    %v1141 = vunpack.c.l.b16 %v1044
    %v1142 = vunpack.c.h.b16 %v1044
    %v1143 = vunpack.c.l.b16 %v1045
    %v1144 = vunpack.c.h.b16 %v1045
    %v1145 = vunpack.c.l.b16 %v1046
    %v1146 = vunpack.c.h.b16 %v1046
    %v1147 = vunpack.c.l.b16 %v1047
    %v1148 = vunpack.c.h.b16 %v1047
    %v1149 = vunpack.c.l.b16 %v1048
    %v1150 = vunpack.c.h.b16 %v1048
    %v1151 = vunpack.c.l.b16 %v1049
    %v1152 = vunpack.c.h.b16 %v1049
    %v1153 = vunpack.c.l.b16 %v1050
    %v1154 = vunpack.c.h.b16 %v1050
    %v1155 = vunpack.c.l.b16 %v1051
    %v1156 = vunpack.c.h.b16 %v1051
    %v1157 = vunpack.c.l.b16 %v1052
    %v1158 = vunpack.c.h.b16 %v1052
    %v1159 = vunpack.c.l.b16 %v1053
    %v1160 = vunpack.c.h.b16 %v1053
    %v1161 = vunpack.c.l.b16 %v1054
    %v1162 = vunpack.c.h.b16 %v1054
    %v1163 = vpack.c.b16 %v1101, %v1099
    %v1164 = vpack.c.b16 %v1102, %v1100
    %v1165 = vpack.c.b16 %v1105, %v1103
    %v1166 = vpack.c.b16 %v1106, %v1104
    %v1167 = vpack.c.b16 %v1109, %v1107
    %v1168 = vpack.c.b16 %v1110, %v1108
    %v1169 = vpack.c.b16 %v1113, %v1111
    %v1170 = vpack.c.b16 %v1114, %v1112
    %v1171 = vpack.c.b16 %v1117, %v1115
    %v1172 = vpack.c.b16 %v1118, %v1116
    %v1173 = vpack.c.b16 %v1121, %v1119
    %v1174 = vpack.c.b16 %v1122, %v1120
    %v1175 = vpack.c.b16 %v1125, %v1123
    %v1176 = vpack.c.b16 %v1126, %v1124
    %v1177 = vpack.c.b16 %v1129, %v1127
    %v1178 = vpack.c.b16 %v1130, %v1128
    %v1179 = vpack.c.b16 %v1133, %v1131
    %v1180 = vpack.c.b16 %v1134, %v1132
    %v1181 = vpack.c.b16 %v1137, %v1135
    %v1182 = vpack.c.b16 %v1138, %v1136
    %v1183 = vpack.c.b16 %v1141, %v1139
    %v1184 = vpack.c.b16 %v1142, %v1140
    %v1185 = vpack.c.b16 %v1145, %v1143
    %v1186 = vpack.c.b16 %v1146, %v1144
    %v1187 = vpack.c.b16 %v1149, %v1147
    %v1188 = vpack.c.b16 %v1150, %v1148
    %v1189 = vpack.c.b16 %v1153, %v1151
    %v1190 = vpack.c.b16 %v1154, %v1152
    %v1191 = vpack.c.b16 %v1157, %v1155
    %v1192 = vpack.c.b16 %v1158, %v1156
    %v1193 = vpack.c.b16 %v1161, %v1159
    %v1194 = vpack.c.b16 %v1162, %v1160
    %1227 = vmatprep.subr.bf16.mxu0 %v1164
    %1228 = vmatpush1.bf16.msra.mxu0 %v1163
    %1229 = vmatprep.subr.bf16.mxu0 %v1166
    %1230 = vmatpush1.bf16.msra.mxu0 %v1165
    %1231 = vmatprep.subr.bf16.mxu0 %v1168
    %1232 = vmatpush1.bf16.msra.mxu0 %v1167
    %1233 = vmatprep.subr.bf16.mxu0 %v1170
    %1234 = vmatpush1.bf16.msra.mxu0 %v1169
    %1235 = vmatprep.subr.bf16.mxu0 %v1172
    %1236 = vmatpush1.bf16.msra.mxu0 %v1171
    %1237 = vmatprep.subr.bf16.mxu0 %v1174
    %1238 = vmatpush1.bf16.msra.mxu0 %v1173
    %1239 = vmatprep.subr.bf16.mxu0 %v1176
    %1240 = vmatpush1.bf16.msra.mxu0 %v1175
    %1241 = vmatprep.subr.bf16.mxu0 %v1178
    %1242 = vmatpush1.bf16.msra.mxu0 %v1177
    %1243 = vmatprep.subr.bf16.mxu0 %v1180
    %1244 = vmatpush1.bf16.msra.mxu0 %v1179
    %1245 = vmatprep.subr.bf16.mxu0 %v1182
    %1246 = vmatpush1.bf16.msra.mxu0 %v1181
    %1247 = vmatprep.subr.bf16.mxu0 %v1184
    %1248 = vmatpush1.bf16.msra.mxu0 %v1183
    %1249 = vmatprep.subr.bf16.mxu0 %v1186
    %1250 = vmatpush1.bf16.msra.mxu0 %v1185
    %1251 = vmatprep.subr.bf16.mxu0 %v1188
    %1252 = vmatpush1.bf16.msra.mxu0 %v1187
    %1253 = vmatprep.subr.bf16.mxu0 %v1190
    %1254 = vmatpush1.bf16.msra.mxu0 %v1189
    %1255 = vmatprep.subr.bf16.mxu0 %v1192
    %1256 = vmatpush1.bf16.msra.mxu0 %v1191
    %1257 = vmatprep.subr.bf16.mxu0 %v1194
    %1258 = vmatpush1.bf16.msra.mxu0 %v1193
    %1259 = vmatprep.mubr.bf16.mxu0 %v992
    %1260 = vmatmul.mubr.bf16.gmra.mrb[0].mxu0 %v991
    %v1261 = vpop.f32.mrb[0].mxu0
    %v1262 = vadd.f32 %v1060, %v1261
    %v1263 = vpop.f32.mrb[0].mxu0
    %v1264 = vadd.f32 %v1064, %v1263
    %v1265 = vpop.f32.mrb[0].mxu0
    %v1266 = vadd.f32 %v1060, %v1265
    %v1267 = vpop.f32.mrb[0].mxu0
    %v1268 = vadd.f32 %v1064, %v1267
    %1269 = vmatprep.mubr.bf16.mxu0 %v994
    %1270 = vmatmul.mubr.bf16.gmra.mrb[0].mxu0 %v993
    %v1271 = vpop.f32.mrb[0].mxu0
    %v1272 = vadd.f32 %v1060, %v1271
    %v1273 = vpop.f32.mrb[0].mxu0
    %v1274 = vadd.f32 %v1064, %v1273
    %v1275 = vpop.f32.mrb[0].mxu0
    %v1276 = vadd.f32 %v1060, %v1275
    %v1277 = vpop.f32.mrb[0].mxu0
    %v1278 = vadd.f32 %v1064, %v1277
    %1279 = vmatprep.mubr.bf16.mxu0 %v996
    %1280 = vmatmul.mubr.bf16.gmra.mrb[0].mxu0 %v995
    %v1281 = vpop.f32.mrb[0].mxu0
    %v1282 = vadd.f32 %v1060, %v1281
    %v1283 = vpop.f32.mrb[0].mxu0
    %v1284 = vadd.f32 %v1064, %v1283
    %v1285 = vpop.f32.mrb[0].mxu0
    %v1286 = vadd.f32 %v1060, %v1285
    %v1287 = vpop.f32.mrb[0].mxu0
    %v1288 = vadd.f32 %v1064, %v1287
    %1289 = vmatprep.mubr.bf16.mxu0 %v998
    %1290 = vmatmul.mubr.bf16.gmra.mrb[0].mxu0 %v997
    %v1291 = vpop.f32.mrb[0].mxu0
    %v1292 = vadd.f32 %v1060, %v1291
    %v1293 = vpop.f32.mrb[0].mxu0
    %v1294 = vadd.f32 %v1064, %v1293
    %v1295 = vpop.f32.mrb[0].mxu0
    %v1296 = vadd.f32 %v1060, %v1295
    %v1297 = vpop.f32.mrb[0].mxu0
    %v1298 = vadd.f32 %v1064, %v1297
    %1299 = vmatprep.mubr.bf16.mxu0 %v1000
    %1300 = vmatmul.mubr.bf16.gmra.mrb[0].mxu0 %v999
    %v1301 = vpop.f32.mrb[0].mxu0
    %v1302 = vadd.f32 %v1060, %v1301
    %v1303 = vpop.f32.mrb[0].mxu0
    %v1304 = vadd.f32 %v1064, %v1303
    %v1305 = vpop.f32.mrb[0].mxu0
    %v1306 = vadd.f32 %v1060, %v1305
    %v1307 = vpop.f32.mrb[0].mxu0
    %v1308 = vadd.f32 %v1064, %v1307
    %1309 = vmatprep.mubr.bf16.mxu0 %v1002
    %1310 = vmatmul.mubr.bf16.gmra.mrb[0].mxu0 %v1001
    %v1311 = vpop.f32.mrb[0].mxu0
    %v1312 = vadd.f32 %v1060, %v1311
    %v1313 = vpop.f32.mrb[0].mxu0
    %v1314 = vadd.f32 %v1064, %v1313
    %v1315 = vpop.f32.mrb[0].mxu0
    %v1316 = vadd.f32 %v1060, %v1315
    %v1317 = vpop.f32.mrb[0].mxu0
    %v1318 = vadd.f32 %v1064, %v1317
    %1319 = vmatprep.mubr.bf16.mxu0 %v1004
    %1320 = vmatmul.mubr.bf16.gmra.mrb[0].mxu0 %v1003
    %v1321 = vpop.f32.mrb[0].mxu0
    %v1322 = vadd.f32 %v1060, %v1321
    %v1323 = vpop.f32.mrb[0].mxu0
    %v1324 = vadd.f32 %v1064, %v1323
    %v1325 = vpop.f32.mrb[0].mxu0
    %v1326 = vadd.f32 %v1060, %v1325
    %v1327 = vpop.f32.mrb[0].mxu0
    %v1328 = vadd.f32 %v1064, %v1327
    %1329 = vmatprep.mubr.bf16.mxu0 %v1006
    %1330 = vmatmul.mubr.bf16.gmra.mrb[0].mxu0 %v1005
    %v1331 = vpop.f32.mrb[0].mxu0
    %v1332 = vadd.f32 %v1060, %v1331
    %v1333 = vpop.f32.mrb[0].mxu0
    %v1334 = vadd.f32 %v1064, %v1333
    %v1335 = vpop.f32.mrb[0].mxu0
    %v1336 = vadd.f32 %v1060, %v1335
    %v1337 = vpop.f32.mrb[0].mxu0
    %v1338 = vadd.f32 %v1064, %v1337
    %1339 = vmatprep.mubr.bf16.mxu0 %v1008
    %1340 = vmatmul.mubr.bf16.gmra.mrb[0].mxu0 %v1007
    %v1341 = vpop.f32.mrb[0].mxu0
    %v1342 = vadd.f32 %v1060, %v1341
    %v1343 = vpop.f32.mrb[0].mxu0
    %v1344 = vadd.f32 %v1064, %v1343
    %v1345 = vpop.f32.mrb[0].mxu0
    %v1346 = vadd.f32 %v1060, %v1345
    %v1347 = vpop.f32.mrb[0].mxu0
    %v1348 = vadd.f32 %v1064, %v1347
    %1349 = vmatprep.mubr.bf16.mxu0 %v1010
    %1350 = vmatmul.mubr.bf16.gmra.mrb[0].mxu0 %v1009
    %v1351 = vpop.f32.mrb[0].mxu0
    %v1352 = vadd.f32 %v1060, %v1351
    %v1353 = vpop.f32.mrb[0].mxu0
    %v1354 = vadd.f32 %v1064, %v1353
    %v1355 = vpop.f32.mrb[0].mxu0
    %v1356 = vadd.f32 %v1060, %v1355
    %v1357 = vpop.f32.mrb[0].mxu0
    %v1358 = vadd.f32 %v1064, %v1357
    %1359 = vmatprep.mubr.bf16.mxu0 %v1012
    %1360 = vmatmul.mubr.bf16.gmra.mrb[0].mxu0 %v1011
    %v1361 = vpop.f32.mrb[0].mxu0
    %v1362 = vadd.f32 %v1060, %v1361
    %v1363 = vpop.f32.mrb[0].mxu0
    %v1364 = vadd.f32 %v1064, %v1363
    %v1365 = vpop.f32.mrb[0].mxu0
    %v1366 = vadd.f32 %v1060, %v1365
    %v1367 = vpop.f32.mrb[0].mxu0
    %v1368 = vadd.f32 %v1064, %v1367
    %1369 = vmatprep.mubr.bf16.mxu0 %v1014
    %1370 = vmatmul.mubr.bf16.gmra.mrb[0].mxu0 %v1013
    %v1371 = vpop.f32.mrb[0].mxu0
    %v1372 = vadd.f32 %v1060, %v1371
    %v1373 = vpop.f32.mrb[0].mxu0
    %v1374 = vadd.f32 %v1064, %v1373
    %v1375 = vpop.f32.mrb[0].mxu0
    %v1376 = vadd.f32 %v1060, %v1375
    %v1377 = vpop.f32.mrb[0].mxu0
    %v1378 = vadd.f32 %v1064, %v1377
    %1379 = vmatprep.mubr.bf16.mxu0 %v1016
    %1380 = vmatmul.mubr.bf16.gmra.mrb[0].mxu0 %v1015
    %v1381 = vpop.f32.mrb[0].mxu0
    %v1382 = vadd.f32 %v1060, %v1381
    %v1383 = vpop.f32.mrb[0].mxu0
    %v1384 = vadd.f32 %v1064, %v1383
    %v1385 = vpop.f32.mrb[0].mxu0
    %v1386 = vadd.f32 %v1060, %v1385
    %v1387 = vpop.f32.mrb[0].mxu0
    %v1388 = vadd.f32 %v1064, %v1387
    %1389 = vmatprep.mubr.bf16.mxu0 %v1018
    %1390 = vmatmul.mubr.bf16.gmra.mrb[0].mxu0 %v1017
    %v1391 = vpop.f32.mrb[0].mxu0
    %v1392 = vadd.f32 %v1060, %v1391
    %v1393 = vpop.f32.mrb[0].mxu0
    %v1394 = vadd.f32 %v1064, %v1393
    %v1395 = vpop.f32.mrb[0].mxu0
    %v1396 = vadd.f32 %v1060, %v1395
    %v1397 = vpop.f32.mrb[0].mxu0
    %v1398 = vadd.f32 %v1064, %v1397
    %1399 = vmatprep.mubr.bf16.mxu0 %v1020
    %1400 = vmatmul.mubr.bf16.gmra.mrb[0].mxu0 %v1019
    %v1401 = vpop.f32.mrb[0].mxu0
    %v1402 = vadd.f32 %v1060, %v1401
    %v1403 = vpop.f32.mrb[0].mxu0
    %v1404 = vadd.f32 %v1064, %v1403
    %v1405 = vpop.f32.mrb[0].mxu0
    %v1406 = vadd.f32 %v1060, %v1405
    %v1407 = vpop.f32.mrb[0].mxu0
    %v1408 = vadd.f32 %v1064, %v1407
    %1409 = vmatprep.mubr.bf16.mxu0 %v1022
    %1410 = vmatmul.mubr.bf16.gmra.mrb[0].mxu0 %v1021
    %v1411 = vpop.f32.mrb[0].mxu0
    %v1412 = vadd.f32 %v1060, %v1411
    %v1413 = vpop.f32.mrb[0].mxu0
    %v1414 = vadd.f32 %v1064, %v1413
    %v1415 = vpop.f32.mrb[0].mxu0
    %v1416 = vadd.f32 %v1060, %v1415
    %v1417 = vpop.f32.mrb[0].mxu0
    %v1418 = vadd.f32 %v1064, %v1417
    %1419 = vdwg.mxu0
    %v1420 = vmax.f32 %v1262, 0.0
    %v1421 = vmax.f32 %v1264, 0.0
    %v1422 = vmax.f32 %v1266, 0.0
    %v1423 = vmax.f32 %v1268, 0.0
    %v1424 = vmax.f32 %v1272, 0.0
    %v1425 = vmax.f32 %v1274, 0.0
    %v1426 = vmax.f32 %v1276, 0.0
    %v1427 = vmax.f32 %v1278, 0.0
    %v1428 = vmax.f32 %v1282, 0.0
    %v1429 = vmax.f32 %v1284, 0.0
    %v1430 = vmax.f32 %v1286, 0.0
    %v1431 = vmax.f32 %v1288, 0.0
    %v1432 = vmax.f32 %v1292, 0.0
    %v1433 = vmax.f32 %v1294, 0.0
    %v1434 = vmax.f32 %v1296, 0.0
    %v1435 = vmax.f32 %v1298, 0.0
    %v1436 = vmax.f32 %v1302, 0.0
    %v1437 = vmax.f32 %v1304, 0.0
    %v1438 = vmax.f32 %v1306, 0.0
    %v1439 = vmax.f32 %v1308, 0.0
    %v1440 = vmax.f32 %v1312, 0.0
    %v1441 = vmax.f32 %v1314, 0.0
    %v1442 = vmax.f32 %v1316, 0.0
    %v1443 = vmax.f32 %v1318, 0.0
    %v1444 = vmax.f32 %v1322, 0.0
    %v1445 = vmax.f32 %v1324, 0.0
    %v1446 = vmax.f32 %v1326, 0.0
    %v1447 = vmax.f32 %v1328, 0.0
    %v1448 = vmax.f32 %v1332, 0.0
    %v1449 = vmax.f32 %v1334, 0.0
    %v1450 = vmax.f32 %v1336, 0.0
    %v1451 = vmax.f32 %v1338, 0.0
    %v1452 = vmax.f32 %v1342, 0.0
    %v1453 = vmax.f32 %v1344, 0.0
    %v1454 = vmax.f32 %v1346, 0.0
    %v1455 = vmax.f32 %v1348, 0.0
    %v1456 = vmax.f32 %v1352, 0.0
    %v1457 = vmax.f32 %v1354, 0.0
    %v1458 = vmax.f32 %v1356, 0.0
    %v1459 = vmax.f32 %v1358, 0.0
    %v1460 = vmax.f32 %v1362, 0.0
    %v1461 = vmax.f32 %v1364, 0.0
    %v1462 = vmax.f32 %v1366, 0.0
    %v1463 = vmax.f32 %v1368, 0.0
    %v1464 = vmax.f32 %v1372, 0.0
    %v1465 = vmax.f32 %v1374, 0.0
    %v1466 = vmax.f32 %v1376, 0.0
    %v1467 = vmax.f32 %v1378, 0.0
    %v1468 = vmax.f32 %v1382, 0.0
    %v1469 = vmax.f32 %v1384, 0.0
    %v1470 = vmax.f32 %v1386, 0.0
    %v1471 = vmax.f32 %v1388, 0.0
    %v1472 = vmax.f32 %v1392, 0.0
    %v1473 = vmax.f32 %v1394, 0.0
    %v1474 = vmax.f32 %v1396, 0.0
    %v1475 = vmax.f32 %v1398, 0.0
    %v1476 = vmax.f32 %v1402, 0.0
    %v1477 = vmax.f32 %v1404, 0.0
    %v1478 = vmax.f32 %v1406, 0.0
    %v1479 = vmax.f32 %v1408, 0.0
    %v1480 = vmax.f32 %v1412, 0.0
    %v1481 = vmax.f32 %v1414, 0.0
    %v1482 = vmax.f32 %v1416, 0.0
    %v1483 = vmax.f32 %v1418, 0.0
    %v1484 = vpack.c.bf16 %v1422, %v1420
    %v1485 = vpack.c.bf16 %v1423, %v1421
    %v1486 = vpack.c.bf16 %v1426, %v1424
    %v1487 = vpack.c.bf16 %v1427, %v1425
    %v1488 = vpack.c.bf16 %v1430, %v1428
    %v1489 = vpack.c.bf16 %v1431, %v1429
    %v1490 = vpack.c.bf16 %v1434, %v1432
    %v1491 = vpack.c.bf16 %v1435, %v1433
    %v1492 = vpack.c.bf16 %v1438, %v1436
    %v1493 = vpack.c.bf16 %v1439, %v1437
    %v1494 = vpack.c.bf16 %v1442, %v1440
    %v1495 = vpack.c.bf16 %v1443, %v1441
    %v1496 = vpack.c.bf16 %v1446, %v1444
    %v1497 = vpack.c.bf16 %v1447, %v1445
    %v1498 = vpack.c.bf16 %v1450, %v1448
    %v1499 = vpack.c.bf16 %v1451, %v1449
    %v1500 = vpack.c.bf16 %v1454, %v1452
    %v1501 = vpack.c.bf16 %v1455, %v1453
    %v1502 = vpack.c.bf16 %v1458, %v1456
    %v1503 = vpack.c.bf16 %v1459, %v1457
    %v1504 = vpack.c.bf16 %v1462, %v1460
    %v1505 = vpack.c.bf16 %v1463, %v1461
    %v1506 = vpack.c.bf16 %v1466, %v1464
    %v1507 = vpack.c.bf16 %v1467, %v1465
    %v1508 = vpack.c.bf16 %v1470, %v1468
    %v1509 = vpack.c.bf16 %v1471, %v1469
    %v1510 = vpack.c.bf16 %v1474, %v1472
    %v1511 = vpack.c.bf16 %v1475, %v1473
    %v1512 = vpack.c.bf16 %v1478, %v1476
    %v1513 = vpack.c.bf16 %v1479, %v1477
    %v1514 = vpack.c.bf16 %v1482, %v1480
    %v1515 = vpack.c.bf16 %v1483, %v1481
    %s1516 = scalar_lea.vmem [#allocation2], 256
    %v1517 = vld [vmem:[%s1516] sm:$0xff]
    %v1518 = vld [vmem:[%s1516 + $0x8] sm:$0xff]
    %v1519 = vld [vmem:[%s1516 + $0x10] sm:$0xff]
    %v1520 = vld [vmem:[%s1516 + $0x18] sm:$0xff]
    %v1521 = vld [vmem:[%s1516 + $0x20] sm:$0xff]
    %v1522 = vld [vmem:[%s1516 + $0x28] sm:$0xff]
    %v1523 = vld [vmem:[%s1516 + $0x30] sm:$0xff]
    %v1524 = vld [vmem:[%s1516 + $0x38] sm:$0xff]
    %v1525 = vld [vmem:[%s1516 + $0x40] sm:$0xff]
    %v1526 = vld [vmem:[%s1516 + $0x48] sm:$0xff]
    %v1527 = vld [vmem:[%s1516 + $0x50] sm:$0xff]
    %v1528 = vld [vmem:[%s1516 + $0x58] sm:$0xff]
    %v1529 = vld [vmem:[%s1516 + $0x60] sm:$0xff]
    %v1530 = vld [vmem:[%s1516 + $0x68] sm:$0xff]
    %v1531 = vld [vmem:[%s1516 + $0x70] sm:$0xff]
    %v1532 = vld [vmem:[%s1516 + $0x78] sm:$0xff]
    %v1533 = vld [vmem:[%s1516 + $0x80] sm:$0xff]
    %v1534 = vld [vmem:[%s1516 + $0x88] sm:$0xff]
    %v1535 = vld [vmem:[%s1516 + $0x90] sm:$0xff]
    %v1536 = vld [vmem:[%s1516 + $0x98] sm:$0xff]
    %v1537 = vld [vmem:[%s1516 + $0xa0] sm:$0xff]
    %v1538 = vld [vmem:[%s1516 + $0xa8] sm:$0xff]
    %v1539 = vld [vmem:[%s1516 + $0xb0] sm:$0xff]
    %v1540 = vld [vmem:[%s1516 + $0xb8] sm:$0xff]
    %v1541 = vld [vmem:[%s1516 + $0xc0] sm:$0xff]
    %v1542 = vld [vmem:[%s1516 + $0xc8] sm:$0xff]
    %v1543 = vld [vmem:[%s1516 + $0xd0] sm:$0xff]
    %v1544 = vld [vmem:[%s1516 + $0xd8] sm:$0xff]
    %v1545 = vld [vmem:[%s1516 + $0xe0] sm:$0xff]
    %v1546 = vld [vmem:[%s1516 + $0xe8] sm:$0xff]
    %v1547 = vld [vmem:[%s1516 + $0xf0] sm:$0xff]
    %v1548 = vld [vmem:[%s1516 + $0xf8] sm:$0xff]
    %s1549 = scalar_lea.vmem %s4, 2
    %v1550 = vld [vmem:[%s1549] sm:$0x3]
    %v1552 = vlaneseq
    %v1553 = vshrl.u32 %v1552, 7
    %v1554 = vsub.s32 0, %v1553
    %v1555 = vrot.slane %v1550, %v1554
    %v1556 = vlaneseq
    %v1557 = vshrl.u32 %v1556, 7
    %v1558 = vsub.s32 1, %v1557
    %v1559 = vrot.slane %v1550, %v1558
    %v1594 = vunpack.c.l.b16 %v1517
    %v1595 = vunpack.c.h.b16 %v1517
    %v1596 = vunpack.c.l.b16 %v1518
    %v1597 = vunpack.c.h.b16 %v1518
    %v1598 = vunpack.c.l.b16 %v1519
    %v1599 = vunpack.c.h.b16 %v1519
    %v1600 = vunpack.c.l.b16 %v1520
    %v1601 = vunpack.c.h.b16 %v1520
    %v1602 = vunpack.c.l.b16 %v1521
    %v1603 = vunpack.c.h.b16 %v1521
    %v1604 = vunpack.c.l.b16 %v1522
    %v1605 = vunpack.c.h.b16 %v1522
    %v1606 = vunpack.c.l.b16 %v1523
    %v1607 = vunpack.c.h.b16 %v1523
    %v1608 = vunpack.c.l.b16 %v1524
    %v1609 = vunpack.c.h.b16 %v1524
    %v1610 = vunpack.c.l.b16 %v1525
    %v1611 = vunpack.c.h.b16 %v1525
    %v1612 = vunpack.c.l.b16 %v1526
    %v1613 = vunpack.c.h.b16 %v1526
    %v1614 = vunpack.c.l.b16 %v1527
    %v1615 = vunpack.c.h.b16 %v1527
    %v1616 = vunpack.c.l.b16 %v1528
    %v1617 = vunpack.c.h.b16 %v1528
    %v1618 = vunpack.c.l.b16 %v1529
    %v1619 = vunpack.c.h.b16 %v1529
    %v1620 = vunpack.c.l.b16 %v1530
    %v1621 = vunpack.c.h.b16 %v1530
    %v1622 = vunpack.c.l.b16 %v1531
    %v1623 = vunpack.c.h.b16 %v1531
    %v1624 = vunpack.c.l.b16 %v1532
    %v1625 = vunpack.c.h.b16 %v1532
    %v1626 = vunpack.c.l.b16 %v1533
    %v1627 = vunpack.c.h.b16 %v1533
    %v1628 = vunpack.c.l.b16 %v1534
    %v1629 = vunpack.c.h.b16 %v1534
    %v1630 = vunpack.c.l.b16 %v1535
    %v1631 = vunpack.c.h.b16 %v1535
    %v1632 = vunpack.c.l.b16 %v1536
    %v1633 = vunpack.c.h.b16 %v1536
    %v1634 = vunpack.c.l.b16 %v1537
    %v1635 = vunpack.c.h.b16 %v1537
    %v1636 = vunpack.c.l.b16 %v1538
    %v1637 = vunpack.c.h.b16 %v1538
    %v1638 = vunpack.c.l.b16 %v1539
    %v1639 = vunpack.c.h.b16 %v1539
    %v1640 = vunpack.c.l.b16 %v1540
    %v1641 = vunpack.c.h.b16 %v1540
    %v1642 = vunpack.c.l.b16 %v1541
    %v1643 = vunpack.c.h.b16 %v1541
    %v1644 = vunpack.c.l.b16 %v1542
    %v1645 = vunpack.c.h.b16 %v1542
    %v1646 = vunpack.c.l.b16 %v1543
    %v1647 = vunpack.c.h.b16 %v1543
    %v1648 = vunpack.c.l.b16 %v1544
    %v1649 = vunpack.c.h.b16 %v1544
    %v1650 = vunpack.c.l.b16 %v1545
    %v1651 = vunpack.c.h.b16 %v1545
    %v1652 = vunpack.c.l.b16 %v1546
    %v1653 = vunpack.c.h.b16 %v1546
    %v1654 = vunpack.c.l.b16 %v1547
    %v1655 = vunpack.c.h.b16 %v1547
    %v1656 = vunpack.c.l.b16 %v1548
    %v1657 = vunpack.c.h.b16 %v1548
    %v1658 = vpack.c.b16 %v1596, %v1594
    %v1659 = vpack.c.b16 %v1597, %v1595
    %v1660 = vpack.c.b16 %v1600, %v1598
    %v1661 = vpack.c.b16 %v1601, %v1599
    %v1662 = vpack.c.b16 %v1604, %v1602
    %v1663 = vpack.c.b16 %v1605, %v1603
    %v1664 = vpack.c.b16 %v1608, %v1606
    %v1665 = vpack.c.b16 %v1609, %v1607
    %v1666 = vpack.c.b16 %v1612, %v1610
    %v1667 = vpack.c.b16 %v1613, %v1611
    %v1668 = vpack.c.b16 %v1616, %v1614
    %v1669 = vpack.c.b16 %v1617, %v1615
    %v1670 = vpack.c.b16 %v1620, %v1618
    %v1671 = vpack.c.b16 %v1621, %v1619
    %v1672 = vpack.c.b16 %v1624, %v1622
    %v1673 = vpack.c.b16 %v1625, %v1623
    %v1674 = vpack.c.b16 %v1628, %v1626
    %v1675 = vpack.c.b16 %v1629, %v1627
    %v1676 = vpack.c.b16 %v1632, %v1630
    %v1677 = vpack.c.b16 %v1633, %v1631
    %v1678 = vpack.c.b16 %v1636, %v1634
    %v1679 = vpack.c.b16 %v1637, %v1635
    %v1680 = vpack.c.b16 %v1640, %v1638
    %v1681 = vpack.c.b16 %v1641, %v1639
    %v1682 = vpack.c.b16 %v1644, %v1642
    %v1683 = vpack.c.b16 %v1645, %v1643
    %v1684 = vpack.c.b16 %v1648, %v1646
    %v1685 = vpack.c.b16 %v1649, %v1647
    %v1686 = vpack.c.b16 %v1652, %v1650
    %v1687 = vpack.c.b16 %v1653, %v1651
    %v1688 = vpack.c.b16 %v1656, %v1654
    %v1689 = vpack.c.b16 %v1657, %v1655
    %1722 = vmatprep.subr.bf16.mxu0 %v1659
    %1723 = vmatpush1.bf16.msra.mxu0 %v1658
    %1724 = vmatprep.subr.bf16.mxu0 %v1661
    %1725 = vmatpush1.bf16.msra.mxu0 %v1660
    %1726 = vmatprep.subr.bf16.mxu0 %v1663
    %1727 = vmatpush1.bf16.msra.mxu0 %v1662
    %1728 = vmatprep.subr.bf16.mxu0 %v1665
    %1729 = vmatpush1.bf16.msra.mxu0 %v1664
    %1730 = vmatprep.subr.bf16.mxu0 %v1667
    %1731 = vmatpush1.bf16.msra.mxu0 %v1666
    %1732 = vmatprep.subr.bf16.mxu0 %v1669
    %1733 = vmatpush1.bf16.msra.mxu0 %v1668
    %1734 = vmatprep.subr.bf16.mxu0 %v1671
    %1735 = vmatpush1.bf16.msra.mxu0 %v1670
    %1736 = vmatprep.subr.bf16.mxu0 %v1673
    %1737 = vmatpush1.bf16.msra.mxu0 %v1672
    %1738 = vmatprep.subr.bf16.mxu0 %v1675
    %1739 = vmatpush1.bf16.msra.mxu0 %v1674
    %1740 = vmatprep.subr.bf16.mxu0 %v1677
    %1741 = vmatpush1.bf16.msra.mxu0 %v1676
    %1742 = vmatprep.subr.bf16.mxu0 %v1679
    %1743 = vmatpush1.bf16.msra.mxu0 %v1678
    %1744 = vmatprep.subr.bf16.mxu0 %v1681
    %1745 = vmatpush1.bf16.msra.mxu0 %v1680
    %1746 = vmatprep.subr.bf16.mxu0 %v1683
    %1747 = vmatpush1.bf16.msra.mxu0 %v1682
    %1748 = vmatprep.subr.bf16.mxu0 %v1685
    %1749 = vmatpush1.bf16.msra.mxu0 %v1684
    %1750 = vmatprep.subr.bf16.mxu0 %v1687
    %1751 = vmatpush1.bf16.msra.mxu0 %v1686
    %1752 = vmatprep.subr.bf16.mxu0 %v1689
    %1753 = vmatpush1.bf16.msra.mxu0 %v1688
    %1754 = vmatprep.mubr.bf16.mxu0 %v1485
    %1755 = vmatmul.mubr.bf16.gmra.mrb[0].mxu0 %v1484
    %v1756 = vpop.f32.mrb[0].mxu0
    %v1757 = vadd.f32 %v1555, %v1756
    %v1758 = vpop.f32.mrb[0].mxu0
    %v1759 = vadd.f32 %v1559, %v1758
    %v1760 = vpop.f32.mrb[0].mxu0
    %v1761 = vadd.f32 %v1555, %v1760
    %v1762 = vpop.f32.mrb[0].mxu0
    %v1763 = vadd.f32 %v1559, %v1762
    %1764 = vmatprep.mubr.bf16.mxu0 %v1487
    %1765 = vmatmul.mubr.bf16.gmra.mrb[0].mxu0 %v1486
    %v1766 = vpop.f32.mrb[0].mxu0
    %v1767 = vadd.f32 %v1555, %v1766
    %v1768 = vpop.f32.mrb[0].mxu0
    %v1769 = vadd.f32 %v1559, %v1768
    %v1770 = vpop.f32.mrb[0].mxu0
    %v1771 = vadd.f32 %v1555, %v1770
    %v1772 = vpop.f32.mrb[0].mxu0
    %v1773 = vadd.f32 %v1559, %v1772
    %1774 = vmatprep.mubr.bf16.mxu0 %v1489
    %1775 = vmatmul.mubr.bf16.gmra.mrb[0].mxu0 %v1488
    %v1776 = vpop.f32.mrb[0].mxu0
    %v1777 = vadd.f32 %v1555, %v1776
    %v1778 = vpop.f32.mrb[0].mxu0
    %v1779 = vadd.f32 %v1559, %v1778
    %v1780 = vpop.f32.mrb[0].mxu0
    %v1781 = vadd.f32 %v1555, %v1780
    %v1782 = vpop.f32.mrb[0].mxu0
    %v1783 = vadd.f32 %v1559, %v1782
    %1784 = vmatprep.mubr.bf16.mxu0 %v1491
    %1785 = vmatmul.mubr.bf16.gmra.mrb[0].mxu0 %v1490
    %v1786 = vpop.f32.mrb[0].mxu0
    %v1787 = vadd.f32 %v1555, %v1786
    %v1788 = vpop.f32.mrb[0].mxu0
    %v1789 = vadd.f32 %v1559, %v1788
    %v1790 = vpop.f32.mrb[0].mxu0
    %v1791 = vadd.f32 %v1555, %v1790
    %v1792 = vpop.f32.mrb[0].mxu0
    %v1793 = vadd.f32 %v1559, %v1792
    %1794 = vmatprep.mubr.bf16.mxu0 %v1493
    %1795 = vmatmul.mubr.bf16.gmra.mrb[0].mxu0 %v1492
    %v1796 = vpop.f32.mrb[0].mxu0
    %v1797 = vadd.f32 %v1555, %v1796
    %v1798 = vpop.f32.mrb[0].mxu0
    %v1799 = vadd.f32 %v1559, %v1798
    %v1800 = vpop.f32.mrb[0].mxu0
    %v1801 = vadd.f32 %v1555, %v1800
    %v1802 = vpop.f32.mrb[0].mxu0
    %v1803 = vadd.f32 %v1559, %v1802
    %1804 = vmatprep.mubr.bf16.mxu0 %v1495
    %1805 = vmatmul.mubr.bf16.gmra.mrb[0].mxu0 %v1494
    %v1806 = vpop.f32.mrb[0].mxu0
    %v1807 = vadd.f32 %v1555, %v1806
    %v1808 = vpop.f32.mrb[0].mxu0
    %v1809 = vadd.f32 %v1559, %v1808
    %v1810 = vpop.f32.mrb[0].mxu0
    %v1811 = vadd.f32 %v1555, %v1810
    %v1812 = vpop.f32.mrb[0].mxu0
    %v1813 = vadd.f32 %v1559, %v1812
    %1814 = vmatprep.mubr.bf16.mxu0 %v1497
    %1815 = vmatmul.mubr.bf16.gmra.mrb[0].mxu0 %v1496
    %v1816 = vpop.f32.mrb[0].mxu0
    %v1817 = vadd.f32 %v1555, %v1816
    %v1818 = vpop.f32.mrb[0].mxu0
    %v1819 = vadd.f32 %v1559, %v1818
    %v1820 = vpop.f32.mrb[0].mxu0
    %v1821 = vadd.f32 %v1555, %v1820
    %v1822 = vpop.f32.mrb[0].mxu0
    %v1823 = vadd.f32 %v1559, %v1822
    %1824 = vmatprep.mubr.bf16.mxu0 %v1499
    %1825 = vmatmul.mubr.bf16.gmra.mrb[0].mxu0 %v1498
    %v1826 = vpop.f32.mrb[0].mxu0
    %v1827 = vadd.f32 %v1555, %v1826
    %v1828 = vpop.f32.mrb[0].mxu0
    %v1829 = vadd.f32 %v1559, %v1828
    %v1830 = vpop.f32.mrb[0].mxu0
    %v1831 = vadd.f32 %v1555, %v1830
    %v1832 = vpop.f32.mrb[0].mxu0
    %v1833 = vadd.f32 %v1559, %v1832
    %1834 = vmatprep.mubr.bf16.mxu0 %v1501
    %1835 = vmatmul.mubr.bf16.gmra.mrb[0].mxu0 %v1500
    %v1836 = vpop.f32.mrb[0].mxu0
    %v1837 = vadd.f32 %v1555, %v1836
    %v1838 = vpop.f32.mrb[0].mxu0
    %v1839 = vadd.f32 %v1559, %v1838
    %v1840 = vpop.f32.mrb[0].mxu0
    %v1841 = vadd.f32 %v1555, %v1840
    %v1842 = vpop.f32.mrb[0].mxu0
    %v1843 = vadd.f32 %v1559, %v1842
    %1844 = vmatprep.mubr.bf16.mxu0 %v1503
    %1845 = vmatmul.mubr.bf16.gmra.mrb[0].mxu0 %v1502
    %v1846 = vpop.f32.mrb[0].mxu0
    %v1847 = vadd.f32 %v1555, %v1846
    %v1848 = vpop.f32.mrb[0].mxu0
    %v1849 = vadd.f32 %v1559, %v1848
    %v1850 = vpop.f32.mrb[0].mxu0
    %v1851 = vadd.f32 %v1555, %v1850
    %v1852 = vpop.f32.mrb[0].mxu0
    %v1853 = vadd.f32 %v1559, %v1852
    %1854 = vmatprep.mubr.bf16.mxu0 %v1505
    %1855 = vmatmul.mubr.bf16.gmra.mrb[0].mxu0 %v1504
    %v1856 = vpop.f32.mrb[0].mxu0
    %v1857 = vadd.f32 %v1555, %v1856
    %v1858 = vpop.f32.mrb[0].mxu0
    %v1859 = vadd.f32 %v1559, %v1858
    %v1860 = vpop.f32.mrb[0].mxu0
    %v1861 = vadd.f32 %v1555, %v1860
    %v1862 = vpop.f32.mrb[0].mxu0
    %v1863 = vadd.f32 %v1559, %v1862
    %1864 = vmatprep.mubr.bf16.mxu0 %v1507
    %1865 = vmatmul.mubr.bf16.gmra.mrb[0].mxu0 %v1506
    %v1866 = vpop.f32.mrb[0].mxu0
    %v1867 = vadd.f32 %v1555, %v1866
    %v1868 = vpop.f32.mrb[0].mxu0
    %v1869 = vadd.f32 %v1559, %v1868
    %v1870 = vpop.f32.mrb[0].mxu0
    %v1871 = vadd.f32 %v1555, %v1870
    %v1872 = vpop.f32.mrb[0].mxu0
    %v1873 = vadd.f32 %v1559, %v1872
    %1874 = vmatprep.mubr.bf16.mxu0 %v1509
    %1875 = vmatmul.mubr.bf16.gmra.mrb[0].mxu0 %v1508
    %v1876 = vpop.f32.mrb[0].mxu0
    %v1877 = vadd.f32 %v1555, %v1876
    %v1878 = vpop.f32.mrb[0].mxu0
    %v1879 = vadd.f32 %v1559, %v1878
    %v1880 = vpop.f32.mrb[0].mxu0
    %v1881 = vadd.f32 %v1555, %v1880
    %v1882 = vpop.f32.mrb[0].mxu0
    %v1883 = vadd.f32 %v1559, %v1882
    %1884 = vmatprep.mubr.bf16.mxu0 %v1511
    %1885 = vmatmul.mubr.bf16.gmra.mrb[0].mxu0 %v1510
    %v1886 = vpop.f32.mrb[0].mxu0
    %v1887 = vadd.f32 %v1555, %v1886
    %v1888 = vpop.f32.mrb[0].mxu0
    %v1889 = vadd.f32 %v1559, %v1888
    %v1890 = vpop.f32.mrb[0].mxu0
    %v1891 = vadd.f32 %v1555, %v1890
    %v1892 = vpop.f32.mrb[0].mxu0
    %v1893 = vadd.f32 %v1559, %v1892
    %1894 = vmatprep.mubr.bf16.mxu0 %v1513
    %1895 = vmatmul.mubr.bf16.gmra.mrb[0].mxu0 %v1512
    %v1896 = vpop.f32.mrb[0].mxu0
    %v1897 = vadd.f32 %v1555, %v1896
    %v1898 = vpop.f32.mrb[0].mxu0
    %v1899 = vadd.f32 %v1559, %v1898
    %v1900 = vpop.f32.mrb[0].mxu0
    %v1901 = vadd.f32 %v1555, %v1900
    %v1902 = vpop.f32.mrb[0].mxu0
    %v1903 = vadd.f32 %v1559, %v1902
    %1904 = vmatprep.mubr.bf16.mxu0 %v1515
    %1905 = vmatmul.mubr.bf16.gmra.mrb[0].mxu0 %v1514
    %v1906 = vpop.f32.mrb[0].mxu0
    %v1907 = vadd.f32 %v1555, %v1906
    %v1908 = vpop.f32.mrb[0].mxu0
    %v1909 = vadd.f32 %v1559, %v1908
    %v1910 = vpop.f32.mrb[0].mxu0
    %v1911 = vadd.f32 %v1555, %v1910
    %v1912 = vpop.f32.mrb[0].mxu0
    %v1913 = vadd.f32 %v1559, %v1912
    %1914 = vdwg.mxu0
    %v1915 = vmax.f32 %v1757, 0.0
    %v1916 = vmax.f32 %v1759, 0.0
    %v1917 = vmax.f32 %v1761, 0.0
    %v1918 = vmax.f32 %v1763, 0.0
    %v1919 = vmax.f32 %v1767, 0.0
    %v1920 = vmax.f32 %v1769, 0.0
    %v1921 = vmax.f32 %v1771, 0.0
    %v1922 = vmax.f32 %v1773, 0.0
    %v1923 = vmax.f32 %v1777, 0.0
    %v1924 = vmax.f32 %v1779, 0.0
    %v1925 = vmax.f32 %v1781, 0.0
    %v1926 = vmax.f32 %v1783, 0.0
    %v1927 = vmax.f32 %v1787, 0.0
    %v1928 = vmax.f32 %v1789, 0.0
    %v1929 = vmax.f32 %v1791, 0.0
    %v1930 = vmax.f32 %v1793, 0.0
    %v1931 = vmax.f32 %v1797, 0.0
    %v1932 = vmax.f32 %v1799, 0.0
    %v1933 = vmax.f32 %v1801, 0.0
    %v1934 = vmax.f32 %v1803, 0.0
    %v1935 = vmax.f32 %v1807, 0.0
    %v1936 = vmax.f32 %v1809, 0.0
    %v1937 = vmax.f32 %v1811, 0.0
    %v1938 = vmax.f32 %v1813, 0.0
    %v1939 = vmax.f32 %v1817, 0.0
    %v1940 = vmax.f32 %v1819, 0.0
    %v1941 = vmax.f32 %v1821, 0.0
    %v1942 = vmax.f32 %v1823, 0.0
    %v1943 = vmax.f32 %v1827, 0.0
    %v1944 = vmax.f32 %v1829, 0.0
    %v1945 = vmax.f32 %v1831, 0.0
    %v1946 = vmax.f32 %v1833, 0.0
    %v1947 = vmax.f32 %v1837, 0.0
    %v1948 = vmax.f32 %v1839, 0.0
    %v1949 = vmax.f32 %v1841, 0.0
    %v1950 = vmax.f32 %v1843, 0.0
    %v1951 = vmax.f32 %v1847, 0.0
    %v1952 = vmax.f32 %v1849, 0.0
    %v1953 = vmax.f32 %v1851, 0.0
    %v1954 = vmax.f32 %v1853, 0.0
    %v1955 = vmax.f32 %v1857, 0.0
    %v1956 = vmax.f32 %v1859, 0.0
    %v1957 = vmax.f32 %v1861, 0.0
    %v1958 = vmax.f32 %v1863, 0.0
    %v1959 = vmax.f32 %v1867, 0.0
    %v1960 = vmax.f32 %v1869, 0.0
    %v1961 = vmax.f32 %v1871, 0.0
    %v1962 = vmax.f32 %v1873, 0.0
    %v1963 = vmax.f32 %v1877, 0.0
    %v1964 = vmax.f32 %v1879, 0.0
    %v1965 = vmax.f32 %v1881, 0.0
    %v1966 = vmax.f32 %v1883, 0.0
    %v1967 = vmax.f32 %v1887, 0.0
    %v1968 = vmax.f32 %v1889, 0.0
    %v1969 = vmax.f32 %v1891, 0.0
    %v1970 = vmax.f32 %v1893, 0.0
    %v1971 = vmax.f32 %v1897, 0.0
    %v1972 = vmax.f32 %v1899, 0.0
    %v1973 = vmax.f32 %v1901, 0.0
    %v1974 = vmax.f32 %v1903, 0.0
    %v1975 = vmax.f32 %v1907, 0.0
    %v1976 = vmax.f32 %v1909, 0.0
    %v1977 = vmax.f32 %v1911, 0.0
    %v1978 = vmax.f32 %v1913, 0.0
    %v1979 = vpack.c.bf16 %v1917, %v1915
    %v1980 = vpack.c.bf16 %v1918, %v1916
    %v1981 = vpack.c.bf16 %v1921, %v1919
    %v1982 = vpack.c.bf16 %v1922, %v1920
    %v1983 = vpack.c.bf16 %v1925, %v1923
    %v1984 = vpack.c.bf16 %v1926, %v1924
    %v1985 = vpack.c.bf16 %v1929, %v1927
    %v1986 = vpack.c.bf16 %v1930, %v1928
    %v1987 = vpack.c.bf16 %v1933, %v1931
    %v1988 = vpack.c.bf16 %v1934, %v1932
    %v1989 = vpack.c.bf16 %v1937, %v1935
    %v1990 = vpack.c.bf16 %v1938, %v1936
    %v1991 = vpack.c.bf16 %v1941, %v1939
    %v1992 = vpack.c.bf16 %v1942, %v1940
    %v1993 = vpack.c.bf16 %v1945, %v1943
    %v1994 = vpack.c.bf16 %v1946, %v1944
    %v1995 = vpack.c.bf16 %v1949, %v1947
    %v1996 = vpack.c.bf16 %v1950, %v1948
    %v1997 = vpack.c.bf16 %v1953, %v1951
    %v1998 = vpack.c.bf16 %v1954, %v1952
    %v1999 = vpack.c.bf16 %v1957, %v1955
    %v2000 = vpack.c.bf16 %v1958, %v1956
    %v2001 = vpack.c.bf16 %v1961, %v1959
    %v2002 = vpack.c.bf16 %v1962, %v1960
    %v2003 = vpack.c.bf16 %v1965, %v1963
    %v2004 = vpack.c.bf16 %v1966, %v1964
    %v2005 = vpack.c.bf16 %v1969, %v1967
    %v2006 = vpack.c.bf16 %v1970, %v1968
    %v2007 = vpack.c.bf16 %v1973, %v1971
    %v2008 = vpack.c.bf16 %v1974, %v1972
    %v2009 = vpack.c.bf16 %v1977, %v1975
    %v2010 = vpack.c.bf16 %v1978, %v1976
    %s2011 = scalar_lea.vmem [#allocation2], 512
    %v2012 = vld [vmem:[%s2011] sm:$0xff]
    %v2013 = vld [vmem:[%s2011 + $0x8] sm:$0xff]
    %v2014 = vld [vmem:[%s2011 + $0x10] sm:$0xff]
    %v2015 = vld [vmem:[%s2011 + $0x18] sm:$0xff]
    %v2016 = vld [vmem:[%s2011 + $0x20] sm:$0xff]
    %v2017 = vld [vmem:[%s2011 + $0x28] sm:$0xff]
    %v2018 = vld [vmem:[%s2011 + $0x30] sm:$0xff]
    %v2019 = vld [vmem:[%s2011 + $0x38] sm:$0xff]
    %v2020 = vld [vmem:[%s2011 + $0x40] sm:$0xff]
    %v2021 = vld [vmem:[%s2011 + $0x48] sm:$0xff]
    %v2022 = vld [vmem:[%s2011 + $0x50] sm:$0xff]
    %v2023 = vld [vmem:[%s2011 + $0x58] sm:$0xff]
    %v2024 = vld [vmem:[%s2011 + $0x60] sm:$0xff]
    %v2025 = vld [vmem:[%s2011 + $0x68] sm:$0xff]
    %v2026 = vld [vmem:[%s2011 + $0x70] sm:$0xff]
    %v2027 = vld [vmem:[%s2011 + $0x78] sm:$0xff]
    %v2028 = vld [vmem:[%s2011 + $0x80] sm:$0xff]
    %v2029 = vld [vmem:[%s2011 + $0x88] sm:$0xff]
    %v2030 = vld [vmem:[%s2011 + $0x90] sm:$0xff]
    %v2031 = vld [vmem:[%s2011 + $0x98] sm:$0xff]
    %v2032 = vld [vmem:[%s2011 + $0xa0] sm:$0xff]
    %v2033 = vld [vmem:[%s2011 + $0xa8] sm:$0xff]
    %v2034 = vld [vmem:[%s2011 + $0xb0] sm:$0xff]
    %v2035 = vld [vmem:[%s2011 + $0xb8] sm:$0xff]
    %v2036 = vld [vmem:[%s2011 + $0xc0] sm:$0xff]
    %v2037 = vld [vmem:[%s2011 + $0xc8] sm:$0xff]
    %v2038 = vld [vmem:[%s2011 + $0xd0] sm:$0xff]
    %v2039 = vld [vmem:[%s2011 + $0xd8] sm:$0xff]
    %v2040 = vld [vmem:[%s2011 + $0xe0] sm:$0xff]
    %v2041 = vld [vmem:[%s2011 + $0xe8] sm:$0xff]
    %v2042 = vld [vmem:[%s2011 + $0xf0] sm:$0xff]
    %v2043 = vld [vmem:[%s2011 + $0xf8] sm:$0xff]
    %s2044 = scalar_lea.vmem %s4, 4
    %v2045 = vld [vmem:[%s2044] sm:$0x3]
    %v2047 = vlaneseq
    %v2048 = vshrl.u32 %v2047, 7
    %v2049 = vsub.s32 0, %v2048
    %v2050 = vrot.slane %v2045, %v2049
    %v2051 = vlaneseq
    %v2052 = vshrl.u32 %v2051, 7
    %v2053 = vsub.s32 1, %v2052
    %v2054 = vrot.slane %v2045, %v2053
    %v2089 = vunpack.c.l.b16 %v2012
    %v2090 = vunpack.c.h.b16 %v2012
    %v2091 = vunpack.c.l.b16 %v2013
    %v2092 = vunpack.c.h.b16 %v2013
    %v2093 = vunpack.c.l.b16 %v2014
    %v2094 = vunpack.c.h.b16 %v2014
    %v2095 = vunpack.c.l.b16 %v2015
    %v2096 = vunpack.c.h.b16 %v2015
    %v2097 = vunpack.c.l.b16 %v2016
    %v2098 = vunpack.c.h.b16 %v2016
    %v2099 = vunpack.c.l.b16 %v2017
    %v2100 = vunpack.c.h.b16 %v2017
    %v2101 = vunpack.c.l.b16 %v2018
    %v2102 = vunpack.c.h.b16 %v2018
    %v2103 = vunpack.c.l.b16 %v2019
    %v2104 = vunpack.c.h.b16 %v2019
    %v2105 = vunpack.c.l.b16 %v2020
    %v2106 = vunpack.c.h.b16 %v2020
    %v2107 = vunpack.c.l.b16 %v2021
    %v2108 = vunpack.c.h.b16 %v2021
    %v2109 = vunpack.c.l.b16 %v2022
    %v2110 = vunpack.c.h.b16 %v2022
    %v2111 = vunpack.c.l.b16 %v2023
    %v2112 = vunpack.c.h.b16 %v2023
    %v2113 = vunpack.c.l.b16 %v2024
    %v2114 = vunpack.c.h.b16 %v2024
    %v2115 = vunpack.c.l.b16 %v2025
    %v2116 = vunpack.c.h.b16 %v2025
    %v2117 = vunpack.c.l.b16 %v2026
    %v2118 = vunpack.c.h.b16 %v2026
    %v2119 = vunpack.c.l.b16 %v2027
    %v2120 = vunpack.c.h.b16 %v2027
    %v2121 = vunpack.c.l.b16 %v2028
    %v2122 = vunpack.c.h.b16 %v2028
    %v2123 = vunpack.c.l.b16 %v2029
    %v2124 = vunpack.c.h.b16 %v2029
    %v2125 = vunpack.c.l.b16 %v2030
    %v2126 = vunpack.c.h.b16 %v2030
    %v2127 = vunpack.c.l.b16 %v2031
    %v2128 = vunpack.c.h.b16 %v2031
    %v2129 = vunpack.c.l.b16 %v2032
    %v2130 = vunpack.c.h.b16 %v2032
    %v2131 = vunpack.c.l.b16 %v2033
    %v2132 = vunpack.c.h.b16 %v2033
    %v2133 = vunpack.c.l.b16 %v2034
    %v2134 = vunpack.c.h.b16 %v2034
    %v2135 = vunpack.c.l.b16 %v2035
    %v2136 = vunpack.c.h.b16 %v2035
    %v2137 = vunpack.c.l.b16 %v2036
    %v2138 = vunpack.c.h.b16 %v2036
    %v2139 = vunpack.c.l.b16 %v2037
    %v2140 = vunpack.c.h.b16 %v2037
    %v2141 = vunpack.c.l.b16 %v2038
    %v2142 = vunpack.c.h.b16 %v2038
    %v2143 = vunpack.c.l.b16 %v2039
    %v2144 = vunpack.c.h.b16 %v2039
    %v2145 = vunpack.c.l.b16 %v2040
    %v2146 = vunpack.c.h.b16 %v2040
    %v2147 = vunpack.c.l.b16 %v2041
    %v2148 = vunpack.c.h.b16 %v2041
    %v2149 = vunpack.c.l.b16 %v2042
    %v2150 = vunpack.c.h.b16 %v2042
    %v2151 = vunpack.c.l.b16 %v2043
    %v2152 = vunpack.c.h.b16 %v2043
    %v2153 = vpack.c.b16 %v2091, %v2089
    %v2154 = vpack.c.b16 %v2092, %v2090
    %v2155 = vpack.c.b16 %v2095, %v2093
    %v2156 = vpack.c.b16 %v2096, %v2094
    %v2157 = vpack.c.b16 %v2099, %v2097
    %v2158 = vpack.c.b16 %v2100, %v2098
    %v2159 = vpack.c.b16 %v2103, %v2101
    %v2160 = vpack.c.b16 %v2104, %v2102
    %v2161 = vpack.c.b16 %v2107, %v2105
    %v2162 = vpack.c.b16 %v2108, %v2106
    %v2163 = vpack.c.b16 %v2111, %v2109
    %v2164 = vpack.c.b16 %v2112, %v2110
    %v2165 = vpack.c.b16 %v2115, %v2113
    %v2166 = vpack.c.b16 %v2116, %v2114
    %v2167 = vpack.c.b16 %v2119, %v2117
    %v2168 = vpack.c.b16 %v2120, %v2118
    %v2169 = vpack.c.b16 %v2123, %v2121
    %v2170 = vpack.c.b16 %v2124, %v2122
    %v2171 = vpack.c.b16 %v2127, %v2125
    %v2172 = vpack.c.b16 %v2128, %v2126
    %v2173 = vpack.c.b16 %v2131, %v2129
    %v2174 = vpack.c.b16 %v2132, %v2130
    %v2175 = vpack.c.b16 %v2135, %v2133
    %v2176 = vpack.c.b16 %v2136, %v2134
    %v2177 = vpack.c.b16 %v2139, %v2137
    %v2178 = vpack.c.b16 %v2140, %v2138
    %v2179 = vpack.c.b16 %v2143, %v2141
    %v2180 = vpack.c.b16 %v2144, %v2142
    %v2181 = vpack.c.b16 %v2147, %v2145
    %v2182 = vpack.c.b16 %v2148, %v2146
    %v2183 = vpack.c.b16 %v2151, %v2149
    %v2184 = vpack.c.b16 %v2152, %v2150
    %2217 = vmatprep.subr.bf16.mxu0 %v2154
    %2218 = vmatpush1.bf16.msra.mxu0 %v2153
    %2219 = vmatprep.subr.bf16.mxu0 %v2156
    %2220 = vmatpush1.bf16.msra.mxu0 %v2155
    %2221 = vmatprep.subr.bf16.mxu0 %v2158
    %2222 = vmatpush1.bf16.msra.mxu0 %v2157
    %2223 = vmatprep.subr.bf16.mxu0 %v2160
    %2224 = vmatpush1.bf16.msra.mxu0 %v2159
    %2225 = vmatprep.subr.bf16.mxu0 %v2162
    %2226 = vmatpush1.bf16.msra.mxu0 %v2161
    %2227 = vmatprep.subr.bf16.mxu0 %v2164
    %2228 = vmatpush1.bf16.msra.mxu0 %v2163
    %2229 = vmatprep.subr.bf16.mxu0 %v2166
    %2230 = vmatpush1.bf16.msra.mxu0 %v2165
    %2231 = vmatprep.subr.bf16.mxu0 %v2168
    %2232 = vmatpush1.bf16.msra.mxu0 %v2167
    %2233 = vmatprep.subr.bf16.mxu0 %v2170
    %2234 = vmatpush1.bf16.msra.mxu0 %v2169
    %2235 = vmatprep.subr.bf16.mxu0 %v2172
    %2236 = vmatpush1.bf16.msra.mxu0 %v2171
    %2237 = vmatprep.subr.bf16.mxu0 %v2174
    %2238 = vmatpush1.bf16.msra.mxu0 %v2173
    %2239 = vmatprep.subr.bf16.mxu0 %v2176
    %2240 = vmatpush1.bf16.msra.mxu0 %v2175
    %2241 = vmatprep.subr.bf16.mxu0 %v2178
    %2242 = vmatpush1.bf16.msra.mxu0 %v2177
    %2243 = vmatprep.subr.bf16.mxu0 %v2180
    %2244 = vmatpush1.bf16.msra.mxu0 %v2179
    %2245 = vmatprep.subr.bf16.mxu0 %v2182
    %2246 = vmatpush1.bf16.msra.mxu0 %v2181
    %2247 = vmatprep.subr.bf16.mxu0 %v2184
    %2248 = vmatpush1.bf16.msra.mxu0 %v2183
    %2249 = vmatprep.mubr.bf16.mxu0 %v1980
    %2250 = vmatmul.mubr.bf16.gmra.mrb[0].mxu0 %v1979
    %v2251 = vpop.f32.mrb[0].mxu0
    %v2252 = vadd.f32 %v2050, %v2251
    %v2253 = vpop.f32.mrb[0].mxu0
    %v2254 = vadd.f32 %v2054, %v2253
    %v2255 = vpop.f32.mrb[0].mxu0
    %v2256 = vadd.f32 %v2050, %v2255
    %v2257 = vpop.f32.mrb[0].mxu0
    %v2258 = vadd.f32 %v2054, %v2257
    %2259 = vmatprep.mubr.bf16.mxu0 %v1982
    %2260 = vmatmul.mubr.bf16.gmra.mrb[0].mxu0 %v1981
    %v2261 = vpop.f32.mrb[0].mxu0
    %v2262 = vadd.f32 %v2050, %v2261
    %v2263 = vpop.f32.mrb[0].mxu0
    %v2264 = vadd.f32 %v2054, %v2263
    %v2265 = vpop.f32.mrb[0].mxu0
    %v2266 = vadd.f32 %v2050, %v2265
    %v2267 = vpop.f32.mrb[0].mxu0
    %v2268 = vadd.f32 %v2054, %v2267
    %2269 = vmatprep.mubr.bf16.mxu0 %v1984
    %2270 = vmatmul.mubr.bf16.gmra.mrb[0].mxu0 %v1983
    %v2271 = vpop.f32.mrb[0].mxu0
    %v2272 = vadd.f32 %v2050, %v2271
    %v2273 = vpop.f32.mrb[0].mxu0
    %v2274 = vadd.f32 %v2054, %v2273
    %v2275 = vpop.f32.mrb[0].mxu0
    %v2276 = vadd.f32 %v2050, %v2275
    %v2277 = vpop.f32.mrb[0].mxu0
    %v2278 = vadd.f32 %v2054, %v2277
    %2279 = vmatprep.mubr.bf16.mxu0 %v1986
    %2280 = vmatmul.mubr.bf16.gmra.mrb[0].mxu0 %v1985
    %v2281 = vpop.f32.mrb[0].mxu0
    %v2282 = vadd.f32 %v2050, %v2281
    %v2283 = vpop.f32.mrb[0].mxu0
    %v2284 = vadd.f32 %v2054, %v2283
    %v2285 = vpop.f32.mrb[0].mxu0
    %v2286 = vadd.f32 %v2050, %v2285
    %v2287 = vpop.f32.mrb[0].mxu0
    %v2288 = vadd.f32 %v2054, %v2287
    %2289 = vmatprep.mubr.bf16.mxu0 %v1988
    %2290 = vmatmul.mubr.bf16.gmra.mrb[0].mxu0 %v1987
    %v2291 = vpop.f32.mrb[0].mxu0
    %v2292 = vadd.f32 %v2050, %v2291
    %v2293 = vpop.f32.mrb[0].mxu0
    %v2294 = vadd.f32 %v2054, %v2293
    %v2295 = vpop.f32.mrb[0].mxu0
    %v2296 = vadd.f32 %v2050, %v2295
    %v2297 = vpop.f32.mrb[0].mxu0
    %v2298 = vadd.f32 %v2054, %v2297
    %2299 = vmatprep.mubr.bf16.mxu0 %v1990
    %2300 = vmatmul.mubr.bf16.gmra.mrb[0].mxu0 %v1989
    %v2301 = vpop.f32.mrb[0].mxu0
    %v2302 = vadd.f32 %v2050, %v2301
    %v2303 = vpop.f32.mrb[0].mxu0
    %v2304 = vadd.f32 %v2054, %v2303
    %v2305 = vpop.f32.mrb[0].mxu0
    %v2306 = vadd.f32 %v2050, %v2305
    %v2307 = vpop.f32.mrb[0].mxu0
    %v2308 = vadd.f32 %v2054, %v2307
    %2309 = vmatprep.mubr.bf16.mxu0 %v1992
    %2310 = vmatmul.mubr.bf16.gmra.mrb[0].mxu0 %v1991
    %v2311 = vpop.f32.mrb[0].mxu0
    %v2312 = vadd.f32 %v2050, %v2311
    %v2313 = vpop.f32.mrb[0].mxu0
    %v2314 = vadd.f32 %v2054, %v2313
    %v2315 = vpop.f32.mrb[0].mxu0
    %v2316 = vadd.f32 %v2050, %v2315
    %v2317 = vpop.f32.mrb[0].mxu0
    %v2318 = vadd.f32 %v2054, %v2317
    %2319 = vmatprep.mubr.bf16.mxu0 %v1994
    %2320 = vmatmul.mubr.bf16.gmra.mrb[0].mxu0 %v1993
    %v2321 = vpop.f32.mrb[0].mxu0
    %v2322 = vadd.f32 %v2050, %v2321
    %v2323 = vpop.f32.mrb[0].mxu0
    %v2324 = vadd.f32 %v2054, %v2323
    %v2325 = vpop.f32.mrb[0].mxu0
    %v2326 = vadd.f32 %v2050, %v2325
    %v2327 = vpop.f32.mrb[0].mxu0
    %v2328 = vadd.f32 %v2054, %v2327
    %2329 = vmatprep.mubr.bf16.mxu0 %v1996
    %2330 = vmatmul.mubr.bf16.gmra.mrb[0].mxu0 %v1995
    %v2331 = vpop.f32.mrb[0].mxu0
    %v2332 = vadd.f32 %v2050, %v2331
    %v2333 = vpop.f32.mrb[0].mxu0
    %v2334 = vadd.f32 %v2054, %v2333
    %v2335 = vpop.f32.mrb[0].mxu0
    %v2336 = vadd.f32 %v2050, %v2335
    %v2337 = vpop.f32.mrb[0].mxu0
    %v2338 = vadd.f32 %v2054, %v2337
    %2339 = vmatprep.mubr.bf16.mxu0 %v1998
    %2340 = vmatmul.mubr.bf16.gmra.mrb[0].mxu0 %v1997
    %v2341 = vpop.f32.mrb[0].mxu0
    %v2342 = vadd.f32 %v2050, %v2341
    %v2343 = vpop.f32.mrb[0].mxu0
    %v2344 = vadd.f32 %v2054, %v2343
    %v2345 = vpop.f32.mrb[0].mxu0
    %v2346 = vadd.f32 %v2050, %v2345
    %v2347 = vpop.f32.mrb[0].mxu0
    %v2348 = vadd.f32 %v2054, %v2347
    %2349 = vmatprep.mubr.bf16.mxu0 %v2000
    %2350 = vmatmul.mubr.bf16.gmra.mrb[0].mxu0 %v1999
    %v2351 = vpop.f32.mrb[0].mxu0
    %v2352 = vadd.f32 %v2050, %v2351
    %v2353 = vpop.f32.mrb[0].mxu0
    %v2354 = vadd.f32 %v2054, %v2353
    %v2355 = vpop.f32.mrb[0].mxu0
    %v2356 = vadd.f32 %v2050, %v2355
    %v2357 = vpop.f32.mrb[0].mxu0
    %v2358 = vadd.f32 %v2054, %v2357
    %2359 = vmatprep.mubr.bf16.mxu0 %v2002
    %2360 = vmatmul.mubr.bf16.gmra.mrb[0].mxu0 %v2001
    %v2361 = vpop.f32.mrb[0].mxu0
    %v2362 = vadd.f32 %v2050, %v2361
    %v2363 = vpop.f32.mrb[0].mxu0
    %v2364 = vadd.f32 %v2054, %v2363
    %v2365 = vpop.f32.mrb[0].mxu0
    %v2366 = vadd.f32 %v2050, %v2365
    %v2367 = vpop.f32.mrb[0].mxu0
    %v2368 = vadd.f32 %v2054, %v2367
    %2369 = vmatprep.mubr.bf16.mxu0 %v2004
    %2370 = vmatmul.mubr.bf16.gmra.mrb[0].mxu0 %v2003
    %v2371 = vpop.f32.mrb[0].mxu0
    %v2372 = vadd.f32 %v2050, %v2371
    %v2373 = vpop.f32.mrb[0].mxu0
    %v2374 = vadd.f32 %v2054, %v2373
    %v2375 = vpop.f32.mrb[0].mxu0
    %v2376 = vadd.f32 %v2050, %v2375
    %v2377 = vpop.f32.mrb[0].mxu0
    %v2378 = vadd.f32 %v2054, %v2377
    %2379 = vmatprep.mubr.bf16.mxu0 %v2006
    %2380 = vmatmul.mubr.bf16.gmra.mrb[0].mxu0 %v2005
    %v2381 = vpop.f32.mrb[0].mxu0
    %v2382 = vadd.f32 %v2050, %v2381
    %v2383 = vpop.f32.mrb[0].mxu0
    %v2384 = vadd.f32 %v2054, %v2383
    %v2385 = vpop.f32.mrb[0].mxu0
    %v2386 = vadd.f32 %v2050, %v2385
    %v2387 = vpop.f32.mrb[0].mxu0
    %v2388 = vadd.f32 %v2054, %v2387
    %2389 = vmatprep.mubr.bf16.mxu0 %v2008
    %2390 = vmatmul.mubr.bf16.gmra.mrb[0].mxu0 %v2007
    %v2391 = vpop.f32.mrb[0].mxu0
    %v2392 = vadd.f32 %v2050, %v2391
    %v2393 = vpop.f32.mrb[0].mxu0
    %v2394 = vadd.f32 %v2054, %v2393
    %v2395 = vpop.f32.mrb[0].mxu0
    %v2396 = vadd.f32 %v2050, %v2395
    %v2397 = vpop.f32.mrb[0].mxu0
    %v2398 = vadd.f32 %v2054, %v2397
    %2399 = vmatprep.mubr.bf16.mxu0 %v2010
    %2400 = vmatmul.mubr.bf16.gmra.mrb[0].mxu0 %v2009
    %v2401 = vpop.f32.mrb[0].mxu0
    %v2402 = vadd.f32 %v2050, %v2401
    %v2403 = vpop.f32.mrb[0].mxu0
    %v2404 = vadd.f32 %v2054, %v2403
    %v2405 = vpop.f32.mrb[0].mxu0
    %v2406 = vadd.f32 %v2050, %v2405
    %v2407 = vpop.f32.mrb[0].mxu0
    %v2408 = vadd.f32 %v2054, %v2407
    %2409 = vdwg.mxu0
    %v2410 = vmax.f32 %v2252, 0.0
    %v2411 = vmax.f32 %v2254, 0.0
    %v2412 = vmax.f32 %v2256, 0.0
    %v2413 = vmax.f32 %v2258, 0.0
    %v2414 = vmax.f32 %v2262, 0.0
    %v2415 = vmax.f32 %v2264, 0.0
    %v2416 = vmax.f32 %v2266, 0.0
    %v2417 = vmax.f32 %v2268, 0.0
    %v2418 = vmax.f32 %v2272, 0.0
    %v2419 = vmax.f32 %v2274, 0.0
    %v2420 = vmax.f32 %v2276, 0.0
    %v2421 = vmax.f32 %v2278, 0.0
    %v2422 = vmax.f32 %v2282, 0.0
    %v2423 = vmax.f32 %v2284, 0.0
    %v2424 = vmax.f32 %v2286, 0.0
    %v2425 = vmax.f32 %v2288, 0.0
    %v2426 = vmax.f32 %v2292, 0.0
    %v2427 = vmax.f32 %v2294, 0.0
    %v2428 = vmax.f32 %v2296, 0.0
    %v2429 = vmax.f32 %v2298, 0.0
    %v2430 = vmax.f32 %v2302, 0.0
    %v2431 = vmax.f32 %v2304, 0.0
    %v2432 = vmax.f32 %v2306, 0.0
    %v2433 = vmax.f32 %v2308, 0.0
    %v2434 = vmax.f32 %v2312, 0.0
    %v2435 = vmax.f32 %v2314, 0.0
    %v2436 = vmax.f32 %v2316, 0.0
    %v2437 = vmax.f32 %v2318, 0.0
    %v2438 = vmax.f32 %v2322, 0.0
    %v2439 = vmax.f32 %v2324, 0.0
    %v2440 = vmax.f32 %v2326, 0.0
    %v2441 = vmax.f32 %v2328, 0.0
    %v2442 = vmax.f32 %v2332, 0.0
    %v2443 = vmax.f32 %v2334, 0.0
    %v2444 = vmax.f32 %v2336, 0.0
    %v2445 = vmax.f32 %v2338, 0.0
    %v2446 = vmax.f32 %v2342, 0.0
    %v2447 = vmax.f32 %v2344, 0.0
    %v2448 = vmax.f32 %v2346, 0.0
    %v2449 = vmax.f32 %v2348, 0.0
    %v2450 = vmax.f32 %v2352, 0.0
    %v2451 = vmax.f32 %v2354, 0.0
    %v2452 = vmax.f32 %v2356, 0.0
    %v2453 = vmax.f32 %v2358, 0.0
    %v2454 = vmax.f32 %v2362, 0.0
    %v2455 = vmax.f32 %v2364, 0.0
    %v2456 = vmax.f32 %v2366, 0.0
    %v2457 = vmax.f32 %v2368, 0.0
    %v2458 = vmax.f32 %v2372, 0.0
    %v2459 = vmax.f32 %v2374, 0.0
    %v2460 = vmax.f32 %v2376, 0.0
    %v2461 = vmax.f32 %v2378, 0.0
    %v2462 = vmax.f32 %v2382, 0.0
    %v2463 = vmax.f32 %v2384, 0.0
    %v2464 = vmax.f32 %v2386, 0.0
    %v2465 = vmax.f32 %v2388, 0.0
    %v2466 = vmax.f32 %v2392, 0.0
    %v2467 = vmax.f32 %v2394, 0.0
    %v2468 = vmax.f32 %v2396, 0.0
    %v2469 = vmax.f32 %v2398, 0.0
    %v2470 = vmax.f32 %v2402, 0.0
    %v2471 = vmax.f32 %v2404, 0.0
    %v2472 = vmax.f32 %v2406, 0.0
    %v2473 = vmax.f32 %v2408, 0.0
    %v2474 = vpack.c.bf16 %v2412, %v2410
    %v2475 = vpack.c.bf16 %v2413, %v2411
    %v2476 = vpack.c.bf16 %v2416, %v2414
    %v2477 = vpack.c.bf16 %v2417, %v2415
    %v2478 = vpack.c.bf16 %v2420, %v2418
    %v2479 = vpack.c.bf16 %v2421, %v2419
    %v2480 = vpack.c.bf16 %v2424, %v2422
    %v2481 = vpack.c.bf16 %v2425, %v2423
    %v2482 = vpack.c.bf16 %v2428, %v2426
    %v2483 = vpack.c.bf16 %v2429, %v2427
    %v2484 = vpack.c.bf16 %v2432, %v2430
    %v2485 = vpack.c.bf16 %v2433, %v2431
    %v2486 = vpack.c.bf16 %v2436, %v2434
    %v2487 = vpack.c.bf16 %v2437, %v2435
    %v2488 = vpack.c.bf16 %v2440, %v2438
    %v2489 = vpack.c.bf16 %v2441, %v2439
    %v2490 = vpack.c.bf16 %v2444, %v2442
    %v2491 = vpack.c.bf16 %v2445, %v2443
    %v2492 = vpack.c.bf16 %v2448, %v2446
    %v2493 = vpack.c.bf16 %v2449, %v2447
    %v2494 = vpack.c.bf16 %v2452, %v2450
    %v2495 = vpack.c.bf16 %v2453, %v2451
    %v2496 = vpack.c.bf16 %v2456, %v2454
    %v2497 = vpack.c.bf16 %v2457, %v2455
    %v2498 = vpack.c.bf16 %v2460, %v2458
    %v2499 = vpack.c.bf16 %v2461, %v2459
    %v2500 = vpack.c.bf16 %v2464, %v2462
    %v2501 = vpack.c.bf16 %v2465, %v2463
    %v2502 = vpack.c.bf16 %v2468, %v2466
    %v2503 = vpack.c.bf16 %v2469, %v2467
    %v2504 = vpack.c.bf16 %v2472, %v2470
    %v2505 = vpack.c.bf16 %v2473, %v2471
    %s2506 = scalar_lea.vmem [#allocation2], 768
    %v2507 = vld [vmem:[%s2506] sm:$0xff]
    %v2508 = vld [vmem:[%s2506 + $0x8] sm:$0xff]
    %v2509 = vld [vmem:[%s2506 + $0x10] sm:$0xff]
    %v2510 = vld [vmem:[%s2506 + $0x18] sm:$0xff]
    %v2511 = vld [vmem:[%s2506 + $0x20] sm:$0xff]
    %v2512 = vld [vmem:[%s2506 + $0x28] sm:$0xff]
    %v2513 = vld [vmem:[%s2506 + $0x30] sm:$0xff]
    %v2514 = vld [vmem:[%s2506 + $0x38] sm:$0xff]
    %v2515 = vld [vmem:[%s2506 + $0x40] sm:$0xff]
    %v2516 = vld [vmem:[%s2506 + $0x48] sm:$0xff]
    %v2517 = vld [vmem:[%s2506 + $0x50] sm:$0xff]
    %v2518 = vld [vmem:[%s2506 + $0x58] sm:$0xff]
    %v2519 = vld [vmem:[%s2506 + $0x60] sm:$0xff]
    %v2520 = vld [vmem:[%s2506 + $0x68] sm:$0xff]
    %v2521 = vld [vmem:[%s2506 + $0x70] sm:$0xff]
    %v2522 = vld [vmem:[%s2506 + $0x78] sm:$0xff]
    %v2523 = vld [vmem:[%s2506 + $0x80] sm:$0xff]
    %v2524 = vld [vmem:[%s2506 + $0x88] sm:$0xff]
    %v2525 = vld [vmem:[%s2506 + $0x90] sm:$0xff]
    %v2526 = vld [vmem:[%s2506 + $0x98] sm:$0xff]
    %v2527 = vld [vmem:[%s2506 + $0xa0] sm:$0xff]
    %v2528 = vld [vmem:[%s2506 + $0xa8] sm:$0xff]
    %v2529 = vld [vmem:[%s2506 + $0xb0] sm:$0xff]
    %v2530 = vld [vmem:[%s2506 + $0xb8] sm:$0xff]
    %v2531 = vld [vmem:[%s2506 + $0xc0] sm:$0xff]
    %v2532 = vld [vmem:[%s2506 + $0xc8] sm:$0xff]
    %v2533 = vld [vmem:[%s2506 + $0xd0] sm:$0xff]
    %v2534 = vld [vmem:[%s2506 + $0xd8] sm:$0xff]
    %v2535 = vld [vmem:[%s2506 + $0xe0] sm:$0xff]
    %v2536 = vld [vmem:[%s2506 + $0xe8] sm:$0xff]
    %v2537 = vld [vmem:[%s2506 + $0xf0] sm:$0xff]
    %v2538 = vld [vmem:[%s2506 + $0xf8] sm:$0xff]
    %s2539 = scalar_lea.vmem %s4, 6
    %v2540 = vld [vmem:[%s2539] sm:$0x3]
    %v2542 = vlaneseq
    %v2543 = vshrl.u32 %v2542, 7
    %v2544 = vsub.s32 0, %v2543
    %v2545 = vrot.slane %v2540, %v2544
    %v2546 = vlaneseq
    %v2547 = vshrl.u32 %v2546, 7
    %v2548 = vsub.s32 1, %v2547
    %v2549 = vrot.slane %v2540, %v2548
    %v2584 = vunpack.c.l.b16 %v2507
    %v2585 = vunpack.c.h.b16 %v2507
    %v2586 = vunpack.c.l.b16 %v2508
    %v2587 = vunpack.c.h.b16 %v2508
    %v2588 = vunpack.c.l.b16 %v2509
    %v2589 = vunpack.c.h.b16 %v2509
    %v2590 = vunpack.c.l.b16 %v2510
    %v2591 = vunpack.c.h.b16 %v2510
    %v2592 = vunpack.c.l.b16 %v2511
    %v2593 = vunpack.c.h.b16 %v2511
    %v2594 = vunpack.c.l.b16 %v2512
    %v2595 = vunpack.c.h.b16 %v2512
    %v2596 = vunpack.c.l.b16 %v2513
    %v2597 = vunpack.c.h.b16 %v2513
    %v2598 = vunpack.c.l.b16 %v2514
    %v2599 = vunpack.c.h.b16 %v2514
    %v2600 = vunpack.c.l.b16 %v2515
    %v2601 = vunpack.c.h.b16 %v2515
    %v2602 = vunpack.c.l.b16 %v2516
    %v2603 = vunpack.c.h.b16 %v2516
    %v2604 = vunpack.c.l.b16 %v2517
    %v2605 = vunpack.c.h.b16 %v2517
    %v2606 = vunpack.c.l.b16 %v2518
    %v2607 = vunpack.c.h.b16 %v2518
    %v2608 = vunpack.c.l.b16 %v2519
    %v2609 = vunpack.c.h.b16 %v2519
    %v2610 = vunpack.c.l.b16 %v2520
    %v2611 = vunpack.c.h.b16 %v2520
    %v2612 = vunpack.c.l.b16 %v2521
    %v2613 = vunpack.c.h.b16 %v2521
    %v2614 = vunpack.c.l.b16 %v2522
    %v2615 = vunpack.c.h.b16 %v2522
    %v2616 = vunpack.c.l.b16 %v2523
    %v2617 = vunpack.c.h.b16 %v2523
    %v2618 = vunpack.c.l.b16 %v2524
    %v2619 = vunpack.c.h.b16 %v2524
    %v2620 = vunpack.c.l.b16 %v2525
    %v2621 = vunpack.c.h.b16 %v2525
    %v2622 = vunpack.c.l.b16 %v2526
    %v2623 = vunpack.c.h.b16 %v2526
    %v2624 = vunpack.c.l.b16 %v2527
    %v2625 = vunpack.c.h.b16 %v2527
    %v2626 = vunpack.c.l.b16 %v2528
    %v2627 = vunpack.c.h.b16 %v2528
    %v2628 = vunpack.c.l.b16 %v2529
    %v2629 = vunpack.c.h.b16 %v2529
    %v2630 = vunpack.c.l.b16 %v2530
    %v2631 = vunpack.c.h.b16 %v2530
    %v2632 = vunpack.c.l.b16 %v2531
    %v2633 = vunpack.c.h.b16 %v2531
    %v2634 = vunpack.c.l.b16 %v2532
    %v2635 = vunpack.c.h.b16 %v2532
    %v2636 = vunpack.c.l.b16 %v2533
    %v2637 = vunpack.c.h.b16 %v2533
    %v2638 = vunpack.c.l.b16 %v2534
    %v2639 = vunpack.c.h.b16 %v2534
    %v2640 = vunpack.c.l.b16 %v2535
    %v2641 = vunpack.c.h.b16 %v2535
    %v2642 = vunpack.c.l.b16 %v2536
    %v2643 = vunpack.c.h.b16 %v2536
    %v2644 = vunpack.c.l.b16 %v2537
    %v2645 = vunpack.c.h.b16 %v2537
    %v2646 = vunpack.c.l.b16 %v2538
    %v2647 = vunpack.c.h.b16 %v2538
    %v2648 = vpack.c.b16 %v2586, %v2584
    %v2649 = vpack.c.b16 %v2587, %v2585
    %v2650 = vpack.c.b16 %v2590, %v2588
    %v2651 = vpack.c.b16 %v2591, %v2589
    %v2652 = vpack.c.b16 %v2594, %v2592
    %v2653 = vpack.c.b16 %v2595, %v2593
    %v2654 = vpack.c.b16 %v2598, %v2596
    %v2655 = vpack.c.b16 %v2599, %v2597
    %v2656 = vpack.c.b16 %v2602, %v2600
    %v2657 = vpack.c.b16 %v2603, %v2601
    %v2658 = vpack.c.b16 %v2606, %v2604
    %v2659 = vpack.c.b16 %v2607, %v2605
    %v2660 = vpack.c.b16 %v2610, %v2608
    %v2661 = vpack.c.b16 %v2611, %v2609
    %v2662 = vpack.c.b16 %v2614, %v2612
    %v2663 = vpack.c.b16 %v2615, %v2613
    %v2664 = vpack.c.b16 %v2618, %v2616
    %v2665 = vpack.c.b16 %v2619, %v2617
    %v2666 = vpack.c.b16 %v2622, %v2620
    %v2667 = vpack.c.b16 %v2623, %v2621
    %v2668 = vpack.c.b16 %v2626, %v2624
    %v2669 = vpack.c.b16 %v2627, %v2625
    %v2670 = vpack.c.b16 %v2630, %v2628
    %v2671 = vpack.c.b16 %v2631, %v2629
    %v2672 = vpack.c.b16 %v2634, %v2632
    %v2673 = vpack.c.b16 %v2635, %v2633
    %v2674 = vpack.c.b16 %v2638, %v2636
    %v2675 = vpack.c.b16 %v2639, %v2637
    %v2676 = vpack.c.b16 %v2642, %v2640
    %v2677 = vpack.c.b16 %v2643, %v2641
    %v2678 = vpack.c.b16 %v2646, %v2644
    %v2679 = vpack.c.b16 %v2647, %v2645
    %2712 = vmatprep.subr.bf16.mxu0 %v2649
    %2713 = vmatpush1.bf16.msra.mxu0 %v2648
    %2714 = vmatprep.subr.bf16.mxu0 %v2651
    %2715 = vmatpush1.bf16.msra.mxu0 %v2650
    %2716 = vmatprep.subr.bf16.mxu0 %v2653
    %2717 = vmatpush1.bf16.msra.mxu0 %v2652
    %2718 = vmatprep.subr.bf16.mxu0 %v2655
    %2719 = vmatpush1.bf16.msra.mxu0 %v2654
    %2720 = vmatprep.subr.bf16.mxu0 %v2657
    %2721 = vmatpush1.bf16.msra.mxu0 %v2656
    %2722 = vmatprep.subr.bf16.mxu0 %v2659
    %2723 = vmatpush1.bf16.msra.mxu0 %v2658
    %2724 = vmatprep.subr.bf16.mxu0 %v2661
    %2725 = vmatpush1.bf16.msra.mxu0 %v2660
    %2726 = vmatprep.subr.bf16.mxu0 %v2663
    %2727 = vmatpush1.bf16.msra.mxu0 %v2662
    %2728 = vmatprep.subr.bf16.mxu0 %v2665
    %2729 = vmatpush1.bf16.msra.mxu0 %v2664
    %2730 = vmatprep.subr.bf16.mxu0 %v2667
    %2731 = vmatpush1.bf16.msra.mxu0 %v2666
    %2732 = vmatprep.subr.bf16.mxu0 %v2669
    %2733 = vmatpush1.bf16.msra.mxu0 %v2668
    %2734 = vmatprep.subr.bf16.mxu0 %v2671
    %2735 = vmatpush1.bf16.msra.mxu0 %v2670
    %2736 = vmatprep.subr.bf16.mxu0 %v2673
    %2737 = vmatpush1.bf16.msra.mxu0 %v2672
    %2738 = vmatprep.subr.bf16.mxu0 %v2675
    %2739 = vmatpush1.bf16.msra.mxu0 %v2674
    %2740 = vmatprep.subr.bf16.mxu0 %v2677
    %2741 = vmatpush1.bf16.msra.mxu0 %v2676
    %2742 = vmatprep.subr.bf16.mxu0 %v2679
    %2743 = vmatpush1.bf16.msra.mxu0 %v2678
    %2744 = vmatprep.mubr.bf16.mxu0 %v2475
    %2745 = vmatmul.mubr.bf16.gmra.mrb[0].mxu0 %v2474
    %v2746 = vpop.f32.mrb[0].mxu0
    %v2747 = vadd.f32 %v2545, %v2746
    %v2748 = vpop.f32.mrb[0].mxu0
    %v2749 = vadd.f32 %v2549, %v2748
    %v2750 = vpop.f32.mrb[0].mxu0
    %v2751 = vadd.f32 %v2545, %v2750
    %v2752 = vpop.f32.mrb[0].mxu0
    %v2753 = vadd.f32 %v2549, %v2752
    %2754 = vmatprep.mubr.bf16.mxu0 %v2477
    %2755 = vmatmul.mubr.bf16.gmra.mrb[0].mxu0 %v2476
    %v2756 = vpop.f32.mrb[0].mxu0
    %v2757 = vadd.f32 %v2545, %v2756
    %v2758 = vpop.f32.mrb[0].mxu0
    %v2759 = vadd.f32 %v2549, %v2758
    %v2760 = vpop.f32.mrb[0].mxu0
    %v2761 = vadd.f32 %v2545, %v2760
    %v2762 = vpop.f32.mrb[0].mxu0
    %v2763 = vadd.f32 %v2549, %v2762
    %2764 = vmatprep.mubr.bf16.mxu0 %v2479
    %2765 = vmatmul.mubr.bf16.gmra.mrb[0].mxu0 %v2478
    %v2766 = vpop.f32.mrb[0].mxu0
    %v2767 = vadd.f32 %v2545, %v2766
    %v2768 = vpop.f32.mrb[0].mxu0
    %v2769 = vadd.f32 %v2549, %v2768
    %v2770 = vpop.f32.mrb[0].mxu0
    %v2771 = vadd.f32 %v2545, %v2770
    %v2772 = vpop.f32.mrb[0].mxu0
    %v2773 = vadd.f32 %v2549, %v2772
    %2774 = vmatprep.mubr.bf16.mxu0 %v2481
    %2775 = vmatmul.mubr.bf16.gmra.mrb[0].mxu0 %v2480
    %v2776 = vpop.f32.mrb[0].mxu0
    %v2777 = vadd.f32 %v2545, %v2776
    %v2778 = vpop.f32.mrb[0].mxu0
    %v2779 = vadd.f32 %v2549, %v2778
    %v2780 = vpop.f32.mrb[0].mxu0
    %v2781 = vadd.f32 %v2545, %v2780
    %v2782 = vpop.f32.mrb[0].mxu0
    %v2783 = vadd.f32 %v2549, %v2782
    %2784 = vmatprep.mubr.bf16.mxu0 %v2483
    %2785 = vmatmul.mubr.bf16.gmra.mrb[0].mxu0 %v2482
    %v2786 = vpop.f32.mrb[0].mxu0
    %v2787 = vadd.f32 %v2545, %v2786
    %v2788 = vpop.f32.mrb[0].mxu0
    %v2789 = vadd.f32 %v2549, %v2788
    %v2790 = vpop.f32.mrb[0].mxu0
    %v2791 = vadd.f32 %v2545, %v2790
    %v2792 = vpop.f32.mrb[0].mxu0
    %v2793 = vadd.f32 %v2549, %v2792
    %2794 = vmatprep.mubr.bf16.mxu0 %v2485
    %2795 = vmatmul.mubr.bf16.gmra.mrb[0].mxu0 %v2484
    %v2796 = vpop.f32.mrb[0].mxu0
    %v2797 = vadd.f32 %v2545, %v2796
    %v2798 = vpop.f32.mrb[0].mxu0
    %v2799 = vadd.f32 %v2549, %v2798
    %v2800 = vpop.f32.mrb[0].mxu0
    %v2801 = vadd.f32 %v2545, %v2800
    %v2802 = vpop.f32.mrb[0].mxu0
    %v2803 = vadd.f32 %v2549, %v2802
    %2804 = vmatprep.mubr.bf16.mxu0 %v2487
    %2805 = vmatmul.mubr.bf16.gmra.mrb[0].mxu0 %v2486
    %v2806 = vpop.f32.mrb[0].mxu0
    %v2807 = vadd.f32 %v2545, %v2806
    %v2808 = vpop.f32.mrb[0].mxu0
    %v2809 = vadd.f32 %v2549, %v2808
    %v2810 = vpop.f32.mrb[0].mxu0
    %v2811 = vadd.f32 %v2545, %v2810
    %v2812 = vpop.f32.mrb[0].mxu0
    %v2813 = vadd.f32 %v2549, %v2812
    %2814 = vmatprep.mubr.bf16.mxu0 %v2489
    %2815 = vmatmul.mubr.bf16.gmra.mrb[0].mxu0 %v2488
    %v2816 = vpop.f32.mrb[0].mxu0
    %v2817 = vadd.f32 %v2545, %v2816
    %v2818 = vpop.f32.mrb[0].mxu0
    %v2819 = vadd.f32 %v2549, %v2818
    %v2820 = vpop.f32.mrb[0].mxu0
    %v2821 = vadd.f32 %v2545, %v2820
    %v2822 = vpop.f32.mrb[0].mxu0
    %v2823 = vadd.f32 %v2549, %v2822
    %2824 = vmatprep.mubr.bf16.mxu0 %v2491
    %2825 = vmatmul.mubr.bf16.gmra.mrb[0].mxu0 %v2490
    %v2826 = vpop.f32.mrb[0].mxu0
    %v2827 = vadd.f32 %v2545, %v2826
    %v2828 = vpop.f32.mrb[0].mxu0
    %v2829 = vadd.f32 %v2549, %v2828
    %v2830 = vpop.f32.mrb[0].mxu0
    %v2831 = vadd.f32 %v2545, %v2830
    %v2832 = vpop.f32.mrb[0].mxu0
    %v2833 = vadd.f32 %v2549, %v2832
    %2834 = vmatprep.mubr.bf16.mxu0 %v2493
    %2835 = vmatmul.mubr.bf16.gmra.mrb[0].mxu0 %v2492
    %v2836 = vpop.f32.mrb[0].mxu0
    %v2837 = vadd.f32 %v2545, %v2836
    %v2838 = vpop.f32.mrb[0].mxu0
    %v2839 = vadd.f32 %v2549, %v2838
    %v2840 = vpop.f32.mrb[0].mxu0
    %v2841 = vadd.f32 %v2545, %v2840
    %v2842 = vpop.f32.mrb[0].mxu0
    %v2843 = vadd.f32 %v2549, %v2842
    %2844 = vmatprep.mubr.bf16.mxu0 %v2495
    %2845 = vmatmul.mubr.bf16.gmra.mrb[0].mxu0 %v2494
    %v2846 = vpop.f32.mrb[0].mxu0
    %v2847 = vadd.f32 %v2545, %v2846
    %v2848 = vpop.f32.mrb[0].mxu0
    %v2849 = vadd.f32 %v2549, %v2848
    %v2850 = vpop.f32.mrb[0].mxu0
    %v2851 = vadd.f32 %v2545, %v2850
    %v2852 = vpop.f32.mrb[0].mxu0
    %v2853 = vadd.f32 %v2549, %v2852
    %2854 = vmatprep.mubr.bf16.mxu0 %v2497
    %2855 = vmatmul.mubr.bf16.gmra.mrb[0].mxu0 %v2496
    %v2856 = vpop.f32.mrb[0].mxu0
    %v2857 = vadd.f32 %v2545, %v2856
    %v2858 = vpop.f32.mrb[0].mxu0
    %v2859 = vadd.f32 %v2549, %v2858
    %v2860 = vpop.f32.mrb[0].mxu0
    %v2861 = vadd.f32 %v2545, %v2860
    %v2862 = vpop.f32.mrb[0].mxu0
    %v2863 = vadd.f32 %v2549, %v2862
    %2864 = vmatprep.mubr.bf16.mxu0 %v2499
    %2865 = vmatmul.mubr.bf16.gmra.mrb[0].mxu0 %v2498
    %v2866 = vpop.f32.mrb[0].mxu0
    %v2867 = vadd.f32 %v2545, %v2866
    %v2868 = vpop.f32.mrb[0].mxu0
    %v2869 = vadd.f32 %v2549, %v2868
    %v2870 = vpop.f32.mrb[0].mxu0
    %v2871 = vadd.f32 %v2545, %v2870
    %v2872 = vpop.f32.mrb[0].mxu0
    %v2873 = vadd.f32 %v2549, %v2872
    %2874 = vmatprep.mubr.bf16.mxu0 %v2501
    %2875 = vmatmul.mubr.bf16.gmra.mrb[0].mxu0 %v2500
    %v2876 = vpop.f32.mrb[0].mxu0
    %v2877 = vadd.f32 %v2545, %v2876
    %v2878 = vpop.f32.mrb[0].mxu0
    %v2879 = vadd.f32 %v2549, %v2878
    %v2880 = vpop.f32.mrb[0].mxu0
    %v2881 = vadd.f32 %v2545, %v2880
    %v2882 = vpop.f32.mrb[0].mxu0
    %v2883 = vadd.f32 %v2549, %v2882
    %2884 = vmatprep.mubr.bf16.mxu0 %v2503
    %2885 = vmatmul.mubr.bf16.gmra.mrb[0].mxu0 %v2502
    %v2886 = vpop.f32.mrb[0].mxu0
    %v2887 = vadd.f32 %v2545, %v2886
    %v2888 = vpop.f32.mrb[0].mxu0
    %v2889 = vadd.f32 %v2549, %v2888
    %v2890 = vpop.f32.mrb[0].mxu0
    %v2891 = vadd.f32 %v2545, %v2890
    %v2892 = vpop.f32.mrb[0].mxu0
    %v2893 = vadd.f32 %v2549, %v2892
    %2894 = vmatprep.mubr.bf16.mxu0 %v2505
    %2895 = vmatmul.mubr.bf16.gmra.mrb[0].mxu0 %v2504
    %v2896 = vpop.f32.mrb[0].mxu0
    %v2897 = vadd.f32 %v2545, %v2896
    %v2898 = vpop.f32.mrb[0].mxu0
    %v2899 = vadd.f32 %v2549, %v2898
    %v2900 = vpop.f32.mrb[0].mxu0
    %v2901 = vadd.f32 %v2545, %v2900
    %v2902 = vpop.f32.mrb[0].mxu0
    %v2903 = vadd.f32 %v2549, %v2902
    %2904 = vdwg.mxu0
    %v2905 = vmax.f32 %v2747, 0.0
    %v2906 = vmax.f32 %v2749, 0.0
    %v2907 = vmax.f32 %v2751, 0.0
    %v2908 = vmax.f32 %v2753, 0.0
    %v2909 = vmax.f32 %v2757, 0.0
    %v2910 = vmax.f32 %v2759, 0.0
    %v2911 = vmax.f32 %v2761, 0.0
    %v2912 = vmax.f32 %v2763, 0.0
    %v2913 = vmax.f32 %v2767, 0.0
    %v2914 = vmax.f32 %v2769, 0.0
    %v2915 = vmax.f32 %v2771, 0.0
    %v2916 = vmax.f32 %v2773, 0.0
    %v2917 = vmax.f32 %v2777, 0.0
    %v2918 = vmax.f32 %v2779, 0.0
    %v2919 = vmax.f32 %v2781, 0.0
    %v2920 = vmax.f32 %v2783, 0.0
    %v2921 = vmax.f32 %v2787, 0.0
    %v2922 = vmax.f32 %v2789, 0.0
    %v2923 = vmax.f32 %v2791, 0.0
    %v2924 = vmax.f32 %v2793, 0.0
    %v2925 = vmax.f32 %v2797, 0.0
    %v2926 = vmax.f32 %v2799, 0.0
    %v2927 = vmax.f32 %v2801, 0.0
    %v2928 = vmax.f32 %v2803, 0.0
    %v2929 = vmax.f32 %v2807, 0.0
    %v2930 = vmax.f32 %v2809, 0.0
    %v2931 = vmax.f32 %v2811, 0.0
    %v2932 = vmax.f32 %v2813, 0.0
    %v2933 = vmax.f32 %v2817, 0.0
    %v2934 = vmax.f32 %v2819, 0.0
    %v2935 = vmax.f32 %v2821, 0.0
    %v2936 = vmax.f32 %v2823, 0.0
    %v2937 = vmax.f32 %v2827, 0.0
    %v2938 = vmax.f32 %v2829, 0.0
    %v2939 = vmax.f32 %v2831, 0.0
    %v2940 = vmax.f32 %v2833, 0.0
    %v2941 = vmax.f32 %v2837, 0.0
    %v2942 = vmax.f32 %v2839, 0.0
    %v2943 = vmax.f32 %v2841, 0.0
    %v2944 = vmax.f32 %v2843, 0.0
    %v2945 = vmax.f32 %v2847, 0.0
    %v2946 = vmax.f32 %v2849, 0.0
    %v2947 = vmax.f32 %v2851, 0.0
    %v2948 = vmax.f32 %v2853, 0.0
    %v2949 = vmax.f32 %v2857, 0.0
    %v2950 = vmax.f32 %v2859, 0.0
    %v2951 = vmax.f32 %v2861, 0.0
    %v2952 = vmax.f32 %v2863, 0.0
    %v2953 = vmax.f32 %v2867, 0.0
    %v2954 = vmax.f32 %v2869, 0.0
    %v2955 = vmax.f32 %v2871, 0.0
    %v2956 = vmax.f32 %v2873, 0.0
    %v2957 = vmax.f32 %v2877, 0.0
    %v2958 = vmax.f32 %v2879, 0.0
    %v2959 = vmax.f32 %v2881, 0.0
    %v2960 = vmax.f32 %v2883, 0.0
    %v2961 = vmax.f32 %v2887, 0.0
    %v2962 = vmax.f32 %v2889, 0.0
    %v2963 = vmax.f32 %v2891, 0.0
    %v2964 = vmax.f32 %v2893, 0.0
    %v2965 = vmax.f32 %v2897, 0.0
    %v2966 = vmax.f32 %v2899, 0.0
    %v2967 = vmax.f32 %v2901, 0.0
    %v2968 = vmax.f32 %v2903, 0.0
    %v2969 = vpack.c.bf16 %v2907, %v2905
    %v2970 = vpack.c.bf16 %v2908, %v2906
    %v2971 = vpack.c.bf16 %v2911, %v2909
    %v2972 = vpack.c.bf16 %v2912, %v2910
    %v2973 = vpack.c.bf16 %v2915, %v2913
    %v2974 = vpack.c.bf16 %v2916, %v2914
    %v2975 = vpack.c.bf16 %v2919, %v2917
    %v2976 = vpack.c.bf16 %v2920, %v2918
    %v2977 = vpack.c.bf16 %v2923, %v2921
    %v2978 = vpack.c.bf16 %v2924, %v2922
    %v2979 = vpack.c.bf16 %v2927, %v2925
    %v2980 = vpack.c.bf16 %v2928, %v2926
    %v2981 = vpack.c.bf16 %v2931, %v2929
    %v2982 = vpack.c.bf16 %v2932, %v2930
    %v2983 = vpack.c.bf16 %v2935, %v2933
    %v2984 = vpack.c.bf16 %v2936, %v2934
    %v2985 = vpack.c.bf16 %v2939, %v2937
    %v2986 = vpack.c.bf16 %v2940, %v2938
    %v2987 = vpack.c.bf16 %v2943, %v2941
    %v2988 = vpack.c.bf16 %v2944, %v2942
    %v2989 = vpack.c.bf16 %v2947, %v2945
    %v2990 = vpack.c.bf16 %v2948, %v2946
    %v2991 = vpack.c.bf16 %v2951, %v2949
    %v2992 = vpack.c.bf16 %v2952, %v2950
    %v2993 = vpack.c.bf16 %v2955, %v2953
    %v2994 = vpack.c.bf16 %v2956, %v2954
    %v2995 = vpack.c.bf16 %v2959, %v2957
    %v2996 = vpack.c.bf16 %v2960, %v2958
    %v2997 = vpack.c.bf16 %v2963, %v2961
    %v2998 = vpack.c.bf16 %v2964, %v2962
    %v2999 = vpack.c.bf16 %v2967, %v2965
    %v3000 = vpack.c.bf16 %v2968, %v2966
    %s3001 = scalar_lea.vmem [#allocation2], 1024
    %v3002 = vld [vmem:[%s3001] sm:$0xff]
    %v3003 = vld [vmem:[%s3001 + $0x8] sm:$0xff]
    %v3004 = vld [vmem:[%s3001 + $0x10] sm:$0xff]
    %v3005 = vld [vmem:[%s3001 + $0x18] sm:$0xff]
    %v3006 = vld [vmem:[%s3001 + $0x20] sm:$0xff]
    %v3007 = vld [vmem:[%s3001 + $0x28] sm:$0xff]
    %v3008 = vld [vmem:[%s3001 + $0x30] sm:$0xff]
    %v3009 = vld [vmem:[%s3001 + $0x38] sm:$0xff]
    %v3010 = vld [vmem:[%s3001 + $0x40] sm:$0xff]
    %v3011 = vld [vmem:[%s3001 + $0x48] sm:$0xff]
    %v3012 = vld [vmem:[%s3001 + $0x50] sm:$0xff]
    %v3013 = vld [vmem:[%s3001 + $0x58] sm:$0xff]
    %v3014 = vld [vmem:[%s3001 + $0x60] sm:$0xff]
    %v3015 = vld [vmem:[%s3001 + $0x68] sm:$0xff]
    %v3016 = vld [vmem:[%s3001 + $0x70] sm:$0xff]
    %v3017 = vld [vmem:[%s3001 + $0x78] sm:$0xff]
    %v3018 = vld [vmem:[%s3001 + $0x80] sm:$0xff]
    %v3019 = vld [vmem:[%s3001 + $0x88] sm:$0xff]
    %v3020 = vld [vmem:[%s3001 + $0x90] sm:$0xff]
    %v3021 = vld [vmem:[%s3001 + $0x98] sm:$0xff]
    %v3022 = vld [vmem:[%s3001 + $0xa0] sm:$0xff]
    %v3023 = vld [vmem:[%s3001 + $0xa8] sm:$0xff]
    %v3024 = vld [vmem:[%s3001 + $0xb0] sm:$0xff]
    %v3025 = vld [vmem:[%s3001 + $0xb8] sm:$0xff]
    %v3026 = vld [vmem:[%s3001 + $0xc0] sm:$0xff]
    %v3027 = vld [vmem:[%s3001 + $0xc8] sm:$0xff]
    %v3028 = vld [vmem:[%s3001 + $0xd0] sm:$0xff]
    %v3029 = vld [vmem:[%s3001 + $0xd8] sm:$0xff]
    %v3030 = vld [vmem:[%s3001 + $0xe0] sm:$0xff]
    %v3031 = vld [vmem:[%s3001 + $0xe8] sm:$0xff]
    %v3032 = vld [vmem:[%s3001 + $0xf0] sm:$0xff]
    %v3033 = vld [vmem:[%s3001 + $0xf8] sm:$0xff]
    %s3034 = scalar_lea.vmem %s4, 8
    %v3035 = vld [vmem:[%s3034] sm:$0x3]
    %v3037 = vlaneseq
    %v3038 = vshrl.u32 %v3037, 7
    %v3039 = vsub.s32 0, %v3038
    %v3040 = vrot.slane %v3035, %v3039
    %v3041 = vlaneseq
    %v3042 = vshrl.u32 %v3041, 7
    %v3043 = vsub.s32 1, %v3042
    %v3044 = vrot.slane %v3035, %v3043
    %v3079 = vunpack.c.l.b16 %v3002
    %v3080 = vunpack.c.h.b16 %v3002
    %v3081 = vunpack.c.l.b16 %v3003
    %v3082 = vunpack.c.h.b16 %v3003
    %v3083 = vunpack.c.l.b16 %v3004
    %v3084 = vunpack.c.h.b16 %v3004
    %v3085 = vunpack.c.l.b16 %v3005
    %v3086 = vunpack.c.h.b16 %v3005
    %v3087 = vunpack.c.l.b16 %v3006
    %v3088 = vunpack.c.h.b16 %v3006
    %v3089 = vunpack.c.l.b16 %v3007
    %v3090 = vunpack.c.h.b16 %v3007
    %v3091 = vunpack.c.l.b16 %v3008
    %v3092 = vunpack.c.h.b16 %v3008
    %v3093 = vunpack.c.l.b16 %v3009
    %v3094 = vunpack.c.h.b16 %v3009
    %v3095 = vunpack.c.l.b16 %v3010
    %v3096 = vunpack.c.h.b16 %v3010
    %v3097 = vunpack.c.l.b16 %v3011
    %v3098 = vunpack.c.h.b16 %v3011
    %v3099 = vunpack.c.l.b16 %v3012
    %v3100 = vunpack.c.h.b16 %v3012
    %v3101 = vunpack.c.l.b16 %v3013
    %v3102 = vunpack.c.h.b16 %v3013
    %v3103 = vunpack.c.l.b16 %v3014
    %v3104 = vunpack.c.h.b16 %v3014
    %v3105 = vunpack.c.l.b16 %v3015
    %v3106 = vunpack.c.h.b16 %v3015
    %v3107 = vunpack.c.l.b16 %v3016
    %v3108 = vunpack.c.h.b16 %v3016
    %v3109 = vunpack.c.l.b16 %v3017
    %v3110 = vunpack.c.h.b16 %v3017
    %v3111 = vunpack.c.l.b16 %v3018
    %v3112 = vunpack.c.h.b16 %v3018
    %v3113 = vunpack.c.l.b16 %v3019
    %v3114 = vunpack.c.h.b16 %v3019
    %v3115 = vunpack.c.l.b16 %v3020
    %v3116 = vunpack.c.h.b16 %v3020
    %v3117 = vunpack.c.l.b16 %v3021
    %v3118 = vunpack.c.h.b16 %v3021
    %v3119 = vunpack.c.l.b16 %v3022
    %v3120 = vunpack.c.h.b16 %v3022
    %v3121 = vunpack.c.l.b16 %v3023
    %v3122 = vunpack.c.h.b16 %v3023
    %v3123 = vunpack.c.l.b16 %v3024
    %v3124 = vunpack.c.h.b16 %v3024
    %v3125 = vunpack.c.l.b16 %v3025
    %v3126 = vunpack.c.h.b16 %v3025
    %v3127 = vunpack.c.l.b16 %v3026
    %v3128 = vunpack.c.h.b16 %v3026
    %v3129 = vunpack.c.l.b16 %v3027
    %v3130 = vunpack.c.h.b16 %v3027
    %v3131 = vunpack.c.l.b16 %v3028
    %v3132 = vunpack.c.h.b16 %v3028
    %v3133 = vunpack.c.l.b16 %v3029
    %v3134 = vunpack.c.h.b16 %v3029
    %v3135 = vunpack.c.l.b16 %v3030
    %v3136 = vunpack.c.h.b16 %v3030
    %v3137 = vunpack.c.l.b16 %v3031
    %v3138 = vunpack.c.h.b16 %v3031
    %v3139 = vunpack.c.l.b16 %v3032
    %v3140 = vunpack.c.h.b16 %v3032
    %v3141 = vunpack.c.l.b16 %v3033
    %v3142 = vunpack.c.h.b16 %v3033
    %v3143 = vpack.c.b16 %v3081, %v3079
    %v3144 = vpack.c.b16 %v3082, %v3080
    %v3145 = vpack.c.b16 %v3085, %v3083
    %v3146 = vpack.c.b16 %v3086, %v3084
    %v3147 = vpack.c.b16 %v3089, %v3087
    %v3148 = vpack.c.b16 %v3090, %v3088
    %v3149 = vpack.c.b16 %v3093, %v3091
    %v3150 = vpack.c.b16 %v3094, %v3092
    %v3151 = vpack.c.b16 %v3097, %v3095
    %v3152 = vpack.c.b16 %v3098, %v3096
    %v3153 = vpack.c.b16 %v3101, %v3099
    %v3154 = vpack.c.b16 %v3102, %v3100
    %v3155 = vpack.c.b16 %v3105, %v3103
    %v3156 = vpack.c.b16 %v3106, %v3104
    %v3157 = vpack.c.b16 %v3109, %v3107
    %v3158 = vpack.c.b16 %v3110, %v3108
    %v3159 = vpack.c.b16 %v3113, %v3111
    %v3160 = vpack.c.b16 %v3114, %v3112
    %v3161 = vpack.c.b16 %v3117, %v3115
    %v3162 = vpack.c.b16 %v3118, %v3116
    %v3163 = vpack.c.b16 %v3121, %v3119
    %v3164 = vpack.c.b16 %v3122, %v3120
    %v3165 = vpack.c.b16 %v3125, %v3123
    %v3166 = vpack.c.b16 %v3126, %v3124
    %v3167 = vpack.c.b16 %v3129, %v3127
    %v3168 = vpack.c.b16 %v3130, %v3128
    %v3169 = vpack.c.b16 %v3133, %v3131
    %v3170 = vpack.c.b16 %v3134, %v3132
    %v3171 = vpack.c.b16 %v3137, %v3135
    %v3172 = vpack.c.b16 %v3138, %v3136
    %v3173 = vpack.c.b16 %v3141, %v3139
    %v3174 = vpack.c.b16 %v3142, %v3140
    %3207 = vmatprep.subr.bf16.mxu0 %v3144
    %3208 = vmatpush1.bf16.msra.mxu0 %v3143
    %3209 = vmatprep.subr.bf16.mxu0 %v3146
    %3210 = vmatpush1.bf16.msra.mxu0 %v3145
    %3211 = vmatprep.subr.bf16.mxu0 %v3148
    %3212 = vmatpush1.bf16.msra.mxu0 %v3147
    %3213 = vmatprep.subr.bf16.mxu0 %v3150
    %3214 = vmatpush1.bf16.msra.mxu0 %v3149
    %3215 = vmatprep.subr.bf16.mxu0 %v3152
    %3216 = vmatpush1.bf16.msra.mxu0 %v3151
    %3217 = vmatprep.subr.bf16.mxu0 %v3154
    %3218 = vmatpush1.bf16.msra.mxu0 %v3153
    %3219 = vmatprep.subr.bf16.mxu0 %v3156
    %3220 = vmatpush1.bf16.msra.mxu0 %v3155
    %3221 = vmatprep.subr.bf16.mxu0 %v3158
    %3222 = vmatpush1.bf16.msra.mxu0 %v3157
    %3223 = vmatprep.subr.bf16.mxu0 %v3160
    %3224 = vmatpush1.bf16.msra.mxu0 %v3159
    %3225 = vmatprep.subr.bf16.mxu0 %v3162
    %3226 = vmatpush1.bf16.msra.mxu0 %v3161
    %3227 = vmatprep.subr.bf16.mxu0 %v3164
    %3228 = vmatpush1.bf16.msra.mxu0 %v3163
    %3229 = vmatprep.subr.bf16.mxu0 %v3166
    %3230 = vmatpush1.bf16.msra.mxu0 %v3165
    %3231 = vmatprep.subr.bf16.mxu0 %v3168
    %3232 = vmatpush1.bf16.msra.mxu0 %v3167
    %3233 = vmatprep.subr.bf16.mxu0 %v3170
    %3234 = vmatpush1.bf16.msra.mxu0 %v3169
    %3235 = vmatprep.subr.bf16.mxu0 %v3172
    %3236 = vmatpush1.bf16.msra.mxu0 %v3171
    %3237 = vmatprep.subr.bf16.mxu0 %v3174
    %3238 = vmatpush1.bf16.msra.mxu0 %v3173
    %3239 = vmatprep.mubr.bf16.mxu0 %v2970
    %3240 = vmatmul.mubr.bf16.gmra.mrb[0].mxu0 %v2969
    %v3241 = vpop.f32.mrb[0].mxu0
    %v3242 = vadd.f32 %v3040, %v3241
    %v3243 = vpop.f32.mrb[0].mxu0
    %v3244 = vadd.f32 %v3044, %v3243
    %v3245 = vpop.f32.mrb[0].mxu0
    %v3246 = vadd.f32 %v3040, %v3245
    %v3247 = vpop.f32.mrb[0].mxu0
    %v3248 = vadd.f32 %v3044, %v3247
    %3249 = vmatprep.mubr.bf16.mxu0 %v2972
    %3250 = vmatmul.mubr.bf16.gmra.mrb[0].mxu0 %v2971
    %v3251 = vpop.f32.mrb[0].mxu0
    %v3252 = vadd.f32 %v3040, %v3251
    %v3253 = vpop.f32.mrb[0].mxu0
    %v3254 = vadd.f32 %v3044, %v3253
    %v3255 = vpop.f32.mrb[0].mxu0
    %v3256 = vadd.f32 %v3040, %v3255
    %v3257 = vpop.f32.mrb[0].mxu0
    %v3258 = vadd.f32 %v3044, %v3257
    %3259 = vmatprep.mubr.bf16.mxu0 %v2974
    %3260 = vmatmul.mubr.bf16.gmra.mrb[0].mxu0 %v2973
    %v3261 = vpop.f32.mrb[0].mxu0
    %v3262 = vadd.f32 %v3040, %v3261
    %v3263 = vpop.f32.mrb[0].mxu0
    %v3264 = vadd.f32 %v3044, %v3263
    %v3265 = vpop.f32.mrb[0].mxu0
    %v3266 = vadd.f32 %v3040, %v3265
    %v3267 = vpop.f32.mrb[0].mxu0
    %v3268 = vadd.f32 %v3044, %v3267
    %3269 = vmatprep.mubr.bf16.mxu0 %v2976
    %3270 = vmatmul.mubr.bf16.gmra.mrb[0].mxu0 %v2975
    %v3271 = vpop.f32.mrb[0].mxu0
    %v3272 = vadd.f32 %v3040, %v3271
    %v3273 = vpop.f32.mrb[0].mxu0
    %v3274 = vadd.f32 %v3044, %v3273
    %v3275 = vpop.f32.mrb[0].mxu0
    %v3276 = vadd.f32 %v3040, %v3275
    %v3277 = vpop.f32.mrb[0].mxu0
    %v3278 = vadd.f32 %v3044, %v3277
    %3279 = vmatprep.mubr.bf16.mxu0 %v2978
    %3280 = vmatmul.mubr.bf16.gmra.mrb[0].mxu0 %v2977
    %v3281 = vpop.f32.mrb[0].mxu0
    %v3282 = vadd.f32 %v3040, %v3281
    %v3283 = vpop.f32.mrb[0].mxu0
    %v3284 = vadd.f32 %v3044, %v3283
    %v3285 = vpop.f32.mrb[0].mxu0
    %v3286 = vadd.f32 %v3040, %v3285
    %v3287 = vpop.f32.mrb[0].mxu0
    %v3288 = vadd.f32 %v3044, %v3287
    %3289 = vmatprep.mubr.bf16.mxu0 %v2980
    %3290 = vmatmul.mubr.bf16.gmra.mrb[0].mxu0 %v2979
    %v3291 = vpop.f32.mrb[0].mxu0
    %v3292 = vadd.f32 %v3040, %v3291
    %v3293 = vpop.f32.mrb[0].mxu0
    %v3294 = vadd.f32 %v3044, %v3293
    %v3295 = vpop.f32.mrb[0].mxu0
    %v3296 = vadd.f32 %v3040, %v3295
    %v3297 = vpop.f32.mrb[0].mxu0
    %v3298 = vadd.f32 %v3044, %v3297
    %3299 = vmatprep.mubr.bf16.mxu0 %v2982
    %3300 = vmatmul.mubr.bf16.gmra.mrb[0].mxu0 %v2981
    %v3301 = vpop.f32.mrb[0].mxu0
    %v3302 = vadd.f32 %v3040, %v3301
    %v3303 = vpop.f32.mrb[0].mxu0
    %v3304 = vadd.f32 %v3044, %v3303
    %v3305 = vpop.f32.mrb[0].mxu0
    %v3306 = vadd.f32 %v3040, %v3305
    %v3307 = vpop.f32.mrb[0].mxu0
    %v3308 = vadd.f32 %v3044, %v3307
    %3309 = vmatprep.mubr.bf16.mxu0 %v2984
    %3310 = vmatmul.mubr.bf16.gmra.mrb[0].mxu0 %v2983
    %v3311 = vpop.f32.mrb[0].mxu0
    %v3312 = vadd.f32 %v3040, %v3311
    %v3313 = vpop.f32.mrb[0].mxu0
    %v3314 = vadd.f32 %v3044, %v3313
    %v3315 = vpop.f32.mrb[0].mxu0
    %v3316 = vadd.f32 %v3040, %v3315
    %v3317 = vpop.f32.mrb[0].mxu0
    %v3318 = vadd.f32 %v3044, %v3317
    %3319 = vmatprep.mubr.bf16.mxu0 %v2986
    %3320 = vmatmul.mubr.bf16.gmra.mrb[0].mxu0 %v2985
    %v3321 = vpop.f32.mrb[0].mxu0
    %v3322 = vadd.f32 %v3040, %v3321
    %v3323 = vpop.f32.mrb[0].mxu0
    %v3324 = vadd.f32 %v3044, %v3323
    %v3325 = vpop.f32.mrb[0].mxu0
    %v3326 = vadd.f32 %v3040, %v3325
    %v3327 = vpop.f32.mrb[0].mxu0
    %v3328 = vadd.f32 %v3044, %v3327
    %3329 = vmatprep.mubr.bf16.mxu0 %v2988
    %3330 = vmatmul.mubr.bf16.gmra.mrb[0].mxu0 %v2987
    %v3331 = vpop.f32.mrb[0].mxu0
    %v3332 = vadd.f32 %v3040, %v3331
    %v3333 = vpop.f32.mrb[0].mxu0
    %v3334 = vadd.f32 %v3044, %v3333
    %v3335 = vpop.f32.mrb[0].mxu0
    %v3336 = vadd.f32 %v3040, %v3335
    %v3337 = vpop.f32.mrb[0].mxu0
    %v3338 = vadd.f32 %v3044, %v3337
    %3339 = vmatprep.mubr.bf16.mxu0 %v2990
    %3340 = vmatmul.mubr.bf16.gmra.mrb[0].mxu0 %v2989
    %v3341 = vpop.f32.mrb[0].mxu0
    %v3342 = vadd.f32 %v3040, %v3341
    %v3343 = vpop.f32.mrb[0].mxu0
    %v3344 = vadd.f32 %v3044, %v3343
    %v3345 = vpop.f32.mrb[0].mxu0
    %v3346 = vadd.f32 %v3040, %v3345
    %v3347 = vpop.f32.mrb[0].mxu0
    %v3348 = vadd.f32 %v3044, %v3347
    %3349 = vmatprep.mubr.bf16.mxu0 %v2992
    %3350 = vmatmul.mubr.bf16.gmra.mrb[0].mxu0 %v2991
    %v3351 = vpop.f32.mrb[0].mxu0
    %v3352 = vadd.f32 %v3040, %v3351
    %v3353 = vpop.f32.mrb[0].mxu0
    %v3354 = vadd.f32 %v3044, %v3353
    %v3355 = vpop.f32.mrb[0].mxu0
    %v3356 = vadd.f32 %v3040, %v3355
    %v3357 = vpop.f32.mrb[0].mxu0
    %v3358 = vadd.f32 %v3044, %v3357
    %3359 = vmatprep.mubr.bf16.mxu0 %v2994
    %3360 = vmatmul.mubr.bf16.gmra.mrb[0].mxu0 %v2993
    %v3361 = vpop.f32.mrb[0].mxu0
    %v3362 = vadd.f32 %v3040, %v3361
    %v3363 = vpop.f32.mrb[0].mxu0
    %v3364 = vadd.f32 %v3044, %v3363
    %v3365 = vpop.f32.mrb[0].mxu0
    %v3366 = vadd.f32 %v3040, %v3365
    %v3367 = vpop.f32.mrb[0].mxu0
    %v3368 = vadd.f32 %v3044, %v3367
    %3369 = vmatprep.mubr.bf16.mxu0 %v2996
    %3370 = vmatmul.mubr.bf16.gmra.mrb[0].mxu0 %v2995
    %v3371 = vpop.f32.mrb[0].mxu0
    %v3372 = vadd.f32 %v3040, %v3371
    %v3373 = vpop.f32.mrb[0].mxu0
    %v3374 = vadd.f32 %v3044, %v3373
    %v3375 = vpop.f32.mrb[0].mxu0
    %v3376 = vadd.f32 %v3040, %v3375
    %v3377 = vpop.f32.mrb[0].mxu0
    %v3378 = vadd.f32 %v3044, %v3377
    %3379 = vmatprep.mubr.bf16.mxu0 %v2998
    %3380 = vmatmul.mubr.bf16.gmra.mrb[0].mxu0 %v2997
    %v3381 = vpop.f32.mrb[0].mxu0
    %v3382 = vadd.f32 %v3040, %v3381
    %v3383 = vpop.f32.mrb[0].mxu0
    %v3384 = vadd.f32 %v3044, %v3383
    %v3385 = vpop.f32.mrb[0].mxu0
    %v3386 = vadd.f32 %v3040, %v3385
    %v3387 = vpop.f32.mrb[0].mxu0
    %v3388 = vadd.f32 %v3044, %v3387
    %3389 = vmatprep.mubr.bf16.mxu0 %v3000
    %3390 = vmatmul.mubr.bf16.gmra.mrb[0].mxu0 %v2999
    %v3391 = vpop.f32.mrb[0].mxu0
    %v3392 = vadd.f32 %v3040, %v3391
    %v3393 = vpop.f32.mrb[0].mxu0
    %v3394 = vadd.f32 %v3044, %v3393
    %v3395 = vpop.f32.mrb[0].mxu0
    %v3396 = vadd.f32 %v3040, %v3395
    %v3397 = vpop.f32.mrb[0].mxu0
    %v3398 = vadd.f32 %v3044, %v3397
    %3399 = vdwg.mxu0
    %v3400 = vld [vmem:[%s5] ss:$4 sm:$0x3]
    %v3402 = vlaneseq
    %v3403 = vshrl.u32 %v3402, 7
    %v3404 = vsub.s32 0, %v3403
    %v3405 = vrot.slane %v3400, %v3404
    %v3406 = vlaneseq
    %v3407 = vshrl.u32 %v3406, 7
    %v3408 = vsub.s32 1, %v3407
    %v3409 = vrot.slane %v3400, %v3408
    %v3412 = vmul.f32 %v81, %v3405
    %v3413 = vmul.f32 %v81, %v3409
    %v3414 = vmul.f32 %v86, %v3405
    %v3415 = vmul.f32 %v86, %v3409
    %v3416 = vmul.f32 %v91, %v3405
    %v3417 = vmul.f32 %v91, %v3409
    %v3418 = vmul.f32 %v96, %v3405
    %v3419 = vmul.f32 %v96, %v3409
    %v3420 = vmul.f32 %v101, %v3405
    %v3421 = vmul.f32 %v101, %v3409
    %v3422 = vmul.f32 %v106, %v3405
    %v3423 = vmul.f32 %v106, %v3409
    %v3424 = vmul.f32 %v111, %v3405
    %v3425 = vmul.f32 %v111, %v3409
    %v3426 = vmul.f32 %v116, %v3405
    %v3427 = vmul.f32 %v116, %v3409
    %v3428 = vmul.f32 %v121, %v3405
    %v3429 = vmul.f32 %v121, %v3409
    %v3430 = vmul.f32 %v126, %v3405
    %v3431 = vmul.f32 %v126, %v3409
    %v3432 = vmul.f32 %v131, %v3405
    %v3433 = vmul.f32 %v131, %v3409
    %v3434 = vmul.f32 %v136, %v3405
    %v3435 = vmul.f32 %v136, %v3409
    %v3436 = vmul.f32 %v141, %v3405
    %v3437 = vmul.f32 %v141, %v3409
    %v3438 = vmul.f32 %v146, %v3405
    %v3439 = vmul.f32 %v146, %v3409
    %v3440 = vmul.f32 %v151, %v3405
    %v3441 = vmul.f32 %v151, %v3409
    %v3442 = vmul.f32 %v156, %v3405
    %v3443 = vmul.f32 %v156, %v3409
    %v3444 = vmul.f32 %v161, %v3405
    %v3445 = vmul.f32 %v161, %v3409
    %v3446 = vmul.f32 %v166, %v3405
    %v3447 = vmul.f32 %v166, %v3409
    %v3448 = vmul.f32 %v171, %v3405
    %v3449 = vmul.f32 %v171, %v3409
    %v3450 = vmul.f32 %v176, %v3405
    %v3451 = vmul.f32 %v176, %v3409
    %v3452 = vmul.f32 %v181, %v3405
    %v3453 = vmul.f32 %v181, %v3409
    %v3454 = vmul.f32 %v186, %v3405
    %v3455 = vmul.f32 %v186, %v3409
    %v3456 = vmul.f32 %v191, %v3405
    %v3457 = vmul.f32 %v191, %v3409
    %v3458 = vmul.f32 %v196, %v3405
    %v3459 = vmul.f32 %v196, %v3409
    %v3460 = vmul.f32 %v201, %v3405
    %v3461 = vmul.f32 %v201, %v3409
    %v3462 = vmul.f32 %v206, %v3405
    %v3463 = vmul.f32 %v206, %v3409
    %v3464 = vmul.f32 %v211, %v3405
    %v3465 = vmul.f32 %v211, %v3409
    %v3466 = vmul.f32 %v216, %v3405
    %v3467 = vmul.f32 %v216, %v3409
    %v3468 = vmul.f32 %v221, %v3405
    %v3469 = vmul.f32 %v221, %v3409
    %v3470 = vmul.f32 %v226, %v3405
    %v3471 = vmul.f32 %v226, %v3409
    %v3472 = vmul.f32 %v231, %v3405
    %v3473 = vmul.f32 %v231, %v3409
    %v3474 = vmul.f32 %v236, %v3405
    %v3475 = vmul.f32 %v236, %v3409
    %s3476 = scalar_lea.vmem %s5, 1
    %v3477 = vld [vmem:[%s3476] ss:$4 sm:$0x3]
    %v3479 = vlaneseq
    %v3480 = vshrl.u32 %v3479, 7
    %v3481 = vsub.s32 0, %v3480
    %v3482 = vrot.slane %v3477, %v3481
    %v3483 = vlaneseq
    %v3484 = vshrl.u32 %v3483, 7
    %v3485 = vsub.s32 1, %v3484
    %v3486 = vrot.slane %v3477, %v3485
    %v3489 = vmul.f32 %v317, %v3482
    %v3490 = vmul.f32 %v317, %v3486
    %v3491 = vmul.f32 %v321, %v3482
    %v3492 = vmul.f32 %v321, %v3486
    %v3493 = vmul.f32 %v325, %v3482
    %v3494 = vmul.f32 %v325, %v3486
    %v3495 = vmul.f32 %v329, %v3482
    %v3496 = vmul.f32 %v329, %v3486
    %v3497 = vmul.f32 %v333, %v3482
    %v3498 = vmul.f32 %v333, %v3486
    %v3499 = vmul.f32 %v337, %v3482
    %v3500 = vmul.f32 %v337, %v3486
    %v3501 = vmul.f32 %v341, %v3482
    %v3502 = vmul.f32 %v341, %v3486
    %v3503 = vmul.f32 %v345, %v3482
    %v3504 = vmul.f32 %v345, %v3486
    %v3505 = vmul.f32 %v349, %v3482
    %v3506 = vmul.f32 %v349, %v3486
    %v3507 = vmul.f32 %v353, %v3482
    %v3508 = vmul.f32 %v353, %v3486
    %v3509 = vmul.f32 %v357, %v3482
    %v3510 = vmul.f32 %v357, %v3486
    %v3511 = vmul.f32 %v361, %v3482
    %v3512 = vmul.f32 %v361, %v3486
    %v3513 = vmul.f32 %v365, %v3482
    %v3514 = vmul.f32 %v365, %v3486
    %v3515 = vmul.f32 %v369, %v3482
    %v3516 = vmul.f32 %v369, %v3486
    %v3517 = vmul.f32 %v373, %v3482
    %v3518 = vmul.f32 %v373, %v3486
    %v3519 = vmul.f32 %v377, %v3482
    %v3520 = vmul.f32 %v377, %v3486
    %v3521 = vmul.f32 %v381, %v3482
    %v3522 = vmul.f32 %v381, %v3486
    %v3523 = vmul.f32 %v385, %v3482
    %v3524 = vmul.f32 %v385, %v3486
    %v3525 = vmul.f32 %v389, %v3482
    %v3526 = vmul.f32 %v389, %v3486
    %v3527 = vmul.f32 %v393, %v3482
    %v3528 = vmul.f32 %v393, %v3486
    %v3529 = vmul.f32 %v397, %v3482
    %v3530 = vmul.f32 %v397, %v3486
    %v3531 = vmul.f32 %v401, %v3482
    %v3532 = vmul.f32 %v401, %v3486
    %v3533 = vmul.f32 %v405, %v3482
    %v3534 = vmul.f32 %v405, %v3486
    %v3535 = vmul.f32 %v409, %v3482
    %v3536 = vmul.f32 %v409, %v3486
    %v3537 = vmul.f32 %v413, %v3482
    %v3538 = vmul.f32 %v413, %v3486
    %v3539 = vmul.f32 %v417, %v3482
    %v3540 = vmul.f32 %v417, %v3486
    %v3541 = vmul.f32 %v421, %v3482
    %v3542 = vmul.f32 %v421, %v3486
    %v3543 = vmul.f32 %v425, %v3482
    %v3544 = vmul.f32 %v425, %v3486
    %v3545 = vmul.f32 %v429, %v3482
    %v3546 = vmul.f32 %v429, %v3486
    %v3547 = vmul.f32 %v433, %v3482
    %v3548 = vmul.f32 %v433, %v3486
    %v3549 = vmul.f32 %v437, %v3482
    %v3550 = vmul.f32 %v437, %v3486
    %v3551 = vmul.f32 %v441, %v3482
    %v3552 = vmul.f32 %v441, %v3486
    %v3553 = vadd.f32 %v3412, %v3489
    %v3554 = vadd.f32 %v3413, %v3490
    %v3555 = vadd.f32 %v3414, %v3491
    %v3556 = vadd.f32 %v3415, %v3492
    %v3557 = vadd.f32 %v3416, %v3493
    %v3558 = vadd.f32 %v3417, %v3494
    %v3559 = vadd.f32 %v3418, %v3495
    %v3560 = vadd.f32 %v3419, %v3496
    %v3561 = vadd.f32 %v3420, %v3497
    %v3562 = vadd.f32 %v3421, %v3498
    %v3563 = vadd.f32 %v3422, %v3499
    %v3564 = vadd.f32 %v3423, %v3500
    %v3565 = vadd.f32 %v3424, %v3501
    %v3566 = vadd.f32 %v3425, %v3502
    %v3567 = vadd.f32 %v3426, %v3503
    %v3568 = vadd.f32 %v3427, %v3504
    %v3569 = vadd.f32 %v3428, %v3505
    %v3570 = vadd.f32 %v3429, %v3506
    %v3571 = vadd.f32 %v3430, %v3507
    %v3572 = vadd.f32 %v3431, %v3508
    %v3573 = vadd.f32 %v3432, %v3509
    %v3574 = vadd.f32 %v3433, %v3510
    %v3575 = vadd.f32 %v3434, %v3511
    %v3576 = vadd.f32 %v3435, %v3512
    %v3577 = vadd.f32 %v3436, %v3513
    %v3578 = vadd.f32 %v3437, %v3514
    %v3579 = vadd.f32 %v3438, %v3515
    %v3580 = vadd.f32 %v3439, %v3516
    %v3581 = vadd.f32 %v3440, %v3517
    %v3582 = vadd.f32 %v3441, %v3518
    %v3583 = vadd.f32 %v3442, %v3519
    %v3584 = vadd.f32 %v3443, %v3520
    %v3585 = vadd.f32 %v3444, %v3521
    %v3586 = vadd.f32 %v3445, %v3522
    %v3587 = vadd.f32 %v3446, %v3523
    %v3588 = vadd.f32 %v3447, %v3524
    %v3589 = vadd.f32 %v3448, %v3525
    %v3590 = vadd.f32 %v3449, %v3526
    %v3591 = vadd.f32 %v3450, %v3527
    %v3592 = vadd.f32 %v3451, %v3528
    %v3593 = vadd.f32 %v3452, %v3529
    %v3594 = vadd.f32 %v3453, %v3530
    %v3595 = vadd.f32 %v3454, %v3531
    %v3596 = vadd.f32 %v3455, %v3532
    %v3597 = vadd.f32 %v3456, %v3533
    %v3598 = vadd.f32 %v3457, %v3534
    %v3599 = vadd.f32 %v3458, %v3535
    %v3600 = vadd.f32 %v3459, %v3536
    %v3601 = vadd.f32 %v3460, %v3537
    %v3602 = vadd.f32 %v3461, %v3538
    %v3603 = vadd.f32 %v3462, %v3539
    %v3604 = vadd.f32 %v3463, %v3540
    %v3605 = vadd.f32 %v3464, %v3541
    %v3606 = vadd.f32 %v3465, %v3542
    %v3607 = vadd.f32 %v3466, %v3543
    %v3608 = vadd.f32 %v3467, %v3544
    %v3609 = vadd.f32 %v3468, %v3545
    %v3610 = vadd.f32 %v3469, %v3546
    %v3611 = vadd.f32 %v3470, %v3547
    %v3612 = vadd.f32 %v3471, %v3548
    %v3613 = vadd.f32 %v3472, %v3549
    %v3614 = vadd.f32 %v3473, %v3550
    %v3615 = vadd.f32 %v3474, %v3551
    %v3616 = vadd.f32 %v3475, %v3552
    %s3617 = scalar_lea.vmem %s5, 2
    %v3618 = vld [vmem:[%s3617] ss:$4 sm:$0x3]
    %v3620 = vlaneseq
    %v3621 = vshrl.u32 %v3620, 7
    %v3622 = vsub.s32 0, %v3621
    %v3623 = vrot.slane %v3618, %v3622
    %v3624 = vlaneseq
    %v3625 = vshrl.u32 %v3624, 7
    %v3626 = vsub.s32 1, %v3625
    %v3627 = vrot.slane %v3618, %v3626
    %v3630 = vmul.f32 %v586, %v3623
    %v3631 = vmul.f32 %v586, %v3627
    %v3632 = vmul.f32 %v590, %v3623
    %v3633 = vmul.f32 %v590, %v3627
    %v3634 = vmul.f32 %v594, %v3623
    %v3635 = vmul.f32 %v594, %v3627
    %v3636 = vmul.f32 %v598, %v3623
    %v3637 = vmul.f32 %v598, %v3627
    %v3638 = vmul.f32 %v602, %v3623
    %v3639 = vmul.f32 %v602, %v3627
    %v3640 = vmul.f32 %v606, %v3623
    %v3641 = vmul.f32 %v606, %v3627
    %v3642 = vmul.f32 %v610, %v3623
    %v3643 = vmul.f32 %v610, %v3627
    %v3644 = vmul.f32 %v614, %v3623
    %v3645 = vmul.f32 %v614, %v3627
    %v3646 = vmul.f32 %v618, %v3623
    %v3647 = vmul.f32 %v618, %v3627
    %v3648 = vmul.f32 %v622, %v3623
    %v3649 = vmul.f32 %v622, %v3627
    %v3650 = vmul.f32 %v626, %v3623
    %v3651 = vmul.f32 %v626, %v3627
    %v3652 = vmul.f32 %v630, %v3623
    %v3653 = vmul.f32 %v630, %v3627
    %v3654 = vmul.f32 %v634, %v3623
    %v3655 = vmul.f32 %v634, %v3627
    %v3656 = vmul.f32 %v638, %v3623
    %v3657 = vmul.f32 %v638, %v3627
    %v3658 = vmul.f32 %v642, %v3623
    %v3659 = vmul.f32 %v642, %v3627
    %v3660 = vmul.f32 %v646, %v3623
    %v3661 = vmul.f32 %v646, %v3627
    %v3662 = vmul.f32 %v650, %v3623
    %v3663 = vmul.f32 %v650, %v3627
    %v3664 = vmul.f32 %v654, %v3623
    %v3665 = vmul.f32 %v654, %v3627
    %v3666 = vmul.f32 %v658, %v3623
    %v3667 = vmul.f32 %v658, %v3627
    %v3668 = vmul.f32 %v662, %v3623
    %v3669 = vmul.f32 %v662, %v3627
    %v3670 = vmul.f32 %v666, %v3623
    %v3671 = vmul.f32 %v666, %v3627
    %v3672 = vmul.f32 %v670, %v3623
    %v3673 = vmul.f32 %v670, %v3627
    %v3674 = vmul.f32 %v674, %v3623
    %v3675 = vmul.f32 %v674, %v3627
    %v3676 = vmul.f32 %v678, %v3623
    %v3677 = vmul.f32 %v678, %v3627
    %v3678 = vmul.f32 %v682, %v3623
    %v3679 = vmul.f32 %v682, %v3627
    %v3680 = vmul.f32 %v686, %v3623
    %v3681 = vmul.f32 %v686, %v3627
    %v3682 = vmul.f32 %v690, %v3623
    %v3683 = vmul.f32 %v690, %v3627
    %v3684 = vmul.f32 %v694, %v3623
    %v3685 = vmul.f32 %v694, %v3627
    %v3686 = vmul.f32 %v698, %v3623
    %v3687 = vmul.f32 %v698, %v3627
    %v3688 = vmul.f32 %v702, %v3623
    %v3689 = vmul.f32 %v702, %v3627
    %v3690 = vmul.f32 %v706, %v3623
    %v3691 = vmul.f32 %v706, %v3627
    %v3692 = vmul.f32 %v710, %v3623
    %v3693 = vmul.f32 %v710, %v3627
    %v3694 = vadd.f32 %v3553, %v3630
    %v3695 = vadd.f32 %v3554, %v3631
    %v3696 = vadd.f32 %v3555, %v3632
    %v3697 = vadd.f32 %v3556, %v3633
    %v3698 = vadd.f32 %v3557, %v3634
    %v3699 = vadd.f32 %v3558, %v3635
    %v3700 = vadd.f32 %v3559, %v3636
    %v3701 = vadd.f32 %v3560, %v3637
    %v3702 = vadd.f32 %v3561, %v3638
    %v3703 = vadd.f32 %v3562, %v3639
    %v3704 = vadd.f32 %v3563, %v3640
    %v3705 = vadd.f32 %v3564, %v3641
    %v3706 = vadd.f32 %v3565, %v3642
    %v3707 = vadd.f32 %v3566, %v3643
    %v3708 = vadd.f32 %v3567, %v3644
    %v3709 = vadd.f32 %v3568, %v3645
    %v3710 = vadd.f32 %v3569, %v3646
    %v3711 = vadd.f32 %v3570, %v3647
    %v3712 = vadd.f32 %v3571, %v3648
    %v3713 = vadd.f32 %v3572, %v3649
    %v3714 = vadd.f32 %v3573, %v3650
    %v3715 = vadd.f32 %v3574, %v3651
    %v3716 = vadd.f32 %v3575, %v3652
    %v3717 = vadd.f32 %v3576, %v3653
    %v3718 = vadd.f32 %v3577, %v3654
    %v3719 = vadd.f32 %v3578, %v3655
    %v3720 = vadd.f32 %v3579, %v3656
    %v3721 = vadd.f32 %v3580, %v3657
    %v3722 = vadd.f32 %v3581, %v3658
    %v3723 = vadd.f32 %v3582, %v3659
    %v3724 = vadd.f32 %v3583, %v3660
    %v3725 = vadd.f32 %v3584, %v3661
    %v3726 = vadd.f32 %v3585, %v3662
    %v3727 = vadd.f32 %v3586, %v3663
    %v3728 = vadd.f32 %v3587, %v3664
    %v3729 = vadd.f32 %v3588, %v3665
    %v3730 = vadd.f32 %v3589, %v3666
    %v3731 = vadd.f32 %v3590, %v3667
    %v3732 = vadd.f32 %v3591, %v3668
    %v3733 = vadd.f32 %v3592, %v3669
    %v3734 = vadd.f32 %v3593, %v3670
    %v3735 = vadd.f32 %v3594, %v3671
    %v3736 = vadd.f32 %v3595, %v3672
    %v3737 = vadd.f32 %v3596, %v3673
    %v3738 = vadd.f32 %v3597, %v3674
    %v3739 = vadd.f32 %v3598, %v3675
    %v3740 = vadd.f32 %v3599, %v3676
    %v3741 = vadd.f32 %v3600, %v3677
    %v3742 = vadd.f32 %v3601, %v3678
    %v3743 = vadd.f32 %v3602, %v3679
    %v3744 = vadd.f32 %v3603, %v3680
    %v3745 = vadd.f32 %v3604, %v3681
    %v3746 = vadd.f32 %v3605, %v3682
    %v3747 = vadd.f32 %v3606, %v3683
    %v3748 = vadd.f32 %v3607, %v3684
    %v3749 = vadd.f32 %v3608, %v3685
    %v3750 = vadd.f32 %v3609, %v3686
    %v3751 = vadd.f32 %v3610, %v3687
    %v3752 = vadd.f32 %v3611, %v3688
    %v3753 = vadd.f32 %v3612, %v3689
    %v3754 = vadd.f32 %v3613, %v3690
    %v3755 = vadd.f32 %v3614, %v3691
    %v3756 = vadd.f32 %v3615, %v3692
    %v3757 = vadd.f32 %v3616, %v3693
    %v3758 = vadd.f32 %v3242, %v3694
    %v3759 = vadd.f32 %v3244, %v3695
    %v3760 = vadd.f32 %v3246, %v3696
    %v3761 = vadd.f32 %v3248, %v3697
    %v3762 = vadd.f32 %v3252, %v3698
    %v3763 = vadd.f32 %v3254, %v3699
    %v3764 = vadd.f32 %v3256, %v3700
    %v3765 = vadd.f32 %v3258, %v3701
    %v3766 = vadd.f32 %v3262, %v3702
    %v3767 = vadd.f32 %v3264, %v3703
    %v3768 = vadd.f32 %v3266, %v3704
    %v3769 = vadd.f32 %v3268, %v3705
    %v3770 = vadd.f32 %v3272, %v3706
    %v3771 = vadd.f32 %v3274, %v3707
    %v3772 = vadd.f32 %v3276, %v3708
    %v3773 = vadd.f32 %v3278, %v3709
    %v3774 = vadd.f32 %v3282, %v3710
    %v3775 = vadd.f32 %v3284, %v3711
    %v3776 = vadd.f32 %v3286, %v3712
    %v3777 = vadd.f32 %v3288, %v3713
    %v3778 = vadd.f32 %v3292, %v3714
    %v3779 = vadd.f32 %v3294, %v3715
    %v3780 = vadd.f32 %v3296, %v3716
    %v3781 = vadd.f32 %v3298, %v3717
    %v3782 = vadd.f32 %v3302, %v3718
    %v3783 = vadd.f32 %v3304, %v3719
    %v3784 = vadd.f32 %v3306, %v3720
    %v3785 = vadd.f32 %v3308, %v3721
    %v3786 = vadd.f32 %v3312, %v3722
    %v3787 = vadd.f32 %v3314, %v3723
    %v3788 = vadd.f32 %v3316, %v3724
    %v3789 = vadd.f32 %v3318, %v3725
    %v3790 = vadd.f32 %v3322, %v3726
    %v3791 = vadd.f32 %v3324, %v3727
    %v3792 = vadd.f32 %v3326, %v3728
    %v3793 = vadd.f32 %v3328, %v3729
    %v3794 = vadd.f32 %v3332, %v3730
    %v3795 = vadd.f32 %v3334, %v3731
    %v3796 = vadd.f32 %v3336, %v3732
    %v3797 = vadd.f32 %v3338, %v3733
    %v3798 = vadd.f32 %v3342, %v3734
    %v3799 = vadd.f32 %v3344, %v3735
    %v3800 = vadd.f32 %v3346, %v3736
    %v3801 = vadd.f32 %v3348, %v3737
    %v3802 = vadd.f32 %v3352, %v3738
    %v3803 = vadd.f32 %v3354, %v3739
    %v3804 = vadd.f32 %v3356, %v3740
    %v3805 = vadd.f32 %v3358, %v3741
    %v3806 = vadd.f32 %v3362, %v3742
    %v3807 = vadd.f32 %v3364, %v3743
    %v3808 = vadd.f32 %v3366, %v3744
    %v3809 = vadd.f32 %v3368, %v3745
    %v3810 = vadd.f32 %v3372, %v3746
    %v3811 = vadd.f32 %v3374, %v3747
    %v3812 = vadd.f32 %v3376, %v3748
    %v3813 = vadd.f32 %v3378, %v3749
    %v3814 = vadd.f32 %v3382, %v3750
    %v3815 = vadd.f32 %v3384, %v3751
    %v3816 = vadd.f32 %v3386, %v3752
    %v3817 = vadd.f32 %v3388, %v3753
    %v3818 = vadd.f32 %v3392, %v3754
    %v3819 = vadd.f32 %v3394, %v3755
    %v3820 = vadd.f32 %v3396, %v3756
    %v3821 = vadd.f32 %v3398, %v3757
    %v3822 = vmax.f32 %v3758, 0.0
    %v3823 = vmax.f32 %v3759, 0.0
    %v3824 = vmax.f32 %v3760, 0.0
    %v3825 = vmax.f32 %v3761, 0.0
    %v3826 = vmax.f32 %v3762, 0.0
    %v3827 = vmax.f32 %v3763, 0.0
    %v3828 = vmax.f32 %v3764, 0.0
    %v3829 = vmax.f32 %v3765, 0.0
    %v3830 = vmax.f32 %v3766, 0.0
    %v3831 = vmax.f32 %v3767, 0.0
    %v3832 = vmax.f32 %v3768, 0.0
    %v3833 = vmax.f32 %v3769, 0.0
    %v3834 = vmax.f32 %v3770, 0.0
    %v3835 = vmax.f32 %v3771, 0.0
    %v3836 = vmax.f32 %v3772, 0.0
    %v3837 = vmax.f32 %v3773, 0.0
    %v3838 = vmax.f32 %v3774, 0.0
    %v3839 = vmax.f32 %v3775, 0.0
    %v3840 = vmax.f32 %v3776, 0.0
    %v3841 = vmax.f32 %v3777, 0.0
    %v3842 = vmax.f32 %v3778, 0.0
    %v3843 = vmax.f32 %v3779, 0.0
    %v3844 = vmax.f32 %v3780, 0.0
    %v3845 = vmax.f32 %v3781, 0.0
    %v3846 = vmax.f32 %v3782, 0.0
    %v3847 = vmax.f32 %v3783, 0.0
    %v3848 = vmax.f32 %v3784, 0.0
    %v3849 = vmax.f32 %v3785, 0.0
    %v3850 = vmax.f32 %v3786, 0.0
    %v3851 = vmax.f32 %v3787, 0.0
    %v3852 = vmax.f32 %v3788, 0.0
    %v3853 = vmax.f32 %v3789, 0.0
    %v3854 = vmax.f32 %v3790, 0.0
    %v3855 = vmax.f32 %v3791, 0.0
    %v3856 = vmax.f32 %v3792, 0.0
    %v3857 = vmax.f32 %v3793, 0.0
    %v3858 = vmax.f32 %v3794, 0.0
    %v3859 = vmax.f32 %v3795, 0.0
    %v3860 = vmax.f32 %v3796, 0.0
    %v3861 = vmax.f32 %v3797, 0.0
    %v3862 = vmax.f32 %v3798, 0.0
    %v3863 = vmax.f32 %v3799, 0.0
    %v3864 = vmax.f32 %v3800, 0.0
    %v3865 = vmax.f32 %v3801, 0.0
    %v3866 = vmax.f32 %v3802, 0.0
    %v3867 = vmax.f32 %v3803, 0.0
    %v3868 = vmax.f32 %v3804, 0.0
    %v3869 = vmax.f32 %v3805, 0.0
    %v3870 = vmax.f32 %v3806, 0.0
    %v3871 = vmax.f32 %v3807, 0.0
    %v3872 = vmax.f32 %v3808, 0.0
    %v3873 = vmax.f32 %v3809, 0.0
    %v3874 = vmax.f32 %v3810, 0.0
    %v3875 = vmax.f32 %v3811, 0.0
    %v3876 = vmax.f32 %v3812, 0.0
    %v3877 = vmax.f32 %v3813, 0.0
    %v3878 = vmax.f32 %v3814, 0.0
    %v3879 = vmax.f32 %v3815, 0.0
    %v3880 = vmax.f32 %v3816, 0.0
    %v3881 = vmax.f32 %v3817, 0.0
    %v3882 = vmax.f32 %v3818, 0.0
    %v3883 = vmax.f32 %v3819, 0.0
    %v3884 = vmax.f32 %v3820, 0.0
    %v3885 = vmax.f32 %v3821, 0.0
    %v3886 = vpack.c.bf16 %v3824, %v3822
    %v3887 = vpack.c.bf16 %v3825, %v3823
    %v3888 = vpack.c.bf16 %v3828, %v3826
    %v3889 = vpack.c.bf16 %v3829, %v3827
    %v3890 = vpack.c.bf16 %v3832, %v3830
    %v3891 = vpack.c.bf16 %v3833, %v3831
    %v3892 = vpack.c.bf16 %v3836, %v3834
    %v3893 = vpack.c.bf16 %v3837, %v3835
    %v3894 = vpack.c.bf16 %v3840, %v3838
    %v3895 = vpack.c.bf16 %v3841, %v3839
    %v3896 = vpack.c.bf16 %v3844, %v3842
    %v3897 = vpack.c.bf16 %v3845, %v3843
    %v3898 = vpack.c.bf16 %v3848, %v3846
    %v3899 = vpack.c.bf16 %v3849, %v3847
    %v3900 = vpack.c.bf16 %v3852, %v3850
    %v3901 = vpack.c.bf16 %v3853, %v3851
    %v3902 = vpack.c.bf16 %v3856, %v3854
    %v3903 = vpack.c.bf16 %v3857, %v3855
    %v3904 = vpack.c.bf16 %v3860, %v3858
    %v3905 = vpack.c.bf16 %v3861, %v3859
    %v3906 = vpack.c.bf16 %v3864, %v3862
    %v3907 = vpack.c.bf16 %v3865, %v3863
    %v3908 = vpack.c.bf16 %v3868, %v3866
    %v3909 = vpack.c.bf16 %v3869, %v3867
    %v3910 = vpack.c.bf16 %v3872, %v3870
    %v3911 = vpack.c.bf16 %v3873, %v3871
    %v3912 = vpack.c.bf16 %v3876, %v3874
    %v3913 = vpack.c.bf16 %v3877, %v3875
    %v3914 = vpack.c.bf16 %v3880, %v3878
    %v3915 = vpack.c.bf16 %v3881, %v3879
    %v3916 = vpack.c.bf16 %v3884, %v3882
    %v3917 = vpack.c.bf16 %v3885, %v3883
    %s3918 = scalar_lea.vmem [#allocation2], 1280
    %v3919 = vld [vmem:[%s3918] sm:$0xff]
    %v3920 = vld [vmem:[%s3918 + $0x8] sm:$0xff]
    %v3921 = vld [vmem:[%s3918 + $0x10] sm:$0xff]
    %v3922 = vld [vmem:[%s3918 + $0x18] sm:$0xff]
    %v3923 = vld [vmem:[%s3918 + $0x20] sm:$0xff]
    %v3924 = vld [vmem:[%s3918 + $0x28] sm:$0xff]
    %v3925 = vld [vmem:[%s3918 + $0x30] sm:$0xff]
    %v3926 = vld [vmem:[%s3918 + $0x38] sm:$0xff]
    %v3927 = vld [vmem:[%s3918 + $0x40] sm:$0xff]
    %v3928 = vld [vmem:[%s3918 + $0x48] sm:$0xff]
    %v3929 = vld [vmem:[%s3918 + $0x50] sm:$0xff]
    %v3930 = vld [vmem:[%s3918 + $0x58] sm:$0xff]
    %v3931 = vld [vmem:[%s3918 + $0x60] sm:$0xff]
    %v3932 = vld [vmem:[%s3918 + $0x68] sm:$0xff]
    %v3933 = vld [vmem:[%s3918 + $0x70] sm:$0xff]
    %v3934 = vld [vmem:[%s3918 + $0x78] sm:$0xff]
    %v3935 = vld [vmem:[%s3918 + $0x80] sm:$0xff]
    %v3936 = vld [vmem:[%s3918 + $0x88] sm:$0xff]
    %v3937 = vld [vmem:[%s3918 + $0x90] sm:$0xff]
    %v3938 = vld [vmem:[%s3918 + $0x98] sm:$0xff]
    %v3939 = vld [vmem:[%s3918 + $0xa0] sm:$0xff]
    %v3940 = vld [vmem:[%s3918 + $0xa8] sm:$0xff]
    %v3941 = vld [vmem:[%s3918 + $0xb0] sm:$0xff]
    %v3942 = vld [vmem:[%s3918 + $0xb8] sm:$0xff]
    %v3943 = vld [vmem:[%s3918 + $0xc0] sm:$0xff]
    %v3944 = vld [vmem:[%s3918 + $0xc8] sm:$0xff]
    %v3945 = vld [vmem:[%s3918 + $0xd0] sm:$0xff]
    %v3946 = vld [vmem:[%s3918 + $0xd8] sm:$0xff]
    %v3947 = vld [vmem:[%s3918 + $0xe0] sm:$0xff]
    %v3948 = vld [vmem:[%s3918 + $0xe8] sm:$0xff]
    %v3949 = vld [vmem:[%s3918 + $0xf0] sm:$0xff]
    %v3950 = vld [vmem:[%s3918 + $0xf8] sm:$0xff]
    %s3951 = scalar_lea.vmem %s4, 10
    %v3952 = vld [vmem:[%s3951] sm:$0x3]
    %v3954 = vlaneseq
    %v3955 = vshrl.u32 %v3954, 7
    %v3956 = vsub.s32 0, %v3955
    %v3957 = vrot.slane %v3952, %v3956
    %v3958 = vlaneseq
    %v3959 = vshrl.u32 %v3958, 7
    %v3960 = vsub.s32 1, %v3959
    %v3961 = vrot.slane %v3952, %v3960
    %v3996 = vunpack.c.l.b16 %v3919
    %v3997 = vunpack.c.h.b16 %v3919
    %v3998 = vunpack.c.l.b16 %v3920
    %v3999 = vunpack.c.h.b16 %v3920
    %v4000 = vunpack.c.l.b16 %v3921
    %v4001 = vunpack.c.h.b16 %v3921
    %v4002 = vunpack.c.l.b16 %v3922
    %v4003 = vunpack.c.h.b16 %v3922
    %v4004 = vunpack.c.l.b16 %v3923
    %v4005 = vunpack.c.h.b16 %v3923
    %v4006 = vunpack.c.l.b16 %v3924
    %v4007 = vunpack.c.h.b16 %v3924
    %v4008 = vunpack.c.l.b16 %v3925
    %v4009 = vunpack.c.h.b16 %v3925
    %v4010 = vunpack.c.l.b16 %v3926
    %v4011 = vunpack.c.h.b16 %v3926
    %v4012 = vunpack.c.l.b16 %v3927
    %v4013 = vunpack.c.h.b16 %v3927
    %v4014 = vunpack.c.l.b16 %v3928
    %v4015 = vunpack.c.h.b16 %v3928
    %v4016 = vunpack.c.l.b16 %v3929
    %v4017 = vunpack.c.h.b16 %v3929
    %v4018 = vunpack.c.l.b16 %v3930
    %v4019 = vunpack.c.h.b16 %v3930
    %v4020 = vunpack.c.l.b16 %v3931
    %v4021 = vunpack.c.h.b16 %v3931
    %v4022 = vunpack.c.l.b16 %v3932
    %v4023 = vunpack.c.h.b16 %v3932
    %v4024 = vunpack.c.l.b16 %v3933
    %v4025 = vunpack.c.h.b16 %v3933
    %v4026 = vunpack.c.l.b16 %v3934
    %v4027 = vunpack.c.h.b16 %v3934
    %v4028 = vunpack.c.l.b16 %v3935
    %v4029 = vunpack.c.h.b16 %v3935
    %v4030 = vunpack.c.l.b16 %v3936
    %v4031 = vunpack.c.h.b16 %v3936
    %v4032 = vunpack.c.l.b16 %v3937
    %v4033 = vunpack.c.h.b16 %v3937
    %v4034 = vunpack.c.l.b16 %v3938
    %v4035 = vunpack.c.h.b16 %v3938
    %v4036 = vunpack.c.l.b16 %v3939
    %v4037 = vunpack.c.h.b16 %v3939
    %v4038 = vunpack.c.l.b16 %v3940
    %v4039 = vunpack.c.h.b16 %v3940
    %v4040 = vunpack.c.l.b16 %v3941
    %v4041 = vunpack.c.h.b16 %v3941
    %v4042 = vunpack.c.l.b16 %v3942
    %v4043 = vunpack.c.h.b16 %v3942
    %v4044 = vunpack.c.l.b16 %v3943
    %v4045 = vunpack.c.h.b16 %v3943
    %v4046 = vunpack.c.l.b16 %v3944
    %v4047 = vunpack.c.h.b16 %v3944
    %v4048 = vunpack.c.l.b16 %v3945
    %v4049 = vunpack.c.h.b16 %v3945
    %v4050 = vunpack.c.l.b16 %v3946
    %v4051 = vunpack.c.h.b16 %v3946
    %v4052 = vunpack.c.l.b16 %v3947
    %v4053 = vunpack.c.h.b16 %v3947
    %v4054 = vunpack.c.l.b16 %v3948
    %v4055 = vunpack.c.h.b16 %v3948
    %v4056 = vunpack.c.l.b16 %v3949
    %v4057 = vunpack.c.h.b16 %v3949
    %v4058 = vunpack.c.l.b16 %v3950
    %v4059 = vunpack.c.h.b16 %v3950
    %v4060 = vpack.c.b16 %v3998, %v3996
    %v4061 = vpack.c.b16 %v3999, %v3997
    %v4062 = vpack.c.b16 %v4002, %v4000
    %v4063 = vpack.c.b16 %v4003, %v4001
    %v4064 = vpack.c.b16 %v4006, %v4004
    %v4065 = vpack.c.b16 %v4007, %v4005
    %v4066 = vpack.c.b16 %v4010, %v4008
    %v4067 = vpack.c.b16 %v4011, %v4009
    %v4068 = vpack.c.b16 %v4014, %v4012
    %v4069 = vpack.c.b16 %v4015, %v4013
    %v4070 = vpack.c.b16 %v4018, %v4016
    %v4071 = vpack.c.b16 %v4019, %v4017
    %v4072 = vpack.c.b16 %v4022, %v4020
    %v4073 = vpack.c.b16 %v4023, %v4021
    %v4074 = vpack.c.b16 %v4026, %v4024
    %v4075 = vpack.c.b16 %v4027, %v4025
    %v4076 = vpack.c.b16 %v4030, %v4028
    %v4077 = vpack.c.b16 %v4031, %v4029
    %v4078 = vpack.c.b16 %v4034, %v4032
    %v4079 = vpack.c.b16 %v4035, %v4033
    %v4080 = vpack.c.b16 %v4038, %v4036
    %v4081 = vpack.c.b16 %v4039, %v4037
    %v4082 = vpack.c.b16 %v4042, %v4040
    %v4083 = vpack.c.b16 %v4043, %v4041
    %v4084 = vpack.c.b16 %v4046, %v4044
    %v4085 = vpack.c.b16 %v4047, %v4045
    %v4086 = vpack.c.b16 %v4050, %v4048
    %v4087 = vpack.c.b16 %v4051, %v4049
    %v4088 = vpack.c.b16 %v4054, %v4052
    %v4089 = vpack.c.b16 %v4055, %v4053
    %v4090 = vpack.c.b16 %v4058, %v4056
    %v4091 = vpack.c.b16 %v4059, %v4057
    %4124 = vmatprep.subr.bf16.mxu0 %v4061
    %4125 = vmatpush1.bf16.msra.mxu0 %v4060
    %4126 = vmatprep.subr.bf16.mxu0 %v4063
    %4127 = vmatpush1.bf16.msra.mxu0 %v4062
    %4128 = vmatprep.subr.bf16.mxu0 %v4065
    %4129 = vmatpush1.bf16.msra.mxu0 %v4064
    %4130 = vmatprep.subr.bf16.mxu0 %v4067
    %4131 = vmatpush1.bf16.msra.mxu0 %v4066
    %4132 = vmatprep.subr.bf16.mxu0 %v4069
    %4133 = vmatpush1.bf16.msra.mxu0 %v4068
    %4134 = vmatprep.subr.bf16.mxu0 %v4071
    %4135 = vmatpush1.bf16.msra.mxu0 %v4070
    %4136 = vmatprep.subr.bf16.mxu0 %v4073
    %4137 = vmatpush1.bf16.msra.mxu0 %v4072
    %4138 = vmatprep.subr.bf16.mxu0 %v4075
    %4139 = vmatpush1.bf16.msra.mxu0 %v4074
    %4140 = vmatprep.subr.bf16.mxu0 %v4077
    %4141 = vmatpush1.bf16.msra.mxu0 %v4076
    %4142 = vmatprep.subr.bf16.mxu0 %v4079
    %4143 = vmatpush1.bf16.msra.mxu0 %v4078
    %4144 = vmatprep.subr.bf16.mxu0 %v4081
    %4145 = vmatpush1.bf16.msra.mxu0 %v4080
    %4146 = vmatprep.subr.bf16.mxu0 %v4083
    %4147 = vmatpush1.bf16.msra.mxu0 %v4082
    %4148 = vmatprep.subr.bf16.mxu0 %v4085
    %4149 = vmatpush1.bf16.msra.mxu0 %v4084
    %4150 = vmatprep.subr.bf16.mxu0 %v4087
    %4151 = vmatpush1.bf16.msra.mxu0 %v4086
    %4152 = vmatprep.subr.bf16.mxu0 %v4089
    %4153 = vmatpush1.bf16.msra.mxu0 %v4088
    %4154 = vmatprep.subr.bf16.mxu0 %v4091
    %4155 = vmatpush1.bf16.msra.mxu0 %v4090
    %4156 = vmatprep.mubr.bf16.mxu0 %v3887
    %4157 = vmatmul.mubr.bf16.gmra.mrb[0].mxu0 %v3886
    %v4158 = vpop.f32.mrb[0].mxu0
    %v4159 = vadd.f32 %v3957, %v4158
    %v4160 = vpop.f32.mrb[0].mxu0
    %v4161 = vadd.f32 %v3961, %v4160
    %v4162 = vpop.f32.mrb[0].mxu0
    %v4163 = vadd.f32 %v3957, %v4162
    %v4164 = vpop.f32.mrb[0].mxu0
    %v4165 = vadd.f32 %v3961, %v4164
    %4166 = vmatprep.mubr.bf16.mxu0 %v3889
    %4167 = vmatmul.mubr.bf16.gmra.mrb[0].mxu0 %v3888
    %v4168 = vpop.f32.mrb[0].mxu0
    %v4169 = vadd.f32 %v3957, %v4168
    %v4170 = vpop.f32.mrb[0].mxu0
    %v4171 = vadd.f32 %v3961, %v4170
    %v4172 = vpop.f32.mrb[0].mxu0
    %v4173 = vadd.f32 %v3957, %v4172
    %v4174 = vpop.f32.mrb[0].mxu0
    %v4175 = vadd.f32 %v3961, %v4174
    %4176 = vmatprep.mubr.bf16.mxu0 %v3891
    %4177 = vmatmul.mubr.bf16.gmra.mrb[0].mxu0 %v3890
    %v4178 = vpop.f32.mrb[0].mxu0
    %v4179 = vadd.f32 %v3957, %v4178
    %v4180 = vpop.f32.mrb[0].mxu0
    %v4181 = vadd.f32 %v3961, %v4180
    %v4182 = vpop.f32.mrb[0].mxu0
    %v4183 = vadd.f32 %v3957, %v4182
    %v4184 = vpop.f32.mrb[0].mxu0
    %v4185 = vadd.f32 %v3961, %v4184
    %4186 = vmatprep.mubr.bf16.mxu0 %v3893
    %4187 = vmatmul.mubr.bf16.gmra.mrb[0].mxu0 %v3892
    %v4188 = vpop.f32.mrb[0].mxu0
    %v4189 = vadd.f32 %v3957, %v4188
    %v4190 = vpop.f32.mrb[0].mxu0
    %v4191 = vadd.f32 %v3961, %v4190
    %v4192 = vpop.f32.mrb[0].mxu0
    %v4193 = vadd.f32 %v3957, %v4192
    %v4194 = vpop.f32.mrb[0].mxu0
    %v4195 = vadd.f32 %v3961, %v4194
    %4196 = vmatprep.mubr.bf16.mxu0 %v3895
    %4197 = vmatmul.mubr.bf16.gmra.mrb[0].mxu0 %v3894
    %v4198 = vpop.f32.mrb[0].mxu0
    %v4199 = vadd.f32 %v3957, %v4198
    %v4200 = vpop.f32.mrb[0].mxu0
    %v4201 = vadd.f32 %v3961, %v4200
    %v4202 = vpop.f32.mrb[0].mxu0
    %v4203 = vadd.f32 %v3957, %v4202
    %v4204 = vpop.f32.mrb[0].mxu0
    %v4205 = vadd.f32 %v3961, %v4204
    %4206 = vmatprep.mubr.bf16.mxu0 %v3897
    %4207 = vmatmul.mubr.bf16.gmra.mrb[0].mxu0 %v3896
    %v4208 = vpop.f32.mrb[0].mxu0
    %v4209 = vadd.f32 %v3957, %v4208
    %v4210 = vpop.f32.mrb[0].mxu0
    %v4211 = vadd.f32 %v3961, %v4210
    %v4212 = vpop.f32.mrb[0].mxu0
    %v4213 = vadd.f32 %v3957, %v4212
    %v4214 = vpop.f32.mrb[0].mxu0
    %v4215 = vadd.f32 %v3961, %v4214
    %4216 = vmatprep.mubr.bf16.mxu0 %v3899
    %4217 = vmatmul.mubr.bf16.gmra.mrb[0].mxu0 %v3898
    %v4218 = vpop.f32.mrb[0].mxu0
    %v4219 = vadd.f32 %v3957, %v4218
    %v4220 = vpop.f32.mrb[0].mxu0
    %v4221 = vadd.f32 %v3961, %v4220
    %v4222 = vpop.f32.mrb[0].mxu0
    %v4223 = vadd.f32 %v3957, %v4222
    %v4224 = vpop.f32.mrb[0].mxu0
    %v4225 = vadd.f32 %v3961, %v4224
    %4226 = vmatprep.mubr.bf16.mxu0 %v3901
    %4227 = vmatmul.mubr.bf16.gmra.mrb[0].mxu0 %v3900
    %v4228 = vpop.f32.mrb[0].mxu0
    %v4229 = vadd.f32 %v3957, %v4228
    %v4230 = vpop.f32.mrb[0].mxu0
    %v4231 = vadd.f32 %v3961, %v4230
    %v4232 = vpop.f32.mrb[0].mxu0
    %v4233 = vadd.f32 %v3957, %v4232
    %v4234 = vpop.f32.mrb[0].mxu0
    %v4235 = vadd.f32 %v3961, %v4234
    %4236 = vmatprep.mubr.bf16.mxu0 %v3903
    %4237 = vmatmul.mubr.bf16.gmra.mrb[0].mxu0 %v3902
    %v4238 = vpop.f32.mrb[0].mxu0
    %v4239 = vadd.f32 %v3957, %v4238
    %v4240 = vpop.f32.mrb[0].mxu0
    %v4241 = vadd.f32 %v3961, %v4240
    %v4242 = vpop.f32.mrb[0].mxu0
    %v4243 = vadd.f32 %v3957, %v4242
    %v4244 = vpop.f32.mrb[0].mxu0
    %v4245 = vadd.f32 %v3961, %v4244
    %4246 = vmatprep.mubr.bf16.mxu0 %v3905
    %4247 = vmatmul.mubr.bf16.gmra.mrb[0].mxu0 %v3904
    %v4248 = vpop.f32.mrb[0].mxu0
    %v4249 = vadd.f32 %v3957, %v4248
    %v4250 = vpop.f32.mrb[0].mxu0
    %v4251 = vadd.f32 %v3961, %v4250
    %v4252 = vpop.f32.mrb[0].mxu0
    %v4253 = vadd.f32 %v3957, %v4252
    %v4254 = vpop.f32.mrb[0].mxu0
    %v4255 = vadd.f32 %v3961, %v4254
    %4256 = vmatprep.mubr.bf16.mxu0 %v3907
    %4257 = vmatmul.mubr.bf16.gmra.mrb[0].mxu0 %v3906
    %v4258 = vpop.f32.mrb[0].mxu0
    %v4259 = vadd.f32 %v3957, %v4258
    %v4260 = vpop.f32.mrb[0].mxu0
    %v4261 = vadd.f32 %v3961, %v4260
    %v4262 = vpop.f32.mrb[0].mxu0
    %v4263 = vadd.f32 %v3957, %v4262
    %v4264 = vpop.f32.mrb[0].mxu0
    %v4265 = vadd.f32 %v3961, %v4264
    %4266 = vmatprep.mubr.bf16.mxu0 %v3909
    %4267 = vmatmul.mubr.bf16.gmra.mrb[0].mxu0 %v3908
    %v4268 = vpop.f32.mrb[0].mxu0
    %v4269 = vadd.f32 %v3957, %v4268
    %v4270 = vpop.f32.mrb[0].mxu0
    %v4271 = vadd.f32 %v3961, %v4270
    %v4272 = vpop.f32.mrb[0].mxu0
    %v4273 = vadd.f32 %v3957, %v4272
    %v4274 = vpop.f32.mrb[0].mxu0
    %v4275 = vadd.f32 %v3961, %v4274
    %4276 = vmatprep.mubr.bf16.mxu0 %v3911
    %4277 = vmatmul.mubr.bf16.gmra.mrb[0].mxu0 %v3910
    %v4278 = vpop.f32.mrb[0].mxu0
    %v4279 = vadd.f32 %v3957, %v4278
    %v4280 = vpop.f32.mrb[0].mxu0
    %v4281 = vadd.f32 %v3961, %v4280
    %v4282 = vpop.f32.mrb[0].mxu0
    %v4283 = vadd.f32 %v3957, %v4282
    %v4284 = vpop.f32.mrb[0].mxu0
    %v4285 = vadd.f32 %v3961, %v4284
    %4286 = vmatprep.mubr.bf16.mxu0 %v3913
    %4287 = vmatmul.mubr.bf16.gmra.mrb[0].mxu0 %v3912
    %v4288 = vpop.f32.mrb[0].mxu0
    %v4289 = vadd.f32 %v3957, %v4288
    %v4290 = vpop.f32.mrb[0].mxu0
    %v4291 = vadd.f32 %v3961, %v4290
    %v4292 = vpop.f32.mrb[0].mxu0
    %v4293 = vadd.f32 %v3957, %v4292
    %v4294 = vpop.f32.mrb[0].mxu0
    %v4295 = vadd.f32 %v3961, %v4294
    %4296 = vmatprep.mubr.bf16.mxu0 %v3915
    %4297 = vmatmul.mubr.bf16.gmra.mrb[0].mxu0 %v3914
    %v4298 = vpop.f32.mrb[0].mxu0
    %v4299 = vadd.f32 %v3957, %v4298
    %v4300 = vpop.f32.mrb[0].mxu0
    %v4301 = vadd.f32 %v3961, %v4300
    %v4302 = vpop.f32.mrb[0].mxu0
    %v4303 = vadd.f32 %v3957, %v4302
    %v4304 = vpop.f32.mrb[0].mxu0
    %v4305 = vadd.f32 %v3961, %v4304
    %4306 = vmatprep.mubr.bf16.mxu0 %v3917
    %4307 = vmatmul.mubr.bf16.gmra.mrb[0].mxu0 %v3916
    %v4308 = vpop.f32.mrb[0].mxu0
    %v4309 = vadd.f32 %v3957, %v4308
    %v4310 = vpop.f32.mrb[0].mxu0
    %v4311 = vadd.f32 %v3961, %v4310
    %v4312 = vpop.f32.mrb[0].mxu0
    %v4313 = vadd.f32 %v3957, %v4312
    %v4314 = vpop.f32.mrb[0].mxu0
    %v4315 = vadd.f32 %v3961, %v4314
    %4316 = vdwg.mxu0
    %v4317 = vmax.f32 %v4159, 0.0
    %v4318 = vmax.f32 %v4161, 0.0
    %v4319 = vmax.f32 %v4163, 0.0
    %v4320 = vmax.f32 %v4165, 0.0
    %v4321 = vmax.f32 %v4169, 0.0
    %v4322 = vmax.f32 %v4171, 0.0
    %v4323 = vmax.f32 %v4173, 0.0
    %v4324 = vmax.f32 %v4175, 0.0
    %v4325 = vmax.f32 %v4179, 0.0
    %v4326 = vmax.f32 %v4181, 0.0
    %v4327 = vmax.f32 %v4183, 0.0
    %v4328 = vmax.f32 %v4185, 0.0
    %v4329 = vmax.f32 %v4189, 0.0
    %v4330 = vmax.f32 %v4191, 0.0
    %v4331 = vmax.f32 %v4193, 0.0
    %v4332 = vmax.f32 %v4195, 0.0
    %v4333 = vmax.f32 %v4199, 0.0
    %v4334 = vmax.f32 %v4201, 0.0
    %v4335 = vmax.f32 %v4203, 0.0
    %v4336 = vmax.f32 %v4205, 0.0
    %v4337 = vmax.f32 %v4209, 0.0
    %v4338 = vmax.f32 %v4211, 0.0
    %v4339 = vmax.f32 %v4213, 0.0
    %v4340 = vmax.f32 %v4215, 0.0
    %v4341 = vmax.f32 %v4219, 0.0
    %v4342 = vmax.f32 %v4221, 0.0
    %v4343 = vmax.f32 %v4223, 0.0
    %v4344 = vmax.f32 %v4225, 0.0
    %v4345 = vmax.f32 %v4229, 0.0
    %v4346 = vmax.f32 %v4231, 0.0
    %v4347 = vmax.f32 %v4233, 0.0
    %v4348 = vmax.f32 %v4235, 0.0
    %v4349 = vmax.f32 %v4239, 0.0
    %v4350 = vmax.f32 %v4241, 0.0
    %v4351 = vmax.f32 %v4243, 0.0
    %v4352 = vmax.f32 %v4245, 0.0
    %v4353 = vmax.f32 %v4249, 0.0
    %v4354 = vmax.f32 %v4251, 0.0
    %v4355 = vmax.f32 %v4253, 0.0
    %v4356 = vmax.f32 %v4255, 0.0
    %v4357 = vmax.f32 %v4259, 0.0
    %v4358 = vmax.f32 %v4261, 0.0
    %v4359 = vmax.f32 %v4263, 0.0
    %v4360 = vmax.f32 %v4265, 0.0
    %v4361 = vmax.f32 %v4269, 0.0
    %v4362 = vmax.f32 %v4271, 0.0
    %v4363 = vmax.f32 %v4273, 0.0
    %v4364 = vmax.f32 %v4275, 0.0
    %v4365 = vmax.f32 %v4279, 0.0
    %v4366 = vmax.f32 %v4281, 0.0
    %v4367 = vmax.f32 %v4283, 0.0
    %v4368 = vmax.f32 %v4285, 0.0
    %v4369 = vmax.f32 %v4289, 0.0
    %v4370 = vmax.f32 %v4291, 0.0
    %v4371 = vmax.f32 %v4293, 0.0
    %v4372 = vmax.f32 %v4295, 0.0
    %v4373 = vmax.f32 %v4299, 0.0
    %v4374 = vmax.f32 %v4301, 0.0
    %v4375 = vmax.f32 %v4303, 0.0
    %v4376 = vmax.f32 %v4305, 0.0
    %v4377 = vmax.f32 %v4309, 0.0
    %v4378 = vmax.f32 %v4311, 0.0
    %v4379 = vmax.f32 %v4313, 0.0
    %v4380 = vmax.f32 %v4315, 0.0
    %v4381 = vpack.c.bf16 %v4319, %v4317
    %v4382 = vpack.c.bf16 %v4320, %v4318
    %v4383 = vpack.c.bf16 %v4323, %v4321
    %v4384 = vpack.c.bf16 %v4324, %v4322
    %v4385 = vpack.c.bf16 %v4327, %v4325
    %v4386 = vpack.c.bf16 %v4328, %v4326
    %v4387 = vpack.c.bf16 %v4331, %v4329
    %v4388 = vpack.c.bf16 %v4332, %v4330
    %v4389 = vpack.c.bf16 %v4335, %v4333
    %v4390 = vpack.c.bf16 %v4336, %v4334
    %v4391 = vpack.c.bf16 %v4339, %v4337
    %v4392 = vpack.c.bf16 %v4340, %v4338
    %v4393 = vpack.c.bf16 %v4343, %v4341
    %v4394 = vpack.c.bf16 %v4344, %v4342
    %v4395 = vpack.c.bf16 %v4347, %v4345
    %v4396 = vpack.c.bf16 %v4348, %v4346
    %v4397 = vpack.c.bf16 %v4351, %v4349
    %v4398 = vpack.c.bf16 %v4352, %v4350
    %v4399 = vpack.c.bf16 %v4355, %v4353
    %v4400 = vpack.c.bf16 %v4356, %v4354
    %v4401 = vpack.c.bf16 %v4359, %v4357
    %v4402 = vpack.c.bf16 %v4360, %v4358
    %v4403 = vpack.c.bf16 %v4363, %v4361
    %v4404 = vpack.c.bf16 %v4364, %v4362
    %v4405 = vpack.c.bf16 %v4367, %v4365
    %v4406 = vpack.c.bf16 %v4368, %v4366
    %v4407 = vpack.c.bf16 %v4371, %v4369
    %v4408 = vpack.c.bf16 %v4372, %v4370
    %v4409 = vpack.c.bf16 %v4375, %v4373
    %v4410 = vpack.c.bf16 %v4376, %v4374
    %v4411 = vpack.c.bf16 %v4379, %v4377
    %v4412 = vpack.c.bf16 %v4380, %v4378
    %s4413 = scalar_lea.vmem [#allocation2], 1536
    %v4414 = vld [vmem:[%s4413] sm:$0xff]
    %v4415 = vld [vmem:[%s4413 + $0x8] sm:$0xff]
    %v4416 = vld [vmem:[%s4413 + $0x10] sm:$0xff]
    %v4417 = vld [vmem:[%s4413 + $0x18] sm:$0xff]
    %v4418 = vld [vmem:[%s4413 + $0x20] sm:$0xff]
    %v4419 = vld [vmem:[%s4413 + $0x28] sm:$0xff]
    %v4420 = vld [vmem:[%s4413 + $0x30] sm:$0xff]
    %v4421 = vld [vmem:[%s4413 + $0x38] sm:$0xff]
    %v4422 = vld [vmem:[%s4413 + $0x40] sm:$0xff]
    %v4423 = vld [vmem:[%s4413 + $0x48] sm:$0xff]
    %v4424 = vld [vmem:[%s4413 + $0x50] sm:$0xff]
    %v4425 = vld [vmem:[%s4413 + $0x58] sm:$0xff]
    %v4426 = vld [vmem:[%s4413 + $0x60] sm:$0xff]
    %v4427 = vld [vmem:[%s4413 + $0x68] sm:$0xff]
    %v4428 = vld [vmem:[%s4413 + $0x70] sm:$0xff]
    %v4429 = vld [vmem:[%s4413 + $0x78] sm:$0xff]
    %v4430 = vld [vmem:[%s4413 + $0x80] sm:$0xff]
    %v4431 = vld [vmem:[%s4413 + $0x88] sm:$0xff]
    %v4432 = vld [vmem:[%s4413 + $0x90] sm:$0xff]
    %v4433 = vld [vmem:[%s4413 + $0x98] sm:$0xff]
    %v4434 = vld [vmem:[%s4413 + $0xa0] sm:$0xff]
    %v4435 = vld [vmem:[%s4413 + $0xa8] sm:$0xff]
    %v4436 = vld [vmem:[%s4413 + $0xb0] sm:$0xff]
    %v4437 = vld [vmem:[%s4413 + $0xb8] sm:$0xff]
    %v4438 = vld [vmem:[%s4413 + $0xc0] sm:$0xff]
    %v4439 = vld [vmem:[%s4413 + $0xc8] sm:$0xff]
    %v4440 = vld [vmem:[%s4413 + $0xd0] sm:$0xff]
    %v4441 = vld [vmem:[%s4413 + $0xd8] sm:$0xff]
    %v4442 = vld [vmem:[%s4413 + $0xe0] sm:$0xff]
    %v4443 = vld [vmem:[%s4413 + $0xe8] sm:$0xff]
    %v4444 = vld [vmem:[%s4413 + $0xf0] sm:$0xff]
    %v4445 = vld [vmem:[%s4413 + $0xf8] sm:$0xff]
    %s4446 = scalar_lea.vmem %s4, 12
    %v4447 = vld [vmem:[%s4446] sm:$0x3]
    %v4449 = vlaneseq
    %v4450 = vshrl.u32 %v4449, 7
    %v4451 = vsub.s32 0, %v4450
    %v4452 = vrot.slane %v4447, %v4451
    %v4453 = vlaneseq
    %v4454 = vshrl.u32 %v4453, 7
    %v4455 = vsub.s32 1, %v4454
    %v4456 = vrot.slane %v4447, %v4455
    %v4491 = vunpack.c.l.b16 %v4414
    %v4492 = vunpack.c.h.b16 %v4414
    %v4493 = vunpack.c.l.b16 %v4415
    %v4494 = vunpack.c.h.b16 %v4415
    %v4495 = vunpack.c.l.b16 %v4416
    %v4496 = vunpack.c.h.b16 %v4416
    %v4497 = vunpack.c.l.b16 %v4417
    %v4498 = vunpack.c.h.b16 %v4417
    %v4499 = vunpack.c.l.b16 %v4418
    %v4500 = vunpack.c.h.b16 %v4418
    %v4501 = vunpack.c.l.b16 %v4419
    %v4502 = vunpack.c.h.b16 %v4419
    %v4503 = vunpack.c.l.b16 %v4420
    %v4504 = vunpack.c.h.b16 %v4420
    %v4505 = vunpack.c.l.b16 %v4421
    %v4506 = vunpack.c.h.b16 %v4421
    %v4507 = vunpack.c.l.b16 %v4422
    %v4508 = vunpack.c.h.b16 %v4422
    %v4509 = vunpack.c.l.b16 %v4423
    %v4510 = vunpack.c.h.b16 %v4423
    %v4511 = vunpack.c.l.b16 %v4424
    %v4512 = vunpack.c.h.b16 %v4424
    %v4513 = vunpack.c.l.b16 %v4425
    %v4514 = vunpack.c.h.b16 %v4425
    %v4515 = vunpack.c.l.b16 %v4426
    %v4516 = vunpack.c.h.b16 %v4426
    %v4517 = vunpack.c.l.b16 %v4427
    %v4518 = vunpack.c.h.b16 %v4427
    %v4519 = vunpack.c.l.b16 %v4428
    %v4520 = vunpack.c.h.b16 %v4428
    %v4521 = vunpack.c.l.b16 %v4429
    %v4522 = vunpack.c.h.b16 %v4429
    %v4523 = vunpack.c.l.b16 %v4430
    %v4524 = vunpack.c.h.b16 %v4430
    %v4525 = vunpack.c.l.b16 %v4431
    %v4526 = vunpack.c.h.b16 %v4431
    %v4527 = vunpack.c.l.b16 %v4432
    %v4528 = vunpack.c.h.b16 %v4432
    %v4529 = vunpack.c.l.b16 %v4433
    %v4530 = vunpack.c.h.b16 %v4433
    %v4531 = vunpack.c.l.b16 %v4434
    %v4532 = vunpack.c.h.b16 %v4434
    %v4533 = vunpack.c.l.b16 %v4435
    %v4534 = vunpack.c.h.b16 %v4435
    %v4535 = vunpack.c.l.b16 %v4436
    %v4536 = vunpack.c.h.b16 %v4436
    %v4537 = vunpack.c.l.b16 %v4437
    %v4538 = vunpack.c.h.b16 %v4437
    %v4539 = vunpack.c.l.b16 %v4438
    %v4540 = vunpack.c.h.b16 %v4438
    %v4541 = vunpack.c.l.b16 %v4439
    %v4542 = vunpack.c.h.b16 %v4439
    %v4543 = vunpack.c.l.b16 %v4440
    %v4544 = vunpack.c.h.b16 %v4440
    %v4545 = vunpack.c.l.b16 %v4441
    %v4546 = vunpack.c.h.b16 %v4441
    %v4547 = vunpack.c.l.b16 %v4442
    %v4548 = vunpack.c.h.b16 %v4442
    %v4549 = vunpack.c.l.b16 %v4443
    %v4550 = vunpack.c.h.b16 %v4443
    %v4551 = vunpack.c.l.b16 %v4444
    %v4552 = vunpack.c.h.b16 %v4444
    %v4553 = vunpack.c.l.b16 %v4445
    %v4554 = vunpack.c.h.b16 %v4445
    %v4555 = vpack.c.b16 %v4493, %v4491
    %v4556 = vpack.c.b16 %v4494, %v4492
    %v4557 = vpack.c.b16 %v4497, %v4495
    %v4558 = vpack.c.b16 %v4498, %v4496
    %v4559 = vpack.c.b16 %v4501, %v4499
    %v4560 = vpack.c.b16 %v4502, %v4500
    %v4561 = vpack.c.b16 %v4505, %v4503
    %v4562 = vpack.c.b16 %v4506, %v4504
    %v4563 = vpack.c.b16 %v4509, %v4507
    %v4564 = vpack.c.b16 %v4510, %v4508
    %v4565 = vpack.c.b16 %v4513, %v4511
    %v4566 = vpack.c.b16 %v4514, %v4512
    %v4567 = vpack.c.b16 %v4517, %v4515
    %v4568 = vpack.c.b16 %v4518, %v4516
    %v4569 = vpack.c.b16 %v4521, %v4519
    %v4570 = vpack.c.b16 %v4522, %v4520
    %v4571 = vpack.c.b16 %v4525, %v4523
    %v4572 = vpack.c.b16 %v4526, %v4524
    %v4573 = vpack.c.b16 %v4529, %v4527
    %v4574 = vpack.c.b16 %v4530, %v4528
    %v4575 = vpack.c.b16 %v4533, %v4531
    %v4576 = vpack.c.b16 %v4534, %v4532
    %v4577 = vpack.c.b16 %v4537, %v4535
    %v4578 = vpack.c.b16 %v4538, %v4536
    %v4579 = vpack.c.b16 %v4541, %v4539
    %v4580 = vpack.c.b16 %v4542, %v4540
    %v4581 = vpack.c.b16 %v4545, %v4543
    %v4582 = vpack.c.b16 %v4546, %v4544
    %v4583 = vpack.c.b16 %v4549, %v4547
    %v4584 = vpack.c.b16 %v4550, %v4548
    %v4585 = vpack.c.b16 %v4553, %v4551
    %v4586 = vpack.c.b16 %v4554, %v4552
    %4619 = vmatprep.subr.bf16.mxu0 %v4556
    %4620 = vmatpush1.bf16.msra.mxu0 %v4555
    %4621 = vmatprep.subr.bf16.mxu0 %v4558
    %4622 = vmatpush1.bf16.msra.mxu0 %v4557
    %4623 = vmatprep.subr.bf16.mxu0 %v4560
    %4624 = vmatpush1.bf16.msra.mxu0 %v4559
    %4625 = vmatprep.subr.bf16.mxu0 %v4562
    %4626 = vmatpush1.bf16.msra.mxu0 %v4561
    %4627 = vmatprep.subr.bf16.mxu0 %v4564
    %4628 = vmatpush1.bf16.msra.mxu0 %v4563
    %4629 = vmatprep.subr.bf16.mxu0 %v4566
    %4630 = vmatpush1.bf16.msra.mxu0 %v4565
    %4631 = vmatprep.subr.bf16.mxu0 %v4568
    %4632 = vmatpush1.bf16.msra.mxu0 %v4567
    %4633 = vmatprep.subr.bf16.mxu0 %v4570
    %4634 = vmatpush1.bf16.msra.mxu0 %v4569
    %4635 = vmatprep.subr.bf16.mxu0 %v4572
    %4636 = vmatpush1.bf16.msra.mxu0 %v4571
    %4637 = vmatprep.subr.bf16.mxu0 %v4574
    %4638 = vmatpush1.bf16.msra.mxu0 %v4573
    %4639 = vmatprep.subr.bf16.mxu0 %v4576
    %4640 = vmatpush1.bf16.msra.mxu0 %v4575
    %4641 = vmatprep.subr.bf16.mxu0 %v4578
    %4642 = vmatpush1.bf16.msra.mxu0 %v4577
    %4643 = vmatprep.subr.bf16.mxu0 %v4580
    %4644 = vmatpush1.bf16.msra.mxu0 %v4579
    %4645 = vmatprep.subr.bf16.mxu0 %v4582
    %4646 = vmatpush1.bf16.msra.mxu0 %v4581
    %4647 = vmatprep.subr.bf16.mxu0 %v4584
    %4648 = vmatpush1.bf16.msra.mxu0 %v4583
    %4649 = vmatprep.subr.bf16.mxu0 %v4586
    %4650 = vmatpush1.bf16.msra.mxu0 %v4585
    %4651 = vmatprep.mubr.bf16.mxu0 %v4382
    %4652 = vmatmul.mubr.bf16.gmra.mrb[0].mxu0 %v4381
    %v4653 = vpop.f32.mrb[0].mxu0
    %v4654 = vadd.f32 %v4452, %v4653
    %v4655 = vpop.f32.mrb[0].mxu0
    %v4656 = vadd.f32 %v4456, %v4655
    %v4657 = vpop.f32.mrb[0].mxu0
    %v4658 = vadd.f32 %v4452, %v4657
    %v4659 = vpop.f32.mrb[0].mxu0
    %v4660 = vadd.f32 %v4456, %v4659
    %4661 = vmatprep.mubr.bf16.mxu0 %v4384
    %4662 = vmatmul.mubr.bf16.gmra.mrb[0].mxu0 %v4383
    %v4663 = vpop.f32.mrb[0].mxu0
    %v4664 = vadd.f32 %v4452, %v4663
    %v4665 = vpop.f32.mrb[0].mxu0
    %v4666 = vadd.f32 %v4456, %v4665
    %v4667 = vpop.f32.mrb[0].mxu0
    %v4668 = vadd.f32 %v4452, %v4667
    %v4669 = vpop.f32.mrb[0].mxu0
    %v4670 = vadd.f32 %v4456, %v4669
    %4671 = vmatprep.mubr.bf16.mxu0 %v4386
    %4672 = vmatmul.mubr.bf16.gmra.mrb[0].mxu0 %v4385
    %v4673 = vpop.f32.mrb[0].mxu0
    %v4674 = vadd.f32 %v4452, %v4673
    %v4675 = vpop.f32.mrb[0].mxu0
    %v4676 = vadd.f32 %v4456, %v4675
    %v4677 = vpop.f32.mrb[0].mxu0
    %v4678 = vadd.f32 %v4452, %v4677
    %v4679 = vpop.f32.mrb[0].mxu0
    %v4680 = vadd.f32 %v4456, %v4679
    %4681 = vmatprep.mubr.bf16.mxu0 %v4388
    %4682 = vmatmul.mubr.bf16.gmra.mrb[0].mxu0 %v4387
    %v4683 = vpop.f32.mrb[0].mxu0
    %v4684 = vadd.f32 %v4452, %v4683
    %v4685 = vpop.f32.mrb[0].mxu0
    %v4686 = vadd.f32 %v4456, %v4685
    %v4687 = vpop.f32.mrb[0].mxu0
    %v4688 = vadd.f32 %v4452, %v4687
    %v4689 = vpop.f32.mrb[0].mxu0
    %v4690 = vadd.f32 %v4456, %v4689
    %4691 = vmatprep.mubr.bf16.mxu0 %v4390
    %4692 = vmatmul.mubr.bf16.gmra.mrb[0].mxu0 %v4389
    %v4693 = vpop.f32.mrb[0].mxu0
    %v4694 = vadd.f32 %v4452, %v4693
    %v4695 = vpop.f32.mrb[0].mxu0
    %v4696 = vadd.f32 %v4456, %v4695
    %v4697 = vpop.f32.mrb[0].mxu0
    %v4698 = vadd.f32 %v4452, %v4697
    %v4699 = vpop.f32.mrb[0].mxu0
    %v4700 = vadd.f32 %v4456, %v4699
    %4701 = vmatprep.mubr.bf16.mxu0 %v4392
    %4702 = vmatmul.mubr.bf16.gmra.mrb[0].mxu0 %v4391
    %v4703 = vpop.f32.mrb[0].mxu0
    %v4704 = vadd.f32 %v4452, %v4703
    %v4705 = vpop.f32.mrb[0].mxu0
    %v4706 = vadd.f32 %v4456, %v4705
    %v4707 = vpop.f32.mrb[0].mxu0
    %v4708 = vadd.f32 %v4452, %v4707
    %v4709 = vpop.f32.mrb[0].mxu0
    %v4710 = vadd.f32 %v4456, %v4709
    %4711 = vmatprep.mubr.bf16.mxu0 %v4394
    %4712 = vmatmul.mubr.bf16.gmra.mrb[0].mxu0 %v4393
    %v4713 = vpop.f32.mrb[0].mxu0
    %v4714 = vadd.f32 %v4452, %v4713
    %v4715 = vpop.f32.mrb[0].mxu0
    %v4716 = vadd.f32 %v4456, %v4715
    %v4717 = vpop.f32.mrb[0].mxu0
    %v4718 = vadd.f32 %v4452, %v4717
    %v4719 = vpop.f32.mrb[0].mxu0
    %v4720 = vadd.f32 %v4456, %v4719
    %4721 = vmatprep.mubr.bf16.mxu0 %v4396
    %4722 = vmatmul.mubr.bf16.gmra.mrb[0].mxu0 %v4395
    %v4723 = vpop.f32.mrb[0].mxu0
    %v4724 = vadd.f32 %v4452, %v4723
    %v4725 = vpop.f32.mrb[0].mxu0
    %v4726 = vadd.f32 %v4456, %v4725
    %v4727 = vpop.f32.mrb[0].mxu0
    %v4728 = vadd.f32 %v4452, %v4727
    %v4729 = vpop.f32.mrb[0].mxu0
    %v4730 = vadd.f32 %v4456, %v4729
    %4731 = vmatprep.mubr.bf16.mxu0 %v4398
    %4732 = vmatmul.mubr.bf16.gmra.mrb[0].mxu0 %v4397
    %v4733 = vpop.f32.mrb[0].mxu0
    %v4734 = vadd.f32 %v4452, %v4733
    %v4735 = vpop.f32.mrb[0].mxu0
    %v4736 = vadd.f32 %v4456, %v4735
    %v4737 = vpop.f32.mrb[0].mxu0
    %v4738 = vadd.f32 %v4452, %v4737
    %v4739 = vpop.f32.mrb[0].mxu0
    %v4740 = vadd.f32 %v4456, %v4739
    %4741 = vmatprep.mubr.bf16.mxu0 %v4400
    %4742 = vmatmul.mubr.bf16.gmra.mrb[0].mxu0 %v4399
    %v4743 = vpop.f32.mrb[0].mxu0
    %v4744 = vadd.f32 %v4452, %v4743
    %v4745 = vpop.f32.mrb[0].mxu0
    %v4746 = vadd.f32 %v4456, %v4745
    %v4747 = vpop.f32.mrb[0].mxu0
    %v4748 = vadd.f32 %v4452, %v4747
    %v4749 = vpop.f32.mrb[0].mxu0
    %v4750 = vadd.f32 %v4456, %v4749
    %4751 = vmatprep.mubr.bf16.mxu0 %v4402
    %4752 = vmatmul.mubr.bf16.gmra.mrb[0].mxu0 %v4401
    %v4753 = vpop.f32.mrb[0].mxu0
    %v4754 = vadd.f32 %v4452, %v4753
    %v4755 = vpop.f32.mrb[0].mxu0
    %v4756 = vadd.f32 %v4456, %v4755
    %v4757 = vpop.f32.mrb[0].mxu0
    %v4758 = vadd.f32 %v4452, %v4757
    %v4759 = vpop.f32.mrb[0].mxu0
    %v4760 = vadd.f32 %v4456, %v4759
    %4761 = vmatprep.mubr.bf16.mxu0 %v4404
    %4762 = vmatmul.mubr.bf16.gmra.mrb[0].mxu0 %v4403
    %v4763 = vpop.f32.mrb[0].mxu0
    %v4764 = vadd.f32 %v4452, %v4763
    %v4765 = vpop.f32.mrb[0].mxu0
    %v4766 = vadd.f32 %v4456, %v4765
    %v4767 = vpop.f32.mrb[0].mxu0
    %v4768 = vadd.f32 %v4452, %v4767
    %v4769 = vpop.f32.mrb[0].mxu0
    %v4770 = vadd.f32 %v4456, %v4769
    %4771 = vmatprep.mubr.bf16.mxu0 %v4406
    %4772 = vmatmul.mubr.bf16.gmra.mrb[0].mxu0 %v4405
    %v4773 = vpop.f32.mrb[0].mxu0
    %v4774 = vadd.f32 %v4452, %v4773
    %v4775 = vpop.f32.mrb[0].mxu0
    %v4776 = vadd.f32 %v4456, %v4775
    %v4777 = vpop.f32.mrb[0].mxu0
    %v4778 = vadd.f32 %v4452, %v4777
    %v4779 = vpop.f32.mrb[0].mxu0
    %v4780 = vadd.f32 %v4456, %v4779
    %4781 = vmatprep.mubr.bf16.mxu0 %v4408
    %4782 = vmatmul.mubr.bf16.gmra.mrb[0].mxu0 %v4407
    %v4783 = vpop.f32.mrb[0].mxu0
    %v4784 = vadd.f32 %v4452, %v4783
    %v4785 = vpop.f32.mrb[0].mxu0
    %v4786 = vadd.f32 %v4456, %v4785
    %v4787 = vpop.f32.mrb[0].mxu0
    %v4788 = vadd.f32 %v4452, %v4787
    %v4789 = vpop.f32.mrb[0].mxu0
    %v4790 = vadd.f32 %v4456, %v4789
    %4791 = vmatprep.mubr.bf16.mxu0 %v4410
    %4792 = vmatmul.mubr.bf16.gmra.mrb[0].mxu0 %v4409
    %v4793 = vpop.f32.mrb[0].mxu0
    %v4794 = vadd.f32 %v4452, %v4793
    %v4795 = vpop.f32.mrb[0].mxu0
    %v4796 = vadd.f32 %v4456, %v4795
    %v4797 = vpop.f32.mrb[0].mxu0
    %v4798 = vadd.f32 %v4452, %v4797
    %v4799 = vpop.f32.mrb[0].mxu0
    %v4800 = vadd.f32 %v4456, %v4799
    %4801 = vmatprep.mubr.bf16.mxu0 %v4412
    %4802 = vmatmul.mubr.bf16.gmra.mrb[0].mxu0 %v4411
    %v4803 = vpop.f32.mrb[0].mxu0
    %v4804 = vadd.f32 %v4452, %v4803
    %v4805 = vpop.f32.mrb[0].mxu0
    %v4806 = vadd.f32 %v4456, %v4805
    %v4807 = vpop.f32.mrb[0].mxu0
    %v4808 = vadd.f32 %v4452, %v4807
    %v4809 = vpop.f32.mrb[0].mxu0
    %v4810 = vadd.f32 %v4456, %v4809
    %4811 = vdwg.mxu0
    %v4812 = vmax.f32 %v4654, 0.0
    %v4813 = vmax.f32 %v4656, 0.0
    %v4814 = vmax.f32 %v4658, 0.0
    %v4815 = vmax.f32 %v4660, 0.0
    %v4816 = vmax.f32 %v4664, 0.0
    %v4817 = vmax.f32 %v4666, 0.0
    %v4818 = vmax.f32 %v4668, 0.0
    %v4819 = vmax.f32 %v4670, 0.0
    %v4820 = vmax.f32 %v4674, 0.0
    %v4821 = vmax.f32 %v4676, 0.0
    %v4822 = vmax.f32 %v4678, 0.0
    %v4823 = vmax.f32 %v4680, 0.0
    %v4824 = vmax.f32 %v4684, 0.0
    %v4825 = vmax.f32 %v4686, 0.0
    %v4826 = vmax.f32 %v4688, 0.0
    %v4827 = vmax.f32 %v4690, 0.0
    %v4828 = vmax.f32 %v4694, 0.0
    %v4829 = vmax.f32 %v4696, 0.0
    %v4830 = vmax.f32 %v4698, 0.0
    %v4831 = vmax.f32 %v4700, 0.0
    %v4832 = vmax.f32 %v4704, 0.0
    %v4833 = vmax.f32 %v4706, 0.0
    %v4834 = vmax.f32 %v4708, 0.0
    %v4835 = vmax.f32 %v4710, 0.0
    %v4836 = vmax.f32 %v4714, 0.0
    %v4837 = vmax.f32 %v4716, 0.0
    %v4838 = vmax.f32 %v4718, 0.0
    %v4839 = vmax.f32 %v4720, 0.0
    %v4840 = vmax.f32 %v4724, 0.0
    %v4841 = vmax.f32 %v4726, 0.0
    %v4842 = vmax.f32 %v4728, 0.0
    %v4843 = vmax.f32 %v4730, 0.0
    %v4844 = vmax.f32 %v4734, 0.0
    %v4845 = vmax.f32 %v4736, 0.0
    %v4846 = vmax.f32 %v4738, 0.0
    %v4847 = vmax.f32 %v4740, 0.0
    %v4848 = vmax.f32 %v4744, 0.0
    %v4849 = vmax.f32 %v4746, 0.0
    %v4850 = vmax.f32 %v4748, 0.0
    %v4851 = vmax.f32 %v4750, 0.0
    %v4852 = vmax.f32 %v4754, 0.0
    %v4853 = vmax.f32 %v4756, 0.0
    %v4854 = vmax.f32 %v4758, 0.0
    %v4855 = vmax.f32 %v4760, 0.0
    %v4856 = vmax.f32 %v4764, 0.0
    %v4857 = vmax.f32 %v4766, 0.0
    %v4858 = vmax.f32 %v4768, 0.0
    %v4859 = vmax.f32 %v4770, 0.0
    %v4860 = vmax.f32 %v4774, 0.0
    %v4861 = vmax.f32 %v4776, 0.0
    %v4862 = vmax.f32 %v4778, 0.0
    %v4863 = vmax.f32 %v4780, 0.0
    %v4864 = vmax.f32 %v4784, 0.0
    %v4865 = vmax.f32 %v4786, 0.0
    %v4866 = vmax.f32 %v4788, 0.0
    %v4867 = vmax.f32 %v4790, 0.0
    %v4868 = vmax.f32 %v4794, 0.0
    %v4869 = vmax.f32 %v4796, 0.0
    %v4870 = vmax.f32 %v4798, 0.0
    %v4871 = vmax.f32 %v4800, 0.0
    %v4872 = vmax.f32 %v4804, 0.0
    %v4873 = vmax.f32 %v4806, 0.0
    %v4874 = vmax.f32 %v4808, 0.0
    %v4875 = vmax.f32 %v4810, 0.0
    %v4876 = vpack.c.bf16 %v4814, %v4812
    %v4877 = vpack.c.bf16 %v4815, %v4813
    %v4878 = vpack.c.bf16 %v4818, %v4816
    %v4879 = vpack.c.bf16 %v4819, %v4817
    %v4880 = vpack.c.bf16 %v4822, %v4820
    %v4881 = vpack.c.bf16 %v4823, %v4821
    %v4882 = vpack.c.bf16 %v4826, %v4824
    %v4883 = vpack.c.bf16 %v4827, %v4825
    %v4884 = vpack.c.bf16 %v4830, %v4828
    %v4885 = vpack.c.bf16 %v4831, %v4829
    %v4886 = vpack.c.bf16 %v4834, %v4832
    %v4887 = vpack.c.bf16 %v4835, %v4833
    %v4888 = vpack.c.bf16 %v4838, %v4836
    %v4889 = vpack.c.bf16 %v4839, %v4837
    %v4890 = vpack.c.bf16 %v4842, %v4840
    %v4891 = vpack.c.bf16 %v4843, %v4841
    %v4892 = vpack.c.bf16 %v4846, %v4844
    %v4893 = vpack.c.bf16 %v4847, %v4845
    %v4894 = vpack.c.bf16 %v4850, %v4848
    %v4895 = vpack.c.bf16 %v4851, %v4849
    %v4896 = vpack.c.bf16 %v4854, %v4852
    %v4897 = vpack.c.bf16 %v4855, %v4853
    %v4898 = vpack.c.bf16 %v4858, %v4856
    %v4899 = vpack.c.bf16 %v4859, %v4857
    %v4900 = vpack.c.bf16 %v4862, %v4860
    %v4901 = vpack.c.bf16 %v4863, %v4861
    %v4902 = vpack.c.bf16 %v4866, %v4864
    %v4903 = vpack.c.bf16 %v4867, %v4865
    %v4904 = vpack.c.bf16 %v4870, %v4868
    %v4905 = vpack.c.bf16 %v4871, %v4869
    %v4906 = vpack.c.bf16 %v4874, %v4872
    %v4907 = vpack.c.bf16 %v4875, %v4873
    %v4908 = vld [vmem:[%s6] sm:$0xf]
    %v4909 = vld [vmem:[%s6 + $0x4] sm:$0xf]
    %v4910 = vld [vmem:[%s6 + $0x8] sm:$0xf]
    %v4911 = vld [vmem:[%s6 + $0xc] sm:$0xf]
    %v4912 = vld [vmem:[%s6 + $0x10] sm:$0xf]
    %v4913 = vld [vmem:[%s6 + $0x14] sm:$0xf]
    %v4914 = vld [vmem:[%s6 + $0x18] sm:$0xf]
    %v4915 = vld [vmem:[%s6 + $0x1c] sm:$0xf]
    %v4916 = vld [vmem:[%s6 + $0x20] sm:$0xf]
    %v4917 = vld [vmem:[%s6 + $0x24] sm:$0xf]
    %v4918 = vld [vmem:[%s6 + $0x28] sm:$0xf]
    %v4919 = vld [vmem:[%s6 + $0x2c] sm:$0xf]
    %v4920 = vld [vmem:[%s6 + $0x30] sm:$0xf]
    %v4921 = vld [vmem:[%s6 + $0x34] sm:$0xf]
    %v4922 = vld [vmem:[%s6 + $0x38] sm:$0xf]
    %v4923 = vld [vmem:[%s6 + $0x3c] sm:$0xf]
    %v4924 = vld [vmem:[%s6 + $0x40] sm:$0xf]
    %v4925 = vld [vmem:[%s6 + $0x44] sm:$0xf]
    %v4926 = vld [vmem:[%s6 + $0x48] sm:$0xf]
    %v4927 = vld [vmem:[%s6 + $0x4c] sm:$0xf]
    %v4928 = vld [vmem:[%s6 + $0x50] sm:$0xf]
    %v4929 = vld [vmem:[%s6 + $0x54] sm:$0xf]
    %v4930 = vld [vmem:[%s6 + $0x58] sm:$0xf]
    %v4931 = vld [vmem:[%s6 + $0x5c] sm:$0xf]
    %v4932 = vld [vmem:[%s6 + $0x60] sm:$0xf]
    %v4933 = vld [vmem:[%s6 + $0x64] sm:$0xf]
    %v4934 = vld [vmem:[%s6 + $0x68] sm:$0xf]
    %v4935 = vld [vmem:[%s6 + $0x6c] sm:$0xf]
    %v4936 = vld [vmem:[%s6 + $0x70] sm:$0xf]
    %v4937 = vld [vmem:[%s6 + $0x74] sm:$0xf]
    %v4938 = vld [vmem:[%s6 + $0x78] sm:$0xf]
    %v4939 = vld [vmem:[%s6 + $0x7c] sm:$0xf]
    %v4940 = vld [vmem:[%s7] sm:$0x1]
    %v4942 = vlaneseq
    %v4943 = vshrl.u32 %v4942, 7
    %v4944 = vsub.s32 0, %v4943
    %v4945 = vrot.slane %v4940, %v4944
    %v4979 = vunpack.c.l.b16 %v4908
    %v4980 = vunpack.c.l.b16 %v4909
    %v4981 = vunpack.c.l.b16 %v4910
    %v4982 = vunpack.c.l.b16 %v4911
    %v4983 = vunpack.c.l.b16 %v4912
    %v4984 = vunpack.c.l.b16 %v4913
    %v4985 = vunpack.c.l.b16 %v4914
    %v4986 = vunpack.c.l.b16 %v4915
    %v4987 = vunpack.c.l.b16 %v4916
    %v4988 = vunpack.c.l.b16 %v4917
    %v4989 = vunpack.c.l.b16 %v4918
    %v4990 = vunpack.c.l.b16 %v4919
    %v4991 = vunpack.c.l.b16 %v4920
    %v4992 = vunpack.c.l.b16 %v4921
    %v4993 = vunpack.c.l.b16 %v4922
    %v4994 = vunpack.c.l.b16 %v4923
    %v4995 = vunpack.c.l.b16 %v4924
    %v4996 = vunpack.c.l.b16 %v4925
    %v4997 = vunpack.c.l.b16 %v4926
    %v4998 = vunpack.c.l.b16 %v4927
    %v4999 = vunpack.c.l.b16 %v4928
    %v5000 = vunpack.c.l.b16 %v4929
    %v5001 = vunpack.c.l.b16 %v4930
    %v5002 = vunpack.c.l.b16 %v4931
    %v5003 = vunpack.c.l.b16 %v4932
    %v5004 = vunpack.c.l.b16 %v4933
    %v5005 = vunpack.c.l.b16 %v4934
    %v5006 = vunpack.c.l.b16 %v4935
    %v5007 = vunpack.c.l.b16 %v4936
    %v5008 = vunpack.c.l.b16 %v4937
    %v5009 = vunpack.c.l.b16 %v4938
    %v5010 = vunpack.c.l.b16 %v4939
    %v5011 = vpack.c.b16 %v4980, %v4979
    %v5012 = vpack.c.b16 %v4982, %v4981
    %v5013 = vpack.c.b16 %v4984, %v4983
    %v5014 = vpack.c.b16 %v4986, %v4985
    %v5015 = vpack.c.b16 %v4988, %v4987
    %v5016 = vpack.c.b16 %v4990, %v4989
    %v5017 = vpack.c.b16 %v4992, %v4991
    %v5018 = vpack.c.b16 %v4994, %v4993
    %v5019 = vpack.c.b16 %v4996, %v4995
    %v5020 = vpack.c.b16 %v4998, %v4997
    %v5021 = vpack.c.b16 %v5000, %v4999
    %v5022 = vpack.c.b16 %v5002, %v5001
    %v5023 = vpack.c.b16 %v5004, %v5003
    %v5024 = vpack.c.b16 %v5006, %v5005
    %v5025 = vpack.c.b16 %v5008, %v5007
    %v5026 = vpack.c.b16 %v5010, %v5009
    %5043 = vmatprep.subr.bf16.mxu0 0
    %5044 = vmatpush1.bf16.msra.mxu0 %v5011
    %5045 = vmatprep.subr.bf16.mxu0 0
    %5046 = vmatpush1.bf16.msra.mxu0 %v5012
    %5047 = vmatprep.subr.bf16.mxu0 0
    %5048 = vmatpush1.bf16.msra.mxu0 %v5013
    %5049 = vmatprep.subr.bf16.mxu0 0
    %5050 = vmatpush1.bf16.msra.mxu0 %v5014
    %5051 = vmatprep.subr.bf16.mxu0 0
    %5052 = vmatpush1.bf16.msra.mxu0 %v5015
    %5053 = vmatprep.subr.bf16.mxu0 0
    %5054 = vmatpush1.bf16.msra.mxu0 %v5016
    %5055 = vmatprep.subr.bf16.mxu0 0
    %5056 = vmatpush1.bf16.msra.mxu0 %v5017
    %5057 = vmatprep.subr.bf16.mxu0 0
    %5058 = vmatpush1.bf16.msra.mxu0 %v5018
    %5059 = vmatprep.subr.bf16.mxu0 0
    %5060 = vmatpush1.bf16.msra.mxu0 %v5019
    %5061 = vmatprep.subr.bf16.mxu0 0
    %5062 = vmatpush1.bf16.msra.mxu0 %v5020
    %5063 = vmatprep.subr.bf16.mxu0 0
    %5064 = vmatpush1.bf16.msra.mxu0 %v5021
    %5065 = vmatprep.subr.bf16.mxu0 0
    %5066 = vmatpush1.bf16.msra.mxu0 %v5022
    %5067 = vmatprep.subr.bf16.mxu0 0
    %5068 = vmatpush1.bf16.msra.mxu0 %v5023
    %5069 = vmatprep.subr.bf16.mxu0 0
    %5070 = vmatpush1.bf16.msra.mxu0 %v5024
    %5071 = vmatprep.subr.bf16.mxu0 0
    %5072 = vmatpush1.bf16.msra.mxu0 %v5025
    %5073 = vmatprep.subr.bf16.mxu0 0
    %5074 = vmatpush1.bf16.msra.mxu0 %v5026
    %5075 = vmatprep.mubr.bf16.mxu0 %v4877
    %5076 = vmatmul.mubr.bf16.gmra.mrb[0].mxu0 %v4876
    %v5077 = vpop.f32.mrb[0].mxu0
    %v5078 = vadd.f32 %v4945, %v5077
    %v5079 = vpop.f32.mrb[0].mxu0
    %v5080 = vpop.f32.mrb[0].mxu0
    %v5081 = vadd.f32 %v4945, %v5080
    %v5082 = vpop.f32.mrb[0].mxu0
    %5083 = vmatprep.mubr.bf16.mxu0 %v4879
    %5084 = vmatmul.mubr.bf16.gmra.mrb[0].mxu0 %v4878
    %v5085 = vpop.f32.mrb[0].mxu0
    %v5086 = vadd.f32 %v4945, %v5085
    %v5087 = vpop.f32.mrb[0].mxu0
    %v5088 = vpop.f32.mrb[0].mxu0
    %v5089 = vadd.f32 %v4945, %v5088
    %v5090 = vpop.f32.mrb[0].mxu0
    %5091 = vmatprep.mubr.bf16.mxu0 %v4881
    %5092 = vmatmul.mubr.bf16.gmra.mrb[0].mxu0 %v4880
    %v5093 = vpop.f32.mrb[0].mxu0
    %v5094 = vadd.f32 %v4945, %v5093
    %v5095 = vpop.f32.mrb[0].mxu0
    %v5096 = vpop.f32.mrb[0].mxu0
    %v5097 = vadd.f32 %v4945, %v5096
    %v5098 = vpop.f32.mrb[0].mxu0
    %5099 = vmatprep.mubr.bf16.mxu0 %v4883
    %5100 = vmatmul.mubr.bf16.gmra.mrb[0].mxu0 %v4882
    %v5101 = vpop.f32.mrb[0].mxu0
    %v5102 = vadd.f32 %v4945, %v5101
    %v5103 = vpop.f32.mrb[0].mxu0
    %v5104 = vpop.f32.mrb[0].mxu0
    %v5105 = vadd.f32 %v4945, %v5104
    %v5106 = vpop.f32.mrb[0].mxu0
    %5107 = vmatprep.mubr.bf16.mxu0 %v4885
    %5108 = vmatmul.mubr.bf16.gmra.mrb[0].mxu0 %v4884
    %v5109 = vpop.f32.mrb[0].mxu0
    %v5110 = vadd.f32 %v4945, %v5109
    %v5111 = vpop.f32.mrb[0].mxu0
    %v5112 = vpop.f32.mrb[0].mxu0
    %v5113 = vadd.f32 %v4945, %v5112
    %v5114 = vpop.f32.mrb[0].mxu0
    %5115 = vmatprep.mubr.bf16.mxu0 %v4887
    %5116 = vmatmul.mubr.bf16.gmra.mrb[0].mxu0 %v4886
    %v5117 = vpop.f32.mrb[0].mxu0
    %v5118 = vadd.f32 %v4945, %v5117
    %v5119 = vpop.f32.mrb[0].mxu0
    %v5120 = vpop.f32.mrb[0].mxu0
    %v5121 = vadd.f32 %v4945, %v5120
    %v5122 = vpop.f32.mrb[0].mxu0
    %5123 = vmatprep.mubr.bf16.mxu0 %v4889
    %5124 = vmatmul.mubr.bf16.gmra.mrb[0].mxu0 %v4888
    %v5125 = vpop.f32.mrb[0].mxu0
    %v5126 = vadd.f32 %v4945, %v5125
    %v5127 = vpop.f32.mrb[0].mxu0
    %v5128 = vpop.f32.mrb[0].mxu0
    %v5129 = vadd.f32 %v4945, %v5128
    %v5130 = vpop.f32.mrb[0].mxu0
    %5131 = vmatprep.mubr.bf16.mxu0 %v4891
    %5132 = vmatmul.mubr.bf16.gmra.mrb[0].mxu0 %v4890
    %v5133 = vpop.f32.mrb[0].mxu0
    %v5134 = vadd.f32 %v4945, %v5133
    %v5135 = vpop.f32.mrb[0].mxu0
    %v5136 = vpop.f32.mrb[0].mxu0
    %v5137 = vadd.f32 %v4945, %v5136
    %v5138 = vpop.f32.mrb[0].mxu0
    %5139 = vmatprep.mubr.bf16.mxu0 %v4893
    %5140 = vmatmul.mubr.bf16.gmra.mrb[0].mxu0 %v4892
    %v5141 = vpop.f32.mrb[0].mxu0
    %v5142 = vadd.f32 %v4945, %v5141
    %v5143 = vpop.f32.mrb[0].mxu0
    %v5144 = vpop.f32.mrb[0].mxu0
    %v5145 = vadd.f32 %v4945, %v5144
    %v5146 = vpop.f32.mrb[0].mxu0
    %5147 = vmatprep.mubr.bf16.mxu0 %v4895
    %5148 = vmatmul.mubr.bf16.gmra.mrb[0].mxu0 %v4894
    %v5149 = vpop.f32.mrb[0].mxu0
    %v5150 = vadd.f32 %v4945, %v5149
    %v5151 = vpop.f32.mrb[0].mxu0
    %v5152 = vpop.f32.mrb[0].mxu0
    %v5153 = vadd.f32 %v4945, %v5152
    %v5154 = vpop.f32.mrb[0].mxu0
    %5155 = vmatprep.mubr.bf16.mxu0 %v4897
    %5156 = vmatmul.mubr.bf16.gmra.mrb[0].mxu0 %v4896
    %v5157 = vpop.f32.mrb[0].mxu0
    %v5158 = vadd.f32 %v4945, %v5157
    %v5159 = vpop.f32.mrb[0].mxu0
    %v5160 = vpop.f32.mrb[0].mxu0
    %v5161 = vadd.f32 %v4945, %v5160
    %v5162 = vpop.f32.mrb[0].mxu0
    %5163 = vmatprep.mubr.bf16.mxu0 %v4899
    %5164 = vmatmul.mubr.bf16.gmra.mrb[0].mxu0 %v4898
    %v5165 = vpop.f32.mrb[0].mxu0
    %v5166 = vadd.f32 %v4945, %v5165
    %v5167 = vpop.f32.mrb[0].mxu0
    %v5168 = vpop.f32.mrb[0].mxu0
    %v5169 = vadd.f32 %v4945, %v5168
    %v5170 = vpop.f32.mrb[0].mxu0
    %5171 = vmatprep.mubr.bf16.mxu0 %v4901
    %5172 = vmatmul.mubr.bf16.gmra.mrb[0].mxu0 %v4900
    %v5173 = vpop.f32.mrb[0].mxu0
    %v5174 = vadd.f32 %v4945, %v5173
    %v5175 = vpop.f32.mrb[0].mxu0
    %v5176 = vpop.f32.mrb[0].mxu0
    %v5177 = vadd.f32 %v4945, %v5176
    %v5178 = vpop.f32.mrb[0].mxu0
    %5179 = vmatprep.mubr.bf16.mxu0 %v4903
    %5180 = vmatmul.mubr.bf16.gmra.mrb[0].mxu0 %v4902
    %v5181 = vpop.f32.mrb[0].mxu0
    %v5182 = vadd.f32 %v4945, %v5181
    %v5183 = vpop.f32.mrb[0].mxu0
    %v5184 = vpop.f32.mrb[0].mxu0
    %v5185 = vadd.f32 %v4945, %v5184
    %v5186 = vpop.f32.mrb[0].mxu0
    %5187 = vmatprep.mubr.bf16.mxu0 %v4905
    %5188 = vmatmul.mubr.bf16.gmra.mrb[0].mxu0 %v4904
    %v5189 = vpop.f32.mrb[0].mxu0
    %v5190 = vadd.f32 %v4945, %v5189
    %v5191 = vpop.f32.mrb[0].mxu0
    %v5192 = vpop.f32.mrb[0].mxu0
    %v5193 = vadd.f32 %v4945, %v5192
    %v5194 = vpop.f32.mrb[0].mxu0
    %5195 = vmatprep.mubr.bf16.mxu0 %v4907
    %5196 = vmatmul.mubr.bf16.gmra.mrb[0].mxu0 %v4906
    %v5197 = vpop.f32.mrb[0].mxu0
    %v5198 = vadd.f32 %v4945, %v5197
    %v5199 = vpop.f32.mrb[0].mxu0
    %v5200 = vpop.f32.mrb[0].mxu0
    %v5201 = vadd.f32 %v4945, %v5200
    %v5202 = vpop.f32.mrb[0].mxu0
    %5203 = vdwg.mxu0
    %5204 = vst [vmem:[#allocation5] sm:$0xff] %v5078
    %5205 = vst [vmem:[#allocation5 + $0x8] sm:$0xff] %v5081
    %5206 = vst [vmem:[#allocation5 + $0x10] sm:$0xff] %v5086
    %5207 = vst [vmem:[#allocation5 + $0x18] sm:$0xff] %v5089
    %5208 = vst [vmem:[#allocation5 + $0x20] sm:$0xff] %v5094
    %5209 = vst [vmem:[#allocation5 + $0x28] sm:$0xff] %v5097
    %5210 = vst [vmem:[#allocation5 + $0x30] sm:$0xff] %v5102
    %5211 = vst [vmem:[#allocation5 + $0x38] sm:$0xff] %v5105
    %5212 = vst [vmem:[#allocation5 + $0x40] sm:$0xff] %v5110
    %5213 = vst [vmem:[#allocation5 + $0x48] sm:$0xff] %v5113
    %5214 = vst [vmem:[#allocation5 + $0x50] sm:$0xff] %v5118
    %5215 = vst [vmem:[#allocation5 + $0x58] sm:$0xff] %v5121
    %5216 = vst [vmem:[#allocation5 + $0x60] sm:$0xff] %v5126
    %5217 = vst [vmem:[#allocation5 + $0x68] sm:$0xff] %v5129
    %5218 = vst [vmem:[#allocation5 + $0x70] sm:$0xff] %v5134
    %5219 = vst [vmem:[#allocation5 + $0x78] sm:$0xff] %v5137
    %5220 = vst [vmem:[#allocation5 + $0x80] sm:$0xff] %v5142
    %5221 = vst [vmem:[#allocation5 + $0x88] sm:$0xff] %v5145
    %5222 = vst [vmem:[#allocation5 + $0x90] sm:$0xff] %v5150
    %5223 = vst [vmem:[#allocation5 + $0x98] sm:$0xff] %v5153
    %5224 = vst [vmem:[#allocation5 + $0xa0] sm:$0xff] %v5158
    %5225 = vst [vmem:[#allocation5 + $0xa8] sm:$0xff] %v5161
    %5226 = vst [vmem:[#allocation5 + $0xb0] sm:$0xff] %v5166
    %5227 = vst [vmem:[#allocation5 + $0xb8] sm:$0xff] %v5169
    %5228 = vst [vmem:[#allocation5 + $0xc0] sm:$0xff] %v5174
    %5229 = vst [vmem:[#allocation5 + $0xc8] sm:$0xff] %v5177
    %5230 = vst [vmem:[#allocation5 + $0xd0] sm:$0xff] %v5182
    %5231 = vst [vmem:[#allocation5 + $0xd8] sm:$0xff] %v5185
    %5232 = vst [vmem:[#allocation5 + $0xe0] sm:$0xff] %v5190
    %5233 = vst [vmem:[#allocation5 + $0xe8] sm:$0xff] %v5193
    %5234 = vst [vmem:[#allocation5 + $0xf0] sm:$0xff] %v5198
    %5235 = vst [vmem:[#allocation5 + $0xf8] sm:$0xff] %v5201
    // Predicated region
    $region38: #{tpu_custom_call.1} parent=1 // pred_check
      _
    $region39: #{tpu_custom_call.1} parent=1 // pred_check_branch
      %5237 = sbr.rel (0) target = $region41
    $region40: #{tpu_custom_call.1} parent=1 // pred_region
      %s5239 = ssub.s32 4096, 4096
      %5240 = vsyncadd [#allocation4], %s5239
      %s5241 = sshll.u32 [#allocation5], 4
      %s5242 = int_to_ptr.vmem [resolvable:$true] %s5241
      %5247 = dma.vmem_to_hbm [thread:$0]  %s5242, 4096, %s8, [#allocation4], 128, 128, 8
    $region41: #{tpu_custom_call.1} parent=1 // pred_fallthru
      _
    // Predicated region
    $region42: #{tpu_custom_call.1} parent=1 // pred_check
      _
    $region43: #{tpu_custom_call.1} parent=1 // pred_check_branch
      %5249 = sbr.rel (0) target = $region45
    $region44: #{tpu_custom_call.1} parent=1 // pred_region
      %5250 = dma.done [#allocation4], 4096
    $region45: #{tpu_custom_call.1} parent=1 // pred_fallthru
      _
    %5251 = vsyncpa [#allocation3], 1
    %5252 = vsyncpa [#allocation4], 1

</llo_original>
